<compile_context>
chip_gen: v7x
topology: tpu7x:2x2x1
jax: 0.10.0
libtpu: 0.0.40
codegen_flags: <defaults>
</compile_context>

<pallas_src>
import functools

import jax
import jax.numpy as jnp
from jax.experimental import pallas as pl
from jax.experimental.pallas import tpu as pltpu


_ACT_DTYPE = jnp.bfloat16
_VMEM_LIMIT = 32 * 1024 * 1024


def _compiler_params(dims):
    return pltpu.CompilerParams(dimension_semantics=dims,
                                vmem_limit_bytes=_VMEM_LIMIT)


# -----------------------------------------------------------------------------
# Pallas tiled matmul (bf16 inputs, f32 accumulate, selectable output dtype)
# -----------------------------------------------------------------------------
def _matmul_kernel(x_ref, w_ref, o_ref, acc_ref):
    # grid = (M tiles, N tiles, K tiles); K is the last (reduction) axis.
    @pl.when(pl.program_id(2) == 0)
    def _():
        acc_ref[...] = jnp.zeros_like(acc_ref)

    acc_ref[...] += jnp.dot(x_ref[...], w_ref[...],
                            preferred_element_type=jnp.float32)

    @pl.when(pl.program_id(2) == pl.num_programs(2) - 1)
    def _():
        o_ref[...] = acc_ref[...].astype(o_ref.dtype)


def pallas_matmul(x, w, out_dtype=_ACT_DTYPE):
    """x: (M, K), w: (K, N) -> (M, N) out_dtype. bf16 MXU, f32 accumulation.

    Small K / N use full-dim blocks (no zero padding of activations, no output
    slice).  M / N remainders are handled by Pallas edge-block masking, so no
    explicit pad / slice pass on the activation path.
    """
    M, K = x.shape
    K2, N = w.shape
    assert K == K2
    x = x.astype(jnp.bfloat16)   # no-op when the producer already emitted bf16
    w = w.astype(jnp.bfloat16)

    tm = M if M <= 512 else 512
    tn = N if N <= 512 else 512
    if K <= 1024:
        tk = K                    # full-dim reduction block, single K step
    else:
        tk = 512
        Kp = -(-K // tk) * tk
        if Kp != K:               # garbage in K would corrupt results -> pad
            x = jnp.pad(x, ((0, 0), (0, Kp - K)))
            w = jnp.pad(w, ((0, Kp - K), (0, 0)))
        K = Kp

    grid = (pl.cdiv(M, tm), pl.cdiv(N, tn), K // tk)
    return pl.pallas_call(
        _matmul_kernel,
        out_shape=jax.ShapeDtypeStruct((M, N), out_dtype),
        grid_spec=pltpu.PrefetchScalarGridSpec(
            num_scalar_prefetch=0,
            grid=grid,
            in_specs=[
                pl.BlockSpec((tm, tk), lambda i, j, k: (i, k)),
                pl.BlockSpec((tk, tn), lambda i, j, k: (k, j)),
            ],
            out_specs=pl.BlockSpec((tm, tn), lambda i, j, k: (i, j)),
            scratch_shapes=[pltpu.VMEM((tm, tn), jnp.float32)],
        ),
        compiler_params=_compiler_params(("parallel", "parallel", "arbitrary")),
    )(x, w)


# -----------------------------------------------------------------------------
# fused GroupNorm + ReLU on NHWC (bf16 in/out, f32 stats)
# grid = (batch, channel-blocks); a channel block always holds whole groups
# -----------------------------------------------------------------------------
def _gn_relu_perchannel_kernel(x_ref, g_ref, b_ref, o_ref):
    x = x_ref[0].astype(jnp.float32)                   # (HW, Cblk)
    hw = x.shape[0]
    inv_n = 1.0 / float(hw)
    mean_c = jnp.sum(x, axis=0, keepdims=True) * inv_n
    cen = x - mean_c
    var_c = jnp.sum(cen * cen, axis=0, keepdims=True) * inv_n
    inv_c = jax.lax.rsqrt(var_c + 1e-5)
    y = cen * (inv_c * g_ref[...]) + b_ref[...]        # (1,Cblk) broadcasts
    o_ref[0] = jnp.maximum(y, 0.0).astype(o_ref.dtype)


def _gn_relu_group_kernel(x_ref, g_ref, b_ref, mem_ref, memt_ref, o_ref, *, cpg):
    x = x_ref[0].astype(jnp.float32)                   # (HW, Cblk)
    hw = x.shape[0]
    inv_n = 1.0 / float(hw * cpg)
    mem = mem_ref[...]                                 # (Cblk, Gblk) constant
    memt = memt_ref[...]                               # (Gblk, Cblk) constant
    s_c = jnp.sum(x, axis=0, keepdims=True)            # (1, Cblk)
    mean_g = jnp.dot(s_c, mem, preferred_element_type=jnp.float32) * inv_n
    mean_c = jnp.dot(mean_g, memt, preferred_element_type=jnp.float32)
    cen = x - mean_c
    v_c = jnp.sum(cen * cen, axis=0, keepdims=True)
    var_g = jnp.dot(v_c, mem, preferred_element_type=jnp.float32) * inv_n
    inv_g = jax.lax.rsqrt(var_g + 1e-5)
    inv_c = jnp.dot(inv_g, memt, preferred_element_type=jnp.float32)
    y = cen * (inv_c * g_ref[...]) + b_ref[...]
    o_ref[0] = jnp.maximum(y, 0.0).astype(o_ref.dtype)


def group_norm_relu(x_nhwc, gamma, beta, num_groups):
    """GroupNorm (eps=1e-5, affine, biased variance) + ReLU, bf16 activations."""
    N, H, W, C = x_nhwc.shape
    G = num_groups
    cpg = C // G
    HW = H * W

    # channel-block gridding: lane-dense blocks of whole groups when possible
    cblk = C
    if C > 128 and C % 128 == 0 and 128 % cpg == 0:
        cblk = 128
    n_cblk = C // cblk

    x3 = x_nhwc.reshape(N, HW, C)
    g2 = gamma.reshape(1, C).astype(jnp.float32)
    b2 = beta.reshape(1, C).astype(jnp.float32)
    cp = _compiler_params(("parallel", "parallel"))
    out_shape = jax.ShapeDtypeStruct((N, HW, C), _ACT_DTYPE)
    x_spec = pl.BlockSpec((1, HW, cblk), lambda n, c: (n, 0, c))
    gb_spec = pl.BlockSpec((1, cblk), lambda n, c: (0, c))

    if cpg == 1:
        out = pl.pallas_call(
            _gn_relu_perchannel_kernel,
            out_shape=out_shape,
            grid_spec=pltpu.PrefetchScalarGridSpec(
                num_scalar_prefetch=0,
                grid=(N, n_cblk),
                in_specs=[x_spec, gb_spec, gb_spec],
                out_specs=x_spec,
            ),
            compiler_params=cp,
        )(x3, g2, b2)
    else:
        gblk = cblk // cpg
        # group-membership matrices built once here (XLA constants), not per step
        mem = (jnp.arange(cblk)[:, None] // cpg
               == jnp.arange(gblk)[None, :]).astype(jnp.float32)
        memt = jnp.transpose(mem)
        kern = functools.partial(_gn_relu_group_kernel, cpg=cpg)
        out = pl.pallas_call(
            kern,
            out_shape=out_shape,
            grid_spec=pltpu.PrefetchScalarGridSpec(
                num_scalar_prefetch=0,
                grid=(N, n_cblk),
                in_specs=[x_spec, gb_spec, gb_spec,
                          pl.BlockSpec((cblk, gblk), lambda n, c: (0, 0)),
                          pl.BlockSpec((gblk, cblk), lambda n, c: (0, 0))],
                out_specs=x_spec,
            ),
            compiler_params=cp,
        )(x3, g2, b2, mem, memt)
    return out.reshape(N, H, W, C)


# -----------------------------------------------------------------------------
# convolutions
# -----------------------------------------------------------------------------
def conv1x1(x_nhwc, w_mat):
    """1x1 conv: plain matmul, w_mat: (Cin, Cout) bf16."""
    N, H, W, C = x_nhwc.shape
    cout = w_mat.shape[1]
    y = pallas_matmul(x_nhwc.reshape(N * H * W, C), w_mat)
    return y.reshape(N, H, W, cout)


def _conv3x3_kernel(x_ref, w_ref, o_ref, *, wp):
    # x_ref: (rows_in, Cin) flattened padded plane of one sample
    # w_ref: (9, Cin, Cout) per-tap weights; o_ref: (H*Wp, Cout)
    mo = o_ref.shape[0]
    acc = jnp.zeros(o_ref.shape, jnp.float32)
    for t in range(9):                       # taps reduced in VMEM/vregs
        off = (t // 3) * wp + (t % 3)
        acc = acc + jnp.dot(x_ref[pl.ds(off, mo), :], w_ref[t],
                            preferred_element_type=jnp.float32)
    o_ref[...] = acc.astype(o_ref.dtype)


def conv3x3_s1_p1(x_nhwc, w_taps):
    """3x3 / stride 1 / pad 1 conv with the 9 taps folded into the reduction.

    The padded plane of one sample is loaded once into VMEM and each tap reads
    a row-shifted window of it; the 9 partial matmuls accumulate into a single
    f32 accumulator -- no 9x-wide HBM intermediate, no shift-and-add passes.
    """
    B, H, W, C = x_nhwc.shape
    Cout = w_taps.shape[2]
    Wp = W + 2
    # 1 row of conv padding on top, 1 on the bottom plus 1 spare row so the
    # shifted in-kernel windows never run off the flattened plane.
    xp = jnp.pad(x_nhwc, ((0, 0), (1, 2), (1, 1), (0, 0)))
    rows_in = (H + 3) * Wp
    xf = xp.reshape(B, rows_in, C)
    Mo = H * Wp                               # output rows incl. Wp-W garbage cols
    kern = functools.partial(_conv3x3_kernel, wp=Wp)
    out = pl.pallas_call(
        kern,
        out_shape=jax.ShapeDtypeStruct((B, Mo, Cout), _ACT_DTYPE),
        grid_spec=pltpu.PrefetchScalarGridSpec(
            num_scalar_prefetch=0,
            grid=(B,),
            in_specs=[
                pl.BlockSpec((None, rows_in, C), lambda b: (b, 0, 0)),
                pl.BlockSpec((9, C, Cout), lambda b: (0, 0, 0)),
            ],
            out_specs=pl.BlockSpec((None, Mo, Cout), lambda b: (b, 0, 0)),
        ),
        compiler_params=_compiler_params(("parallel",)),
    )(xf, w_taps)
    return out.reshape(B, H, Wp, Cout)[:, :, :W, :]


def conv_im2col(x_nhwc, w_mat, kh, kw, stride, pad):
    """General conv via im2col + Pallas matmul (only the 7x7 stem uses this)."""
    # TODO(synk): the stem still materializes im2col patches in HBM; it runs
    #             once on a 3-channel input so the amplification is negligible.
    N, H, W, C = x_nhwc.shape
    cout = w_mat.shape[1]
    xp = jnp.pad(x_nhwc, ((0, 0), (pad, pad), (pad, pad), (0, 0)))
    Ho = (H + 2 * pad - kh) // stride + 1
    Wo = (W + 2 * pad - kw) // stride + 1
    cols = []
    for i in range(kh):
        for j in range(kw):
            cols.append(xp[:, i:i + stride * (Ho - 1) + 1:stride,
                           j:j + stride * (Wo - 1) + 1:stride, :])
    patches = jnp.concatenate(cols, axis=-1).reshape(N * Ho * Wo, kh * kw * C)
    y = pallas_matmul(patches, w_mat)
    return y.reshape(N, Ho, Wo, cout)


def max_pool_3x3_s2_p1(x_nhwc):
    # TODO(synk): pooling stays in XLA (reduce_window); cheap vs the matmuls.
    return jax.lax.reduce_window(
        x_nhwc, jnp.array(-jnp.inf, x_nhwc.dtype), jax.lax.max,
        window_dimensions=(1, 3, 3, 1),
        window_strides=(1, 2, 2, 1),
        padding=((0, 0), (1, 1), (1, 1), (0, 0)))


def avg_pool_2x2(x_nhwc):
    N, H, W, C = x_nhwc.shape
    x = x_nhwc[:, :(H // 2) * 2, :(W // 2) * 2, :]
    y = x.reshape(N, H // 2, 2, W // 2, 2, C).astype(jnp.float32).mean(axis=(2, 4))
    return y.astype(_ACT_DTYPE)


# -----------------------------------------------------------------------------
# parameter construction: weights pre-transposed to matmul layouts + bf16 once
# -----------------------------------------------------------------------------
def _num_groups(c):
    return 32 if c % 32 == 0 else c


def make_params(key, num_classes, num_init_features, growth_rate,
                block_config, bn_size):
    keys = iter(jax.random.split(key, 4096))

    def conv_w(cout, cin, kh, kw):
        fan_in = cin * kh * kw
        return (jax.random.normal(next(keys), (cout, cin, kh, kw), jnp.float32)
                * (2.0 / fan_in) ** 0.5)

    def to_im2col(w):          # (Cout,Cin,kh,kw) -> (kh*kw*Cin, Cout)
        cout, cin, kh, kw = w.shape
        return (jnp.transpose(w, (2, 3, 1, 0))
                .reshape(kh * kw * cin, cout).astype(jnp.bfloat16))

    def to_1x1(w):             # (Cout,Cin,1,1) -> (Cin, Cout)
        cout, cin = w.shape[:2]
        return jnp.transpose(w.reshape(cout, cin)).astype(jnp.bfloat16)

    def to_taps(w):            # (Cout,Cin,3,3) -> (9, Cin, Cout), tap-major
        cout, cin, kh, kw = w.shape
        return (jnp.transpose(w, (2, 3, 1, 0))
                .reshape(kh * kw, cin, cout).astype(jnp.bfloat16))

    def gn(c):
        g = 1.0 + 0.05 * jax.random.normal(next(keys), (c,), jnp.float32)
        b = 0.05 * jax.random.normal(next(keys), (c,), jnp.float32)
        return {"g": g, "b": b, "G": _num_groups(c)}

    params = {
        "conv0_w": to_im2col(conv_w(num_init_features, 3, 7, 7)),
        "gn0": gn(num_init_features),
        "blocks": [],
    }
    nf = num_init_features
    for i, num_layers in enumerate(block_config):
        layers = []
        for l in range(num_layers):
            cin = nf + l * growth_rate
            cmid = bn_size * growth_rate
            layers.append({
                "gn1": gn(cin),
                "w1": to_1x1(conv_w(cmid, cin, 1, 1)),
                "gn2": gn(cmid),
                "w2": to_taps(conv_w(growth_rate, cmid, 3, 3)),
            })
        nf = nf + num_layers * growth_rate
        block = {"layers": layers, "trans": None}
        if i != len(block_config) - 1:
            block["trans"] = {"gn": gn(nf), "w": to_1x1(conv_w(nf // 2, nf, 1, 1))}
            nf = nf // 2
        params["blocks"].append(block)
    params["gn5"] = gn(nf)
    params["fc_w"] = jnp.transpose(
        jax.random.normal(next(keys), (num_classes, nf), jnp.float32)
        * (1.0 / nf) ** 0.5)                                       # (nf, classes) f32
    params["fc_b"] = 0.01 * jax.random.normal(next(keys), (num_classes,),
                                              jnp.float32)
    return params


# -----------------------------------------------------------------------------
# forward pass (semantics of DenseNet.forward)
# -----------------------------------------------------------------------------
def dense_layer_forward(x, p):
    h = group_norm_relu(x, p["gn1"]["g"], p["gn1"]["b"], p["gn1"]["G"])
    h = conv1x1(h, p["w1"])
    h = group_norm_relu(h, p["gn2"]["g"], p["gn2"]["b"], p["gn2"]["G"])
    h = conv3x3_s1_p1(h, p["w2"])
    # TODO(synk): write h into a pre-allocated, 128-padded channel slab via
    #             out_spec channel offset + input_output_aliases instead of
    #             re-copying the growing activation every layer.
    return jnp.concatenate([x, h], axis=-1)        # channel concat (dim=1 NCHW)


def densenet_forward(params, x_nchw):
    x = jnp.transpose(x_nchw, (0, 2, 3, 1)).astype(_ACT_DTYPE)    # -> NHWC bf16
    x = conv_im2col(x, params["conv0_w"], kh=7, kw=7, stride=2, pad=3)
    x = group_norm_relu(x, params["gn0"]["g"], params["gn0"]["b"],
                        params["gn0"]["G"])
    x = max_pool_3x3_s2_p1(x)
    for block in params["blocks"]:
        for layer in block["layers"]:
            x = dense_layer_forward(x, layer)
        if block["trans"] is not None:
            t = block["trans"]
            x = group_norm_relu(x, t["gn"]["g"], t["gn"]["b"], t["gn"]["G"])
            x = conv1x1(x, t["w"])
            x = avg_pool_2x2(x)
    # norm5 + F.relu (fused in the GN kernel)
    x = group_norm_relu(x, params["gn5"]["g"], params["gn5"]["b"],
                        params["gn5"]["G"])
    # adaptive_avg_pool2d((1,1)) + flatten + classifier (tiny -> plain jnp.dot)
    feats = jnp.mean(x.astype(jnp.float32), axis=(1, 2))          # (N, C) f32
    logits = jnp.dot(feats, params["fc_w"]) + params["fc_b"]
    return logits


# -----------------------------------------------------------------------------
if __name__ == "__main__":
    key = jax.random.PRNGKey(0)
    k_param, k_x = jax.random.split(key)

    # Small-but-consistent DenseNet config.
    cfg = dict(num_classes=10, num_init_features=32, growth_rate=16,
               block_config=(2, 2), bn_size=2)
    params = make_params(k_param, **cfg)

    # PyTorch-style NCHW input: batch=2, channels=3, spatial=32.
    x = jax.random.normal(k_x, (2, 3, 32, 32), jnp.float32)

    fwd = jax.jit(functools.partial(densenet_forward, params))
    out = fwd(x)
    jax.block_until_ready(out)
    assert out.shape == (2, cfg["num_classes"])
    assert jnp.all(jnp.isfinite(out))
    print("KERNEL_OK")
</pallas_src>

<mosaic_0001>
module attributes {stable_mosaic.version = 11 : i64} {
  func.func @_matmul_kernel(%arg0: i32, %arg1: i32, %arg2: i32, %arg3: memref<512x147xbf16, #tpu.memory_space<vmem>>, %arg4: memref<147x32xbf16, #tpu.memory_space<vmem>>, %arg5: memref<512x32xbf16, #tpu.memory_space<vmem>>, %arg6: memref<512x32xf32, #tpu.memory_space<vmem>>) attributes {dimension_semantics = [#tpu.dimension_semantics<parallel>, #tpu.dimension_semantics<parallel>, #tpu.dimension_semantics<arbitrary>], iteration_bounds = array<i64: 1, 1, 1>, scalar_prefetch = 0 : i64, scratch_operands = 1 : i64, tpu.core_type = #tpu.core_type<tc>, window_params = [{transform_indices = @transform_0, window_bounds = array<i64: 512, 147>}, {transform_indices = @transform_1, window_bounds = array<i64: 147, 32>}, {transform_indices = @transform_2, window_bounds = array<i64: 512, 32>}]} {
    %c0_i32 = arith.constant 0 : i32
    %0 = arith.cmpi eq, %arg2, %c0_i32 : i32
    %1 = arith.extui %0 : i1 to i32
    %c0_i32_0 = arith.constant 0 : i32
    %2 = arith.cmpi ne, %1, %c0_i32_0 : i32
    scf.if %2 {
      %cst_10 = arith.constant 0.000000e+00 : f32
      %12 = vector.broadcast %cst_10 : f32 to vector<512x32xf32>
      %c0_11 = arith.constant 0 : index
      %c0_12 = arith.constant 0 : index
      %13 = vector.load %arg6[%c0_11, %c0_12] : memref<512x32xf32, #tpu.memory_space<vmem>>, vector<512x32xf32>
      tpu.vector_store %arg6[%c0_11, %c0_12], %12 {strides = array<i32>} : memref<512x32xf32, #tpu.memory_space<vmem>>, vector<512x32xf32>,
    } else {
    }
    %c0 = arith.constant 0 : index
    %c0_1 = arith.constant 0 : index
    %3 = vector.load %arg6[%c0, %c0_1] : memref<512x32xf32, #tpu.memory_space<vmem>>, vector<512x32xf32>
    %c0_2 = arith.constant 0 : index
    %c0_3 = arith.constant 0 : index
    %4 = vector.load %arg3[%c0_2, %c0_3] : memref<512x147xbf16, #tpu.memory_space<vmem>>, vector<512x147xbf16>
    %c0_4 = arith.constant 0 : index
    %c0_5 = arith.constant 0 : index
    %5 = vector.load %arg4[%c0_4, %c0_5] : memref<147x32xbf16, #tpu.memory_space<vmem>>, vector<147x32xbf16>
    %cst = arith.constant dense<0.000000e+00> : vector<512x32xf32>
    %6 = tpu.matmul %4, %5, %cst {dimension_numbers = #tpu.dot_dimension_numbers<[1], [0], [0], [1], [0, 0, 1, 1], [], []>} : vector<512x147xbf16>, vector<147x32xbf16>, vector<512x32xf32> -> vector<512x32xf32>
    %7 = arith.addf %3, %6 : vector<512x32xf32>
    %c0_6 = arith.constant 0 : index
    %c0_7 = arith.constant 0 : index
    %8 = vector.load %arg6[%c0_6, %c0_7] : memref<512x32xf32, #tpu.memory_space<vmem>>, vector<512x32xf32>
    tpu.vector_store %arg6[%c0_6, %c0_7], %7 {strides = array<i32>} : memref<512x32xf32, #tpu.memory_space<vmem>>, vector<512x32xf32>,
    %c0_i32_8 = arith.constant 0 : i32
    %9 = arith.cmpi eq, %arg2, %c0_i32_8 : i32
    %10 = arith.extui %9 : i1 to i32
    %c0_i32_9 = arith.constant 0 : i32
    %11 = arith.cmpi ne, %10, %c0_i32_9 : i32
    scf.if %11 {
      %c0_10 = arith.constant 0 : index
      %c0_11 = arith.constant 0 : index
      %12 = vector.load %arg6[%c0_10, %c0_11] : memref<512x32xf32, #tpu.memory_space<vmem>>, vector<512x32xf32>
      %13 = arith.truncf %12 : vector<512x32xf32> to vector<512x32xbf16>
      %c0_12 = arith.constant 0 : index
      %c0_13 = arith.constant 0 : index
      %14 = vector.load %arg5[%c0_12, %c0_13] : memref<512x32xbf16, #tpu.memory_space<vmem>>, vector<512x32xbf16>
      tpu.vector_store %arg5[%c0_12, %c0_13], %13 {strides = array<i32>} : memref<512x32xbf16, #tpu.memory_space<vmem>>, vector<512x32xbf16>,
    } else {
    }
    return
  }
  func.func @transform_0(%arg0: i32, %arg1: i32, %arg2: i32) -> (i32, i32) {
    %c0_i32 = arith.constant 0 : i32
    return %arg0, %arg2 : i32, i32
  }
  func.func @transform_1(%arg0: i32, %arg1: i32, %arg2: i32) -> (i32, i32) {
    %c0_i32 = arith.constant 0 : i32
    return %arg2, %arg1 : i32, i32
  }
  func.func @transform_2(%arg0: i32, %arg1: i32, %arg2: i32) -> (i32, i32) {
    %c0_i32 = arith.constant 0 : i32
    return %arg0, %arg1 : i32, i32
  }
}

module attributes {stable_mosaic.version = 11 : i64} {
  func.func @_gn_relu_perchannel_kernel(%arg0: i32, %arg1: i32, %arg2: memref<1x256x32xbf16, #tpu.memory_space<vmem>>, %arg3: memref<1x32xf32, #tpu.memory_space<vmem>>, %arg4: memref<1x32xf32, #tpu.memory_space<vmem>>, %arg5: memref<1x256x32xbf16, #tpu.memory_space<vmem>>) attributes {dimension_semantics = [#tpu.dimension_semantics<parallel>, #tpu.dimension_semantics<parallel>], iteration_bounds = array<i64: 2, 1>, scalar_prefetch = 0 : i64, scratch_operands = 0 : i64, tpu.core_type = #tpu.core_type<tc>, window_params = [{transform_indices = @transform_0, window_bounds = array<i64: 1, 256, 32>}, {transform_indices = @transform_1, window_bounds = array<i64: 1, 32>}, {transform_indices = @transform_2, window_bounds = array<i64: 1, 32>}, {transform_indices = @transform_3, window_bounds = array<i64: 1, 256, 32>}]} {
    %c0 = arith.constant 0 : index
    %c0_0 = arith.constant 0 : index
    %c0_1 = arith.constant 0 : index
    %0 = vector.load %arg2[%c0, %c0_0, %c0_1] : memref<1x256x32xbf16, #tpu.memory_space<vmem>>, vector<1x256x32xbf16>
    %1 = vector.shape_cast %0 : vector<1x256x32xbf16> to vector<256x32xbf16>
    %2 = arith.extf %1 : vector<256x32xbf16> to vector<256x32xf32>
    %cst = arith.constant dense<0.000000e+00> : vector<32xf32>
    %3 = vector.multi_reduction <add>, %2, %cst [0] : vector<256x32xf32> to vector<32xf32>
    %4 = vector.shape_cast %3 : vector<32xf32> to vector<1x32xf32>
    %cst_2 = arith.constant 3.906250e-03 : f32
    %5 = vector.broadcast %cst_2 : f32 to vector<1x32xf32>
    %6 = arith.mulf %4, %5 : vector<1x32xf32>
    %7 = vector.broadcast %6 : vector<1x32xf32> to vector<256x32xf32>
    %8 = arith.subf %2, %7 : vector<256x32xf32>
    %9 = arith.mulf %8, %8 : vector<256x32xf32>
    %cst_3 = arith.constant dense<0.000000e+00> : vector<32xf32>
    %10 = vector.multi_reduction <add>, %9, %cst_3 [0] : vector<256x32xf32> to vector<32xf32>
    %11 = vector.shape_cast %10 : vector<32xf32> to vector<1x32xf32>
    %cst_4 = arith.constant 3.906250e-03 : f32
    %12 = vector.broadcast %cst_4 : f32 to vector<1x32xf32>
    %13 = arith.mulf %11, %12 : vector<1x32xf32>
    %cst_5 = arith.constant 9.99999974E-6 : f32
    %14 = vector.broadcast %cst_5 : f32 to vector<1x32xf32>
    %15 = arith.addf %13, %14 : vector<1x32xf32>
    %16 = math.rsqrt %15 : vector<1x32xf32>
    %c0_6 = arith.constant 0 : index
    %c0_7 = arith.constant 0 : index
    %17 = vector.load %arg3[%c0_6, %c0_7] : memref<1x32xf32, #tpu.memory_space<vmem>>, vector<1x32xf32>
    %18 = arith.mulf %16, %17 : vector<1x32xf32>
    %19 = vector.broadcast %18 : vector<1x32xf32> to vector<256x32xf32>
    %20 = arith.mulf %8, %19 : vector<256x32xf32>
    %c0_8 = arith.constant 0 : index
    %c0_9 = arith.constant 0 : index
    %21 = vector.load %arg4[%c0_8, %c0_9] : memref<1x32xf32, #tpu.memory_space<vmem>>, vector<1x32xf32>
    %22 = vector.broadcast %21 : vector<1x32xf32> to vector<256x32xf32>
    %23 = arith.addf %20, %22 : vector<256x32xf32>
    %cst_10 = arith.constant 0.000000e+00 : f32
    %24 = vector.broadcast %cst_10 : f32 to vector<256x32xf32>
    %25 = arith.maximumf %23, %24 : vector<256x32xf32>
    %26 = arith.truncf %25 : vector<256x32xf32> to vector<256x32xbf16>
    %c0_11 = arith.constant 0 : index
    %c0_12 = arith.constant 0 : index
    %c0_13 = arith.constant 0 : index
    %27 = vector.load %arg5[%c0_11, %c0_12, %c0_13] : memref<1x256x32xbf16, #tpu.memory_space<vmem>>, vector<1x256x32xbf16>
    %28 = vector.shape_cast %27 : vector<1x256x32xbf16> to vector<256x32xbf16>
    %29 = vector.shape_cast %26 : vector<256x32xbf16> to vector<1x256x32xbf16>
    tpu.vector_store %arg5[%c0_11, %c0_12, %c0_13], %29 {strides = array<i32>} : memref<1x256x32xbf16, #tpu.memory_space<vmem>>, vector<1x256x32xbf16>,
    return
  }
  func.func @transform_0(%arg0: i32, %arg1: i32) -> (i32, i32, i32) {
    %c0_i32 = arith.constant 0 : i32
    %c0_i32_0 = arith.constant 0 : i32
    return %arg0, %c0_i32, %arg1 : i32, i32, i32
  }
  func.func @transform_1(%arg0: i32, %arg1: i32) -> (i32, i32) {
    %c0_i32 = arith.constant 0 : i32
    %c0_i32_0 = arith.constant 0 : i32
    return %c0_i32, %arg1 : i32, i32
  }
  func.func @transform_2(%arg0: i32, %arg1: i32) -> (i32, i32) {
    %c0_i32 = arith.constant 0 : i32
    %c0_i32_0 = arith.constant 0 : i32
    return %c0_i32, %arg1 : i32, i32
  }
  func.func @transform_3(%arg0: i32, %arg1: i32) -> (i32, i32, i32) {
    %c0_i32 = arith.constant 0 : i32
    %c0_i32_0 = arith.constant 0 : i32
    return %arg0, %c0_i32, %arg1 : i32, i32, i32
  }
}

module attributes {stable_mosaic.version = 11 : i64} {
  func.func @_gn_relu_perchannel_kernel(%arg0: i32, %arg1: i32, %arg2: memref<1x64x32xbf16, #tpu.memory_space<vmem>>, %arg3: memref<1x32xf32, #tpu.memory_space<vmem>>, %arg4: memref<1x32xf32, #tpu.memory_space<vmem>>, %arg5: memref<1x64x32xbf16, #tpu.memory_space<vmem>>) attributes {dimension_semantics = [#tpu.dimension_semantics<parallel>, #tpu.dimension_semantics<parallel>], iteration_bounds = array<i64: 2, 1>, scalar_prefetch = 0 : i64, scratch_operands = 0 : i64, tpu.core_type = #tpu.core_type<tc>, window_params = [{transform_indices = @transform_0, window_bounds = array<i64: 1, 64, 32>}, {transform_indices = @transform_1, window_bounds = array<i64: 1, 32>}, {transform_indices = @transform_2, window_bounds = array<i64: 1, 32>}, {transform_indices = @transform_3, window_bounds = array<i64: 1, 64, 32>}]} {
    %c0 = arith.constant 0 : index
    %c0_0 = arith.constant 0 : index
    %c0_1 = arith.constant 0 : index
    %0 = vector.load %arg2[%c0, %c0_0, %c0_1] : memref<1x64x32xbf16, #tpu.memory_space<vmem>>, vector<1x64x32xbf16>
    %1 = vector.shape_cast %0 : vector<1x64x32xbf16> to vector<64x32xbf16>
    %2 = arith.extf %1 : vector<64x32xbf16> to vector<64x32xf32>
    %cst = arith.constant dense<0.000000e+00> : vector<32xf32>
    %3 = vector.multi_reduction <add>, %2, %cst [0] : vector<64x32xf32> to vector<32xf32>
    %4 = vector.shape_cast %3 : vector<32xf32> to vector<1x32xf32>
    %cst_2 = arith.constant 1.562500e-02 : f32
    %5 = vector.broadcast %cst_2 : f32 to vector<1x32xf32>
    %6 = arith.mulf %4, %5 : vector<1x32xf32>
    %7 = vector.broadcast %6 : vector<1x32xf32> to vector<64x32xf32>
    %8 = arith.subf %2, %7 : vector<64x32xf32>
    %9 = arith.mulf %8, %8 : vector<64x32xf32>
    %cst_3 = arith.constant dense<0.000000e+00> : vector<32xf32>
    %10 = vector.multi_reduction <add>, %9, %cst_3 [0] : vector<64x32xf32> to vector<32xf32>
    %11 = vector.shape_cast %10 : vector<32xf32> to vector<1x32xf32>
    %cst_4 = arith.constant 1.562500e-02 : f32
    %12 = vector.broadcast %cst_4 : f32 to vector<1x32xf32>
    %13 = arith.mulf %11, %12 : vector<1x32xf32>
    %cst_5 = arith.constant 9.99999974E-6 : f32
    %14 = vector.broadcast %cst_5 : f32 to vector<1x32xf32>
    %15 = arith.addf %13, %14 : vector<1x32xf32>
    %16 = math.rsqrt %15 : vector<1x32xf32>
    %c0_6 = arith.constant 0 : index
    %c0_7 = arith.constant 0 : index
    %17 = vector.load %arg3[%c0_6, %c0_7] : memref<1x32xf32, #tpu.memory_space<vmem>>, vector<1x32xf32>
    %18 = arith.mulf %16, %17 : vector<1x32xf32>
    %19 = vector.broadcast %18 : vector<1x32xf32> to vector<64x32xf32>
    %20 = arith.mulf %8, %19 : vector<64x32xf32>
    %c0_8 = arith.constant 0 : index
    %c0_9 = arith.constant 0 : index
    %21 = vector.load %arg4[%c0_8, %c0_9] : memref<1x32xf32, #tpu.memory_space<vmem>>, vector<1x32xf32>
    %22 = vector.broadcast %21 : vector<1x32xf32> to vector<64x32xf32>
    %23 = arith.addf %20, %22 : vector<64x32xf32>
    %cst_10 = arith.constant 0.000000e+00 : f32
    %24 = vector.broadcast %cst_10 : f32 to vector<64x32xf32>
    %25 = arith.maximumf %23, %24 : vector<64x32xf32>
    %26 = arith.truncf %25 : vector<64x32xf32> to vector<64x32xbf16>
    %c0_11 = arith.constant 0 : index
    %c0_12 = arith.constant 0 : index
    %c0_13 = arith.constant 0 : index
    %27 = vector.load %arg5[%c0_11, %c0_12, %c0_13] : memref<1x64x32xbf16, #tpu.memory_space<vmem>>, vector<1x64x32xbf16>
    %28 = vector.shape_cast %27 : vector<1x64x32xbf16> to vector<64x32xbf16>
    %29 = vector.shape_cast %26 : vector<64x32xbf16> to vector<1x64x32xbf16>
    tpu.vector_store %arg5[%c0_11, %c0_12, %c0_13], %29 {strides = array<i32>} : memref<1x64x32xbf16, #tpu.memory_space<vmem>>, vector<1x64x32xbf16>,
    return
  }
  func.func @transform_0(%arg0: i32, %arg1: i32) -> (i32, i32, i32) {
    %c0_i32 = arith.constant 0 : i32
    %c0_i32_0 = arith.constant 0 : i32
    return %arg0, %c0_i32, %arg1 : i32, i32, i32
  }
  func.func @transform_1(%arg0: i32, %arg1: i32) -> (i32, i32) {
    %c0_i32 = arith.constant 0 : i32
    %c0_i32_0 = arith.constant 0 : i32
    return %c0_i32, %arg1 : i32, i32
  }
  func.func @transform_2(%arg0: i32, %arg1: i32) -> (i32, i32) {
    %c0_i32 = arith.constant 0 : i32
    %c0_i32_0 = arith.constant 0 : i32
    return %c0_i32, %arg1 : i32, i32
  }
  func.func @transform_3(%arg0: i32, %arg1: i32) -> (i32, i32, i32) {
    %c0_i32 = arith.constant 0 : i32
    %c0_i32_0 = arith.constant 0 : i32
    return %arg0, %c0_i32, %arg1 : i32, i32, i32
  }
}

module attributes {stable_mosaic.version = 11 : i64} {
  func.func @_matmul_kernel(%arg0: i32, %arg1: i32, %arg2: i32, %arg3: memref<128x32xbf16, #tpu.memory_space<vmem>>, %arg4: memref<32x32xbf16, #tpu.memory_space<vmem>>, %arg5: memref<128x32xbf16, #tpu.memory_space<vmem>>, %arg6: memref<128x32xf32, #tpu.memory_space<vmem>>) attributes {dimension_semantics = [#tpu.dimension_semantics<parallel>, #tpu.dimension_semantics<parallel>, #tpu.dimension_semantics<arbitrary>], iteration_bounds = array<i64: 1, 1, 1>, scalar_prefetch = 0 : i64, scratch_operands = 1 : i64, tpu.core_type = #tpu.core_type<tc>, window_params = [{transform_indices = @transform_0, window_bounds = array<i64: 128, 32>}, {transform_indices = @transform_1, window_bounds = array<i64: 32, 32>}, {transform_indices = @transform_2, window_bounds = array<i64: 128, 32>}]} {
    %c0_i32 = arith.constant 0 : i32
    %0 = arith.cmpi eq, %arg2, %c0_i32 : i32
    %1 = arith.extui %0 : i1 to i32
    %c0_i32_0 = arith.constant 0 : i32
    %2 = arith.cmpi ne, %1, %c0_i32_0 : i32
    scf.if %2 {
      %cst_10 = arith.constant 0.000000e+00 : f32
      %12 = vector.broadcast %cst_10 : f32 to vector<128x32xf32>
      %c0_11 = arith.constant 0 : index
      %c0_12 = arith.constant 0 : index
      %13 = vector.load %arg6[%c0_11, %c0_12] : memref<128x32xf32, #tpu.memory_space<vmem>>, vector<128x32xf32>
      tpu.vector_store %arg6[%c0_11, %c0_12], %12 {strides = array<i32>} : memref<128x32xf32, #tpu.memory_space<vmem>>, vector<128x32xf32>,
    } else {
    }
    %c0 = arith.constant 0 : index
    %c0_1 = arith.constant 0 : index
    %3 = vector.load %arg6[%c0, %c0_1] : memref<128x32xf32, #tpu.memory_space<vmem>>, vector<128x32xf32>
    %c0_2 = arith.constant 0 : index
    %c0_3 = arith.constant 0 : index
    %4 = vector.load %arg3[%c0_2, %c0_3] : memref<128x32xbf16, #tpu.memory_space<vmem>>, vector<128x32xbf16>
    %c0_4 = arith.constant 0 : index
    %c0_5 = arith.constant 0 : index
    %5 = vector.load %arg4[%c0_4, %c0_5] : memref<32x32xbf16, #tpu.memory_space<vmem>>, vector<32x32xbf16>
    %cst = arith.constant dense<0.000000e+00> : vector<128x32xf32>
    %6 = tpu.matmul %4, %5, %cst {dimension_numbers = #tpu.dot_dimension_numbers<[1], [0], [0], [1], [0, 0, 1, 1], [], []>} : vector<128x32xbf16>, vector<32x32xbf16>, vector<128x32xf32> -> vector<128x32xf32>
    %7 = arith.addf %3, %6 : vector<128x32xf32>
    %c0_6 = arith.constant 0 : index
    %c0_7 = arith.constant 0 : index
    %8 = vector.load %arg6[%c0_6, %c0_7] : memref<128x32xf32, #tpu.memory_space<vmem>>, vector<128x32xf32>
    tpu.vector_store %arg6[%c0_6, %c0_7], %7 {strides = array<i32>} : memref<128x32xf32, #tpu.memory_space<vmem>>, vector<128x32xf32>,
    %c0_i32_8 = arith.constant 0 : i32
    %9 = arith.cmpi eq, %arg2, %c0_i32_8 : i32
    %10 = arith.extui %9 : i1 to i32
    %c0_i32_9 = arith.constant 0 : i32
    %11 = arith.cmpi ne, %10, %c0_i32_9 : i32
    scf.if %11 {
      %c0_10 = arith.constant 0 : index
      %c0_11 = arith.constant 0 : index
      %12 = vector.load %arg6[%c0_10, %c0_11] : memref<128x32xf32, #tpu.memory_space<vmem>>, vector<128x32xf32>
      %13 = arith.truncf %12 : vector<128x32xf32> to vector<128x32xbf16>
      %c0_12 = arith.constant 0 : index
      %c0_13 = arith.constant 0 : index
      %14 = vector.load %arg5[%c0_12, %c0_13] : memref<128x32xbf16, #tpu.memory_space<vmem>>, vector<128x32xbf16>
      tpu.vector_store %arg5[%c0_12, %c0_13], %13 {strides = array<i32>} : memref<128x32xbf16, #tpu.memory_space<vmem>>, vector<128x32xbf16>,
    } else {
    }
    return
  }
  func.func @transform_0(%arg0: i32, %arg1: i32, %arg2: i32) -> (i32, i32) {
    %c0_i32 = arith.constant 0 : i32
    return %arg0, %arg2 : i32, i32
  }
  func.func @transform_1(%arg0: i32, %arg1: i32, %arg2: i32) -> (i32, i32) {
    %c0_i32 = arith.constant 0 : i32
    return %arg2, %arg1 : i32, i32
  }
  func.func @transform_2(%arg0: i32, %arg1: i32, %arg2: i32) -> (i32, i32) {
    %c0_i32 = arith.constant 0 : i32
    return %arg0, %arg1 : i32, i32
  }
}

module attributes {stable_mosaic.version = 11 : i64} {
  func.func @_conv3x3_kernel(%arg0: i32, %arg1: memref<1x110x32xbf16, #tpu.memory_space<vmem>>, %arg2: memref<9x32x16xbf16, #tpu.memory_space<vmem>>, %arg3: memref<1x80x16xbf16, #tpu.memory_space<vmem>>) attributes {dimension_semantics = [#tpu.dimension_semantics<parallel>], iteration_bounds = array<i64: 2>, scalar_prefetch = 0 : i64, scratch_operands = 0 : i64, tpu.core_type = #tpu.core_type<tc>, window_params = [{transform_indices = @transform_0, window_bounds = array<i64: 1, 110, 32>}, {pipeline_mode = #tpu.pipeline_mode<synchronous>, transform_indices = @transform_1, window_bounds = array<i64: 9, 32, 16>}, {transform_indices = @transform_2, window_bounds = array<i64: 1, 80, 16>}]} {
    %cst = arith.constant 0.000000e+00 : f32
    %0 = vector.broadcast %cst : f32 to vector<80x16xf32>
    %c0 = arith.constant 0 : index
    %c0_0 = arith.constant 0 : index
    %c0_1 = arith.constant 0 : index
    %1 = vector.load %arg1[%c0, %c0_0, %c0_1] : memref<1x110x32xbf16, #tpu.memory_space<vmem>>, vector<1x80x32xbf16>
    %2 = vector.shape_cast %1 : vector<1x80x32xbf16> to vector<80x32xbf16>
    %c0_2 = arith.constant 0 : index
    %c0_3 = arith.constant 0 : index
    %c0_4 = arith.constant 0 : index
    %3 = vector.load %arg2[%c0_2, %c0_3, %c0_4] : memref<9x32x16xbf16, #tpu.memory_space<vmem>>, vector<1x32x16xbf16>
    %4 = vector.shape_cast %3 : vector<1x32x16xbf16> to vector<32x16xbf16>
    %cst_5 = arith.constant dense<0.000000e+00> : vector<80x16xf32>
    %5 = tpu.matmul %2, %4, %cst_5 {dimension_numbers = #tpu.dot_dimension_numbers<[1], [0], [0], [1], [0, 0, 1, 1], [], []>} : vector<80x32xbf16>, vector<32x16xbf16>, vector<80x16xf32> -> vector<80x16xf32>
    %6 = arith.addf %0, %5 : vector<80x16xf32>
    %c0_6 = arith.constant 0 : index
    %c1 = arith.constant 1 : index
    %c0_7 = arith.constant 0 : index
    %7 = vector.load %arg1[%c0_6, %c1, %c0_7] : memref<1x110x32xbf16, #tpu.memory_space<vmem>>, vector<1x80x32xbf16>
    %8 = vector.shape_cast %7 : vector<1x80x32xbf16> to vector<80x32xbf16>
    %c1_8 = arith.constant 1 : index
    %c0_9 = arith.constant 0 : index
    %c0_10 = arith.constant 0 : index
    %9 = vector.load %arg2[%c1_8, %c0_9, %c0_10] : memref<9x32x16xbf16, #tpu.memory_space<vmem>>, vector<1x32x16xbf16>
    %10 = vector.shape_cast %9 : vector<1x32x16xbf16> to vector<32x16xbf16>
    %cst_11 = arith.constant dense<0.000000e+00> : vector<80x16xf32>
    %11 = tpu.matmul %8, %10, %cst_11 {dimension_numbers = #tpu.dot_dimension_numbers<[1], [0], [0], [1], [0, 0, 1, 1], [], []>} : vector<80x32xbf16>, vector<32x16xbf16>, vector<80x16xf32> -> vector<80x16xf32>
    %12 = arith.addf %6, %11 : vector<80x16xf32>
    %c0_12 = arith.constant 0 : index
    %c2 = arith.constant 2 : index
    %c0_13 = arith.constant 0 : index
    %13 = vector.load %arg1[%c0_12, %c2, %c0_13] : memref<1x110x32xbf16, #tpu.memory_space<vmem>>, vector<1x80x32xbf16>
    %14 = vector.shape_cast %13 : vector<1x80x32xbf16> to vector<80x32xbf16>
    %c2_14 = arith.constant 2 : index
    %c0_15 = arith.constant 0 : index
    %c0_16 = arith.constant 0 : index
    %15 = vector.load %arg2[%c2_14, %c0_15, %c0_16] : memref<9x32x16xbf16, #tpu.memory_space<vmem>>, vector<1x32x16xbf16>
    %16 = vector.shape_cast %15 : vector<1x32x16xbf16> to vector<32x16xbf16>
    %cst_17 = arith.constant dense<0.000000e+00> : vector<80x16xf32>
    %17 = tpu.matmul %14, %16, %cst_17 {dimension_numbers = #tpu.dot_dimension_numbers<[1], [0], [0], [1], [0, 0, 1, 1], [], []>} : vector<80x32xbf16>, vector<32x16xbf16>, vector<80x16xf32> -> vector<80x16xf32>
    %18 = arith.addf %12, %17 : vector<80x16xf32>
    %c0_18 = arith.constant 0 : index
    %c10 = arith.constant 10 : index
    %c0_19 = arith.constant 0 : index
    %19 = vector.load %arg1[%c0_18, %c10, %c0_19] : memref<1x110x32xbf16, #tpu.memory_space<vmem>>, vector<1x80x32xbf16>
    %20 = vector.shape_cast %19 : vector<1x80x32xbf16> to vector<80x32xbf16>
    %c3 = arith.constant 3 : index
    %c0_20 = arith.constant 0 : index
    %c0_21 = arith.constant 0 : index
    %21 = vector.load %arg2[%c3, %c0_20, %c0_21] : memref<9x32x16xbf16, #tpu.memory_space<vmem>>, vector<1x32x16xbf16>
    %22 = vector.shape_cast %21 : vector<1x32x16xbf16> to vector<32x16xbf16>
    %cst_22 = arith.constant dense<0.000000e+00> : vector<80x16xf32>
    %23 = tpu.matmul %20, %22, %cst_22 {dimension_numbers = #tpu.dot_dimension_numbers<[1], [0], [0], [1], [0, 0, 1, 1], [], []>} : vector<80x32xbf16>, vector<32x16xbf16>, vector<80x16xf32> -> vector<80x16xf32>
    %24 = arith.addf %18, %23 : vector<80x16xf32>
    %c0_23 = arith.constant 0 : index
    %c11 = arith.constant 11 : index
    %c0_24 = arith.constant 0 : index
    %25 = vector.load %arg1[%c0_23, %c11, %c0_24] : memref<1x110x32xbf16, #tpu.memory_space<vmem>>, vector<1x80x32xbf16>
    %26 = vector.shape_cast %25 : vector<1x80x32xbf16> to vector<80x32xbf16>
    %c4 = arith.constant 4 : index
    %c0_25 = arith.constant 0 : index
    %c0_26 = arith.constant 0 : index
    %27 = vector.load %arg2[%c4, %c0_25, %c0_26] : memref<9x32x16xbf16, #tpu.memory_space<vmem>>, vector<1x32x16xbf16>
    %28 = vector.shape_cast %27 : vector<1x32x16xbf16> to vector<32x16xbf16>
    %cst_27 = arith.constant dense<0.000000e+00> : vector<80x16xf32>
    %29 = tpu.matmul %26, %28, %cst_27 {dimension_numbers = #tpu.dot_dimension_numbers<[1], [0], [0], [1], [0, 0, 1, 1], [], []>} : vector<80x32xbf16>, vector<32x16xbf16>, vector<80x16xf32> -> vector<80x16xf32>
    %30 = arith.addf %24, %29 : vector<80x16xf32>
    %c0_28 = arith.constant 0 : index
    %c12 = arith.constant 12 : index
    %c0_29 = arith.constant 0 : index
    %31 = vector.load %arg1[%c0_28, %c12, %c0_29] : memref<1x110x32xbf16, #tpu.memory_space<vmem>>, vector<1x80x32xbf16>
    %32 = vector.shape_cast %31 : vector<1x80x32xbf16> to vector<80x32xbf16>
    %c5 = arith.constant 5 : index
    %c0_30 = arith.constant 0 : index
    %c0_31 = arith.constant 0 : index
    %33 = vector.load %arg2[%c5, %c0_30, %c0_31] : memref<9x32x16xbf16, #tpu.memory_space<vmem>>, vector<1x32x16xbf16>
    %34 = vector.shape_cast %33 : vector<1x32x16xbf16> to vector<32x16xbf16>
    %cst_32 = arith.constant dense<0.000000e+00> : vector<80x16xf32>
    %35 = tpu.matmul %32, %34, %cst_32 {dimension_numbers = #tpu.dot_dimension_numbers<[1], [0], [0], [1], [0, 0, 1, 1], [], []>} : vector<80x32xbf16>, vector<32x16xbf16>, vector<80x16xf32> -> vector<80x16xf32>
    %36 = arith.addf %30, %35 : vector<80x16xf32>
    %c0_33 = arith.constant 0 : index
    %c20 = arith.constant 20 : index
    %c0_34 = arith.constant 0 : index
    %37 = vector.load %arg1[%c0_33, %c20, %c0_34] : memref<1x110x32xbf16, #tpu.memory_space<vmem>>, vector<1x80x32xbf16>
    %38 = vector.shape_cast %37 : vector<1x80x32xbf16> to vector<80x32xbf16>
    %c6 = arith.constant 6 : index
    %c0_35 = arith.constant 0 : index
    %c0_36 = arith.constant 0 : index
    %39 = vector.load %arg2[%c6, %c0_35, %c0_36] : memref<9x32x16xbf16, #tpu.memory_space<vmem>>, vector<1x32x16xbf16>
    %40 = vector.shape_cast %39 : vector<1x32x16xbf16> to vector<32x16xbf16>
    %cst_37 = arith.constant dense<0.000000e+00> : vector<80x16xf32>
    %41 = tpu.matmul %38, %40, %cst_37 {dimension_numbers = #tpu.dot_dimension_numbers<[1], [0], [0], [1], [0, 0, 1, 1], [], []>} : vector<80x32xbf16>, vector<32x16xbf16>, vector<80x16xf32> -> vector<80x16xf32>
    %42 = arith.addf %36, %41 : vector<80x16xf32>
    %c0_38 = arith.constant 0 : index
    %c21 = arith.constant 21 : index
    %c0_39 = arith.constant 0 : index
    %43 = vector.load %arg1[%c0_38, %c21, %c0_39] : memref<1x110x32xbf16, #tpu.memory_space<vmem>>, vector<1x80x32xbf16>
    %44 = vector.shape_cast %43 : vector<1x80x32xbf16> to vector<80x32xbf16>
    %c7 = arith.constant 7 : index
    %c0_40 = arith.constant 0 : index
    %c0_41 = arith.constant 0 : index
    %45 = vector.load %arg2[%c7, %c0_40, %c0_41] : memref<9x32x16xbf16, #tpu.memory_space<vmem>>, vector<1x32x16xbf16>
    %46 = vector.shape_cast %45 : vector<1x32x16xbf16> to vector<32x16xbf16>
    %cst_42 = arith.constant dense<0.000000e+00> : vector<80x16xf32>
    %47 = tpu.matmul %44, %46, %cst_42 {dimension_numbers = #tpu.dot_dimension_numbers<[1], [0], [0], [1], [0, 0, 1, 1], [], []>} : vector<80x32xbf16>, vector<32x16xbf16>, vector<80x16xf32> -> vector<80x16xf32>
    %48 = arith.addf %42, %47 : vector<80x16xf32>
    %c0_43 = arith.constant 0 : index
    %c22 = arith.constant 22 : index
    %c0_44 = arith.constant 0 : index
    %49 = vector.load %arg1[%c0_43, %c22, %c0_44] : memref<1x110x32xbf16, #tpu.memory_space<vmem>>, vector<1x80x32xbf16>
    %50 = vector.shape_cast %49 : vector<1x80x32xbf16> to vector<80x32xbf16>
    %c8 = arith.constant 8 : index
    %c0_45 = arith.constant 0 : index
    %c0_46 = arith.constant 0 : index
    %51 = vector.load %arg2[%c8, %c0_45, %c0_46] : memref<9x32x16xbf16, #tpu.memory_space<vmem>>, vector<1x32x16xbf16>
    %52 = vector.shape_cast %51 : vector<1x32x16xbf16> to vector<32x16xbf16>
    %cst_47 = arith.constant dense<0.000000e+00> : vector<80x16xf32>
    %53 = tpu.matmul %50, %52, %cst_47 {dimension_numbers = #tpu.dot_dimension_numbers<[1], [0], [0], [1], [0, 0, 1, 1], [], []>} : vector<80x32xbf16>, vector<32x16xbf16>, vector<80x16xf32> -> vector<80x16xf32>
    %54 = arith.addf %48, %53 : vector<80x16xf32>
    %55 = arith.truncf %54 : vector<80x16xf32> to vector<80x16xbf16>
    %c0_48 = arith.constant 0 : index
    %c0_49 = arith.constant 0 : index
    %c0_50 = arith.constant 0 : index
    %56 = vector.load %arg3[%c0_48, %c0_49, %c0_50] : memref<1x80x16xbf16, #tpu.memory_space<vmem>>, vector<1x80x16xbf16>
    %57 = vector.shape_cast %56 : vector<1x80x16xbf16> to vector<80x16xbf16>
    %58 = vector.shape_cast %55 : vector<80x16xbf16> to vector<1x80x16xbf16>
    tpu.vector_store %arg3[%c0_48, %c0_49, %c0_50], %58 {strides = array<i32>} : memref<1x80x16xbf16, #tpu.memory_space<vmem>>, vector<1x80x16xbf16>,
    return
  }
  func.func @transform_0(%arg0: i32) -> (i32, i32, i32) {
    %c0_i32 = arith.constant 0 : i32
    %c0_i32_0 = arith.constant 0 : i32
    %c0_i32_1 = arith.constant 0 : i32
    return %arg0, %c0_i32, %c0_i32_0 : i32, i32, i32
  }
  func.func @transform_1(%arg0: i32) -> (i32, i32, i32) {
    %c0_i32 = arith.constant 0 : i32
    %c0_i32_0 = arith.constant 0 : i32
    %c0_i32_1 = arith.constant 0 : i32
    %c0_i32_2 = arith.constant 0 : i32
    return %c0_i32, %c0_i32_0, %c0_i32_1 : i32, i32, i32
  }
  func.func @transform_2(%arg0: i32) -> (i32, i32, i32) {
    %c0_i32 = arith.constant 0 : i32
    %c0_i32_0 = arith.constant 0 : i32
    %c0_i32_1 = arith.constant 0 : i32
    return %arg0, %c0_i32, %c0_i32_0 : i32, i32, i32
  }
}

module attributes {stable_mosaic.version = 11 : i64} {
  func.func @_gn_relu_perchannel_kernel(%arg0: i32, %arg1: i32, %arg2: memref<1x64x48xbf16, #tpu.memory_space<vmem>>, %arg3: memref<1x48xf32, #tpu.memory_space<vmem>>, %arg4: memref<1x48xf32, #tpu.memory_space<vmem>>, %arg5: memref<1x64x48xbf16, #tpu.memory_space<vmem>>) attributes {dimension_semantics = [#tpu.dimension_semantics<parallel>, #tpu.dimension_semantics<parallel>], iteration_bounds = array<i64: 2, 1>, scalar_prefetch = 0 : i64, scratch_operands = 0 : i64, tpu.core_type = #tpu.core_type<tc>, window_params = [{transform_indices = @transform_0, window_bounds = array<i64: 1, 64, 48>}, {transform_indices = @transform_1, window_bounds = array<i64: 1, 48>}, {transform_indices = @transform_2, window_bounds = array<i64: 1, 48>}, {transform_indices = @transform_3, window_bounds = array<i64: 1, 64, 48>}]} {
    %c0 = arith.constant 0 : index
    %c0_0 = arith.constant 0 : index
    %c0_1 = arith.constant 0 : index
    %0 = vector.load %arg2[%c0, %c0_0, %c0_1] : memref<1x64x48xbf16, #tpu.memory_space<vmem>>, vector<1x64x48xbf16>
    %1 = vector.shape_cast %0 : vector<1x64x48xbf16> to vector<64x48xbf16>
    %2 = arith.extf %1 : vector<64x48xbf16> to vector<64x48xf32>
    %cst = arith.constant dense<0.000000e+00> : vector<48xf32>
    %3 = vector.multi_reduction <add>, %2, %cst [0] : vector<64x48xf32> to vector<48xf32>
    %4 = vector.shape_cast %3 : vector<48xf32> to vector<1x48xf32>
    %cst_2 = arith.constant 1.562500e-02 : f32
    %5 = vector.broadcast %cst_2 : f32 to vector<1x48xf32>
    %6 = arith.mulf %4, %5 : vector<1x48xf32>
    %7 = vector.broadcast %6 : vector<1x48xf32> to vector<64x48xf32>
    %8 = arith.subf %2, %7 : vector<64x48xf32>
    %9 = arith.mulf %8, %8 : vector<64x48xf32>
    %cst_3 = arith.constant dense<0.000000e+00> : vector<48xf32>
    %10 = vector.multi_reduction <add>, %9, %cst_3 [0] : vector<64x48xf32> to vector<48xf32>
    %11 = vector.shape_cast %10 : vector<48xf32> to vector<1x48xf32>
    %cst_4 = arith.constant 1.562500e-02 : f32
    %12 = vector.broadcast %cst_4 : f32 to vector<1x48xf32>
    %13 = arith.mulf %11, %12 : vector<1x48xf32>
    %cst_5 = arith.constant 9.99999974E-6 : f32
    %14 = vector.broadcast %cst_5 : f32 to vector<1x48xf32>
    %15 = arith.addf %13, %14 : vector<1x48xf32>
    %16 = math.rsqrt %15 : vector<1x48xf32>
    %c0_6 = arith.constant 0 : index
    %c0_7 = arith.constant 0 : index
    %17 = vector.load %arg3[%c0_6, %c0_7] : memref<1x48xf32, #tpu.memory_space<vmem>>, vector<1x48xf32>
    %18 = arith.mulf %16, %17 : vector<1x48xf32>
    %19 = vector.broadcast %18 : vector<1x48xf32> to vector<64x48xf32>
    %20 = arith.mulf %8, %19 : vector<64x48xf32>
    %c0_8 = arith.constant 0 : index
    %c0_9 = arith.constant 0 : index
    %21 = vector.load %arg4[%c0_8, %c0_9] : memref<1x48xf32, #tpu.memory_space<vmem>>, vector<1x48xf32>
    %22 = vector.broadcast %21 : vector<1x48xf32> to vector<64x48xf32>
    %23 = arith.addf %20, %22 : vector<64x48xf32>
    %cst_10 = arith.constant 0.000000e+00 : f32
    %24 = vector.broadcast %cst_10 : f32 to vector<64x48xf32>
    %25 = arith.maximumf %23, %24 : vector<64x48xf32>
    %26 = arith.truncf %25 : vector<64x48xf32> to vector<64x48xbf16>
    %c0_11 = arith.constant 0 : index
    %c0_12 = arith.constant 0 : index
    %c0_13 = arith.constant 0 : index
    %27 = vector.load %arg5[%c0_11, %c0_12, %c0_13] : memref<1x64x48xbf16, #tpu.memory_space<vmem>>, vector<1x64x48xbf16>
    %28 = vector.shape_cast %27 : vector<1x64x48xbf16> to vector<64x48xbf16>
    %29 = vector.shape_cast %26 : vector<64x48xbf16> to vector<1x64x48xbf16>
    tpu.vector_store %arg5[%c0_11, %c0_12, %c0_13], %29 {strides = array<i32>} : memref<1x64x48xbf16, #tpu.memory_space<vmem>>, vector<1x64x48xbf16>,
    return
  }
  func.func @transform_0(%arg0: i32, %arg1: i32) -> (i32, i32, i32) {
    %c0_i32 = arith.constant 0 : i32
    %c0_i32_0 = arith.constant 0 : i32
    return %arg0, %c0_i32, %arg1 : i32, i32, i32
  }
  func.func @transform_1(%arg0: i32, %arg1: i32) -> (i32, i32) {
    %c0_i32 = arith.constant 0 : i32
    %c0_i32_0 = arith.constant 0 : i32
    return %c0_i32, %arg1 : i32, i32
  }
  func.func @transform_2(%arg0: i32, %arg1: i32) -> (i32, i32) {
    %c0_i32 = arith.constant 0 : i32
    %c0_i32_0 = arith.constant 0 : i32
    return %c0_i32, %arg1 : i32, i32
  }
  func.func @transform_3(%arg0: i32, %arg1: i32) -> (i32, i32, i32) {
    %c0_i32 = arith.constant 0 : i32
    %c0_i32_0 = arith.constant 0 : i32
    return %arg0, %c0_i32, %arg1 : i32, i32, i32
  }
}

module attributes {stable_mosaic.version = 11 : i64} {
  func.func @_gn_relu_group_kernel(%arg0: i32, %arg1: i32, %arg2: memref<1x64x64xbf16, #tpu.memory_space<vmem>>, %arg3: memref<1x64xf32, #tpu.memory_space<vmem>>, %arg4: memref<1x64xf32, #tpu.memory_space<vmem>>, %arg5: memref<64x32xf32, #tpu.memory_space<vmem>>, %arg6: memref<32x64xf32, #tpu.memory_space<vmem>>, %arg7: memref<1x64x64xbf16, #tpu.memory_space<vmem>>) attributes {dimension_semantics = [#tpu.dimension_semantics<parallel>, #tpu.dimension_semantics<parallel>], iteration_bounds = array<i64: 2, 1>, scalar_prefetch = 0 : i64, scratch_operands = 0 : i64, tpu.core_type = #tpu.core_type<tc>, window_params = [{transform_indices = @transform_0, window_bounds = array<i64: 1, 64, 64>}, {transform_indices = @transform_1, window_bounds = array<i64: 1, 64>}, {transform_indices = @transform_2, window_bounds = array<i64: 1, 64>}, {pipeline_mode = #tpu.pipeline_mode<synchronous>, transform_indices = @transform_3, window_bounds = array<i64: 64, 32>}, {pipeline_mode = #tpu.pipeline_mode<synchronous>, transform_indices = @transform_4, window_bounds = array<i64: 32, 64>}, {transform_indices = @transform_5, window_bounds = array<i64: 1, 64, 64>}]} {
    %c0 = arith.constant 0 : index
    %c0_0 = arith.constant 0 : index
    %c0_1 = arith.constant 0 : index
    %0 = vector.load %arg2[%c0, %c0_0, %c0_1] : memref<1x64x64xbf16, #tpu.memory_space<vmem>>, vector<1x64x64xbf16>
    %1 = vector.shape_cast %0 : vector<1x64x64xbf16> to vector<64x64xbf16>
    %2 = arith.extf %1 : vector<64x64xbf16> to vector<64x64xf32>
    %c0_2 = arith.constant 0 : index
    %c0_3 = arith.constant 0 : index
    %3 = vector.load %arg5[%c0_2, %c0_3] : memref<64x32xf32, #tpu.memory_space<vmem>>, vector<64x32xf32>
    %c0_4 = arith.constant 0 : index
    %c0_5 = arith.constant 0 : index
    %4 = vector.load %arg6[%c0_4, %c0_5] : memref<32x64xf32, #tpu.memory_space<vmem>>, vector<32x64xf32>
    %cst = arith.constant dense<0.000000e+00> : vector<64xf32>
    %5 = vector.multi_reduction <add>, %2, %cst [0] : vector<64x64xf32> to vector<64xf32>
    %6 = vector.shape_cast %5 : vector<64xf32> to vector<1x64xf32>
    %cst_6 = arith.constant dense<0.000000e+00> : vector<1x32xf32>
    %7 = tpu.matmul %6, %3, %cst_6 {dimension_numbers = #tpu.dot_dimension_numbers<[1], [0], [0], [1], [0, 0, 1, 1], [], []>} : vector<1x64xf32>, vector<64x32xf32>, vector<1x32xf32> -> vector<1x32xf32>
    %cst_7 = arith.constant 7.812500e-03 : f32
    %8 = vector.broadcast %cst_7 : f32 to vector<1x32xf32>
    %9 = arith.mulf %7, %8 : vector<1x32xf32>
    %cst_8 = arith.constant dense<0.000000e+00> : vector<1x64xf32>
    %10 = tpu.matmul %9, %4, %cst_8 {dimension_numbers = #tpu.dot_dimension_numbers<[1], [0], [0], [1], [0, 0, 1, 1], [], []>} : vector<1x32xf32>, vector<32x64xf32>, vector<1x64xf32> -> vector<1x64xf32>
    %11 = vector.broadcast %10 : vector<1x64xf32> to vector<64x64xf32>
    %12 = arith.subf %2, %11 : vector<64x64xf32>
    %13 = arith.mulf %12, %12 : vector<64x64xf32>
    %cst_9 = arith.constant dense<0.000000e+00> : vector<64xf32>
    %14 = vector.multi_reduction <add>, %13, %cst_9 [0] : vector<64x64xf32> to vector<64xf32>
    %15 = vector.shape_cast %14 : vector<64xf32> to vector<1x64xf32>
    %cst_10 = arith.constant dense<0.000000e+00> : vector<1x32xf32>
    %16 = tpu.matmul %15, %3, %cst_10 {dimension_numbers = #tpu.dot_dimension_numbers<[1], [0], [0], [1], [0, 0, 1, 1], [], []>} : vector<1x64xf32>, vector<64x32xf32>, vector<1x32xf32> -> vector<1x32xf32>
    %cst_11 = arith.constant 7.812500e-03 : f32
    %17 = vector.broadcast %cst_11 : f32 to vector<1x32xf32>
    %18 = arith.mulf %16, %17 : vector<1x32xf32>
    %cst_12 = arith.constant 9.99999974E-6 : f32
    %19 = vector.broadcast %cst_12 : f32 to vector<1x32xf32>
    %20 = arith.addf %18, %19 : vector<1x32xf32>
    %21 = math.rsqrt %20 : vector<1x32xf32>
    %cst_13 = arith.constant dense<0.000000e+00> : vector<1x64xf32>
    %22 = tpu.matmul %21, %4, %cst_13 {dimension_numbers = #tpu.dot_dimension_numbers<[1], [0], [0], [1], [0, 0, 1, 1], [], []>} : vector<1x32xf32>, vector<32x64xf32>, vector<1x64xf32> -> vector<1x64xf32>
    %c0_14 = arith.constant 0 : index
    %c0_15 = arith.constant 0 : index
    %23 = vector.load %arg3[%c0_14, %c0_15] : memref<1x64xf32, #tpu.memory_space<vmem>>, vector<1x64xf32>
    %24 = arith.mulf %22, %23 : vector<1x64xf32>
    %25 = vector.broadcast %24 : vector<1x64xf32> to vector<64x64xf32>
    %26 = arith.mulf %12, %25 : vector<64x64xf32>
    %c0_16 = arith.constant 0 : index
    %c0_17 = arith.constant 0 : index
    %27 = vector.load %arg4[%c0_16, %c0_17] : memref<1x64xf32, #tpu.memory_space<vmem>>, vector<1x64xf32>
    %28 = vector.broadcast %27 : vector<1x64xf32> to vector<64x64xf32>
    %29 = arith.addf %26, %28 : vector<64x64xf32>
    %cst_18 = arith.constant 0.000000e+00 : f32
    %30 = vector.broadcast %cst_18 : f32 to vector<64x64xf32>
    %31 = arith.maximumf %29, %30 : vector<64x64xf32>
    %32 = arith.truncf %31 : vector<64x64xf32> to vector<64x64xbf16>
    %c0_19 = arith.constant 0 : index
    %c0_20 = arith.constant 0 : index
    %c0_21 = arith.constant 0 : index
    %33 = vector.load %arg7[%c0_19, %c0_20, %c0_21] : memref<1x64x64xbf16, #tpu.memory_space<vmem>>, vector<1x64x64xbf16>
    %34 = vector.shape_cast %33 : vector<1x64x64xbf16> to vector<64x64xbf16>
    %35 = vector.shape_cast %32 : vector<64x64xbf16> to vector<1x64x64xbf16>
    tpu.vector_store %arg7[%c0_19, %c0_20, %c0_21], %35 {strides = array<i32>} : memref<1x64x64xbf16, #tpu.memory_space<vmem>>, vector<1x64x64xbf16>,
    return
  }
  func.func @transform_0(%arg0: i32, %arg1: i32) -> (i32, i32, i32) {
    %c0_i32 = arith.constant 0 : i32
    %c0_i32_0 = arith.constant 0 : i32
    return %arg0, %c0_i32, %arg1 : i32, i32, i32
  }
  func.func @transform_1(%arg0: i32, %arg1: i32) -> (i32, i32) {
    %c0_i32 = arith.constant 0 : i32
    %c0_i32_0 = arith.constant 0 : i32
    return %c0_i32, %arg1 : i32, i32
  }
  func.func @transform_2(%arg0: i32, %arg1: i32) -> (i32, i32) {
    %c0_i32 = arith.constant 0 : i32
    %c0_i32_0 = arith.constant 0 : i32
    return %c0_i32, %arg1 : i32, i32
  }
  func.func @transform_3(%arg0: i32, %arg1: i32) -> (i32, i32) {
    %c0_i32 = arith.constant 0 : i32
    %c0_i32_0 = arith.constant 0 : i32
    %c0_i32_1 = arith.constant 0 : i32
    return %c0_i32, %c0_i32_0 : i32, i32
  }
  func.func @transform_4(%arg0: i32, %arg1: i32) -> (i32, i32) {
    %c0_i32 = arith.constant 0 : i32
    %c0_i32_0 = arith.constant 0 : i32
    %c0_i32_1 = arith.constant 0 : i32
    return %c0_i32, %c0_i32_0 : i32, i32
  }
  func.func @transform_5(%arg0: i32, %arg1: i32) -> (i32, i32, i32) {
    %c0_i32 = arith.constant 0 : i32
    %c0_i32_0 = arith.constant 0 : i32
    return %arg0, %c0_i32, %arg1 : i32, i32, i32
  }
}

module attributes {stable_mosaic.version = 11 : i64} {
  func.func @_matmul_kernel(%arg0: i32, %arg1: i32, %arg2: i32, %arg3: memref<128x48xbf16, #tpu.memory_space<vmem>>, %arg4: memref<48x32xbf16, #tpu.memory_space<vmem>>, %arg5: memref<128x32xbf16, #tpu.memory_space<vmem>>, %arg6: memref<128x32xf32, #tpu.memory_space<vmem>>) attributes {dimension_semantics = [#tpu.dimension_semantics<parallel>, #tpu.dimension_semantics<parallel>, #tpu.dimension_semantics<arbitrary>], iteration_bounds = array<i64: 1, 1, 1>, scalar_prefetch = 0 : i64, scratch_operands = 1 : i64, tpu.core_type = #tpu.core_type<tc>, window_params = [{transform_indices = @transform_0, window_bounds = array<i64: 128, 48>}, {transform_indices = @transform_1, window_bounds = array<i64: 48, 32>}, {transform_indices = @transform_2, window_bounds = array<i64: 128, 32>}]} {
    %c0_i32 = arith.constant 0 : i32
    %0 = arith.cmpi eq, %arg2, %c0_i32 : i32
    %1 = arith.extui %0 : i1 to i32
    %c0_i32_0 = arith.constant 0 : i32
    %2 = arith.cmpi ne, %1, %c0_i32_0 : i32
    scf.if %2 {
      %cst_10 = arith.constant 0.000000e+00 : f32
      %12 = vector.broadcast %cst_10 : f32 to vector<128x32xf32>
      %c0_11 = arith.constant 0 : index
      %c0_12 = arith.constant 0 : index
      %13 = vector.load %arg6[%c0_11, %c0_12] : memref<128x32xf32, #tpu.memory_space<vmem>>, vector<128x32xf32>
      tpu.vector_store %arg6[%c0_11, %c0_12], %12 {strides = array<i32>} : memref<128x32xf32, #tpu.memory_space<vmem>>, vector<128x32xf32>,
    } else {
    }
    %c0 = arith.constant 0 : index
    %c0_1 = arith.constant 0 : index
    %3 = vector.load %arg6[%c0, %c0_1] : memref<128x32xf32, #tpu.memory_space<vmem>>, vector<128x32xf32>
    %c0_2 = arith.constant 0 : index
    %c0_3 = arith.constant 0 : index
    %4 = vector.load %arg3[%c0_2, %c0_3] : memref<128x48xbf16, #tpu.memory_space<vmem>>, vector<128x48xbf16>
    %c0_4 = arith.constant 0 : index
    %c0_5 = arith.constant 0 : index
    %5 = vector.load %arg4[%c0_4, %c0_5] : memref<48x32xbf16, #tpu.memory_space<vmem>>, vector<48x32xbf16>
    %cst = arith.constant dense<0.000000e+00> : vector<128x32xf32>
    %6 = tpu.matmul %4, %5, %cst {dimension_numbers = #tpu.dot_dimension_numbers<[1], [0], [0], [1], [0, 0, 1, 1], [], []>} : vector<128x48xbf16>, vector<48x32xbf16>, vector<128x32xf32> -> vector<128x32xf32>
    %7 = arith.addf %3, %6 : vector<128x32xf32>
    %c0_6 = arith.constant 0 : index
    %c0_7 = arith.constant 0 : index
    %8 = vector.load %arg6[%c0_6, %c0_7] : memref<128x32xf32, #tpu.memory_space<vmem>>, vector<128x32xf32>
    tpu.vector_store %arg6[%c0_6, %c0_7], %7 {strides = array<i32>} : memref<128x32xf32, #tpu.memory_space<vmem>>, vector<128x32xf32>,
    %c0_i32_8 = arith.constant 0 : i32
    %9 = arith.cmpi eq, %arg2, %c0_i32_8 : i32
    %10 = arith.extui %9 : i1 to i32
    %c0_i32_9 = arith.constant 0 : i32
    %11 = arith.cmpi ne, %10, %c0_i32_9 : i32
    scf.if %11 {
      %c0_10 = arith.constant 0 : index
      %c0_11 = arith.constant 0 : index
      %12 = vector.load %arg6[%c0_10, %c0_11] : memref<128x32xf32, #tpu.memory_space<vmem>>, vector<128x32xf32>
      %13 = arith.truncf %12 : vector<128x32xf32> to vector<128x32xbf16>
      %c0_12 = arith.constant 0 : index
      %c0_13 = arith.constant 0 : index
      %14 = vector.load %arg5[%c0_12, %c0_13] : memref<128x32xbf16, #tpu.memory_space<vmem>>, vector<128x32xbf16>
      tpu.vector_store %arg5[%c0_12, %c0_13], %13 {strides = array<i32>} : memref<128x32xbf16, #tpu.memory_space<vmem>>, vector<128x32xbf16>,
    } else {
    }
    return
  }
  func.func @transform_0(%arg0: i32, %arg1: i32, %arg2: i32) -> (i32, i32) {
    %c0_i32 = arith.constant 0 : i32
    return %arg0, %arg2 : i32, i32
  }
  func.func @transform_1(%arg0: i32, %arg1: i32, %arg2: i32) -> (i32, i32) {
    %c0_i32 = arith.constant 0 : i32
    return %arg2, %arg1 : i32, i32
  }
  func.func @transform_2(%arg0: i32, %arg1: i32, %arg2: i32) -> (i32, i32) {
    %c0_i32 = arith.constant 0 : i32
    return %arg0, %arg1 : i32, i32
  }
}

module attributes {stable_mosaic.version = 11 : i64} {
  func.func @_matmul_kernel(%arg0: i32, %arg1: i32, %arg2: i32, %arg3: memref<128x64xbf16, #tpu.memory_space<vmem>>, %arg4: memref<64x32xbf16, #tpu.memory_space<vmem>>, %arg5: memref<128x32xbf16, #tpu.memory_space<vmem>>, %arg6: memref<128x32xf32, #tpu.memory_space<vmem>>) attributes {dimension_semantics = [#tpu.dimension_semantics<parallel>, #tpu.dimension_semantics<parallel>, #tpu.dimension_semantics<arbitrary>], iteration_bounds = array<i64: 1, 1, 1>, scalar_prefetch = 0 : i64, scratch_operands = 1 : i64, tpu.core_type = #tpu.core_type<tc>, window_params = [{transform_indices = @transform_0, window_bounds = array<i64: 128, 64>}, {transform_indices = @transform_1, window_bounds = array<i64: 64, 32>}, {transform_indices = @transform_2, window_bounds = array<i64: 128, 32>}]} {
    %c0_i32 = arith.constant 0 : i32
    %0 = arith.cmpi eq, %arg2, %c0_i32 : i32
    %1 = arith.extui %0 : i1 to i32
    %c0_i32_0 = arith.constant 0 : i32
    %2 = arith.cmpi ne, %1, %c0_i32_0 : i32
    scf.if %2 {
      %cst_10 = arith.constant 0.000000e+00 : f32
      %12 = vector.broadcast %cst_10 : f32 to vector<128x32xf32>
      %c0_11 = arith.constant 0 : index
      %c0_12 = arith.constant 0 : index
      %13 = vector.load %arg6[%c0_11, %c0_12] : memref<128x32xf32, #tpu.memory_space<vmem>>, vector<128x32xf32>
      tpu.vector_store %arg6[%c0_11, %c0_12], %12 {strides = array<i32>} : memref<128x32xf32, #tpu.memory_space<vmem>>, vector<128x32xf32>,
    } else {
    }
    %c0 = arith.constant 0 : index
    %c0_1 = arith.constant 0 : index
    %3 = vector.load %arg6[%c0, %c0_1] : memref<128x32xf32, #tpu.memory_space<vmem>>, vector<128x32xf32>
    %c0_2 = arith.constant 0 : index
    %c0_3 = arith.constant 0 : index
    %4 = vector.load %arg3[%c0_2, %c0_3] : memref<128x64xbf16, #tpu.memory_space<vmem>>, vector<128x64xbf16>
    %c0_4 = arith.constant 0 : index
    %c0_5 = arith.constant 0 : index
    %5 = vector.load %arg4[%c0_4, %c0_5] : memref<64x32xbf16, #tpu.memory_space<vmem>>, vector<64x32xbf16>
    %cst = arith.constant dense<0.000000e+00> : vector<128x32xf32>
    %6 = tpu.matmul %4, %5, %cst {dimension_numbers = #tpu.dot_dimension_numbers<[1], [0], [0], [1], [0, 0, 1, 1], [], []>} : vector<128x64xbf16>, vector<64x32xbf16>, vector<128x32xf32> -> vector<128x32xf32>
    %7 = arith.addf %3, %6 : vector<128x32xf32>
    %c0_6 = arith.constant 0 : index
    %c0_7 = arith.constant 0 : index
    %8 = vector.load %arg6[%c0_6, %c0_7] : memref<128x32xf32, #tpu.memory_space<vmem>>, vector<128x32xf32>
    tpu.vector_store %arg6[%c0_6, %c0_7], %7 {strides = array<i32>} : memref<128x32xf32, #tpu.memory_space<vmem>>, vector<128x32xf32>,
    %c0_i32_8 = arith.constant 0 : i32
    %9 = arith.cmpi eq, %arg2, %c0_i32_8 : i32
    %10 = arith.extui %9 : i1 to i32
    %c0_i32_9 = arith.constant 0 : i32
    %11 = arith.cmpi ne, %10, %c0_i32_9 : i32
    scf.if %11 {
      %c0_10 = arith.constant 0 : index
      %c0_11 = arith.constant 0 : index
      %12 = vector.load %arg6[%c0_10, %c0_11] : memref<128x32xf32, #tpu.memory_space<vmem>>, vector<128x32xf32>
      %13 = arith.truncf %12 : vector<128x32xf32> to vector<128x32xbf16>
      %c0_12 = arith.constant 0 : index
      %c0_13 = arith.constant 0 : index
      %14 = vector.load %arg5[%c0_12, %c0_13] : memref<128x32xbf16, #tpu.memory_space<vmem>>, vector<128x32xbf16>
      tpu.vector_store %arg5[%c0_12, %c0_13], %13 {strides = array<i32>} : memref<128x32xbf16, #tpu.memory_space<vmem>>, vector<128x32xbf16>,
    } else {
    }
    return
  }
  func.func @transform_0(%arg0: i32, %arg1: i32, %arg2: i32) -> (i32, i32) {
    %c0_i32 = arith.constant 0 : i32
    return %arg0, %arg2 : i32, i32
  }
  func.func @transform_1(%arg0: i32, %arg1: i32, %arg2: i32) -> (i32, i32) {
    %c0_i32 = arith.constant 0 : i32
    return %arg2, %arg1 : i32, i32
  }
  func.func @transform_2(%arg0: i32, %arg1: i32, %arg2: i32) -> (i32, i32) {
    %c0_i32 = arith.constant 0 : i32
    return %arg0, %arg1 : i32, i32
  }
}

module attributes {stable_mosaic.version = 11 : i64} {
  func.func @_matmul_kernel(%arg0: i32, %arg1: i32, %arg2: i32, %arg3: memref<32x32xbf16, #tpu.memory_space<vmem>>, %arg4: memref<32x32xbf16, #tpu.memory_space<vmem>>, %arg5: memref<32x32xbf16, #tpu.memory_space<vmem>>, %arg6: memref<32x32xf32, #tpu.memory_space<vmem>>) attributes {dimension_semantics = [#tpu.dimension_semantics<parallel>, #tpu.dimension_semantics<parallel>, #tpu.dimension_semantics<arbitrary>], iteration_bounds = array<i64: 1, 1, 1>, scalar_prefetch = 0 : i64, scratch_operands = 1 : i64, tpu.core_type = #tpu.core_type<tc>, window_params = [{transform_indices = @transform_0, window_bounds = array<i64: 32, 32>}, {transform_indices = @transform_1, window_bounds = array<i64: 32, 32>}, {transform_indices = @transform_2, window_bounds = array<i64: 32, 32>}]} {
    %c0_i32 = arith.constant 0 : i32
    %0 = arith.cmpi eq, %arg2, %c0_i32 : i32
    %1 = arith.extui %0 : i1 to i32
    %c0_i32_0 = arith.constant 0 : i32
    %2 = arith.cmpi ne, %1, %c0_i32_0 : i32
    scf.if %2 {
      %cst_10 = arith.constant 0.000000e+00 : f32
      %12 = vector.broadcast %cst_10 : f32 to vector<32x32xf32>
      %c0_11 = arith.constant 0 : index
      %c0_12 = arith.constant 0 : index
      %13 = vector.load %arg6[%c0_11, %c0_12] : memref<32x32xf32, #tpu.memory_space<vmem>>, vector<32x32xf32>
      tpu.vector_store %arg6[%c0_11, %c0_12], %12 {strides = array<i32>} : memref<32x32xf32, #tpu.memory_space<vmem>>, vector<32x32xf32>,
    } else {
    }
    %c0 = arith.constant 0 : index
    %c0_1 = arith.constant 0 : index
    %3 = vector.load %arg6[%c0, %c0_1] : memref<32x32xf32, #tpu.memory_space<vmem>>, vector<32x32xf32>
    %c0_2 = arith.constant 0 : index
    %c0_3 = arith.constant 0 : index
    %4 = vector.load %arg3[%c0_2, %c0_3] : memref<32x32xbf16, #tpu.memory_space<vmem>>, vector<32x32xbf16>
    %c0_4 = arith.constant 0 : index
    %c0_5 = arith.constant 0 : index
    %5 = vector.load %arg4[%c0_4, %c0_5] : memref<32x32xbf16, #tpu.memory_space<vmem>>, vector<32x32xbf16>
    %cst = arith.constant dense<0.000000e+00> : vector<32x32xf32>
    %6 = tpu.matmul %4, %5, %cst {dimension_numbers = #tpu.dot_dimension_numbers<[1], [0], [0], [1], [0, 0, 1, 1], [], []>} : vector<32x32xbf16>, vector<32x32xbf16>, vector<32x32xf32> -> vector<32x32xf32>
    %7 = arith.addf %3, %6 : vector<32x32xf32>
    %c0_6 = arith.constant 0 : index
    %c0_7 = arith.constant 0 : index
    %8 = vector.load %arg6[%c0_6, %c0_7] : memref<32x32xf32, #tpu.memory_space<vmem>>, vector<32x32xf32>
    tpu.vector_store %arg6[%c0_6, %c0_7], %7 {strides = array<i32>} : memref<32x32xf32, #tpu.memory_space<vmem>>, vector<32x32xf32>,
    %c0_i32_8 = arith.constant 0 : i32
    %9 = arith.cmpi eq, %arg2, %c0_i32_8 : i32
    %10 = arith.extui %9 : i1 to i32
    %c0_i32_9 = arith.constant 0 : i32
    %11 = arith.cmpi ne, %10, %c0_i32_9 : i32
    scf.if %11 {
      %c0_10 = arith.constant 0 : index
      %c0_11 = arith.constant 0 : index
      %12 = vector.load %arg6[%c0_10, %c0_11] : memref<32x32xf32, #tpu.memory_space<vmem>>, vector<32x32xf32>
      %13 = arith.truncf %12 : vector<32x32xf32> to vector<32x32xbf16>
      %c0_12 = arith.constant 0 : index
      %c0_13 = arith.constant 0 : index
      %14 = vector.load %arg5[%c0_12, %c0_13] : memref<32x32xbf16, #tpu.memory_space<vmem>>, vector<32x32xbf16>
      tpu.vector_store %arg5[%c0_12, %c0_13], %13 {strides = array<i32>} : memref<32x32xbf16, #tpu.memory_space<vmem>>, vector<32x32xbf16>,
    } else {
    }
    return
  }
  func.func @transform_0(%arg0: i32, %arg1: i32, %arg2: i32) -> (i32, i32) {
    %c0_i32 = arith.constant 0 : i32
    return %arg0, %arg2 : i32, i32
  }
  func.func @transform_1(%arg0: i32, %arg1: i32, %arg2: i32) -> (i32, i32) {
    %c0_i32 = arith.constant 0 : i32
    return %arg2, %arg1 : i32, i32
  }
  func.func @transform_2(%arg0: i32, %arg1: i32, %arg2: i32) -> (i32, i32) {
    %c0_i32 = arith.constant 0 : i32
    return %arg0, %arg1 : i32, i32
  }
}

module attributes {stable_mosaic.version = 11 : i64} {
  func.func @_gn_relu_perchannel_kernel(%arg0: i32, %arg1: i32, %arg2: memref<1x16x32xbf16, #tpu.memory_space<vmem>>, %arg3: memref<1x32xf32, #tpu.memory_space<vmem>>, %arg4: memref<1x32xf32, #tpu.memory_space<vmem>>, %arg5: memref<1x16x32xbf16, #tpu.memory_space<vmem>>) attributes {dimension_semantics = [#tpu.dimension_semantics<parallel>, #tpu.dimension_semantics<parallel>], iteration_bounds = array<i64: 2, 1>, scalar_prefetch = 0 : i64, scratch_operands = 0 : i64, tpu.core_type = #tpu.core_type<tc>, window_params = [{transform_indices = @transform_0, window_bounds = array<i64: 1, 16, 32>}, {transform_indices = @transform_1, window_bounds = array<i64: 1, 32>}, {transform_indices = @transform_2, window_bounds = array<i64: 1, 32>}, {transform_indices = @transform_3, window_bounds = array<i64: 1, 16, 32>}]} {
    %c0 = arith.constant 0 : index
    %c0_0 = arith.constant 0 : index
    %c0_1 = arith.constant 0 : index
    %0 = vector.load %arg2[%c0, %c0_0, %c0_1] : memref<1x16x32xbf16, #tpu.memory_space<vmem>>, vector<1x16x32xbf16>
    %1 = vector.shape_cast %0 : vector<1x16x32xbf16> to vector<16x32xbf16>
    %2 = arith.extf %1 : vector<16x32xbf16> to vector<16x32xf32>
    %cst = arith.constant dense<0.000000e+00> : vector<32xf32>
    %3 = vector.multi_reduction <add>, %2, %cst [0] : vector<16x32xf32> to vector<32xf32>
    %4 = vector.shape_cast %3 : vector<32xf32> to vector<1x32xf32>
    %cst_2 = arith.constant 6.250000e-02 : f32
    %5 = vector.broadcast %cst_2 : f32 to vector<1x32xf32>
    %6 = arith.mulf %4, %5 : vector<1x32xf32>
    %7 = vector.broadcast %6 : vector<1x32xf32> to vector<16x32xf32>
    %8 = arith.subf %2, %7 : vector<16x32xf32>
    %9 = arith.mulf %8, %8 : vector<16x32xf32>
    %cst_3 = arith.constant dense<0.000000e+00> : vector<32xf32>
    %10 = vector.multi_reduction <add>, %9, %cst_3 [0] : vector<16x32xf32> to vector<32xf32>
    %11 = vector.shape_cast %10 : vector<32xf32> to vector<1x32xf32>
    %cst_4 = arith.constant 6.250000e-02 : f32
    %12 = vector.broadcast %cst_4 : f32 to vector<1x32xf32>
    %13 = arith.mulf %11, %12 : vector<1x32xf32>
    %cst_5 = arith.constant 9.99999974E-6 : f32
    %14 = vector.broadcast %cst_5 : f32 to vector<1x32xf32>
    %15 = arith.addf %13, %14 : vector<1x32xf32>
    %16 = math.rsqrt %15 : vector<1x32xf32>
    %c0_6 = arith.constant 0 : index
    %c0_7 = arith.constant 0 : index
    %17 = vector.load %arg3[%c0_6, %c0_7] : memref<1x32xf32, #tpu.memory_space<vmem>>, vector<1x32xf32>
    %18 = arith.mulf %16, %17 : vector<1x32xf32>
    %19 = vector.broadcast %18 : vector<1x32xf32> to vector<16x32xf32>
    %20 = arith.mulf %8, %19 : vector<16x32xf32>
    %c0_8 = arith.constant 0 : index
    %c0_9 = arith.constant 0 : index
    %21 = vector.load %arg4[%c0_8, %c0_9] : memref<1x32xf32, #tpu.memory_space<vmem>>, vector<1x32xf32>
    %22 = vector.broadcast %21 : vector<1x32xf32> to vector<16x32xf32>
    %23 = arith.addf %20, %22 : vector<16x32xf32>
    %cst_10 = arith.constant 0.000000e+00 : f32
    %24 = vector.broadcast %cst_10 : f32 to vector<16x32xf32>
    %25 = arith.maximumf %23, %24 : vector<16x32xf32>
    %26 = arith.truncf %25 : vector<16x32xf32> to vector<16x32xbf16>
    %c0_11 = arith.constant 0 : index
    %c0_12 = arith.constant 0 : index
    %c0_13 = arith.constant 0 : index
    %27 = vector.load %arg5[%c0_11, %c0_12, %c0_13] : memref<1x16x32xbf16, #tpu.memory_space<vmem>>, vector<1x16x32xbf16>
    %28 = vector.shape_cast %27 : vector<1x16x32xbf16> to vector<16x32xbf16>
    %29 = vector.shape_cast %26 : vector<16x32xbf16> to vector<1x16x32xbf16>
    tpu.vector_store %arg5[%c0_11, %c0_12, %c0_13], %29 {strides = array<i32>} : memref<1x16x32xbf16, #tpu.memory_space<vmem>>, vector<1x16x32xbf16>,
    return
  }
  func.func @transform_0(%arg0: i32, %arg1: i32) -> (i32, i32, i32) {
    %c0_i32 = arith.constant 0 : i32
    %c0_i32_0 = arith.constant 0 : i32
    return %arg0, %c0_i32, %arg1 : i32, i32, i32
  }
  func.func @transform_1(%arg0: i32, %arg1: i32) -> (i32, i32) {
    %c0_i32 = arith.constant 0 : i32
    %c0_i32_0 = arith.constant 0 : i32
    return %c0_i32, %arg1 : i32, i32
  }
  func.func @transform_2(%arg0: i32, %arg1: i32) -> (i32, i32) {
    %c0_i32 = arith.constant 0 : i32
    %c0_i32_0 = arith.constant 0 : i32
    return %c0_i32, %arg1 : i32, i32
  }
  func.func @transform_3(%arg0: i32, %arg1: i32) -> (i32, i32, i32) {
    %c0_i32 = arith.constant 0 : i32
    %c0_i32_0 = arith.constant 0 : i32
    return %arg0, %c0_i32, %arg1 : i32, i32, i32
  }
}

module attributes {stable_mosaic.version = 11 : i64} {
  func.func @_conv3x3_kernel(%arg0: i32, %arg1: memref<1x42x32xbf16, #tpu.memory_space<vmem>>, %arg2: memref<9x32x16xbf16, #tpu.memory_space<vmem>>, %arg3: memref<1x24x16xbf16, #tpu.memory_space<vmem>>) attributes {dimension_semantics = [#tpu.dimension_semantics<parallel>], iteration_bounds = array<i64: 2>, scalar_prefetch = 0 : i64, scratch_operands = 0 : i64, tpu.core_type = #tpu.core_type<tc>, window_params = [{transform_indices = @transform_0, window_bounds = array<i64: 1, 42, 32>}, {pipeline_mode = #tpu.pipeline_mode<synchronous>, transform_indices = @transform_1, window_bounds = array<i64: 9, 32, 16>}, {transform_indices = @transform_2, window_bounds = array<i64: 1, 24, 16>}]} {
    %cst = arith.constant 0.000000e+00 : f32
    %0 = vector.broadcast %cst : f32 to vector<24x16xf32>
    %c0 = arith.constant 0 : index
    %c0_0 = arith.constant 0 : index
    %c0_1 = arith.constant 0 : index
    %1 = vector.load %arg1[%c0, %c0_0, %c0_1] : memref<1x42x32xbf16, #tpu.memory_space<vmem>>, vector<1x24x32xbf16>
    %2 = vector.shape_cast %1 : vector<1x24x32xbf16> to vector<24x32xbf16>
    %c0_2 = arith.constant 0 : index
    %c0_3 = arith.constant 0 : index
    %c0_4 = arith.constant 0 : index
    %3 = vector.load %arg2[%c0_2, %c0_3, %c0_4] : memref<9x32x16xbf16, #tpu.memory_space<vmem>>, vector<1x32x16xbf16>
    %4 = vector.shape_cast %3 : vector<1x32x16xbf16> to vector<32x16xbf16>
    %cst_5 = arith.constant dense<0.000000e+00> : vector<24x16xf32>
    %5 = tpu.matmul %2, %4, %cst_5 {dimension_numbers = #tpu.dot_dimension_numbers<[1], [0], [0], [1], [0, 0, 1, 1], [], []>} : vector<24x32xbf16>, vector<32x16xbf16>, vector<24x16xf32> -> vector<24x16xf32>
    %6 = arith.addf %0, %5 : vector<24x16xf32>
    %c0_6 = arith.constant 0 : index
    %c1 = arith.constant 1 : index
    %c0_7 = arith.constant 0 : index
    %7 = vector.load %arg1[%c0_6, %c1, %c0_7] : memref<1x42x32xbf16, #tpu.memory_space<vmem>>, vector<1x24x32xbf16>
    %8 = vector.shape_cast %7 : vector<1x24x32xbf16> to vector<24x32xbf16>
    %c1_8 = arith.constant 1 : index
    %c0_9 = arith.constant 0 : index
    %c0_10 = arith.constant 0 : index
    %9 = vector.load %arg2[%c1_8, %c0_9, %c0_10] : memref<9x32x16xbf16, #tpu.memory_space<vmem>>, vector<1x32x16xbf16>
    %10 = vector.shape_cast %9 : vector<1x32x16xbf16> to vector<32x16xbf16>
    %cst_11 = arith.constant dense<0.000000e+00> : vector<24x16xf32>
    %11 = tpu.matmul %8, %10, %cst_11 {dimension_numbers = #tpu.dot_dimension_numbers<[1], [0], [0], [1], [0, 0, 1, 1], [], []>} : vector<24x32xbf16>, vector<32x16xbf16>, vector<24x16xf32> -> vector<24x16xf32>
    %12 = arith.addf %6, %11 : vector<24x16xf32>
    %c0_12 = arith.constant 0 : index
    %c2 = arith.constant 2 : index
    %c0_13 = arith.constant 0 : index
    %13 = vector.load %arg1[%c0_12, %c2, %c0_13] : memref<1x42x32xbf16, #tpu.memory_space<vmem>>, vector<1x24x32xbf16>
    %14 = vector.shape_cast %13 : vector<1x24x32xbf16> to vector<24x32xbf16>
    %c2_14 = arith.constant 2 : index
    %c0_15 = arith.constant 0 : index
    %c0_16 = arith.constant 0 : index
    %15 = vector.load %arg2[%c2_14, %c0_15, %c0_16] : memref<9x32x16xbf16, #tpu.memory_space<vmem>>, vector<1x32x16xbf16>
    %16 = vector.shape_cast %15 : vector<1x32x16xbf16> to vector<32x16xbf16>
    %cst_17 = arith.constant dense<0.000000e+00> : vector<24x16xf32>
    %17 = tpu.matmul %14, %16, %cst_17 {dimension_numbers = #tpu.dot_dimension_numbers<[1], [0], [0], [1], [0, 0, 1, 1], [], []>} : vector<24x32xbf16>, vector<32x16xbf16>, vector<24x16xf32> -> vector<24x16xf32>
    %18 = arith.addf %12, %17 : vector<24x16xf32>
    %c0_18 = arith.constant 0 : index
    %c6 = arith.constant 6 : index
    %c0_19 = arith.constant 0 : index
    %19 = vector.load %arg1[%c0_18, %c6, %c0_19] : memref<1x42x32xbf16, #tpu.memory_space<vmem>>, vector<1x24x32xbf16>
    %20 = vector.shape_cast %19 : vector<1x24x32xbf16> to vector<24x32xbf16>
    %c3 = arith.constant 3 : index
    %c0_20 = arith.constant 0 : index
    %c0_21 = arith.constant 0 : index
    %21 = vector.load %arg2[%c3, %c0_20, %c0_21] : memref<9x32x16xbf16, #tpu.memory_space<vmem>>, vector<1x32x16xbf16>
    %22 = vector.shape_cast %21 : vector<1x32x16xbf16> to vector<32x16xbf16>
    %cst_22 = arith.constant dense<0.000000e+00> : vector<24x16xf32>
    %23 = tpu.matmul %20, %22, %cst_22 {dimension_numbers = #tpu.dot_dimension_numbers<[1], [0], [0], [1], [0, 0, 1, 1], [], []>} : vector<24x32xbf16>, vector<32x16xbf16>, vector<24x16xf32> -> vector<24x16xf32>
    %24 = arith.addf %18, %23 : vector<24x16xf32>
    %c0_23 = arith.constant 0 : index
    %c7 = arith.constant 7 : index
    %c0_24 = arith.constant 0 : index
    %25 = vector.load %arg1[%c0_23, %c7, %c0_24] : memref<1x42x32xbf16, #tpu.memory_space<vmem>>, vector<1x24x32xbf16>
    %26 = vector.shape_cast %25 : vector<1x24x32xbf16> to vector<24x32xbf16>
    %c4 = arith.constant 4 : index
    %c0_25 = arith.constant 0 : index
    %c0_26 = arith.constant 0 : index
    %27 = vector.load %arg2[%c4, %c0_25, %c0_26] : memref<9x32x16xbf16, #tpu.memory_space<vmem>>, vector<1x32x16xbf16>
    %28 = vector.shape_cast %27 : vector<1x32x16xbf16> to vector<32x16xbf16>
    %cst_27 = arith.constant dense<0.000000e+00> : vector<24x16xf32>
    %29 = tpu.matmul %26, %28, %cst_27 {dimension_numbers = #tpu.dot_dimension_numbers<[1], [0], [0], [1], [0, 0, 1, 1], [], []>} : vector<24x32xbf16>, vector<32x16xbf16>, vector<24x16xf32> -> vector<24x16xf32>
    %30 = arith.addf %24, %29 : vector<24x16xf32>
    %c0_28 = arith.constant 0 : index
    %c8 = arith.constant 8 : index
    %c0_29 = arith.constant 0 : index
    %31 = vector.load %arg1[%c0_28, %c8, %c0_29] : memref<1x42x32xbf16, #tpu.memory_space<vmem>>, vector<1x24x32xbf16>
    %32 = vector.shape_cast %31 : vector<1x24x32xbf16> to vector<24x32xbf16>
    %c5 = arith.constant 5 : index
    %c0_30 = arith.constant 0 : index
    %c0_31 = arith.constant 0 : index
    %33 = vector.load %arg2[%c5, %c0_30, %c0_31] : memref<9x32x16xbf16, #tpu.memory_space<vmem>>, vector<1x32x16xbf16>
    %34 = vector.shape_cast %33 : vector<1x32x16xbf16> to vector<32x16xbf16>
    %cst_32 = arith.constant dense<0.000000e+00> : vector<24x16xf32>
    %35 = tpu.matmul %32, %34, %cst_32 {dimension_numbers = #tpu.dot_dimension_numbers<[1], [0], [0], [1], [0, 0, 1, 1], [], []>} : vector<24x32xbf16>, vector<32x16xbf16>, vector<24x16xf32> -> vector<24x16xf32>
    %36 = arith.addf %30, %35 : vector<24x16xf32>
    %c0_33 = arith.constant 0 : index
    %c12 = arith.constant 12 : index
    %c0_34 = arith.constant 0 : index
    %37 = vector.load %arg1[%c0_33, %c12, %c0_34] : memref<1x42x32xbf16, #tpu.memory_space<vmem>>, vector<1x24x32xbf16>
    %38 = vector.shape_cast %37 : vector<1x24x32xbf16> to vector<24x32xbf16>
    %c6_35 = arith.constant 6 : index
    %c0_36 = arith.constant 0 : index
    %c0_37 = arith.constant 0 : index
    %39 = vector.load %arg2[%c6_35, %c0_36, %c0_37] : memref<9x32x16xbf16, #tpu.memory_space<vmem>>, vector<1x32x16xbf16>
    %40 = vector.shape_cast %39 : vector<1x32x16xbf16> to vector<32x16xbf16>
    %cst_38 = arith.constant dense<0.000000e+00> : vector<24x16xf32>
    %41 = tpu.matmul %38, %40, %cst_38 {dimension_numbers = #tpu.dot_dimension_numbers<[1], [0], [0], [1], [0, 0, 1, 1], [], []>} : vector<24x32xbf16>, vector<32x16xbf16>, vector<24x16xf32> -> vector<24x16xf32>
    %42 = arith.addf %36, %41 : vector<24x16xf32>
    %c0_39 = arith.constant 0 : index
    %c13 = arith.constant 13 : index
    %c0_40 = arith.constant 0 : index
    %43 = vector.load %arg1[%c0_39, %c13, %c0_40] : memref<1x42x32xbf16, #tpu.memory_space<vmem>>, vector<1x24x32xbf16>
    %44 = vector.shape_cast %43 : vector<1x24x32xbf16> to vector<24x32xbf16>
    %c7_41 = arith.constant 7 : index
    %c0_42 = arith.constant 0 : index
    %c0_43 = arith.constant 0 : index
    %45 = vector.load %arg2[%c7_41, %c0_42, %c0_43] : memref<9x32x16xbf16, #tpu.memory_space<vmem>>, vector<1x32x16xbf16>
    %46 = vector.shape_cast %45 : vector<1x32x16xbf16> to vector<32x16xbf16>
    %cst_44 = arith.constant dense<0.000000e+00> : vector<24x16xf32>
    %47 = tpu.matmul %44, %46, %cst_44 {dimension_numbers = #tpu.dot_dimension_numbers<[1], [0], [0], [1], [0, 0, 1, 1], [], []>} : vector<24x32xbf16>, vector<32x16xbf16>, vector<24x16xf32> -> vector<24x16xf32>
    %48 = arith.addf %42, %47 : vector<24x16xf32>
    %c0_45 = arith.constant 0 : index
    %c14 = arith.constant 14 : index
    %c0_46 = arith.constant 0 : index
    %49 = vector.load %arg1[%c0_45, %c14, %c0_46] : memref<1x42x32xbf16, #tpu.memory_space<vmem>>, vector<1x24x32xbf16>
    %50 = vector.shape_cast %49 : vector<1x24x32xbf16> to vector<24x32xbf16>
    %c8_47 = arith.constant 8 : index
    %c0_48 = arith.constant 0 : index
    %c0_49 = arith.constant 0 : index
    %51 = vector.load %arg2[%c8_47, %c0_48, %c0_49] : memref<9x32x16xbf16, #tpu.memory_space<vmem>>, vector<1x32x16xbf16>
    %52 = vector.shape_cast %51 : vector<1x32x16xbf16> to vector<32x16xbf16>
    %cst_50 = arith.constant dense<0.000000e+00> : vector<24x16xf32>
    %53 = tpu.matmul %50, %52, %cst_50 {dimension_numbers = #tpu.dot_dimension_numbers<[1], [0], [0], [1], [0, 0, 1, 1], [], []>} : vector<24x32xbf16>, vector<32x16xbf16>, vector<24x16xf32> -> vector<24x16xf32>
    %54 = arith.addf %48, %53 : vector<24x16xf32>
    %55 = arith.truncf %54 : vector<24x16xf32> to vector<24x16xbf16>
    %c0_51 = arith.constant 0 : index
    %c0_52 = arith.constant 0 : index
    %c0_53 = arith.constant 0 : index
    %56 = vector.load %arg3[%c0_51, %c0_52, %c0_53] : memref<1x24x16xbf16, #tpu.memory_space<vmem>>, vector<1x24x16xbf16>
    %57 = vector.shape_cast %56 : vector<1x24x16xbf16> to vector<24x16xbf16>
    %58 = vector.shape_cast %55 : vector<24x16xbf16> to vector<1x24x16xbf16>
    tpu.vector_store %arg3[%c0_51, %c0_52, %c0_53], %58 {strides = array<i32>} : memref<1x24x16xbf16, #tpu.memory_space<vmem>>, vector<1x24x16xbf16>,
    return
  }
  func.func @transform_0(%arg0: i32) -> (i32, i32, i32) {
    %c0_i32 = arith.constant 0 : i32
    %c0_i32_0 = arith.constant 0 : i32
    %c0_i32_1 = arith.constant 0 : i32
    return %arg0, %c0_i32, %c0_i32_0 : i32, i32, i32
  }
  func.func @transform_1(%arg0: i32) -> (i32, i32, i32) {
    %c0_i32 = arith.constant 0 : i32
    %c0_i32_0 = arith.constant 0 : i32
    %c0_i32_1 = arith.constant 0 : i32
    %c0_i32_2 = arith.constant 0 : i32
    return %c0_i32, %c0_i32_0, %c0_i32_1 : i32, i32, i32
  }
  func.func @transform_2(%arg0: i32) -> (i32, i32, i32) {
    %c0_i32 = arith.constant 0 : i32
    %c0_i32_0 = arith.constant 0 : i32
    %c0_i32_1 = arith.constant 0 : i32
    return %arg0, %c0_i32, %c0_i32_0 : i32, i32, i32
  }
}

module attributes {stable_mosaic.version = 11 : i64} {
  func.func @_gn_relu_perchannel_kernel(%arg0: i32, %arg1: i32, %arg2: memref<1x16x48xbf16, #tpu.memory_space<vmem>>, %arg3: memref<1x48xf32, #tpu.memory_space<vmem>>, %arg4: memref<1x48xf32, #tpu.memory_space<vmem>>, %arg5: memref<1x16x48xbf16, #tpu.memory_space<vmem>>) attributes {dimension_semantics = [#tpu.dimension_semantics<parallel>, #tpu.dimension_semantics<parallel>], iteration_bounds = array<i64: 2, 1>, scalar_prefetch = 0 : i64, scratch_operands = 0 : i64, tpu.core_type = #tpu.core_type<tc>, window_params = [{transform_indices = @transform_0, window_bounds = array<i64: 1, 16, 48>}, {transform_indices = @transform_1, window_bounds = array<i64: 1, 48>}, {transform_indices = @transform_2, window_bounds = array<i64: 1, 48>}, {transform_indices = @transform_3, window_bounds = array<i64: 1, 16, 48>}]} {
    %c0 = arith.constant 0 : index
    %c0_0 = arith.constant 0 : index
    %c0_1 = arith.constant 0 : index
    %0 = vector.load %arg2[%c0, %c0_0, %c0_1] : memref<1x16x48xbf16, #tpu.memory_space<vmem>>, vector<1x16x48xbf16>
    %1 = vector.shape_cast %0 : vector<1x16x48xbf16> to vector<16x48xbf16>
    %2 = arith.extf %1 : vector<16x48xbf16> to vector<16x48xf32>
    %cst = arith.constant dense<0.000000e+00> : vector<48xf32>
    %3 = vector.multi_reduction <add>, %2, %cst [0] : vector<16x48xf32> to vector<48xf32>
    %4 = vector.shape_cast %3 : vector<48xf32> to vector<1x48xf32>
    %cst_2 = arith.constant 6.250000e-02 : f32
    %5 = vector.broadcast %cst_2 : f32 to vector<1x48xf32>
    %6 = arith.mulf %4, %5 : vector<1x48xf32>
    %7 = vector.broadcast %6 : vector<1x48xf32> to vector<16x48xf32>
    %8 = arith.subf %2, %7 : vector<16x48xf32>
    %9 = arith.mulf %8, %8 : vector<16x48xf32>
    %cst_3 = arith.constant dense<0.000000e+00> : vector<48xf32>
    %10 = vector.multi_reduction <add>, %9, %cst_3 [0] : vector<16x48xf32> to vector<48xf32>
    %11 = vector.shape_cast %10 : vector<48xf32> to vector<1x48xf32>
    %cst_4 = arith.constant 6.250000e-02 : f32
    %12 = vector.broadcast %cst_4 : f32 to vector<1x48xf32>
    %13 = arith.mulf %11, %12 : vector<1x48xf32>
    %cst_5 = arith.constant 9.99999974E-6 : f32
    %14 = vector.broadcast %cst_5 : f32 to vector<1x48xf32>
    %15 = arith.addf %13, %14 : vector<1x48xf32>
    %16 = math.rsqrt %15 : vector<1x48xf32>
    %c0_6 = arith.constant 0 : index
    %c0_7 = arith.constant 0 : index
    %17 = vector.load %arg3[%c0_6, %c0_7] : memref<1x48xf32, #tpu.memory_space<vmem>>, vector<1x48xf32>
    %18 = arith.mulf %16, %17 : vector<1x48xf32>
    %19 = vector.broadcast %18 : vector<1x48xf32> to vector<16x48xf32>
    %20 = arith.mulf %8, %19 : vector<16x48xf32>
    %c0_8 = arith.constant 0 : index
    %c0_9 = arith.constant 0 : index
    %21 = vector.load %arg4[%c0_8, %c0_9] : memref<1x48xf32, #tpu.memory_space<vmem>>, vector<1x48xf32>
    %22 = vector.broadcast %21 : vector<1x48xf32> to vector<16x48xf32>
    %23 = arith.addf %20, %22 : vector<16x48xf32>
    %cst_10 = arith.constant 0.000000e+00 : f32
    %24 = vector.broadcast %cst_10 : f32 to vector<16x48xf32>
    %25 = arith.maximumf %23, %24 : vector<16x48xf32>
    %26 = arith.truncf %25 : vector<16x48xf32> to vector<16x48xbf16>
    %c0_11 = arith.constant 0 : index
    %c0_12 = arith.constant 0 : index
    %c0_13 = arith.constant 0 : index
    %27 = vector.load %arg5[%c0_11, %c0_12, %c0_13] : memref<1x16x48xbf16, #tpu.memory_space<vmem>>, vector<1x16x48xbf16>
    %28 = vector.shape_cast %27 : vector<1x16x48xbf16> to vector<16x48xbf16>
    %29 = vector.shape_cast %26 : vector<16x48xbf16> to vector<1x16x48xbf16>
    tpu.vector_store %arg5[%c0_11, %c0_12, %c0_13], %29 {strides = array<i32>} : memref<1x16x48xbf16, #tpu.memory_space<vmem>>, vector<1x16x48xbf16>,
    return
  }
  func.func @transform_0(%arg0: i32, %arg1: i32) -> (i32, i32, i32) {
    %c0_i32 = arith.constant 0 : i32
    %c0_i32_0 = arith.constant 0 : i32
    return %arg0, %c0_i32, %arg1 : i32, i32, i32
  }
  func.func @transform_1(%arg0: i32, %arg1: i32) -> (i32, i32) {
    %c0_i32 = arith.constant 0 : i32
    %c0_i32_0 = arith.constant 0 : i32
    return %c0_i32, %arg1 : i32, i32
  }
  func.func @transform_2(%arg0: i32, %arg1: i32) -> (i32, i32) {
    %c0_i32 = arith.constant 0 : i32
    %c0_i32_0 = arith.constant 0 : i32
    return %c0_i32, %arg1 : i32, i32
  }
  func.func @transform_3(%arg0: i32, %arg1: i32) -> (i32, i32, i32) {
    %c0_i32 = arith.constant 0 : i32
    %c0_i32_0 = arith.constant 0 : i32
    return %arg0, %c0_i32, %arg1 : i32, i32, i32
  }
}

module attributes {stable_mosaic.version = 11 : i64} {
  func.func @_matmul_kernel(%arg0: i32, %arg1: i32, %arg2: i32, %arg3: memref<32x48xbf16, #tpu.memory_space<vmem>>, %arg4: memref<48x32xbf16, #tpu.memory_space<vmem>>, %arg5: memref<32x32xbf16, #tpu.memory_space<vmem>>, %arg6: memref<32x32xf32, #tpu.memory_space<vmem>>) attributes {dimension_semantics = [#tpu.dimension_semantics<parallel>, #tpu.dimension_semantics<parallel>, #tpu.dimension_semantics<arbitrary>], iteration_bounds = array<i64: 1, 1, 1>, scalar_prefetch = 0 : i64, scratch_operands = 1 : i64, tpu.core_type = #tpu.core_type<tc>, window_params = [{transform_indices = @transform_0, window_bounds = array<i64: 32, 48>}, {transform_indices = @transform_1, window_bounds = array<i64: 48, 32>}, {transform_indices = @transform_2, window_bounds = array<i64: 32, 32>}]} {
    %c0_i32 = arith.constant 0 : i32
    %0 = arith.cmpi eq, %arg2, %c0_i32 : i32
    %1 = arith.extui %0 : i1 to i32
    %c0_i32_0 = arith.constant 0 : i32
    %2 = arith.cmpi ne, %1, %c0_i32_0 : i32
    scf.if %2 {
      %cst_10 = arith.constant 0.000000e+00 : f32
      %12 = vector.broadcast %cst_10 : f32 to vector<32x32xf32>
      %c0_11 = arith.constant 0 : index
      %c0_12 = arith.constant 0 : index
      %13 = vector.load %arg6[%c0_11, %c0_12] : memref<32x32xf32, #tpu.memory_space<vmem>>, vector<32x32xf32>
      tpu.vector_store %arg6[%c0_11, %c0_12], %12 {strides = array<i32>} : memref<32x32xf32, #tpu.memory_space<vmem>>, vector<32x32xf32>,
    } else {
    }
    %c0 = arith.constant 0 : index
    %c0_1 = arith.constant 0 : index
    %3 = vector.load %arg6[%c0, %c0_1] : memref<32x32xf32, #tpu.memory_space<vmem>>, vector<32x32xf32>
    %c0_2 = arith.constant 0 : index
    %c0_3 = arith.constant 0 : index
    %4 = vector.load %arg3[%c0_2, %c0_3] : memref<32x48xbf16, #tpu.memory_space<vmem>>, vector<32x48xbf16>
    %c0_4 = arith.constant 0 : index
    %c0_5 = arith.constant 0 : index
    %5 = vector.load %arg4[%c0_4, %c0_5] : memref<48x32xbf16, #tpu.memory_space<vmem>>, vector<48x32xbf16>
    %cst = arith.constant dense<0.000000e+00> : vector<32x32xf32>
    %6 = tpu.matmul %4, %5, %cst {dimension_numbers = #tpu.dot_dimension_numbers<[1], [0], [0], [1], [0, 0, 1, 1], [], []>} : vector<32x48xbf16>, vector<48x32xbf16>, vector<32x32xf32> -> vector<32x32xf32>
    %7 = arith.addf %3, %6 : vector<32x32xf32>
    %c0_6 = arith.constant 0 : index
    %c0_7 = arith.constant 0 : index
    %8 = vector.load %arg6[%c0_6, %c0_7] : memref<32x32xf32, #tpu.memory_space<vmem>>, vector<32x32xf32>
    tpu.vector_store %arg6[%c0_6, %c0_7], %7 {strides = array<i32>} : memref<32x32xf32, #tpu.memory_space<vmem>>, vector<32x32xf32>,
    %c0_i32_8 = arith.constant 0 : i32
    %9 = arith.cmpi eq, %arg2, %c0_i32_8 : i32
    %10 = arith.extui %9 : i1 to i32
    %c0_i32_9 = arith.constant 0 : i32
    %11 = arith.cmpi ne, %10, %c0_i32_9 : i32
    scf.if %11 {
      %c0_10 = arith.constant 0 : index
      %c0_11 = arith.constant 0 : index
      %12 = vector.load %arg6[%c0_10, %c0_11] : memref<32x32xf32, #tpu.memory_space<vmem>>, vector<32x32xf32>
      %13 = arith.truncf %12 : vector<32x32xf32> to vector<32x32xbf16>
      %c0_12 = arith.constant 0 : index
      %c0_13 = arith.constant 0 : index
      %14 = vector.load %arg5[%c0_12, %c0_13] : memref<32x32xbf16, #tpu.memory_space<vmem>>, vector<32x32xbf16>
      tpu.vector_store %arg5[%c0_12, %c0_13], %13 {strides = array<i32>} : memref<32x32xbf16, #tpu.memory_space<vmem>>, vector<32x32xbf16>,
    } else {
    }
    return
  }
  func.func @transform_0(%arg0: i32, %arg1: i32, %arg2: i32) -> (i32, i32) {
    %c0_i32 = arith.constant 0 : i32
    return %arg0, %arg2 : i32, i32
  }
  func.func @transform_1(%arg0: i32, %arg1: i32, %arg2: i32) -> (i32, i32) {
    %c0_i32 = arith.constant 0 : i32
    return %arg2, %arg1 : i32, i32
  }
  func.func @transform_2(%arg0: i32, %arg1: i32, %arg2: i32) -> (i32, i32) {
    %c0_i32 = arith.constant 0 : i32
    return %arg0, %arg1 : i32, i32
  }
}

module attributes {stable_mosaic.version = 11 : i64} {
  func.func @_gn_relu_group_kernel(%arg0: i32, %arg1: i32, %arg2: memref<1x16x64xbf16, #tpu.memory_space<vmem>>, %arg3: memref<1x64xf32, #tpu.memory_space<vmem>>, %arg4: memref<1x64xf32, #tpu.memory_space<vmem>>, %arg5: memref<64x32xf32, #tpu.memory_space<vmem>>, %arg6: memref<32x64xf32, #tpu.memory_space<vmem>>, %arg7: memref<1x16x64xbf16, #tpu.memory_space<vmem>>) attributes {dimension_semantics = [#tpu.dimension_semantics<parallel>, #tpu.dimension_semantics<parallel>], iteration_bounds = array<i64: 2, 1>, scalar_prefetch = 0 : i64, scratch_operands = 0 : i64, tpu.core_type = #tpu.core_type<tc>, window_params = [{transform_indices = @transform_0, window_bounds = array<i64: 1, 16, 64>}, {transform_indices = @transform_1, window_bounds = array<i64: 1, 64>}, {transform_indices = @transform_2, window_bounds = array<i64: 1, 64>}, {pipeline_mode = #tpu.pipeline_mode<synchronous>, transform_indices = @transform_3, window_bounds = array<i64: 64, 32>}, {pipeline_mode = #tpu.pipeline_mode<synchronous>, transform_indices = @transform_4, window_bounds = array<i64: 32, 64>}, {transform_indices = @transform_5, window_bounds = array<i64: 1, 16, 64>}]} {
    %c0 = arith.constant 0 : index
    %c0_0 = arith.constant 0 : index
    %c0_1 = arith.constant 0 : index
    %0 = vector.load %arg2[%c0, %c0_0, %c0_1] : memref<1x16x64xbf16, #tpu.memory_space<vmem>>, vector<1x16x64xbf16>
    %1 = vector.shape_cast %0 : vector<1x16x64xbf16> to vector<16x64xbf16>
    %2 = arith.extf %1 : vector<16x64xbf16> to vector<16x64xf32>
    %c0_2 = arith.constant 0 : index
    %c0_3 = arith.constant 0 : index
    %3 = vector.load %arg5[%c0_2, %c0_3] : memref<64x32xf32, #tpu.memory_space<vmem>>, vector<64x32xf32>
    %c0_4 = arith.constant 0 : index
    %c0_5 = arith.constant 0 : index
    %4 = vector.load %arg6[%c0_4, %c0_5] : memref<32x64xf32, #tpu.memory_space<vmem>>, vector<32x64xf32>
    %cst = arith.constant dense<0.000000e+00> : vector<64xf32>
    %5 = vector.multi_reduction <add>, %2, %cst [0] : vector<16x64xf32> to vector<64xf32>
    %6 = vector.shape_cast %5 : vector<64xf32> to vector<1x64xf32>
    %cst_6 = arith.constant dense<0.000000e+00> : vector<1x32xf32>
    %7 = tpu.matmul %6, %3, %cst_6 {dimension_numbers = #tpu.dot_dimension_numbers<[1], [0], [0], [1], [0, 0, 1, 1], [], []>} : vector<1x64xf32>, vector<64x32xf32>, vector<1x32xf32> -> vector<1x32xf32>
    %cst_7 = arith.constant 3.125000e-02 : f32
    %8 = vector.broadcast %cst_7 : f32 to vector<1x32xf32>
    %9 = arith.mulf %7, %8 : vector<1x32xf32>
    %cst_8 = arith.constant dense<0.000000e+00> : vector<1x64xf32>
    %10 = tpu.matmul %9, %4, %cst_8 {dimension_numbers = #tpu.dot_dimension_numbers<[1], [0], [0], [1], [0, 0, 1, 1], [], []>} : vector<1x32xf32>, vector<32x64xf32>, vector<1x64xf32> -> vector<1x64xf32>
    %11 = vector.broadcast %10 : vector<1x64xf32> to vector<16x64xf32>
    %12 = arith.subf %2, %11 : vector<16x64xf32>
    %13 = arith.mulf %12, %12 : vector<16x64xf32>
    %cst_9 = arith.constant dense<0.000000e+00> : vector<64xf32>
    %14 = vector.multi_reduction <add>, %13, %cst_9 [0] : vector<16x64xf32> to vector<64xf32>
    %15 = vector.shape_cast %14 : vector<64xf32> to vector<1x64xf32>
    %cst_10 = arith.constant dense<0.000000e+00> : vector<1x32xf32>
    %16 = tpu.matmul %15, %3, %cst_10 {dimension_numbers = #tpu.dot_dimension_numbers<[1], [0], [0], [1], [0, 0, 1, 1], [], []>} : vector<1x64xf32>, vector<64x32xf32>, vector<1x32xf32> -> vector<1x32xf32>
    %cst_11 = arith.constant 3.125000e-02 : f32
    %17 = vector.broadcast %cst_11 : f32 to vector<1x32xf32>
    %18 = arith.mulf %16, %17 : vector<1x32xf32>
    %cst_12 = arith.constant 9.99999974E-6 : f32
    %19 = vector.broadcast %cst_12 : f32 to vector<1x32xf32>
    %20 = arith.addf %18, %19 : vector<1x32xf32>
    %21 = math.rsqrt %20 : vector<1x32xf32>
    %cst_13 = arith.constant dense<0.000000e+00> : vector<1x64xf32>
    %22 = tpu.matmul %21, %4, %cst_13 {dimension_numbers = #tpu.dot_dimension_numbers<[1], [0], [0], [1], [0, 0, 1, 1], [], []>} : vector<1x32xf32>, vector<32x64xf32>, vector<1x64xf32> -> vector<1x64xf32>
    %c0_14 = arith.constant 0 : index
    %c0_15 = arith.constant 0 : index
    %23 = vector.load %arg3[%c0_14, %c0_15] : memref<1x64xf32, #tpu.memory_space<vmem>>, vector<1x64xf32>
    %24 = arith.mulf %22, %23 : vector<1x64xf32>
    %25 = vector.broadcast %24 : vector<1x64xf32> to vector<16x64xf32>
    %26 = arith.mulf %12, %25 : vector<16x64xf32>
    %c0_16 = arith.constant 0 : index
    %c0_17 = arith.constant 0 : index
    %27 = vector.load %arg4[%c0_16, %c0_17] : memref<1x64xf32, #tpu.memory_space<vmem>>, vector<1x64xf32>
    %28 = vector.broadcast %27 : vector<1x64xf32> to vector<16x64xf32>
    %29 = arith.addf %26, %28 : vector<16x64xf32>
    %cst_18 = arith.constant 0.000000e+00 : f32
    %30 = vector.broadcast %cst_18 : f32 to vector<16x64xf32>
    %31 = arith.maximumf %29, %30 : vector<16x64xf32>
    %32 = arith.truncf %31 : vector<16x64xf32> to vector<16x64xbf16>
    %c0_19 = arith.constant 0 : index
    %c0_20 = arith.constant 0 : index
    %c0_21 = arith.constant 0 : index
    %33 = vector.load %arg7[%c0_19, %c0_20, %c0_21] : memref<1x16x64xbf16, #tpu.memory_space<vmem>>, vector<1x16x64xbf16>
    %34 = vector.shape_cast %33 : vector<1x16x64xbf16> to vector<16x64xbf16>
    %35 = vector.shape_cast %32 : vector<16x64xbf16> to vector<1x16x64xbf16>
    tpu.vector_store %arg7[%c0_19, %c0_20, %c0_21], %35 {strides = array<i32>} : memref<1x16x64xbf16, #tpu.memory_space<vmem>>, vector<1x16x64xbf16>,
    return
  }
  func.func @transform_0(%arg0: i32, %arg1: i32) -> (i32, i32, i32) {
    %c0_i32 = arith.constant 0 : i32
    %c0_i32_0 = arith.constant 0 : i32
    return %arg0, %c0_i32, %arg1 : i32, i32, i32
  }
  func.func @transform_1(%arg0: i32, %arg1: i32) -> (i32, i32) {
    %c0_i32 = arith.constant 0 : i32
    %c0_i32_0 = arith.constant 0 : i32
    return %c0_i32, %arg1 : i32, i32
  }
  func.func @transform_2(%arg0: i32, %arg1: i32) -> (i32, i32) {
    %c0_i32 = arith.constant 0 : i32
    %c0_i32_0 = arith.constant 0 : i32
    return %c0_i32, %arg1 : i32, i32
  }
  func.func @transform_3(%arg0: i32, %arg1: i32) -> (i32, i32) {
    %c0_i32 = arith.constant 0 : i32
    %c0_i32_0 = arith.constant 0 : i32
    %c0_i32_1 = arith.constant 0 : i32
    return %c0_i32, %c0_i32_0 : i32, i32
  }
  func.func @transform_4(%arg0: i32, %arg1: i32) -> (i32, i32) {
    %c0_i32 = arith.constant 0 : i32
    %c0_i32_0 = arith.constant 0 : i32
    %c0_i32_1 = arith.constant 0 : i32
    return %c0_i32, %c0_i32_0 : i32, i32
  }
  func.func @transform_5(%arg0: i32, %arg1: i32) -> (i32, i32, i32) {
    %c0_i32 = arith.constant 0 : i32
    %c0_i32_0 = arith.constant 0 : i32
    return %arg0, %c0_i32, %arg1 : i32, i32, i32
  }
}

</mosaic_0001>

<llo_original>
// kernel: densenet_forward.23
$region0: #{densenet_forward.23}
  #allocation0 [shape = 'u32[]', space=smem, size = 0x4, offset = 0x4, fixed_abs, tag = 'smem constant byte address 0x4 - core index']
  #allocation1 [shape = 'u32[144,128]{1,0:T(1,128)}', space=vmem, size = 0x12000, scoped, tag = 'internal scratch']
  %s0 = inlined_call_operand.vmem [shape: bf16[2,64,32], index: 0, kind: input, shape index: {}]
  %s1 = inlined_call_operand.vmem [shape: f32[1,32], index: 1, kind: input, shape index: {}]
  %s2 = inlined_call_operand.vmem [shape: f32[1,32], index: 2, kind: input, shape index: {}]
  %s3 = inlined_call_operand.vmem [shape: bf16[2,64,32], index: 3, kind: output, shape index: {}]
  %s4 = sld [smem:[#allocation0]]
  $region45: #{densenet_forward.23} parent=0
    _
  %s6 = ssub.s32 1, %s4
  %s7 = scalar_select 0, %s6, %s4
  loop: start=0, step=1, limit=4
  $region2: #{densenet_forward.23} parent=0 // loop_pre_header
    _
  $region3: #{densenet_forward.23} parent=0 // loop_header
    %s9 = sphi 0, %s13
    %p10 = scmp.ge.s32.totalorder %s9, 4
    %s16 = sphi 0, %s28
    %s17 = sphi 0, %s24
    %s18 = sphi 0, %s16
    %s19 = sphi 0, %s17
    %s20 = sphi 0, %s18
    %s21 = sphi 0, %s19
    %s33 = sphi 0, %s35
    %s36 = sphi 0, %s33
    %s37 = sphi 0, %s36
    %s53 = sphi 0, %s37
    %s59 = sphi 0, %s61
    %s62 = sphi 0, %s59
    %s63 = sphi 0, %s62
    %s79 = sphi 0, %s63
    %s85 = sphi 0, %s87
    %s88 = sphi 0, %s85
    %s89 = sphi 0, %s88
    %s105 = sphi 0, %s89
    %s113 = sphi 0, %s115
    %s116 = sphi 0, %s113
    %s117 = sphi 0, %s116
    %s133 = sphi 0, %s117
  $region4: #{densenet_forward.23} parent=0 // loop_header_branch
    %12 = sbr.rel (%p10) target = $region8
  $region5: #{densenet_forward.23} parent=0 // loop_body
    %s14 = ssub.s32 %s9, 1
    %s15 = ssub.s32 %s9, 2
    %s22 = sadd.s32 1, %s17
    %p23 = scmp.ge.s32.totalorder %s22, 1
    %s24 = scalar_select %p23, 0, %s22
    %s25 = sadd.s32 1, %s16
    %s26 = scalar_select %p23, %s25, %s16
    %p27 = scmp.ge.s32.totalorder %s26, 2
    %s28 = scalar_select %p27, 0, %s26
    %s29 = ssub.s32 %s16, %s28
    %s30 = ssub.s32 %s17, %s24
    %s31 = sor.u32 %s29, %s30
    %p32 = scmp.eq.s32.totalorder %s31, 0
    %s34 = sadd.s32 %s33, 1
    %s35 = scalar_select %p32, %s33, %s34
    %p38 = pneg %p32
    %p39 = scmp.eq.s32.totalorder %s9, 1
    %p40 = por %p38, %p39
    %p41 = scmp.ne.s32.totalorder %s33, %s36
    %p42 = scmp.eq.s32.totalorder %s9, 0
    %p43 = por %p41, %p42
    %p44 = scmp.ne.s32.totalorder %s33, %s36
    %p45 = scmp.eq.s32.totalorder %s14, 1
    %p46 = por %p44, %p45
    %p47 = scmp.ne.s32.totalorder %s36, %s37
    %p48 = scmp.eq.s32.totalorder %s14, 0
    %p49 = por %p47, %p48
    %p50 = scmp.ne.s32.totalorder %s36, %s37
    %p51 = scmp.eq.s32.totalorder %s15, 1
    %p52 = por %p50, %p51
    %p54 = scmp.ne.s32.totalorder %s37, %s53
    %p55 = scmp.eq.s32.totalorder %s15, 0
    %p56 = por %p54, %p55
    %s57 = ssub.s32 %s17, %s24
    %p58 = scmp.eq.s32.totalorder %s57, 0
    %s60 = sadd.s32 %s59, 1
    %s61 = scalar_select %p58, %s59, %s60
    %p64 = pneg %p58
    %p65 = scmp.eq.s32.totalorder %s9, 1
    %p66 = por %p64, %p65
    %p67 = scmp.ne.s32.totalorder %s59, %s62
    %p68 = scmp.eq.s32.totalorder %s9, 0
    %p69 = por %p67, %p68
    %p70 = scmp.ne.s32.totalorder %s59, %s62
    %p71 = scmp.eq.s32.totalorder %s14, 1
    %p72 = por %p70, %p71
    %p73 = scmp.ne.s32.totalorder %s62, %s63
    %p74 = scmp.eq.s32.totalorder %s14, 0
    %p75 = por %p73, %p74
    %p76 = scmp.ne.s32.totalorder %s62, %s63
    %p77 = scmp.eq.s32.totalorder %s15, 1
    %p78 = por %p76, %p77
    %p80 = scmp.ne.s32.totalorder %s63, %s79
    %p81 = scmp.eq.s32.totalorder %s15, 0
    %p82 = por %p80, %p81
    %s83 = ssub.s32 %s17, %s24
    %p84 = scmp.eq.s32.totalorder %s83, 0
    %s86 = sadd.s32 %s85, 1
    %s87 = scalar_select %p84, %s85, %s86
    %p90 = pneg %p84
    %p91 = scmp.eq.s32.totalorder %s9, 1
    %p92 = por %p90, %p91
    %p93 = scmp.ne.s32.totalorder %s85, %s88
    %p94 = scmp.eq.s32.totalorder %s9, 0
    %p95 = por %p93, %p94
    %p96 = scmp.ne.s32.totalorder %s85, %s88
    %p97 = scmp.eq.s32.totalorder %s14, 1
    %p98 = por %p96, %p97
    %p99 = scmp.ne.s32.totalorder %s88, %s89
    %p100 = scmp.eq.s32.totalorder %s14, 0
    %p101 = por %p99, %p100
    %p102 = scmp.ne.s32.totalorder %s88, %s89
    %p103 = scmp.eq.s32.totalorder %s15, 1
    %p104 = por %p102, %p103
    %p106 = scmp.ne.s32.totalorder %s89, %s105
    %p107 = scmp.eq.s32.totalorder %s15, 0
    %p108 = por %p106, %p107
    %s109 = ssub.s32 %s16, %s28
    %s110 = ssub.s32 %s17, %s24
    %s111 = sor.u32 %s109, %s110
    %p112 = scmp.eq.s32.totalorder %s111, 0
    %s114 = sadd.s32 %s113, 1
    %s115 = scalar_select %p112, %s113, %s114
    %p118 = pneg %p112
    %p119 = scmp.eq.s32.totalorder %s9, 1
    %p120 = por %p118, %p119
    %p121 = scmp.ne.s32.totalorder %s113, %s116
    %p122 = scmp.eq.s32.totalorder %s9, 0
    %p123 = por %p121, %p122
    %p124 = scmp.ne.s32.totalorder %s113, %s116
    %p125 = scmp.eq.s32.totalorder %s14, 1
    %p126 = por %p124, %p125
    %p127 = scmp.ne.s32.totalorder %s116, %s117
    %p128 = scmp.eq.s32.totalorder %s14, 0
    %p129 = por %p127, %p128
    %p130 = scmp.ne.s32.totalorder %s116, %s117
    %p131 = scmp.eq.s32.totalorder %s15, 1
    %p132 = por %p130, %p131
    %p134 = scmp.ne.s32.totalorder %s117, %s133
    %p135 = scmp.eq.s32.totalorder %s15, 0
    %p136 = por %p134, %p135
    %p137 = scmp.le.s32.totalorder 1, %s9
    %p138 = scmp.lt.s32.totalorder %s9, 3
    %p139 = pnand %p137, %p138
    %p140 = pneg %p139
    // Predicated region
    $region9: #{densenet_forward.23} parent=5 // pred_check
      _
    $region10: #{densenet_forward.23} parent=5 // pred_check_branch
      %142 = sbr.rel (%p139) target = $region12
    $region11: #{densenet_forward.23} parent=5 // pred_region
      %s143 = ssub.s32 %s9, 1
      // Predicated region
      $region13: #{densenet_forward.23} parent=11 // pred_check
        %p144 = pneg %p75
      $region14: #{densenet_forward.23} parent=11 // pred_check_branch
        %146 = sbr.rel (%p144) target = $region16
      $region15: #{densenet_forward.23} parent=11 // pred_region
        %p147 = scmp.lt.s32.totalorder %s19, 0
        %s148 = scalar_select %p147, %s19, 0
        %s149 = scalar_lea.vmem %s1, %s148
      $region16: #{densenet_forward.23} parent=11 // pred_fallthru
        _
      // Predicated region
      $region17: #{densenet_forward.23} parent=11 // pred_check
        %p150 = pneg %p101
      $region18: #{densenet_forward.23} parent=11 // pred_check_branch
        %152 = sbr.rel (%p150) target = $region20
      $region19: #{densenet_forward.23} parent=11 // pred_region
        %p153 = scmp.lt.s32.totalorder %s19, 0
        %s154 = scalar_select %p153, %s19, 0
        %s155 = scalar_lea.vmem %s2, %s154
      $region20: #{densenet_forward.23} parent=11 // pred_fallthru
        _
    $region12: #{densenet_forward.23} parent=5 // pred_fallthru
      _
    %p156 = scmp.lt.s32.totalorder %s9, 2
    // Predicated region
    $region21: #{densenet_forward.23} parent=5 // pred_check
      %p157 = pneg %p156
    $region22: #{densenet_forward.23} parent=5 // pred_check_branch
      %159 = sbr.rel (%p157) target = $region24
    $region23: #{densenet_forward.23} parent=5 // pred_region
      // Predicated region
      $region25: #{densenet_forward.23} parent=23 // pred_check
        %p160 = pneg %p43
      $region26: #{densenet_forward.23} parent=23 // pred_check_branch
        %162 = sbr.rel (%p160) target = $region28
      $region27: #{densenet_forward.23} parent=23 // pred_region
        %p163 = scmp.lt.s32.totalorder %s16, 1
        %s164 = scalar_select %p163, %s16, 1
        %p165 = scmp.lt.s32.totalorder %s17, 0
        %s166 = scalar_select %p165, %s17, 0
        %s167 = smul.addr %s164, 8
        %s168 = sadd.s32 %s166, %s167
        %s169 = smul.addr %s168, 4
        %s170 = scalar_lea.vmem %s0, %s169
      $region28: #{densenet_forward.23} parent=23 // pred_fallthru
        _
    $region24: #{densenet_forward.23} parent=5 // pred_fallthru
      _
    %p171 = scmp.le.s32.totalorder 1, %s9
    %p172 = scmp.lt.s32.totalorder %s9, 3
    %p173 = pnand %p171, %p172
    %p174 = pneg %p173
    // Predicated region
    $region29: #{densenet_forward.23} parent=5 // pred_check
      _
    $region30: #{densenet_forward.23} parent=5 // pred_check_branch
      %176 = sbr.rel (%p173) target = $region32
    $region31: #{densenet_forward.23} parent=5 // pred_region
      %s177 = ssub.s32 %s9, 1
      %p178 = scmp.lt.s32.totalorder %s18, 1
      %s179 = scalar_select %p178, %s18, 1
      %p180 = scmp.lt.s32.totalorder %s19, 0
      %s181 = scalar_select %p180, %s19, 0
      %s182 = smul.addr %s179, 8
      %s183 = sadd.s32 %s181, %s182
      %s184 = smul.addr %s183, 4
      %s185 = scalar_lea.vmem %s0, %s184
      %p186 = pneg %p49
      %p187 = pneg %p46
      %p188 = scmp.lt.s32.totalorder %s19, 0
      %s189 = scalar_select %p188, %s19, 0
      %s190 = scalar_lea.vmem %s1, %s189
      %p191 = pneg %p75
      %p192 = pneg %p72
      %p193 = scmp.lt.s32.totalorder %s19, 0
      %s194 = scalar_select %p193, %s19, 0
      %s195 = scalar_lea.vmem %s2, %s194
      %p196 = pneg %p101
      %p197 = pneg %p98
      %p198 = pneg %p129
      %p199 = pneg %p126
      %p200 = scmp.lt.s32.totalorder %s18, 1
      %s201 = scalar_select %p200, %s18, 1
      %p202 = scmp.lt.s32.totalorder %s19, 0
      %s203 = scalar_select %p202, %s19, 0
      %s204 = smul.addr %s201, 8
      %s205 = sadd.s32 %s203, %s204
      %s206 = smul.addr %s205, 4
      %s207 = scalar_lea.vmem %s3, %s206
      %p208 = scmp.lt.s32.totalorder %s18, 1
      %s209 = scalar_select %p208, %s18, 1
      %p210 = scmp.lt.s32.totalorder %s19, 0
      %s211 = scalar_select %p210, %s19, 0
      %s212 = smul.addr %s209, 8
      %s213 = sadd.s32 %s211, %s212
      %s214 = smul.addr %s213, 4
      %s215 = scalar_lea.vmem %s0, %s214
      %p216 = scmp.lt.s32.totalorder %s19, 0
      %s217 = scalar_select %p216, %s19, 0
      %s218 = scalar_lea.vmem %s1, %s217
      %p219 = scmp.lt.s32.totalorder %s19, 0
      %s220 = scalar_select %p219, %s19, 0
      %s221 = scalar_lea.vmem %s2, %s220
      %p222 = scmp.lt.s32.totalorder %s18, 1
      %s223 = scalar_select %p222, %s18, 1
      %p224 = scmp.lt.s32.totalorder %s19, 0
      %s225 = scalar_select %p224, %s19, 0
      %s226 = smul.addr %s223, 8
      %s227 = sadd.s32 %s225, %s226
      %s228 = smul.addr %s227, 4
      %s229 = scalar_lea.vmem %s3, %s228
      %v230 = vld [vmem:[%s215] sm:$0xf]
      %v231 = vld [vmem:[%s215 + $0x4] sm:$0xf]
      %v232 = vld [vmem:[%s215 + $0x8] sm:$0xf]
      %v233 = vld [vmem:[%s215 + $0xc] sm:$0xf]
      %v234 = vld [vmem:[%s215 + $0x10] sm:$0xf]
      %v235 = vld [vmem:[%s215 + $0x14] sm:$0xf]
      %v236 = vld [vmem:[%s215 + $0x18] sm:$0xf]
      %v237 = vld [vmem:[%s215 + $0x1c] sm:$0xf]
      %v238 = vunpack.c.l.bf16 %v230
      %v239 = vunpack.c.l.bf16 %v231
      %v240 = vunpack.c.l.bf16 %v232
      %v241 = vunpack.c.l.bf16 %v233
      %v242 = vunpack.c.l.bf16 %v234
      %v243 = vunpack.c.l.bf16 %v235
      %v244 = vunpack.c.l.bf16 %v236
      %v245 = vunpack.c.l.bf16 %v237
      %vm246 = vcmask 261120
      %v247 = vsel %vm246, %v238, 0.0
      %v248 = vsel %vm246, %v239, 0.0
      %v249 = vadd.f32 %v247, %v248
      %v250 = vsel %vm246, %v240, 0.0
      %v251 = vadd.f32 %v249, %v250
      %v252 = vsel %vm246, %v241, 0.0
      %v253 = vadd.f32 %v251, %v252
      %v254 = vsel %vm246, %v242, 0.0
      %v255 = vadd.f32 %v253, %v254
      %v256 = vsel %vm246, %v243, 0.0
      %v257 = vadd.f32 %v255, %v256
      %v258 = vsel %vm246, %v244, 0.0
      %v259 = vadd.f32 %v257, %v258
      %v260 = vsel %vm246, %v245, 0.0
      %v261 = vadd.f32 %v259, %v260
      %v262 = vrot.slane %v261, 4
      %v263 = vadd.f32 %v261, %v262
      %v264 = vrot.slane %v263, 2
      %v265 = vadd.f32 %v263, %v264
      %v266 = vrot.slane %v265, 1
      %v267 = vadd.f32 %v265, %v266
      %v268 = vmul.f32 %v267, 0.015625
      %v269 = vsub.f32 %v238, %v268
      %v270 = vsub.f32 %v239, %v268
      %v271 = vsub.f32 %v240, %v268
      %v272 = vsub.f32 %v241, %v268
      %v273 = vsub.f32 %v242, %v268
      %v274 = vsub.f32 %v243, %v268
      %v275 = vsub.f32 %v244, %v268
      %v276 = vsub.f32 %v245, %v268
      %v277 = vmul.f32 %v269, %v269
      %v278 = vmul.f32 %v270, %v270
      %v279 = vmul.f32 %v271, %v271
      %v280 = vmul.f32 %v272, %v272
      %v281 = vmul.f32 %v273, %v273
      %v282 = vmul.f32 %v274, %v274
      %v283 = vmul.f32 %v275, %v275
      %v284 = vmul.f32 %v276, %v276
      %v285 = vsel %vm246, %v277, 0.0
      %v286 = vsel %vm246, %v278, 0.0
      %v287 = vadd.f32 %v285, %v286
      %v288 = vsel %vm246, %v279, 0.0
      %v289 = vadd.f32 %v287, %v288
      %v290 = vsel %vm246, %v280, 0.0
      %v291 = vadd.f32 %v289, %v290
      %v292 = vsel %vm246, %v281, 0.0
      %v293 = vadd.f32 %v291, %v292
      %v294 = vsel %vm246, %v282, 0.0
      %v295 = vadd.f32 %v293, %v294
      %v296 = vsel %vm246, %v283, 0.0
      %v297 = vadd.f32 %v295, %v296
      %v298 = vsel %vm246, %v284, 0.0
      %v299 = vadd.f32 %v297, %v298
      %v300 = vrot.slane %v299, 4
      %v301 = vadd.f32 %v299, %v300
      %v302 = vrot.slane %v301, 2
      %v303 = vadd.f32 %v301, %v302
      %v304 = vrot.slane %v303, 1
      %v305 = vadd.f32 %v303, %v304
      %v306 = vmul.f32 %v305, 0.015625
      %v307 = vadd.f32 %v306, 1e-05
      %v308 = vrsqrt.pop %v307
      %v309 = vld [vmem:[%s218] sm:$0x1]
      %v310 = vmul.f32 %v308, %v309
      %v311 = vlaneseq
      %v312 = vshrl.u32 %v311, 7
      %v313 = vsub.s32 0, %v312
      %v314 = vrot.slane %v310, %v313
      %v315 = vmul.f32 %v269, %v314
      %v316 = vmul.f32 %v270, %v314
      %v317 = vmul.f32 %v271, %v314
      %v318 = vmul.f32 %v272, %v314
      %v319 = vmul.f32 %v273, %v314
      %v320 = vmul.f32 %v274, %v314
      %v321 = vmul.f32 %v275, %v314
      %v322 = vmul.f32 %v276, %v314
      %v323 = vld [vmem:[%s221] sm:$0x1]
      %v325 = vlaneseq
      %v326 = vshrl.u32 %v325, 7
      %v327 = vsub.s32 0, %v326
      %v328 = vrot.slane %v323, %v327
      %v330 = vadd.f32 %v315, %v328
      %v331 = vadd.f32 %v316, %v328
      %v332 = vadd.f32 %v317, %v328
      %v333 = vadd.f32 %v318, %v328
      %v334 = vadd.f32 %v319, %v328
      %v335 = vadd.f32 %v320, %v328
      %v336 = vadd.f32 %v321, %v328
      %v337 = vadd.f32 %v322, %v328
      %v338 = vmax.f32 %v330, 0.0
      %v339 = vmax.f32 %v331, 0.0
      %v340 = vmax.f32 %v332, 0.0
      %v341 = vmax.f32 %v333, 0.0
      %v342 = vmax.f32 %v334, 0.0
      %v343 = vmax.f32 %v335, 0.0
      %v344 = vmax.f32 %v336, 0.0
      %v345 = vmax.f32 %v337, 0.0
      %v346 = vpack.c.bf16 %v339, %v338
      %v347 = vpack.c.bf16 %v341, %v340
      %v348 = vpack.c.bf16 %v343, %v342
      %v349 = vpack.c.bf16 %v345, %v344
      %v354 = vunpack.c.l.b16 %v346
      %v355 = vunpack.c.h.b16 %v346
      %v356 = vunpack.c.l.b16 %v347
      %v357 = vunpack.c.h.b16 %v347
      %v358 = vunpack.c.l.b16 %v348
      %v359 = vunpack.c.h.b16 %v348
      %v360 = vunpack.c.l.b16 %v349
      %v361 = vunpack.c.h.b16 %v349
      %v362 = vpack.c.b16 %v354, %v354
      %v363 = vpack.c.b16 %v355, %v355
      %v364 = vpack.c.b16 %v356, %v356
      %v365 = vpack.c.b16 %v357, %v357
      %v366 = vpack.c.b16 %v358, %v358
      %v367 = vpack.c.b16 %v359, %v359
      %v368 = vpack.c.b16 %v360, %v360
      %v369 = vpack.c.b16 %v361, %v361
      %vm378 = vcmask 257024
      %379 = vst.msk [vmem:[%s229] sm:$0xf] %vm378, %v362
      %380 = vst.msk [vmem:[%s229 + $0x4] sm:$0xf] %vm378, %v363
      %381 = vst.msk [vmem:[%s229 + $0x8] sm:$0xf] %vm378, %v364
      %382 = vst.msk [vmem:[%s229 + $0xc] sm:$0xf] %vm378, %v365
      %383 = vst.msk [vmem:[%s229 + $0x10] sm:$0xf] %vm378, %v366
      %384 = vst.msk [vmem:[%s229 + $0x14] sm:$0xf] %vm378, %v367
      %385 = vst.msk [vmem:[%s229 + $0x18] sm:$0xf] %vm378, %v368
      %386 = vst.msk [vmem:[%s229 + $0x1c] sm:$0xf] %vm378, %v369
      %p387 = scmp.lt.s32.totalorder %s18, 1
      %s388 = scalar_select %p387, %s18, 1
      %p389 = scmp.lt.s32.totalorder %s19, 0
      %s390 = scalar_select %p389, %s19, 0
      %s391 = smul.addr %s388, 8
      %s392 = sadd.s32 %s390, %s391
      %s393 = smul.addr %s392, 4
      %s394 = scalar_lea.vmem %s3, %s393
      // Predicated region
      $region33: #{densenet_forward.23} parent=31 // pred_check
        %p395 = pneg %p126
      $region34: #{densenet_forward.23} parent=31 // pred_check_branch
        %397 = sbr.rel (%p395) target = $region36
      $region35: #{densenet_forward.23} parent=31 // pred_region
        _
      $region36: #{densenet_forward.23} parent=31 // pred_fallthru
        _
    $region32: #{densenet_forward.23} parent=5 // pred_fallthru
      _
    %p398 = scmp.le.s32.totalorder 2, %s9
    // Predicated region
    $region37: #{densenet_forward.23} parent=5 // pred_check
      %p399 = pneg %p398
    $region38: #{densenet_forward.23} parent=5 // pred_check_branch
      %401 = sbr.rel (%p399) target = $region40
    $region39: #{densenet_forward.23} parent=5 // pred_region
      %s402 = ssub.s32 %s9, 2
      // Predicated region
      $region41: #{densenet_forward.23} parent=39 // pred_check
        %p403 = pneg %p132
      $region42: #{densenet_forward.23} parent=39 // pred_check_branch
        %405 = sbr.rel (%p403) target = $region44
      $region43: #{densenet_forward.23} parent=39 // pred_region
        %p406 = scmp.lt.s32.totalorder %s20, 1
        %s407 = scalar_select %p406, %s20, 1
        %p408 = scmp.lt.s32.totalorder %s21, 0
        %s409 = scalar_select %p408, %s21, 0
        %s410 = smul.addr %s407, 8
        %s411 = sadd.s32 %s409, %s410
        %s412 = smul.addr %s411, 4
        %s413 = scalar_lea.vmem %s3, %s412
      $region44: #{densenet_forward.23} parent=39 // pred_fallthru
        _
    $region40: #{densenet_forward.23} parent=5 // pred_fallthru
      _
  $region6: #{densenet_forward.23} parent=0 // loop_footer
    %s13 = sadd.s32 1, %s9
  $region7: #{densenet_forward.23} parent=0 // loop_footer_branch
    %8 = sbr.rel target = $region3
  $region8: #{densenet_forward.23} parent=0 // loop_exit
    _

// kernel: densenet_forward.22
$region0: #{densenet_forward.22}
  #allocation0 [shape = 'u32[]', space=smem, size = 0x4, offset = 0x4, fixed_abs, tag = 'smem constant byte address 0x4 - core index']
  #allocation1 [shape = 'u32[144,128]{1,0:T(1,128)}', space=vmem, size = 0x12000, scoped, tag = 'internal scratch']
  %s0 = inlined_call_operand.vmem [shape: bf16[2,256,32], index: 0, kind: input, shape index: {}]
  %s1 = inlined_call_operand.vmem [shape: f32[1,32], index: 1, kind: input, shape index: {}]
  %s2 = inlined_call_operand.vmem [shape: f32[1,32], index: 2, kind: input, shape index: {}]
  %s3 = inlined_call_operand.vmem [shape: bf16[2,256,32], index: 3, kind: output, shape index: {}]
  %s4 = sld [smem:[#allocation0]]
  $region45: #{densenet_forward.22} parent=0
    _
  %s6 = ssub.s32 1, %s4
  %s7 = scalar_select 0, %s6, %s4
  loop: start=0, step=1, limit=4
  $region2: #{densenet_forward.22} parent=0 // loop_pre_header
    _
  $region3: #{densenet_forward.22} parent=0 // loop_header
    %s9 = sphi 0, %s13
    %p10 = scmp.ge.s32.totalorder %s9, 4
    %s16 = sphi 0, %s28
    %s17 = sphi 0, %s24
    %s18 = sphi 0, %s16
    %s19 = sphi 0, %s17
    %s20 = sphi 0, %s18
    %s21 = sphi 0, %s19
    %s33 = sphi 0, %s35
    %s36 = sphi 0, %s33
    %s37 = sphi 0, %s36
    %s53 = sphi 0, %s37
    %s59 = sphi 0, %s61
    %s62 = sphi 0, %s59
    %s63 = sphi 0, %s62
    %s79 = sphi 0, %s63
    %s85 = sphi 0, %s87
    %s88 = sphi 0, %s85
    %s89 = sphi 0, %s88
    %s105 = sphi 0, %s89
    %s113 = sphi 0, %s115
    %s116 = sphi 0, %s113
    %s117 = sphi 0, %s116
    %s133 = sphi 0, %s117
  $region4: #{densenet_forward.22} parent=0 // loop_header_branch
    %12 = sbr.rel (%p10) target = $region8
  $region5: #{densenet_forward.22} parent=0 // loop_body
    %s14 = ssub.s32 %s9, 1
    %s15 = ssub.s32 %s9, 2
    %s22 = sadd.s32 1, %s17
    %p23 = scmp.ge.s32.totalorder %s22, 1
    %s24 = scalar_select %p23, 0, %s22
    %s25 = sadd.s32 1, %s16
    %s26 = scalar_select %p23, %s25, %s16
    %p27 = scmp.ge.s32.totalorder %s26, 2
    %s28 = scalar_select %p27, 0, %s26
    %s29 = ssub.s32 %s16, %s28
    %s30 = ssub.s32 %s17, %s24
    %s31 = sor.u32 %s29, %s30
    %p32 = scmp.eq.s32.totalorder %s31, 0
    %s34 = sadd.s32 %s33, 1
    %s35 = scalar_select %p32, %s33, %s34
    %p38 = pneg %p32
    %p39 = scmp.eq.s32.totalorder %s9, 1
    %p40 = por %p38, %p39
    %p41 = scmp.ne.s32.totalorder %s33, %s36
    %p42 = scmp.eq.s32.totalorder %s9, 0
    %p43 = por %p41, %p42
    %p44 = scmp.ne.s32.totalorder %s33, %s36
    %p45 = scmp.eq.s32.totalorder %s14, 1
    %p46 = por %p44, %p45
    %p47 = scmp.ne.s32.totalorder %s36, %s37
    %p48 = scmp.eq.s32.totalorder %s14, 0
    %p49 = por %p47, %p48
    %p50 = scmp.ne.s32.totalorder %s36, %s37
    %p51 = scmp.eq.s32.totalorder %s15, 1
    %p52 = por %p50, %p51
    %p54 = scmp.ne.s32.totalorder %s37, %s53
    %p55 = scmp.eq.s32.totalorder %s15, 0
    %p56 = por %p54, %p55
    %s57 = ssub.s32 %s17, %s24
    %p58 = scmp.eq.s32.totalorder %s57, 0
    %s60 = sadd.s32 %s59, 1
    %s61 = scalar_select %p58, %s59, %s60
    %p64 = pneg %p58
    %p65 = scmp.eq.s32.totalorder %s9, 1
    %p66 = por %p64, %p65
    %p67 = scmp.ne.s32.totalorder %s59, %s62
    %p68 = scmp.eq.s32.totalorder %s9, 0
    %p69 = por %p67, %p68
    %p70 = scmp.ne.s32.totalorder %s59, %s62
    %p71 = scmp.eq.s32.totalorder %s14, 1
    %p72 = por %p70, %p71
    %p73 = scmp.ne.s32.totalorder %s62, %s63
    %p74 = scmp.eq.s32.totalorder %s14, 0
    %p75 = por %p73, %p74
    %p76 = scmp.ne.s32.totalorder %s62, %s63
    %p77 = scmp.eq.s32.totalorder %s15, 1
    %p78 = por %p76, %p77
    %p80 = scmp.ne.s32.totalorder %s63, %s79
    %p81 = scmp.eq.s32.totalorder %s15, 0
    %p82 = por %p80, %p81
    %s83 = ssub.s32 %s17, %s24
    %p84 = scmp.eq.s32.totalorder %s83, 0
    %s86 = sadd.s32 %s85, 1
    %s87 = scalar_select %p84, %s85, %s86
    %p90 = pneg %p84
    %p91 = scmp.eq.s32.totalorder %s9, 1
    %p92 = por %p90, %p91
    %p93 = scmp.ne.s32.totalorder %s85, %s88
    %p94 = scmp.eq.s32.totalorder %s9, 0
    %p95 = por %p93, %p94
    %p96 = scmp.ne.s32.totalorder %s85, %s88
    %p97 = scmp.eq.s32.totalorder %s14, 1
    %p98 = por %p96, %p97
    %p99 = scmp.ne.s32.totalorder %s88, %s89
    %p100 = scmp.eq.s32.totalorder %s14, 0
    %p101 = por %p99, %p100
    %p102 = scmp.ne.s32.totalorder %s88, %s89
    %p103 = scmp.eq.s32.totalorder %s15, 1
    %p104 = por %p102, %p103
    %p106 = scmp.ne.s32.totalorder %s89, %s105
    %p107 = scmp.eq.s32.totalorder %s15, 0
    %p108 = por %p106, %p107
    %s109 = ssub.s32 %s16, %s28
    %s110 = ssub.s32 %s17, %s24
    %s111 = sor.u32 %s109, %s110
    %p112 = scmp.eq.s32.totalorder %s111, 0
    %s114 = sadd.s32 %s113, 1
    %s115 = scalar_select %p112, %s113, %s114
    %p118 = pneg %p112
    %p119 = scmp.eq.s32.totalorder %s9, 1
    %p120 = por %p118, %p119
    %p121 = scmp.ne.s32.totalorder %s113, %s116
    %p122 = scmp.eq.s32.totalorder %s9, 0
    %p123 = por %p121, %p122
    %p124 = scmp.ne.s32.totalorder %s113, %s116
    %p125 = scmp.eq.s32.totalorder %s14, 1
    %p126 = por %p124, %p125
    %p127 = scmp.ne.s32.totalorder %s116, %s117
    %p128 = scmp.eq.s32.totalorder %s14, 0
    %p129 = por %p127, %p128
    %p130 = scmp.ne.s32.totalorder %s116, %s117
    %p131 = scmp.eq.s32.totalorder %s15, 1
    %p132 = por %p130, %p131
    %p134 = scmp.ne.s32.totalorder %s117, %s133
    %p135 = scmp.eq.s32.totalorder %s15, 0
    %p136 = por %p134, %p135
    %p137 = scmp.le.s32.totalorder 1, %s9
    %p138 = scmp.lt.s32.totalorder %s9, 3
    %p139 = pnand %p137, %p138
    %p140 = pneg %p139
    // Predicated region
    $region9: #{densenet_forward.22} parent=5 // pred_check
      _
    $region10: #{densenet_forward.22} parent=5 // pred_check_branch
      %142 = sbr.rel (%p139) target = $region12
    $region11: #{densenet_forward.22} parent=5 // pred_region
      %s143 = ssub.s32 %s9, 1
      // Predicated region
      $region13: #{densenet_forward.22} parent=11 // pred_check
        %p144 = pneg %p75
      $region14: #{densenet_forward.22} parent=11 // pred_check_branch
        %146 = sbr.rel (%p144) target = $region16
      $region15: #{densenet_forward.22} parent=11 // pred_region
        %p147 = scmp.lt.s32.totalorder %s19, 0
        %s148 = scalar_select %p147, %s19, 0
        %s149 = scalar_lea.vmem %s1, %s148
      $region16: #{densenet_forward.22} parent=11 // pred_fallthru
        _
      // Predicated region
      $region17: #{densenet_forward.22} parent=11 // pred_check
        %p150 = pneg %p101
      $region18: #{densenet_forward.22} parent=11 // pred_check_branch
        %152 = sbr.rel (%p150) target = $region20
      $region19: #{densenet_forward.22} parent=11 // pred_region
        %p153 = scmp.lt.s32.totalorder %s19, 0
        %s154 = scalar_select %p153, %s19, 0
        %s155 = scalar_lea.vmem %s2, %s154
      $region20: #{densenet_forward.22} parent=11 // pred_fallthru
        _
    $region12: #{densenet_forward.22} parent=5 // pred_fallthru
      _
    %p156 = scmp.lt.s32.totalorder %s9, 2
    // Predicated region
    $region21: #{densenet_forward.22} parent=5 // pred_check
      %p157 = pneg %p156
    $region22: #{densenet_forward.22} parent=5 // pred_check_branch
      %159 = sbr.rel (%p157) target = $region24
    $region23: #{densenet_forward.22} parent=5 // pred_region
      // Predicated region
      $region25: #{densenet_forward.22} parent=23 // pred_check
        %p160 = pneg %p43
      $region26: #{densenet_forward.22} parent=23 // pred_check_branch
        %162 = sbr.rel (%p160) target = $region28
      $region27: #{densenet_forward.22} parent=23 // pred_region
        %p163 = scmp.lt.s32.totalorder %s16, 1
        %s164 = scalar_select %p163, %s16, 1
        %p165 = scmp.lt.s32.totalorder %s17, 0
        %s166 = scalar_select %p165, %s17, 0
        %s167 = smul.addr %s164, 32
        %s168 = sadd.s32 %s166, %s167
        %s169 = smul.addr %s168, 4
        %s170 = scalar_lea.vmem %s0, %s169
      $region28: #{densenet_forward.22} parent=23 // pred_fallthru
        _
    $region24: #{densenet_forward.22} parent=5 // pred_fallthru
      _
    %p171 = scmp.le.s32.totalorder 1, %s9
    %p172 = scmp.lt.s32.totalorder %s9, 3
    %p173 = pnand %p171, %p172
    %p174 = pneg %p173
    // Predicated region
    $region29: #{densenet_forward.22} parent=5 // pred_check
      _
    $region30: #{densenet_forward.22} parent=5 // pred_check_branch
      %176 = sbr.rel (%p173) target = $region32
    $region31: #{densenet_forward.22} parent=5 // pred_region
      %s177 = ssub.s32 %s9, 1
      %p178 = scmp.lt.s32.totalorder %s18, 1
      %s179 = scalar_select %p178, %s18, 1
      %p180 = scmp.lt.s32.totalorder %s19, 0
      %s181 = scalar_select %p180, %s19, 0
      %s182 = smul.addr %s179, 32
      %s183 = sadd.s32 %s181, %s182
      %s184 = smul.addr %s183, 4
      %s185 = scalar_lea.vmem %s0, %s184
      %p186 = pneg %p49
      %p187 = pneg %p46
      %p188 = scmp.lt.s32.totalorder %s19, 0
      %s189 = scalar_select %p188, %s19, 0
      %s190 = scalar_lea.vmem %s1, %s189
      %p191 = pneg %p75
      %p192 = pneg %p72
      %p193 = scmp.lt.s32.totalorder %s19, 0
      %s194 = scalar_select %p193, %s19, 0
      %s195 = scalar_lea.vmem %s2, %s194
      %p196 = pneg %p101
      %p197 = pneg %p98
      %p198 = pneg %p129
      %p199 = pneg %p126
      %p200 = scmp.lt.s32.totalorder %s18, 1
      %s201 = scalar_select %p200, %s18, 1
      %p202 = scmp.lt.s32.totalorder %s19, 0
      %s203 = scalar_select %p202, %s19, 0
      %s204 = smul.addr %s201, 32
      %s205 = sadd.s32 %s203, %s204
      %s206 = smul.addr %s205, 4
      %s207 = scalar_lea.vmem %s3, %s206
      %p208 = scmp.lt.s32.totalorder %s18, 1
      %s209 = scalar_select %p208, %s18, 1
      %p210 = scmp.lt.s32.totalorder %s19, 0
      %s211 = scalar_select %p210, %s19, 0
      %s212 = smul.addr %s209, 32
      %s213 = sadd.s32 %s211, %s212
      %s214 = smul.addr %s213, 4
      %s215 = scalar_lea.vmem %s0, %s214
      %p216 = scmp.lt.s32.totalorder %s19, 0
      %s217 = scalar_select %p216, %s19, 0
      %s218 = scalar_lea.vmem %s1, %s217
      %p219 = scmp.lt.s32.totalorder %s19, 0
      %s220 = scalar_select %p219, %s19, 0
      %s221 = scalar_lea.vmem %s2, %s220
      %p222 = scmp.lt.s32.totalorder %s18, 1
      %s223 = scalar_select %p222, %s18, 1
      %p224 = scmp.lt.s32.totalorder %s19, 0
      %s225 = scalar_select %p224, %s19, 0
      %s226 = smul.addr %s223, 32
      %s227 = sadd.s32 %s225, %s226
      %s228 = smul.addr %s227, 4
      %s229 = scalar_lea.vmem %s3, %s228
      %v230 = vld [vmem:[%s215] sm:$0xf]
      %v231 = vld [vmem:[%s215 + $0x4] sm:$0xf]
      %v232 = vld [vmem:[%s215 + $0x8] sm:$0xf]
      %v233 = vld [vmem:[%s215 + $0xc] sm:$0xf]
      %v234 = vld [vmem:[%s215 + $0x10] sm:$0xf]
      %v235 = vld [vmem:[%s215 + $0x14] sm:$0xf]
      %v236 = vld [vmem:[%s215 + $0x18] sm:$0xf]
      %v237 = vld [vmem:[%s215 + $0x1c] sm:$0xf]
      %v238 = vld [vmem:[%s215 + $0x20] sm:$0xf]
      %v239 = vld [vmem:[%s215 + $0x24] sm:$0xf]
      %v240 = vld [vmem:[%s215 + $0x28] sm:$0xf]
      %v241 = vld [vmem:[%s215 + $0x2c] sm:$0xf]
      %v242 = vld [vmem:[%s215 + $0x30] sm:$0xf]
      %v243 = vld [vmem:[%s215 + $0x34] sm:$0xf]
      %v244 = vld [vmem:[%s215 + $0x38] sm:$0xf]
      %v245 = vld [vmem:[%s215 + $0x3c] sm:$0xf]
      %v246 = vld [vmem:[%s215 + $0x40] sm:$0xf]
      %v247 = vld [vmem:[%s215 + $0x44] sm:$0xf]
      %v248 = vld [vmem:[%s215 + $0x48] sm:$0xf]
      %v249 = vld [vmem:[%s215 + $0x4c] sm:$0xf]
      %v250 = vld [vmem:[%s215 + $0x50] sm:$0xf]
      %v251 = vld [vmem:[%s215 + $0x54] sm:$0xf]
      %v252 = vld [vmem:[%s215 + $0x58] sm:$0xf]
      %v253 = vld [vmem:[%s215 + $0x5c] sm:$0xf]
      %v254 = vld [vmem:[%s215 + $0x60] sm:$0xf]
      %v255 = vld [vmem:[%s215 + $0x64] sm:$0xf]
      %v256 = vld [vmem:[%s215 + $0x68] sm:$0xf]
      %v257 = vld [vmem:[%s215 + $0x6c] sm:$0xf]
      %v258 = vld [vmem:[%s215 + $0x70] sm:$0xf]
      %v259 = vld [vmem:[%s215 + $0x74] sm:$0xf]
      %v260 = vld [vmem:[%s215 + $0x78] sm:$0xf]
      %v261 = vld [vmem:[%s215 + $0x7c] sm:$0xf]
      %v262 = vunpack.c.l.bf16 %v230
      %v263 = vunpack.c.l.bf16 %v231
      %v264 = vunpack.c.l.bf16 %v232
      %v265 = vunpack.c.l.bf16 %v233
      %v266 = vunpack.c.l.bf16 %v234
      %v267 = vunpack.c.l.bf16 %v235
      %v268 = vunpack.c.l.bf16 %v236
      %v269 = vunpack.c.l.bf16 %v237
      %v270 = vunpack.c.l.bf16 %v238
      %v271 = vunpack.c.l.bf16 %v239
      %v272 = vunpack.c.l.bf16 %v240
      %v273 = vunpack.c.l.bf16 %v241
      %v274 = vunpack.c.l.bf16 %v242
      %v275 = vunpack.c.l.bf16 %v243
      %v276 = vunpack.c.l.bf16 %v244
      %v277 = vunpack.c.l.bf16 %v245
      %v278 = vunpack.c.l.bf16 %v246
      %v279 = vunpack.c.l.bf16 %v247
      %v280 = vunpack.c.l.bf16 %v248
      %v281 = vunpack.c.l.bf16 %v249
      %v282 = vunpack.c.l.bf16 %v250
      %v283 = vunpack.c.l.bf16 %v251
      %v284 = vunpack.c.l.bf16 %v252
      %v285 = vunpack.c.l.bf16 %v253
      %v286 = vunpack.c.l.bf16 %v254
      %v287 = vunpack.c.l.bf16 %v255
      %v288 = vunpack.c.l.bf16 %v256
      %v289 = vunpack.c.l.bf16 %v257
      %v290 = vunpack.c.l.bf16 %v258
      %v291 = vunpack.c.l.bf16 %v259
      %v292 = vunpack.c.l.bf16 %v260
      %v293 = vunpack.c.l.bf16 %v261
      %vm294 = vcmask 261120
      %v295 = vsel %vm294, %v262, 0.0
      %v296 = vsel %vm294, %v263, 0.0
      %v297 = vadd.f32 %v295, %v296
      %v298 = vsel %vm294, %v264, 0.0
      %v299 = vadd.f32 %v297, %v298
      %v300 = vsel %vm294, %v265, 0.0
      %v301 = vadd.f32 %v299, %v300
      %v302 = vsel %vm294, %v266, 0.0
      %v303 = vadd.f32 %v301, %v302
      %v304 = vsel %vm294, %v267, 0.0
      %v305 = vadd.f32 %v303, %v304
      %v306 = vsel %vm294, %v268, 0.0
      %v307 = vadd.f32 %v305, %v306
      %v308 = vsel %vm294, %v269, 0.0
      %v309 = vadd.f32 %v307, %v308
      %v310 = vsel %vm294, %v270, 0.0
      %v311 = vadd.f32 %v309, %v310
      %v312 = vsel %vm294, %v271, 0.0
      %v313 = vadd.f32 %v311, %v312
      %v314 = vsel %vm294, %v272, 0.0
      %v315 = vadd.f32 %v313, %v314
      %v316 = vsel %vm294, %v273, 0.0
      %v317 = vadd.f32 %v315, %v316
      %v318 = vsel %vm294, %v274, 0.0
      %v319 = vadd.f32 %v317, %v318
      %v320 = vsel %vm294, %v275, 0.0
      %v321 = vadd.f32 %v319, %v320
      %v322 = vsel %vm294, %v276, 0.0
      %v323 = vadd.f32 %v321, %v322
      %v324 = vsel %vm294, %v277, 0.0
      %v325 = vadd.f32 %v323, %v324
      %v326 = vsel %vm294, %v278, 0.0
      %v327 = vadd.f32 %v325, %v326
      %v328 = vsel %vm294, %v279, 0.0
      %v329 = vadd.f32 %v327, %v328
      %v330 = vsel %vm294, %v280, 0.0
      %v331 = vadd.f32 %v329, %v330
      %v332 = vsel %vm294, %v281, 0.0
      %v333 = vadd.f32 %v331, %v332
      %v334 = vsel %vm294, %v282, 0.0
      %v335 = vadd.f32 %v333, %v334
      %v336 = vsel %vm294, %v283, 0.0
      %v337 = vadd.f32 %v335, %v336
      %v338 = vsel %vm294, %v284, 0.0
      %v339 = vadd.f32 %v337, %v338
      %v340 = vsel %vm294, %v285, 0.0
      %v341 = vadd.f32 %v339, %v340
      %v342 = vsel %vm294, %v286, 0.0
      %v343 = vadd.f32 %v341, %v342
      %v344 = vsel %vm294, %v287, 0.0
      %v345 = vadd.f32 %v343, %v344
      %v346 = vsel %vm294, %v288, 0.0
      %v347 = vadd.f32 %v345, %v346
      %v348 = vsel %vm294, %v289, 0.0
      %v349 = vadd.f32 %v347, %v348
      %v350 = vsel %vm294, %v290, 0.0
      %v351 = vadd.f32 %v349, %v350
      %v352 = vsel %vm294, %v291, 0.0
      %v353 = vadd.f32 %v351, %v352
      %v354 = vsel %vm294, %v292, 0.0
      %v355 = vadd.f32 %v353, %v354
      %v356 = vsel %vm294, %v293, 0.0
      %v357 = vadd.f32 %v355, %v356
      %v358 = vrot.slane %v357, 4
      %v359 = vadd.f32 %v357, %v358
      %v360 = vrot.slane %v359, 2
      %v361 = vadd.f32 %v359, %v360
      %v362 = vrot.slane %v361, 1
      %v363 = vadd.f32 %v361, %v362
      %v364 = vmul.f32 %v363, 0.00390625
      %v365 = vsub.f32 %v262, %v364
      %v366 = vsub.f32 %v263, %v364
      %v367 = vsub.f32 %v264, %v364
      %v368 = vsub.f32 %v265, %v364
      %v369 = vsub.f32 %v266, %v364
      %v370 = vsub.f32 %v267, %v364
      %v371 = vsub.f32 %v268, %v364
      %v372 = vsub.f32 %v269, %v364
      %v373 = vsub.f32 %v270, %v364
      %v374 = vsub.f32 %v271, %v364
      %v375 = vsub.f32 %v272, %v364
      %v376 = vsub.f32 %v273, %v364
      %v377 = vsub.f32 %v274, %v364
      %v378 = vsub.f32 %v275, %v364
      %v379 = vsub.f32 %v276, %v364
      %v380 = vsub.f32 %v277, %v364
      %v381 = vsub.f32 %v278, %v364
      %v382 = vsub.f32 %v279, %v364
      %v383 = vsub.f32 %v280, %v364
      %v384 = vsub.f32 %v281, %v364
      %v385 = vsub.f32 %v282, %v364
      %v386 = vsub.f32 %v283, %v364
      %v387 = vsub.f32 %v284, %v364
      %v388 = vsub.f32 %v285, %v364
      %v389 = vsub.f32 %v286, %v364
      %v390 = vsub.f32 %v287, %v364
      %v391 = vsub.f32 %v288, %v364
      %v392 = vsub.f32 %v289, %v364
      %v393 = vsub.f32 %v290, %v364
      %v394 = vsub.f32 %v291, %v364
      %v395 = vsub.f32 %v292, %v364
      %v396 = vsub.f32 %v293, %v364
      %v397 = vmul.f32 %v365, %v365
      %v398 = vmul.f32 %v366, %v366
      %v399 = vmul.f32 %v367, %v367
      %v400 = vmul.f32 %v368, %v368
      %v401 = vmul.f32 %v369, %v369
      %v402 = vmul.f32 %v370, %v370
      %v403 = vmul.f32 %v371, %v371
      %v404 = vmul.f32 %v372, %v372
      %v405 = vmul.f32 %v373, %v373
      %v406 = vmul.f32 %v374, %v374
      %v407 = vmul.f32 %v375, %v375
      %v408 = vmul.f32 %v376, %v376
      %v409 = vmul.f32 %v377, %v377
      %v410 = vmul.f32 %v378, %v378
      %v411 = vmul.f32 %v379, %v379
      %v412 = vmul.f32 %v380, %v380
      %v413 = vmul.f32 %v381, %v381
      %v414 = vmul.f32 %v382, %v382
      %v415 = vmul.f32 %v383, %v383
      %v416 = vmul.f32 %v384, %v384
      %v417 = vmul.f32 %v385, %v385
      %v418 = vmul.f32 %v386, %v386
      %v419 = vmul.f32 %v387, %v387
      %v420 = vmul.f32 %v388, %v388
      %v421 = vmul.f32 %v389, %v389
      %v422 = vmul.f32 %v390, %v390
      %v423 = vmul.f32 %v391, %v391
      %v424 = vmul.f32 %v392, %v392
      %v425 = vmul.f32 %v393, %v393
      %v426 = vmul.f32 %v394, %v394
      %v427 = vmul.f32 %v395, %v395
      %v428 = vmul.f32 %v396, %v396
      %v429 = vsel %vm294, %v397, 0.0
      %v430 = vsel %vm294, %v398, 0.0
      %v431 = vadd.f32 %v429, %v430
      %v432 = vsel %vm294, %v399, 0.0
      %v433 = vadd.f32 %v431, %v432
      %v434 = vsel %vm294, %v400, 0.0
      %v435 = vadd.f32 %v433, %v434
      %v436 = vsel %vm294, %v401, 0.0
      %v437 = vadd.f32 %v435, %v436
      %v438 = vsel %vm294, %v402, 0.0
      %v439 = vadd.f32 %v437, %v438
      %v440 = vsel %vm294, %v403, 0.0
      %v441 = vadd.f32 %v439, %v440
      %v442 = vsel %vm294, %v404, 0.0
      %v443 = vadd.f32 %v441, %v442
      %v444 = vsel %vm294, %v405, 0.0
      %v445 = vadd.f32 %v443, %v444
      %v446 = vsel %vm294, %v406, 0.0
      %v447 = vadd.f32 %v445, %v446
      %v448 = vsel %vm294, %v407, 0.0
      %v449 = vadd.f32 %v447, %v448
      %v450 = vsel %vm294, %v408, 0.0
      %v451 = vadd.f32 %v449, %v450
      %v452 = vsel %vm294, %v409, 0.0
      %v453 = vadd.f32 %v451, %v452
      %v454 = vsel %vm294, %v410, 0.0
      %v455 = vadd.f32 %v453, %v454
      %v456 = vsel %vm294, %v411, 0.0
      %v457 = vadd.f32 %v455, %v456
      %v458 = vsel %vm294, %v412, 0.0
      %v459 = vadd.f32 %v457, %v458
      %v460 = vsel %vm294, %v413, 0.0
      %v461 = vadd.f32 %v459, %v460
      %v462 = vsel %vm294, %v414, 0.0
      %v463 = vadd.f32 %v461, %v462
      %v464 = vsel %vm294, %v415, 0.0
      %v465 = vadd.f32 %v463, %v464
      %v466 = vsel %vm294, %v416, 0.0
      %v467 = vadd.f32 %v465, %v466
      %v468 = vsel %vm294, %v417, 0.0
      %v469 = vadd.f32 %v467, %v468
      %v470 = vsel %vm294, %v418, 0.0
      %v471 = vadd.f32 %v469, %v470
      %v472 = vsel %vm294, %v419, 0.0
      %v473 = vadd.f32 %v471, %v472
      %v474 = vsel %vm294, %v420, 0.0
      %v475 = vadd.f32 %v473, %v474
      %v476 = vsel %vm294, %v421, 0.0
      %v477 = vadd.f32 %v475, %v476
      %v478 = vsel %vm294, %v422, 0.0
      %v479 = vadd.f32 %v477, %v478
      %v480 = vsel %vm294, %v423, 0.0
      %v481 = vadd.f32 %v479, %v480
      %v482 = vsel %vm294, %v424, 0.0
      %v483 = vadd.f32 %v481, %v482
      %v484 = vsel %vm294, %v425, 0.0
      %v485 = vadd.f32 %v483, %v484
      %v486 = vsel %vm294, %v426, 0.0
      %v487 = vadd.f32 %v485, %v486
      %v488 = vsel %vm294, %v427, 0.0
      %v489 = vadd.f32 %v487, %v488
      %v490 = vsel %vm294, %v428, 0.0
      %v491 = vadd.f32 %v489, %v490
      %v492 = vrot.slane %v491, 4
      %v493 = vadd.f32 %v491, %v492
      %v494 = vrot.slane %v493, 2
      %v495 = vadd.f32 %v493, %v494
      %v496 = vrot.slane %v495, 1
      %v497 = vadd.f32 %v495, %v496
      %v498 = vmul.f32 %v497, 0.00390625
      %v499 = vadd.f32 %v498, 1e-05
      %v500 = vrsqrt.pop %v499
      %v501 = vld [vmem:[%s218] sm:$0x1]
      %v502 = vmul.f32 %v500, %v501
      %v503 = vlaneseq
      %v504 = vshrl.u32 %v503, 7
      %v505 = vsub.s32 0, %v504
      %v506 = vrot.slane %v502, %v505
      %v507 = vmul.f32 %v365, %v506
      %v508 = vmul.f32 %v366, %v506
      %v509 = vmul.f32 %v367, %v506
      %v510 = vmul.f32 %v368, %v506
      %v511 = vmul.f32 %v369, %v506
      %v512 = vmul.f32 %v370, %v506
      %v513 = vmul.f32 %v371, %v506
      %v514 = vmul.f32 %v372, %v506
      %v515 = vmul.f32 %v373, %v506
      %v516 = vmul.f32 %v374, %v506
      %v517 = vmul.f32 %v375, %v506
      %v518 = vmul.f32 %v376, %v506
      %v519 = vmul.f32 %v377, %v506
      %v520 = vmul.f32 %v378, %v506
      %v521 = vmul.f32 %v379, %v506
      %v522 = vmul.f32 %v380, %v506
      %v523 = vmul.f32 %v381, %v506
      %v524 = vmul.f32 %v382, %v506
      %v525 = vmul.f32 %v383, %v506
      %v526 = vmul.f32 %v384, %v506
      %v527 = vmul.f32 %v385, %v506
      %v528 = vmul.f32 %v386, %v506
      %v529 = vmul.f32 %v387, %v506
      %v530 = vmul.f32 %v388, %v506
      %v531 = vmul.f32 %v389, %v506
      %v532 = vmul.f32 %v390, %v506
      %v533 = vmul.f32 %v391, %v506
      %v534 = vmul.f32 %v392, %v506
      %v535 = vmul.f32 %v393, %v506
      %v536 = vmul.f32 %v394, %v506
      %v537 = vmul.f32 %v395, %v506
      %v538 = vmul.f32 %v396, %v506
      %v539 = vld [vmem:[%s221] sm:$0x1]
      %v541 = vlaneseq
      %v542 = vshrl.u32 %v541, 7
      %v543 = vsub.s32 0, %v542
      %v544 = vrot.slane %v539, %v543
      %v546 = vadd.f32 %v507, %v544
      %v547 = vadd.f32 %v508, %v544
      %v548 = vadd.f32 %v509, %v544
      %v549 = vadd.f32 %v510, %v544
      %v550 = vadd.f32 %v511, %v544
      %v551 = vadd.f32 %v512, %v544
      %v552 = vadd.f32 %v513, %v544
      %v553 = vadd.f32 %v514, %v544
      %v554 = vadd.f32 %v515, %v544
      %v555 = vadd.f32 %v516, %v544
      %v556 = vadd.f32 %v517, %v544
      %v557 = vadd.f32 %v518, %v544
      %v558 = vadd.f32 %v519, %v544
      %v559 = vadd.f32 %v520, %v544
      %v560 = vadd.f32 %v521, %v544
      %v561 = vadd.f32 %v522, %v544
      %v562 = vadd.f32 %v523, %v544
      %v563 = vadd.f32 %v524, %v544
      %v564 = vadd.f32 %v525, %v544
      %v565 = vadd.f32 %v526, %v544
      %v566 = vadd.f32 %v527, %v544
      %v567 = vadd.f32 %v528, %v544
      %v568 = vadd.f32 %v529, %v544
      %v569 = vadd.f32 %v530, %v544
      %v570 = vadd.f32 %v531, %v544
      %v571 = vadd.f32 %v532, %v544
      %v572 = vadd.f32 %v533, %v544
      %v573 = vadd.f32 %v534, %v544
      %v574 = vadd.f32 %v535, %v544
      %v575 = vadd.f32 %v536, %v544
      %v576 = vadd.f32 %v537, %v544
      %v577 = vadd.f32 %v538, %v544
      %v578 = vmax.f32 %v546, 0.0
      %v579 = vmax.f32 %v547, 0.0
      %v580 = vmax.f32 %v548, 0.0
      %v581 = vmax.f32 %v549, 0.0
      %v582 = vmax.f32 %v550, 0.0
      %v583 = vmax.f32 %v551, 0.0
      %v584 = vmax.f32 %v552, 0.0
      %v585 = vmax.f32 %v553, 0.0
      %v586 = vmax.f32 %v554, 0.0
      %v587 = vmax.f32 %v555, 0.0
      %v588 = vmax.f32 %v556, 0.0
      %v589 = vmax.f32 %v557, 0.0
      %v590 = vmax.f32 %v558, 0.0
      %v591 = vmax.f32 %v559, 0.0
      %v592 = vmax.f32 %v560, 0.0
      %v593 = vmax.f32 %v561, 0.0
      %v594 = vmax.f32 %v562, 0.0
      %v595 = vmax.f32 %v563, 0.0
      %v596 = vmax.f32 %v564, 0.0
      %v597 = vmax.f32 %v565, 0.0
      %v598 = vmax.f32 %v566, 0.0
      %v599 = vmax.f32 %v567, 0.0
      %v600 = vmax.f32 %v568, 0.0
      %v601 = vmax.f32 %v569, 0.0
      %v602 = vmax.f32 %v570, 0.0
      %v603 = vmax.f32 %v571, 0.0
      %v604 = vmax.f32 %v572, 0.0
      %v605 = vmax.f32 %v573, 0.0
      %v606 = vmax.f32 %v574, 0.0
      %v607 = vmax.f32 %v575, 0.0
      %v608 = vmax.f32 %v576, 0.0
      %v609 = vmax.f32 %v577, 0.0
      %v610 = vpack.c.bf16 %v579, %v578
      %v611 = vpack.c.bf16 %v581, %v580
      %v612 = vpack.c.bf16 %v583, %v582
      %v613 = vpack.c.bf16 %v585, %v584
      %v614 = vpack.c.bf16 %v587, %v586
      %v615 = vpack.c.bf16 %v589, %v588
      %v616 = vpack.c.bf16 %v591, %v590
      %v617 = vpack.c.bf16 %v593, %v592
      %v618 = vpack.c.bf16 %v595, %v594
      %v619 = vpack.c.bf16 %v597, %v596
      %v620 = vpack.c.bf16 %v599, %v598
      %v621 = vpack.c.bf16 %v601, %v600
      %v622 = vpack.c.bf16 %v603, %v602
      %v623 = vpack.c.bf16 %v605, %v604
      %v624 = vpack.c.bf16 %v607, %v606
      %v625 = vpack.c.bf16 %v609, %v608
      %v642 = vunpack.c.l.b16 %v610
      %v643 = vunpack.c.h.b16 %v610
      %v644 = vunpack.c.l.b16 %v611
      %v645 = vunpack.c.h.b16 %v611
      %v646 = vunpack.c.l.b16 %v612
      %v647 = vunpack.c.h.b16 %v612
      %v648 = vunpack.c.l.b16 %v613
      %v649 = vunpack.c.h.b16 %v613
      %v650 = vunpack.c.l.b16 %v614
      %v651 = vunpack.c.h.b16 %v614
      %v652 = vunpack.c.l.b16 %v615
      %v653 = vunpack.c.h.b16 %v615
      %v654 = vunpack.c.l.b16 %v616
      %v655 = vunpack.c.h.b16 %v616
      %v656 = vunpack.c.l.b16 %v617
      %v657 = vunpack.c.h.b16 %v617
      %v658 = vunpack.c.l.b16 %v618
      %v659 = vunpack.c.h.b16 %v618
      %v660 = vunpack.c.l.b16 %v619
      %v661 = vunpack.c.h.b16 %v619
      %v662 = vunpack.c.l.b16 %v620
      %v663 = vunpack.c.h.b16 %v620
      %v664 = vunpack.c.l.b16 %v621
      %v665 = vunpack.c.h.b16 %v621
      %v666 = vunpack.c.l.b16 %v622
      %v667 = vunpack.c.h.b16 %v622
      %v668 = vunpack.c.l.b16 %v623
      %v669 = vunpack.c.h.b16 %v623
      %v670 = vunpack.c.l.b16 %v624
      %v671 = vunpack.c.h.b16 %v624
      %v672 = vunpack.c.l.b16 %v625
      %v673 = vunpack.c.h.b16 %v625
      %v674 = vpack.c.b16 %v642, %v642
      %v675 = vpack.c.b16 %v643, %v643
      %v676 = vpack.c.b16 %v644, %v644
      %v677 = vpack.c.b16 %v645, %v645
      %v678 = vpack.c.b16 %v646, %v646
      %v679 = vpack.c.b16 %v647, %v647
      %v680 = vpack.c.b16 %v648, %v648
      %v681 = vpack.c.b16 %v649, %v649
      %v682 = vpack.c.b16 %v650, %v650
      %v683 = vpack.c.b16 %v651, %v651
      %v684 = vpack.c.b16 %v652, %v652
      %v685 = vpack.c.b16 %v653, %v653
      %v686 = vpack.c.b16 %v654, %v654
      %v687 = vpack.c.b16 %v655, %v655
      %v688 = vpack.c.b16 %v656, %v656
      %v689 = vpack.c.b16 %v657, %v657
      %v690 = vpack.c.b16 %v658, %v658
      %v691 = vpack.c.b16 %v659, %v659
      %v692 = vpack.c.b16 %v660, %v660
      %v693 = vpack.c.b16 %v661, %v661
      %v694 = vpack.c.b16 %v662, %v662
      %v695 = vpack.c.b16 %v663, %v663
      %v696 = vpack.c.b16 %v664, %v664
      %v697 = vpack.c.b16 %v665, %v665
      %v698 = vpack.c.b16 %v666, %v666
      %v699 = vpack.c.b16 %v667, %v667
      %v700 = vpack.c.b16 %v668, %v668
      %v701 = vpack.c.b16 %v669, %v669
      %v702 = vpack.c.b16 %v670, %v670
      %v703 = vpack.c.b16 %v671, %v671
      %v704 = vpack.c.b16 %v672, %v672
      %v705 = vpack.c.b16 %v673, %v673
      %vm738 = vcmask 257024
      %739 = vst.msk [vmem:[%s229] sm:$0xf] %vm738, %v674
      %740 = vst.msk [vmem:[%s229 + $0x4] sm:$0xf] %vm738, %v675
      %741 = vst.msk [vmem:[%s229 + $0x8] sm:$0xf] %vm738, %v676
      %742 = vst.msk [vmem:[%s229 + $0xc] sm:$0xf] %vm738, %v677
      %743 = vst.msk [vmem:[%s229 + $0x10] sm:$0xf] %vm738, %v678
      %744 = vst.msk [vmem:[%s229 + $0x14] sm:$0xf] %vm738, %v679
      %745 = vst.msk [vmem:[%s229 + $0x18] sm:$0xf] %vm738, %v680
      %746 = vst.msk [vmem:[%s229 + $0x1c] sm:$0xf] %vm738, %v681
      %747 = vst.msk [vmem:[%s229 + $0x20] sm:$0xf] %vm738, %v682
      %748 = vst.msk [vmem:[%s229 + $0x24] sm:$0xf] %vm738, %v683
      %749 = vst.msk [vmem:[%s229 + $0x28] sm:$0xf] %vm738, %v684
      %750 = vst.msk [vmem:[%s229 + $0x2c] sm:$0xf] %vm738, %v685
      %751 = vst.msk [vmem:[%s229 + $0x30] sm:$0xf] %vm738, %v686
      %752 = vst.msk [vmem:[%s229 + $0x34] sm:$0xf] %vm738, %v687
      %753 = vst.msk [vmem:[%s229 + $0x38] sm:$0xf] %vm738, %v688
      %754 = vst.msk [vmem:[%s229 + $0x3c] sm:$0xf] %vm738, %v689
      %755 = vst.msk [vmem:[%s229 + $0x40] sm:$0xf] %vm738, %v690
      %756 = vst.msk [vmem:[%s229 + $0x44] sm:$0xf] %vm738, %v691
      %757 = vst.msk [vmem:[%s229 + $0x48] sm:$0xf] %vm738, %v692
      %758 = vst.msk [vmem:[%s229 + $0x4c] sm:$0xf] %vm738, %v693
      %759 = vst.msk [vmem:[%s229 + $0x50] sm:$0xf] %vm738, %v694
      %760 = vst.msk [vmem:[%s229 + $0x54] sm:$0xf] %vm738, %v695
      %761 = vst.msk [vmem:[%s229 + $0x58] sm:$0xf] %vm738, %v696
      %762 = vst.msk [vmem:[%s229 + $0x5c] sm:$0xf] %vm738, %v697
      %763 = vst.msk [vmem:[%s229 + $0x60] sm:$0xf] %vm738, %v698
      %764 = vst.msk [vmem:[%s229 + $0x64] sm:$0xf] %vm738, %v699
      %765 = vst.msk [vmem:[%s229 + $0x68] sm:$0xf] %vm738, %v700
      %766 = vst.msk [vmem:[%s229 + $0x6c] sm:$0xf] %vm738, %v701
      %767 = vst.msk [vmem:[%s229 + $0x70] sm:$0xf] %vm738, %v702
      %768 = vst.msk [vmem:[%s229 + $0x74] sm:$0xf] %vm738, %v703
      %769 = vst.msk [vmem:[%s229 + $0x78] sm:$0xf] %vm738, %v704
      %770 = vst.msk [vmem:[%s229 + $0x7c] sm:$0xf] %vm738, %v705
      %p771 = scmp.lt.s32.totalorder %s18, 1
      %s772 = scalar_select %p771, %s18, 1
      %p773 = scmp.lt.s32.totalorder %s19, 0
      %s774 = scalar_select %p773, %s19, 0
      %s775 = smul.addr %s772, 32
      %s776 = sadd.s32 %s774, %s775
      %s777 = smul.addr %s776, 4
      %s778 = scalar_lea.vmem %s3, %s777
      // Predicated region
      $region33: #{densenet_forward.22} parent=31 // pred_check
        %p779 = pneg %p126
      $region34: #{densenet_forward.22} parent=31 // pred_check_branch
        %781 = sbr.rel (%p779) target = $region36
      $region35: #{densenet_forward.22} parent=31 // pred_region
        _
      $region36: #{densenet_forward.22} parent=31 // pred_fallthru
        _
    $region32: #{densenet_forward.22} parent=5 // pred_fallthru
      _
    %p782 = scmp.le.s32.totalorder 2, %s9
    // Predicated region
    $region37: #{densenet_forward.22} parent=5 // pred_check
      %p783 = pneg %p782
    $region38: #{densenet_forward.22} parent=5 // pred_check_branch
      %785 = sbr.rel (%p783) target = $region40
    $region39: #{densenet_forward.22} parent=5 // pred_region
      %s786 = ssub.s32 %s9, 2
      // Predicated region
      $region41: #{densenet_forward.22} parent=39 // pred_check
        %p787 = pneg %p132
      $region42: #{densenet_forward.22} parent=39 // pred_check_branch
        %789 = sbr.rel (%p787) target = $region44
      $region43: #{densenet_forward.22} parent=39 // pred_region
        %p790 = scmp.lt.s32.totalorder %s20, 1
        %s791 = scalar_select %p790, %s20, 1
        %p792 = scmp.lt.s32.totalorder %s21, 0
        %s793 = scalar_select %p792, %s21, 0
        %s794 = smul.addr %s791, 32
        %s795 = sadd.s32 %s793, %s794
        %s796 = smul.addr %s795, 4
        %s797 = scalar_lea.vmem %s3, %s796
      $region44: #{densenet_forward.22} parent=39 // pred_fallthru
        _
    $region40: #{densenet_forward.22} parent=5 // pred_fallthru
      _
  $region6: #{densenet_forward.22} parent=0 // loop_footer
    %s13 = sadd.s32 1, %s9
  $region7: #{densenet_forward.22} parent=0 // loop_footer_branch
    %8 = sbr.rel target = $region3
  $region8: #{densenet_forward.22} parent=0 // loop_exit
    _

// kernel: densenet_forward.21
$region0: #{densenet_forward.21}
  #allocation0 [shape = 'u32[]', space=smem, size = 0x4, offset = 0x4, fixed_abs, tag = 'smem constant byte address 0x4 - core index']
  #allocation1 [shape = 'u32[144,128]{1,0:T(1,128)}', space=vmem, size = 0x12000, scoped, tag = 'internal scratch']
  #allocation2 [shape = 'f32[512,32]{1,0:T(8,128)}', space=vmem, size = 0x40000, scoped, tag = 'scratch operand']
  %s0 = inlined_call_operand.vmem [shape: bf16[512,147], index: 0, kind: input, shape index: {}]
  %s1 = inlined_call_operand.vmem [shape: bf16[147,32], index: 1, kind: input, shape index: {}]
  %s2 = inlined_call_operand.vmem [shape: bf16[512,32], index: 2, kind: output, shape index: {}]
  %s3 = sld [smem:[#allocation0]]
  $region26: #{densenet_forward.21} parent=0
    _
  %s5 = ssub.s32 1, %s3
  %s6 = scalar_select 0, %s5, %s3
  // Predicated region
  $region2: #{densenet_forward.21} parent=0 // pred_check
    _
  $region3: #{densenet_forward.21} parent=0 // pred_check_branch
    %8 = sbr.rel (0) target = $region5
  $region4: #{densenet_forward.21} parent=0 // pred_region
    _
  $region5: #{densenet_forward.21} parent=0 // pred_fallthru
    _
  // Predicated region
  $region6: #{densenet_forward.21} parent=0 // pred_check
    _
  $region7: #{densenet_forward.21} parent=0 // pred_check_branch
    %10 = sbr.rel (0) target = $region9
  $region8: #{densenet_forward.21} parent=0 // pred_region
    _
  $region9: #{densenet_forward.21} parent=0 // pred_fallthru
    _
  %p12 = scmp.eq.s32.totalorder 0, 0
  // Predicated region
  $region10: #{densenet_forward.21} parent=0 // pred_check
    %p13 = pneg %p12
  $region11: #{densenet_forward.21} parent=0 // pred_check_branch
    %15 = sbr.rel (%p13) target = $region13
  $region12: #{densenet_forward.21} parent=0 // pred_region
    %vm16 = vcmask 261120
    %17 = vst.msk [vmem:[#allocation2] sm:$0xff] %vm16, 0.0
    %18 = vst.msk [vmem:[#allocation2 + $0x8] sm:$0xff] %vm16, 0.0
    %19 = vst.msk [vmem:[#allocation2 + $0x10] sm:$0xff] %vm16, 0.0
    %20 = vst.msk [vmem:[#allocation2 + $0x18] sm:$0xff] %vm16, 0.0
    %21 = vst.msk [vmem:[#allocation2 + $0x20] sm:$0xff] %vm16, 0.0
    %22 = vst.msk [vmem:[#allocation2 + $0x28] sm:$0xff] %vm16, 0.0
    %23 = vst.msk [vmem:[#allocation2 + $0x30] sm:$0xff] %vm16, 0.0
    %24 = vst.msk [vmem:[#allocation2 + $0x38] sm:$0xff] %vm16, 0.0
    %25 = vst.msk [vmem:[#allocation2 + $0x40] sm:$0xff] %vm16, 0.0
    %26 = vst.msk [vmem:[#allocation2 + $0x48] sm:$0xff] %vm16, 0.0
    %27 = vst.msk [vmem:[#allocation2 + $0x50] sm:$0xff] %vm16, 0.0
    %28 = vst.msk [vmem:[#allocation2 + $0x58] sm:$0xff] %vm16, 0.0
    %29 = vst.msk [vmem:[#allocation2 + $0x60] sm:$0xff] %vm16, 0.0
    %30 = vst.msk [vmem:[#allocation2 + $0x68] sm:$0xff] %vm16, 0.0
    %31 = vst.msk [vmem:[#allocation2 + $0x70] sm:$0xff] %vm16, 0.0
    %32 = vst.msk [vmem:[#allocation2 + $0x78] sm:$0xff] %vm16, 0.0
    %33 = vst.msk [vmem:[#allocation2 + $0x80] sm:$0xff] %vm16, 0.0
    %34 = vst.msk [vmem:[#allocation2 + $0x88] sm:$0xff] %vm16, 0.0
    %35 = vst.msk [vmem:[#allocation2 + $0x90] sm:$0xff] %vm16, 0.0
    %36 = vst.msk [vmem:[#allocation2 + $0x98] sm:$0xff] %vm16, 0.0
    %37 = vst.msk [vmem:[#allocation2 + $0xa0] sm:$0xff] %vm16, 0.0
    %38 = vst.msk [vmem:[#allocation2 + $0xa8] sm:$0xff] %vm16, 0.0
    %39 = vst.msk [vmem:[#allocation2 + $0xb0] sm:$0xff] %vm16, 0.0
    %40 = vst.msk [vmem:[#allocation2 + $0xb8] sm:$0xff] %vm16, 0.0
    %41 = vst.msk [vmem:[#allocation2 + $0xc0] sm:$0xff] %vm16, 0.0
    %42 = vst.msk [vmem:[#allocation2 + $0xc8] sm:$0xff] %vm16, 0.0
    %43 = vst.msk [vmem:[#allocation2 + $0xd0] sm:$0xff] %vm16, 0.0
    %44 = vst.msk [vmem:[#allocation2 + $0xd8] sm:$0xff] %vm16, 0.0
    %45 = vst.msk [vmem:[#allocation2 + $0xe0] sm:$0xff] %vm16, 0.0
    %46 = vst.msk [vmem:[#allocation2 + $0xe8] sm:$0xff] %vm16, 0.0
    %47 = vst.msk [vmem:[#allocation2 + $0xf0] sm:$0xff] %vm16, 0.0
    %48 = vst.msk [vmem:[#allocation2 + $0xf8] sm:$0xff] %vm16, 0.0
    %49 = vst.msk [vmem:[#allocation2 + $0x100] sm:$0xff] %vm16, 0.0
    %50 = vst.msk [vmem:[#allocation2 + $0x108] sm:$0xff] %vm16, 0.0
    %51 = vst.msk [vmem:[#allocation2 + $0x110] sm:$0xff] %vm16, 0.0
    %52 = vst.msk [vmem:[#allocation2 + $0x118] sm:$0xff] %vm16, 0.0
    %53 = vst.msk [vmem:[#allocation2 + $0x120] sm:$0xff] %vm16, 0.0
    %54 = vst.msk [vmem:[#allocation2 + $0x128] sm:$0xff] %vm16, 0.0
    %55 = vst.msk [vmem:[#allocation2 + $0x130] sm:$0xff] %vm16, 0.0
    %56 = vst.msk [vmem:[#allocation2 + $0x138] sm:$0xff] %vm16, 0.0
    %57 = vst.msk [vmem:[#allocation2 + $0x140] sm:$0xff] %vm16, 0.0
    %58 = vst.msk [vmem:[#allocation2 + $0x148] sm:$0xff] %vm16, 0.0
    %59 = vst.msk [vmem:[#allocation2 + $0x150] sm:$0xff] %vm16, 0.0
    %60 = vst.msk [vmem:[#allocation2 + $0x158] sm:$0xff] %vm16, 0.0
    %61 = vst.msk [vmem:[#allocation2 + $0x160] sm:$0xff] %vm16, 0.0
    %62 = vst.msk [vmem:[#allocation2 + $0x168] sm:$0xff] %vm16, 0.0
    %63 = vst.msk [vmem:[#allocation2 + $0x170] sm:$0xff] %vm16, 0.0
    %64 = vst.msk [vmem:[#allocation2 + $0x178] sm:$0xff] %vm16, 0.0
    %65 = vst.msk [vmem:[#allocation2 + $0x180] sm:$0xff] %vm16, 0.0
    %66 = vst.msk [vmem:[#allocation2 + $0x188] sm:$0xff] %vm16, 0.0
    %67 = vst.msk [vmem:[#allocation2 + $0x190] sm:$0xff] %vm16, 0.0
    %68 = vst.msk [vmem:[#allocation2 + $0x198] sm:$0xff] %vm16, 0.0
    %69 = vst.msk [vmem:[#allocation2 + $0x1a0] sm:$0xff] %vm16, 0.0
    %70 = vst.msk [vmem:[#allocation2 + $0x1a8] sm:$0xff] %vm16, 0.0
    %71 = vst.msk [vmem:[#allocation2 + $0x1b0] sm:$0xff] %vm16, 0.0
    %72 = vst.msk [vmem:[#allocation2 + $0x1b8] sm:$0xff] %vm16, 0.0
    %73 = vst.msk [vmem:[#allocation2 + $0x1c0] sm:$0xff] %vm16, 0.0
    %74 = vst.msk [vmem:[#allocation2 + $0x1c8] sm:$0xff] %vm16, 0.0
    %75 = vst.msk [vmem:[#allocation2 + $0x1d0] sm:$0xff] %vm16, 0.0
    %76 = vst.msk [vmem:[#allocation2 + $0x1d8] sm:$0xff] %vm16, 0.0
    %77 = vst.msk [vmem:[#allocation2 + $0x1e0] sm:$0xff] %vm16, 0.0
    %78 = vst.msk [vmem:[#allocation2 + $0x1e8] sm:$0xff] %vm16, 0.0
    %79 = vst.msk [vmem:[#allocation2 + $0x1f0] sm:$0xff] %vm16, 0.0
    %80 = vst.msk [vmem:[#allocation2 + $0x1f8] sm:$0xff] %vm16, 0.0
  $region13: #{densenet_forward.21} parent=0 // pred_fallthru
    _
  %v81 = vld [vmem:[#allocation2] sm:$0xff]
  %v82 = vld [vmem:[#allocation2 + $0x8] sm:$0xff]
  %v83 = vld [vmem:[#allocation2 + $0x10] sm:$0xff]
  %v84 = vld [vmem:[#allocation2 + $0x18] sm:$0xff]
  %v85 = vld [vmem:[#allocation2 + $0x20] sm:$0xff]
  %v86 = vld [vmem:[#allocation2 + $0x28] sm:$0xff]
  %v87 = vld [vmem:[#allocation2 + $0x30] sm:$0xff]
  %v88 = vld [vmem:[#allocation2 + $0x38] sm:$0xff]
  %v89 = vld [vmem:[#allocation2 + $0x40] sm:$0xff]
  %v90 = vld [vmem:[#allocation2 + $0x48] sm:$0xff]
  %v91 = vld [vmem:[#allocation2 + $0x50] sm:$0xff]
  %v92 = vld [vmem:[#allocation2 + $0x58] sm:$0xff]
  %v93 = vld [vmem:[#allocation2 + $0x60] sm:$0xff]
  %v94 = vld [vmem:[#allocation2 + $0x68] sm:$0xff]
  %v95 = vld [vmem:[#allocation2 + $0x70] sm:$0xff]
  %v96 = vld [vmem:[#allocation2 + $0x78] sm:$0xff]
  %v97 = vld [vmem:[#allocation2 + $0x80] sm:$0xff]
  %v98 = vld [vmem:[#allocation2 + $0x88] sm:$0xff]
  %v99 = vld [vmem:[#allocation2 + $0x90] sm:$0xff]
  %v100 = vld [vmem:[#allocation2 + $0x98] sm:$0xff]
  %v101 = vld [vmem:[#allocation2 + $0xa0] sm:$0xff]
  %v102 = vld [vmem:[#allocation2 + $0xa8] sm:$0xff]
  %v103 = vld [vmem:[#allocation2 + $0xb0] sm:$0xff]
  %v104 = vld [vmem:[#allocation2 + $0xb8] sm:$0xff]
  %v105 = vld [vmem:[#allocation2 + $0xc0] sm:$0xff]
  %v106 = vld [vmem:[#allocation2 + $0xc8] sm:$0xff]
  %v107 = vld [vmem:[#allocation2 + $0xd0] sm:$0xff]
  %v108 = vld [vmem:[#allocation2 + $0xd8] sm:$0xff]
  %v109 = vld [vmem:[#allocation2 + $0xe0] sm:$0xff]
  %v110 = vld [vmem:[#allocation2 + $0xe8] sm:$0xff]
  %v111 = vld [vmem:[#allocation2 + $0xf0] sm:$0xff]
  %v112 = vld [vmem:[#allocation2 + $0xf8] sm:$0xff]
  %v113 = vld [vmem:[#allocation2 + $0x100] sm:$0xff]
  %v114 = vld [vmem:[#allocation2 + $0x108] sm:$0xff]
  %v115 = vld [vmem:[#allocation2 + $0x110] sm:$0xff]
  %v116 = vld [vmem:[#allocation2 + $0x118] sm:$0xff]
  %v117 = vld [vmem:[#allocation2 + $0x120] sm:$0xff]
  %v118 = vld [vmem:[#allocation2 + $0x128] sm:$0xff]
  %v119 = vld [vmem:[#allocation2 + $0x130] sm:$0xff]
  %v120 = vld [vmem:[#allocation2 + $0x138] sm:$0xff]
  %v121 = vld [vmem:[#allocation2 + $0x140] sm:$0xff]
  %v122 = vld [vmem:[#allocation2 + $0x148] sm:$0xff]
  %v123 = vld [vmem:[#allocation2 + $0x150] sm:$0xff]
  %v124 = vld [vmem:[#allocation2 + $0x158] sm:$0xff]
  %v125 = vld [vmem:[#allocation2 + $0x160] sm:$0xff]
  %v126 = vld [vmem:[#allocation2 + $0x168] sm:$0xff]
  %v127 = vld [vmem:[#allocation2 + $0x170] sm:$0xff]
  %v128 = vld [vmem:[#allocation2 + $0x178] sm:$0xff]
  %v129 = vld [vmem:[#allocation2 + $0x180] sm:$0xff]
  %v130 = vld [vmem:[#allocation2 + $0x188] sm:$0xff]
  %v131 = vld [vmem:[#allocation2 + $0x190] sm:$0xff]
  %v132 = vld [vmem:[#allocation2 + $0x198] sm:$0xff]
  %v133 = vld [vmem:[#allocation2 + $0x1a0] sm:$0xff]
  %v134 = vld [vmem:[#allocation2 + $0x1a8] sm:$0xff]
  %v135 = vld [vmem:[#allocation2 + $0x1b0] sm:$0xff]
  %v136 = vld [vmem:[#allocation2 + $0x1b8] sm:$0xff]
  %v137 = vld [vmem:[#allocation2 + $0x1c0] sm:$0xff]
  %v138 = vld [vmem:[#allocation2 + $0x1c8] sm:$0xff]
  %v139 = vld [vmem:[#allocation2 + $0x1d0] sm:$0xff]
  %v140 = vld [vmem:[#allocation2 + $0x1d8] sm:$0xff]
  %v141 = vld [vmem:[#allocation2 + $0x1e0] sm:$0xff]
  %v142 = vld [vmem:[#allocation2 + $0x1e8] sm:$0xff]
  %v143 = vld [vmem:[#allocation2 + $0x1f0] sm:$0xff]
  %v144 = vld [vmem:[#allocation2 + $0x1f8] sm:$0xff]
  %v145 = vld [vmem:[%s0] sm:$0xff]
  %v146 = vld [vmem:[%s0 + $0x8] sm:$0xff]
  %v147 = vld [vmem:[%s0 + $0x10] sm:$0xff]
  %v148 = vld [vmem:[%s0 + $0x18] sm:$0xff]
  %v149 = vld [vmem:[%s0 + $0x20] sm:$0xff]
  %v150 = vld [vmem:[%s0 + $0x28] sm:$0xff]
  %v151 = vld [vmem:[%s0 + $0x30] sm:$0xff]
  %v152 = vld [vmem:[%s0 + $0x38] sm:$0xff]
  %v153 = vld [vmem:[%s0 + $0x40] sm:$0xff]
  %v154 = vld [vmem:[%s0 + $0x48] sm:$0xff]
  %v155 = vld [vmem:[%s0 + $0x50] sm:$0xff]
  %v156 = vld [vmem:[%s0 + $0x58] sm:$0xff]
  %v157 = vld [vmem:[%s0 + $0x60] sm:$0xff]
  %v158 = vld [vmem:[%s0 + $0x68] sm:$0xff]
  %v159 = vld [vmem:[%s0 + $0x70] sm:$0xff]
  %v160 = vld [vmem:[%s0 + $0x78] sm:$0xff]
  %v161 = vld [vmem:[%s0 + $0x80] sm:$0xff]
  %v162 = vld [vmem:[%s0 + $0x88] sm:$0xff]
  %v163 = vld [vmem:[%s0 + $0x90] sm:$0xff]
  %v164 = vld [vmem:[%s0 + $0x98] sm:$0xff]
  %v165 = vld [vmem:[%s0 + $0xa0] sm:$0xff]
  %v166 = vld [vmem:[%s0 + $0xa8] sm:$0xff]
  %v167 = vld [vmem:[%s0 + $0xb0] sm:$0xff]
  %v168 = vld [vmem:[%s0 + $0xb8] sm:$0xff]
  %v169 = vld [vmem:[%s0 + $0xc0] sm:$0xff]
  %v170 = vld [vmem:[%s0 + $0xc8] sm:$0xff]
  %v171 = vld [vmem:[%s0 + $0xd0] sm:$0xff]
  %v172 = vld [vmem:[%s0 + $0xd8] sm:$0xff]
  %v173 = vld [vmem:[%s0 + $0xe0] sm:$0xff]
  %v174 = vld [vmem:[%s0 + $0xe8] sm:$0xff]
  %v175 = vld [vmem:[%s0 + $0xf0] sm:$0xff]
  %v176 = vld [vmem:[%s0 + $0xf8] sm:$0xff]
  %v177 = vld [vmem:[%s0 + $0x100] sm:$0xff]
  %v178 = vld [vmem:[%s0 + $0x108] sm:$0xff]
  %v179 = vld [vmem:[%s0 + $0x110] sm:$0xff]
  %v180 = vld [vmem:[%s0 + $0x118] sm:$0xff]
  %v181 = vld [vmem:[%s0 + $0x120] sm:$0xff]
  %v182 = vld [vmem:[%s0 + $0x128] sm:$0xff]
  %v183 = vld [vmem:[%s0 + $0x130] sm:$0xff]
  %v184 = vld [vmem:[%s0 + $0x138] sm:$0xff]
  %v185 = vld [vmem:[%s0 + $0x140] sm:$0xff]
  %v186 = vld [vmem:[%s0 + $0x148] sm:$0xff]
  %v187 = vld [vmem:[%s0 + $0x150] sm:$0xff]
  %v188 = vld [vmem:[%s0 + $0x158] sm:$0xff]
  %v189 = vld [vmem:[%s0 + $0x160] sm:$0xff]
  %v190 = vld [vmem:[%s0 + $0x168] sm:$0xff]
  %v191 = vld [vmem:[%s0 + $0x170] sm:$0xff]
  %v192 = vld [vmem:[%s0 + $0x178] sm:$0xff]
  %v193 = vld [vmem:[%s0 + $0x180] sm:$0xff]
  %v194 = vld [vmem:[%s0 + $0x188] sm:$0xff]
  %v195 = vld [vmem:[%s0 + $0x190] sm:$0xff]
  %v196 = vld [vmem:[%s0 + $0x198] sm:$0xff]
  %v197 = vld [vmem:[%s0 + $0x1a0] sm:$0xff]
  %v198 = vld [vmem:[%s0 + $0x1a8] sm:$0xff]
  %v199 = vld [vmem:[%s0 + $0x1b0] sm:$0xff]
  %v200 = vld [vmem:[%s0 + $0x1b8] sm:$0xff]
  %v201 = vld [vmem:[%s0 + $0x1c0] sm:$0xff]
  %v202 = vld [vmem:[%s0 + $0x1c8] sm:$0xff]
  %v203 = vld [vmem:[%s0 + $0x1d0] sm:$0xff]
  %v204 = vld [vmem:[%s0 + $0x1d8] sm:$0xff]
  %v205 = vld [vmem:[%s0 + $0x1e0] sm:$0xff]
  %v206 = vld [vmem:[%s0 + $0x1e8] sm:$0xff]
  %v207 = vld [vmem:[%s0 + $0x1f0] sm:$0xff]
  %v208 = vld [vmem:[%s0 + $0x1f8] sm:$0xff]
  %v209 = vld [vmem:[%s1] sm:$0xf]
  %v210 = vld [vmem:[%s1 + $0x4] sm:$0xf]
  %v211 = vld [vmem:[%s1 + $0x8] sm:$0xf]
  %v212 = vld [vmem:[%s1 + $0xc] sm:$0xf]
  %v213 = vld [vmem:[%s1 + $0x10] sm:$0xf]
  %v214 = vld [vmem:[%s1 + $0x14] sm:$0xf]
  %v215 = vld [vmem:[%s1 + $0x18] sm:$0xf]
  %v216 = vld [vmem:[%s1 + $0x1c] sm:$0xf]
  %v217 = vld [vmem:[%s1 + $0x20] sm:$0xf]
  %v218 = vld [vmem:[%s1 + $0x24] sm:$0xf]
  %v219 = vld [vmem:[%s1 + $0x28] sm:$0xf]
  %v220 = vld [vmem:[%s1 + $0x2c] sm:$0xf]
  %v221 = vld [vmem:[%s1 + $0x30] sm:$0xf]
  %v222 = vld [vmem:[%s1 + $0x34] sm:$0xf]
  %v223 = vld [vmem:[%s1 + $0x38] sm:$0xf]
  %v224 = vld [vmem:[%s1 + $0x3c] sm:$0xf]
  %v225 = vld [vmem:[%s1 + $0x40] sm:$0xf]
  %v226 = vld [vmem:[%s1 + $0x44] sm:$0xf]
  %v227 = vld [vmem:[%s1 + $0x48] sm:$0x3]
  %v292 = vunpack.c.l.b16 %v145
  %v293 = vunpack.c.h.b16 %v145
  %v294 = vunpack.c.l.b16 %v146
  %v295 = vunpack.c.h.b16 %v146
  %v296 = vunpack.c.l.b16 %v147
  %v297 = vunpack.c.h.b16 %v147
  %v298 = vunpack.c.l.b16 %v148
  %v299 = vunpack.c.h.b16 %v148
  %v300 = vunpack.c.l.b16 %v149
  %v301 = vunpack.c.h.b16 %v149
  %v302 = vunpack.c.l.b16 %v150
  %v303 = vunpack.c.h.b16 %v150
  %v304 = vunpack.c.l.b16 %v151
  %v305 = vunpack.c.h.b16 %v151
  %v306 = vunpack.c.l.b16 %v152
  %v307 = vunpack.c.h.b16 %v152
  %v308 = vunpack.c.l.b16 %v153
  %v309 = vunpack.c.h.b16 %v153
  %v310 = vunpack.c.l.b16 %v154
  %v311 = vunpack.c.h.b16 %v154
  %v312 = vunpack.c.l.b16 %v155
  %v313 = vunpack.c.h.b16 %v155
  %v314 = vunpack.c.l.b16 %v156
  %v315 = vunpack.c.h.b16 %v156
  %v316 = vunpack.c.l.b16 %v157
  %v317 = vunpack.c.h.b16 %v157
  %v318 = vunpack.c.l.b16 %v158
  %v319 = vunpack.c.h.b16 %v158
  %v320 = vunpack.c.l.b16 %v159
  %v321 = vunpack.c.h.b16 %v159
  %v322 = vunpack.c.l.b16 %v160
  %v323 = vunpack.c.h.b16 %v160
  %v324 = vunpack.c.l.b16 %v161
  %v325 = vunpack.c.h.b16 %v161
  %v326 = vunpack.c.l.b16 %v162
  %v327 = vunpack.c.h.b16 %v162
  %v328 = vunpack.c.l.b16 %v163
  %v329 = vunpack.c.h.b16 %v163
  %v330 = vunpack.c.l.b16 %v164
  %v331 = vunpack.c.h.b16 %v164
  %v332 = vunpack.c.l.b16 %v165
  %v333 = vunpack.c.h.b16 %v165
  %v334 = vunpack.c.l.b16 %v166
  %v335 = vunpack.c.h.b16 %v166
  %v336 = vunpack.c.l.b16 %v167
  %v337 = vunpack.c.h.b16 %v167
  %v338 = vunpack.c.l.b16 %v168
  %v339 = vunpack.c.h.b16 %v168
  %v340 = vunpack.c.l.b16 %v169
  %v341 = vunpack.c.h.b16 %v169
  %v342 = vunpack.c.l.b16 %v170
  %v343 = vunpack.c.h.b16 %v170
  %v344 = vunpack.c.l.b16 %v171
  %v345 = vunpack.c.h.b16 %v171
  %v346 = vunpack.c.l.b16 %v172
  %v347 = vunpack.c.h.b16 %v172
  %v348 = vunpack.c.l.b16 %v173
  %v349 = vunpack.c.h.b16 %v173
  %v350 = vunpack.c.l.b16 %v174
  %v351 = vunpack.c.h.b16 %v174
  %v352 = vunpack.c.l.b16 %v175
  %v353 = vunpack.c.h.b16 %v175
  %v354 = vunpack.c.l.b16 %v176
  %v355 = vunpack.c.h.b16 %v176
  %v356 = vunpack.c.l.b16 %v177
  %v357 = vunpack.c.h.b16 %v177
  %v358 = vunpack.c.l.b16 %v178
  %v359 = vunpack.c.h.b16 %v178
  %v360 = vunpack.c.l.b16 %v179
  %v361 = vunpack.c.h.b16 %v179
  %v362 = vunpack.c.l.b16 %v180
  %v363 = vunpack.c.h.b16 %v180
  %v364 = vunpack.c.l.b16 %v181
  %v365 = vunpack.c.h.b16 %v181
  %v366 = vunpack.c.l.b16 %v182
  %v367 = vunpack.c.h.b16 %v182
  %v368 = vunpack.c.l.b16 %v183
  %v369 = vunpack.c.h.b16 %v183
  %v370 = vunpack.c.l.b16 %v184
  %v371 = vunpack.c.h.b16 %v184
  %v372 = vunpack.c.l.b16 %v185
  %v373 = vunpack.c.h.b16 %v185
  %v374 = vunpack.c.l.b16 %v186
  %v375 = vunpack.c.h.b16 %v186
  %v376 = vunpack.c.l.b16 %v187
  %v377 = vunpack.c.h.b16 %v187
  %v378 = vunpack.c.l.b16 %v188
  %v379 = vunpack.c.h.b16 %v188
  %v380 = vunpack.c.l.b16 %v189
  %v381 = vunpack.c.h.b16 %v189
  %v382 = vunpack.c.l.b16 %v190
  %v383 = vunpack.c.h.b16 %v190
  %v384 = vunpack.c.l.b16 %v191
  %v385 = vunpack.c.h.b16 %v191
  %v386 = vunpack.c.l.b16 %v192
  %v387 = vunpack.c.h.b16 %v192
  %v388 = vunpack.c.l.b16 %v193
  %v389 = vunpack.c.h.b16 %v193
  %v390 = vunpack.c.l.b16 %v194
  %v391 = vunpack.c.h.b16 %v194
  %v392 = vunpack.c.l.b16 %v195
  %v393 = vunpack.c.h.b16 %v195
  %v394 = vunpack.c.l.b16 %v196
  %v395 = vunpack.c.h.b16 %v196
  %v396 = vunpack.c.l.b16 %v197
  %v397 = vunpack.c.h.b16 %v197
  %v398 = vunpack.c.l.b16 %v198
  %v399 = vunpack.c.h.b16 %v198
  %v400 = vunpack.c.l.b16 %v199
  %v401 = vunpack.c.h.b16 %v199
  %v402 = vunpack.c.l.b16 %v200
  %v403 = vunpack.c.h.b16 %v200
  %v404 = vunpack.c.l.b16 %v201
  %v405 = vunpack.c.h.b16 %v201
  %v406 = vunpack.c.l.b16 %v202
  %v407 = vunpack.c.h.b16 %v202
  %v408 = vunpack.c.l.b16 %v203
  %v409 = vunpack.c.h.b16 %v203
  %v410 = vunpack.c.l.b16 %v204
  %v411 = vunpack.c.h.b16 %v204
  %v412 = vunpack.c.l.b16 %v205
  %v413 = vunpack.c.h.b16 %v205
  %v414 = vunpack.c.l.b16 %v206
  %v415 = vunpack.c.h.b16 %v206
  %v416 = vunpack.c.l.b16 %v207
  %v417 = vunpack.c.h.b16 %v207
  %v418 = vunpack.c.l.b16 %v208
  %v419 = vunpack.c.h.b16 %v208
  %v420 = vpack.c.b16 %v294, %v292
  %v421 = vpack.c.b16 %v295, %v293
  %v422 = vpack.c.b16 %v298, %v296
  %v423 = vpack.c.b16 %v299, %v297
  %v424 = vpack.c.b16 %v302, %v300
  %v425 = vpack.c.b16 %v303, %v301
  %v426 = vpack.c.b16 %v306, %v304
  %v427 = vpack.c.b16 %v307, %v305
  %v428 = vpack.c.b16 %v310, %v308
  %v429 = vpack.c.b16 %v311, %v309
  %v430 = vpack.c.b16 %v314, %v312
  %v431 = vpack.c.b16 %v315, %v313
  %v432 = vpack.c.b16 %v318, %v316
  %v433 = vpack.c.b16 %v319, %v317
  %v434 = vpack.c.b16 %v322, %v320
  %v435 = vpack.c.b16 %v323, %v321
  %v436 = vpack.c.b16 %v326, %v324
  %v437 = vpack.c.b16 %v327, %v325
  %v438 = vpack.c.b16 %v330, %v328
  %v439 = vpack.c.b16 %v331, %v329
  %v440 = vpack.c.b16 %v334, %v332
  %v441 = vpack.c.b16 %v335, %v333
  %v442 = vpack.c.b16 %v338, %v336
  %v443 = vpack.c.b16 %v339, %v337
  %v444 = vpack.c.b16 %v342, %v340
  %v445 = vpack.c.b16 %v343, %v341
  %v446 = vpack.c.b16 %v346, %v344
  %v447 = vpack.c.b16 %v347, %v345
  %v448 = vpack.c.b16 %v350, %v348
  %v449 = vpack.c.b16 %v351, %v349
  %v450 = vpack.c.b16 %v354, %v352
  %v451 = vpack.c.b16 %v355, %v353
  %v452 = vpack.c.b16 %v358, %v356
  %v453 = vpack.c.b16 %v359, %v357
  %v454 = vpack.c.b16 %v362, %v360
  %v455 = vpack.c.b16 %v363, %v361
  %v456 = vpack.c.b16 %v366, %v364
  %v457 = vpack.c.b16 %v367, %v365
  %v458 = vpack.c.b16 %v370, %v368
  %v459 = vpack.c.b16 %v371, %v369
  %v460 = vpack.c.b16 %v374, %v372
  %v461 = vpack.c.b16 %v375, %v373
  %v462 = vpack.c.b16 %v378, %v376
  %v463 = vpack.c.b16 %v379, %v377
  %v464 = vpack.c.b16 %v382, %v380
  %v465 = vpack.c.b16 %v383, %v381
  %v466 = vpack.c.b16 %v386, %v384
  %v467 = vpack.c.b16 %v387, %v385
  %v468 = vpack.c.b16 %v390, %v388
  %v469 = vpack.c.b16 %v391, %v389
  %v470 = vpack.c.b16 %v394, %v392
  %v471 = vpack.c.b16 %v395, %v393
  %v472 = vpack.c.b16 %v398, %v396
  %v473 = vpack.c.b16 %v399, %v397
  %v474 = vpack.c.b16 %v402, %v400
  %v475 = vpack.c.b16 %v403, %v401
  %v476 = vpack.c.b16 %v406, %v404
  %v477 = vpack.c.b16 %v407, %v405
  %v478 = vpack.c.b16 %v410, %v408
  %v479 = vpack.c.b16 %v411, %v409
  %v480 = vpack.c.b16 %v414, %v412
  %v481 = vpack.c.b16 %v415, %v413
  %v482 = vpack.c.b16 %v418, %v416
  %v483 = vpack.c.b16 %v419, %v417
  %v535 = vunpack.c.l.b16 %v209
  %v536 = vunpack.c.l.b16 %v210
  %v537 = vunpack.c.l.b16 %v211
  %v538 = vunpack.c.l.b16 %v212
  %v539 = vunpack.c.l.b16 %v213
  %v540 = vunpack.c.l.b16 %v214
  %v541 = vunpack.c.l.b16 %v215
  %v542 = vunpack.c.l.b16 %v216
  %v543 = vunpack.c.l.b16 %v217
  %v544 = vunpack.c.l.b16 %v218
  %v545 = vunpack.c.l.b16 %v219
  %v546 = vunpack.c.l.b16 %v220
  %v547 = vunpack.c.l.b16 %v221
  %v548 = vunpack.c.l.b16 %v222
  %v549 = vunpack.c.l.b16 %v223
  %v550 = vunpack.c.l.b16 %v224
  %v551 = vunpack.c.l.b16 %v225
  %v552 = vunpack.c.l.b16 %v226
  %v553 = vunpack.c.l.b16 %v227
  %v554 = vpack.c.b16 %v536, %v535
  %v555 = vpack.c.b16 %v538, %v537
  %v556 = vpack.c.b16 %v540, %v539
  %v557 = vpack.c.b16 %v542, %v541
  %v558 = vpack.c.b16 %v544, %v543
  %v559 = vpack.c.b16 %v546, %v545
  %v560 = vpack.c.b16 %v548, %v547
  %v561 = vpack.c.b16 %v550, %v549
  %v562 = vpack.c.b16 %v552, %v551
  %v563 = vpack.c.b16 %v553, %v553
  %vm573 = vcmask 154624
  %v575 = vsel %vm573, %v421, 0
  %v578 = vsel %vm573, %v423, 0
  %v581 = vsel %vm573, %v425, 0
  %v584 = vsel %vm573, %v427, 0
  %v587 = vsel %vm573, %v429, 0
  %v590 = vsel %vm573, %v431, 0
  %v593 = vsel %vm573, %v433, 0
  %v596 = vsel %vm573, %v435, 0
  %v599 = vsel %vm573, %v437, 0
  %v602 = vsel %vm573, %v439, 0
  %v605 = vsel %vm573, %v441, 0
  %v608 = vsel %vm573, %v443, 0
  %v611 = vsel %vm573, %v445, 0
  %v614 = vsel %vm573, %v447, 0
  %v617 = vsel %vm573, %v449, 0
  %v620 = vsel %vm573, %v451, 0
  %v623 = vsel %vm573, %v453, 0
  %v626 = vsel %vm573, %v455, 0
  %v629 = vsel %vm573, %v457, 0
  %v632 = vsel %vm573, %v459, 0
  %v635 = vsel %vm573, %v461, 0
  %v638 = vsel %vm573, %v463, 0
  %v641 = vsel %vm573, %v465, 0
  %v644 = vsel %vm573, %v467, 0
  %v647 = vsel %vm573, %v469, 0
  %v650 = vsel %vm573, %v471, 0
  %v653 = vsel %vm573, %v473, 0
  %v656 = vsel %vm573, %v475, 0
  %v659 = vsel %vm573, %v477, 0
  %v662 = vsel %vm573, %v479, 0
  %v665 = vsel %vm573, %v481, 0
  %v668 = vsel %vm573, %v483, 0
  %vm670 = vcmask 1040384
  %vm671 = vcmask 1041408
  %v672 = vsel %vm670, 4294967295, 65535
  %v673 = vsel %vm671, %v672, 0
  %v675 = vand.u32 %v563, %v673
  %677 = vmatprep.subr.bf16.mxu0 0
  %678 = vmatpush1.bf16.msra.mxu0 %v554
  %679 = vmatprep.subr.bf16.mxu0 0
  %680 = vmatpush1.bf16.msra.mxu0 %v555
  %681 = vmatprep.subr.bf16.mxu0 0
  %682 = vmatpush1.bf16.msra.mxu0 %v556
  %683 = vmatprep.subr.bf16.mxu0 0
  %684 = vmatpush1.bf16.msra.mxu0 %v557
  %685 = vmatprep.subr.bf16.mxu0 0
  %686 = vmatpush1.bf16.msra.mxu0 %v558
  %687 = vmatprep.subr.bf16.mxu0 0
  %688 = vmatpush1.bf16.msra.mxu0 %v559
  %689 = vmatprep.subr.bf16.mxu0 0
  %690 = vmatpush1.bf16.msra.mxu0 %v560
  %691 = vmatprep.subr.bf16.mxu0 0
  %692 = vmatpush1.bf16.msra.mxu0 %v561
  %693 = vmatprep.subr.bf16.mxu0 0
  %694 = vmatpush1.bf16.msra.mxu0 %v562
  %695 = vmatprep.subr.bf16.mxu0 0
  %696 = vmatpush1.bf16.msra.mxu0 %v675
  %697 = vmatprep.subr.bf16.mxu0 0
  %698 = vmatpush1.bf16.msra.mxu0 0
  %699 = vmatprep.subr.bf16.mxu0 0
  %700 = vmatpush1.bf16.msra.mxu0 0
  %701 = vmatprep.subr.bf16.mxu0 0
  %702 = vmatpush1.bf16.msra.mxu0 0
  %703 = vmatprep.subr.bf16.mxu0 0
  %704 = vmatpush1.bf16.msra.mxu0 0
  %705 = vmatprep.subr.bf16.mxu0 0
  %706 = vmatpush1.bf16.msra.mxu0 0
  %707 = vmatprep.subr.bf16.mxu0 0
  %708 = vmatpush1.bf16.msra.mxu0 0
  %709 = vmatprep.mubr.bf16.mxu0 %v575
  %710 = vmatmul.mubr.bf16.gmra.mrb[0].mxu0 %v420
  %v711 = vpop.f32.mrb[0].mxu0
  %v712 = vadd.f32 0.0, %v711
  %v713 = vpop.f32.mrb[0].mxu0
  %v714 = vpop.f32.mrb[0].mxu0
  %v715 = vadd.f32 0.0, %v714
  %v716 = vpop.f32.mrb[0].mxu0
  %717 = vmatprep.mubr.bf16.mxu0 %v578
  %718 = vmatmul.mubr.bf16.gmra.mrb[0].mxu0 %v422
  %v719 = vpop.f32.mrb[0].mxu0
  %v720 = vadd.f32 0.0, %v719
  %v721 = vpop.f32.mrb[0].mxu0
  %v722 = vpop.f32.mrb[0].mxu0
  %v723 = vadd.f32 0.0, %v722
  %v724 = vpop.f32.mrb[0].mxu0
  %725 = vmatprep.mubr.bf16.mxu0 %v581
  %726 = vmatmul.mubr.bf16.gmra.mrb[0].mxu0 %v424
  %v727 = vpop.f32.mrb[0].mxu0
  %v728 = vadd.f32 0.0, %v727
  %v729 = vpop.f32.mrb[0].mxu0
  %v730 = vpop.f32.mrb[0].mxu0
  %v731 = vadd.f32 0.0, %v730
  %v732 = vpop.f32.mrb[0].mxu0
  %733 = vmatprep.mubr.bf16.mxu0 %v584
  %734 = vmatmul.mubr.bf16.gmra.mrb[0].mxu0 %v426
  %v735 = vpop.f32.mrb[0].mxu0
  %v736 = vadd.f32 0.0, %v735
  %v737 = vpop.f32.mrb[0].mxu0
  %v738 = vpop.f32.mrb[0].mxu0
  %v739 = vadd.f32 0.0, %v738
  %v740 = vpop.f32.mrb[0].mxu0
  %741 = vmatprep.mubr.bf16.mxu0 %v587
  %742 = vmatmul.mubr.bf16.gmra.mrb[0].mxu0 %v428
  %v743 = vpop.f32.mrb[0].mxu0
  %v744 = vadd.f32 0.0, %v743
  %v745 = vpop.f32.mrb[0].mxu0
  %v746 = vpop.f32.mrb[0].mxu0
  %v747 = vadd.f32 0.0, %v746
  %v748 = vpop.f32.mrb[0].mxu0
  %749 = vmatprep.mubr.bf16.mxu0 %v590
  %750 = vmatmul.mubr.bf16.gmra.mrb[0].mxu0 %v430
  %v751 = vpop.f32.mrb[0].mxu0
  %v752 = vadd.f32 0.0, %v751
  %v753 = vpop.f32.mrb[0].mxu0
  %v754 = vpop.f32.mrb[0].mxu0
  %v755 = vadd.f32 0.0, %v754
  %v756 = vpop.f32.mrb[0].mxu0
  %757 = vmatprep.mubr.bf16.mxu0 %v593
  %758 = vmatmul.mubr.bf16.gmra.mrb[0].mxu0 %v432
  %v759 = vpop.f32.mrb[0].mxu0
  %v760 = vadd.f32 0.0, %v759
  %v761 = vpop.f32.mrb[0].mxu0
  %v762 = vpop.f32.mrb[0].mxu0
  %v763 = vadd.f32 0.0, %v762
  %v764 = vpop.f32.mrb[0].mxu0
  %765 = vmatprep.mubr.bf16.mxu0 %v596
  %766 = vmatmul.mubr.bf16.gmra.mrb[0].mxu0 %v434
  %v767 = vpop.f32.mrb[0].mxu0
  %v768 = vadd.f32 0.0, %v767
  %v769 = vpop.f32.mrb[0].mxu0
  %v770 = vpop.f32.mrb[0].mxu0
  %v771 = vadd.f32 0.0, %v770
  %v772 = vpop.f32.mrb[0].mxu0
  %773 = vmatprep.mubr.bf16.mxu0 %v599
  %774 = vmatmul.mubr.bf16.gmra.mrb[0].mxu0 %v436
  %v775 = vpop.f32.mrb[0].mxu0
  %v776 = vadd.f32 0.0, %v775
  %v777 = vpop.f32.mrb[0].mxu0
  %v778 = vpop.f32.mrb[0].mxu0
  %v779 = vadd.f32 0.0, %v778
  %v780 = vpop.f32.mrb[0].mxu0
  %781 = vmatprep.mubr.bf16.mxu0 %v602
  %782 = vmatmul.mubr.bf16.gmra.mrb[0].mxu0 %v438
  %v783 = vpop.f32.mrb[0].mxu0
  %v784 = vadd.f32 0.0, %v783
  %v785 = vpop.f32.mrb[0].mxu0
  %v786 = vpop.f32.mrb[0].mxu0
  %v787 = vadd.f32 0.0, %v786
  %v788 = vpop.f32.mrb[0].mxu0
  %789 = vmatprep.mubr.bf16.mxu0 %v605
  %790 = vmatmul.mubr.bf16.gmra.mrb[0].mxu0 %v440
  %v791 = vpop.f32.mrb[0].mxu0
  %v792 = vadd.f32 0.0, %v791
  %v793 = vpop.f32.mrb[0].mxu0
  %v794 = vpop.f32.mrb[0].mxu0
  %v795 = vadd.f32 0.0, %v794
  %v796 = vpop.f32.mrb[0].mxu0
  %797 = vmatprep.mubr.bf16.mxu0 %v608
  %798 = vmatmul.mubr.bf16.gmra.mrb[0].mxu0 %v442
  %v799 = vpop.f32.mrb[0].mxu0
  %v800 = vadd.f32 0.0, %v799
  %v801 = vpop.f32.mrb[0].mxu0
  %v802 = vpop.f32.mrb[0].mxu0
  %v803 = vadd.f32 0.0, %v802
  %v804 = vpop.f32.mrb[0].mxu0
  %805 = vmatprep.mubr.bf16.mxu0 %v611
  %806 = vmatmul.mubr.bf16.gmra.mrb[0].mxu0 %v444
  %v807 = vpop.f32.mrb[0].mxu0
  %v808 = vadd.f32 0.0, %v807
  %v809 = vpop.f32.mrb[0].mxu0
  %v810 = vpop.f32.mrb[0].mxu0
  %v811 = vadd.f32 0.0, %v810
  %v812 = vpop.f32.mrb[0].mxu0
  %813 = vmatprep.mubr.bf16.mxu0 %v614
  %814 = vmatmul.mubr.bf16.gmra.mrb[0].mxu0 %v446
  %v815 = vpop.f32.mrb[0].mxu0
  %v816 = vadd.f32 0.0, %v815
  %v817 = vpop.f32.mrb[0].mxu0
  %v818 = vpop.f32.mrb[0].mxu0
  %v819 = vadd.f32 0.0, %v818
  %v820 = vpop.f32.mrb[0].mxu0
  %821 = vmatprep.mubr.bf16.mxu0 %v617
  %822 = vmatmul.mubr.bf16.gmra.mrb[0].mxu0 %v448
  %v823 = vpop.f32.mrb[0].mxu0
  %v824 = vadd.f32 0.0, %v823
  %v825 = vpop.f32.mrb[0].mxu0
  %v826 = vpop.f32.mrb[0].mxu0
  %v827 = vadd.f32 0.0, %v826
  %v828 = vpop.f32.mrb[0].mxu0
  %829 = vmatprep.mubr.bf16.mxu0 %v620
  %830 = vmatmul.mubr.bf16.gmra.mrb[0].mxu0 %v450
  %v831 = vpop.f32.mrb[0].mxu0
  %v832 = vadd.f32 0.0, %v831
  %v833 = vpop.f32.mrb[0].mxu0
  %v834 = vpop.f32.mrb[0].mxu0
  %v835 = vadd.f32 0.0, %v834
  %v836 = vpop.f32.mrb[0].mxu0
  %837 = vmatprep.mubr.bf16.mxu0 %v623
  %838 = vmatmul.mubr.bf16.gmra.mrb[0].mxu0 %v452
  %v839 = vpop.f32.mrb[0].mxu0
  %v840 = vadd.f32 0.0, %v839
  %v841 = vpop.f32.mrb[0].mxu0
  %v842 = vpop.f32.mrb[0].mxu0
  %v843 = vadd.f32 0.0, %v842
  %v844 = vpop.f32.mrb[0].mxu0
  %845 = vmatprep.mubr.bf16.mxu0 %v626
  %846 = vmatmul.mubr.bf16.gmra.mrb[0].mxu0 %v454
  %v847 = vpop.f32.mrb[0].mxu0
  %v848 = vadd.f32 0.0, %v847
  %v849 = vpop.f32.mrb[0].mxu0
  %v850 = vpop.f32.mrb[0].mxu0
  %v851 = vadd.f32 0.0, %v850
  %v852 = vpop.f32.mrb[0].mxu0
  %853 = vmatprep.mubr.bf16.mxu0 %v629
  %854 = vmatmul.mubr.bf16.gmra.mrb[0].mxu0 %v456
  %v855 = vpop.f32.mrb[0].mxu0
  %v856 = vadd.f32 0.0, %v855
  %v857 = vpop.f32.mrb[0].mxu0
  %v858 = vpop.f32.mrb[0].mxu0
  %v859 = vadd.f32 0.0, %v858
  %v860 = vpop.f32.mrb[0].mxu0
  %861 = vmatprep.mubr.bf16.mxu0 %v632
  %862 = vmatmul.mubr.bf16.gmra.mrb[0].mxu0 %v458
  %v863 = vpop.f32.mrb[0].mxu0
  %v864 = vadd.f32 0.0, %v863
  %v865 = vpop.f32.mrb[0].mxu0
  %v866 = vpop.f32.mrb[0].mxu0
  %v867 = vadd.f32 0.0, %v866
  %v868 = vpop.f32.mrb[0].mxu0
  %869 = vmatprep.mubr.bf16.mxu0 %v635
  %870 = vmatmul.mubr.bf16.gmra.mrb[0].mxu0 %v460
  %v871 = vpop.f32.mrb[0].mxu0
  %v872 = vadd.f32 0.0, %v871
  %v873 = vpop.f32.mrb[0].mxu0
  %v874 = vpop.f32.mrb[0].mxu0
  %v875 = vadd.f32 0.0, %v874
  %v876 = vpop.f32.mrb[0].mxu0
  %877 = vmatprep.mubr.bf16.mxu0 %v638
  %878 = vmatmul.mubr.bf16.gmra.mrb[0].mxu0 %v462
  %v879 = vpop.f32.mrb[0].mxu0
  %v880 = vadd.f32 0.0, %v879
  %v881 = vpop.f32.mrb[0].mxu0
  %v882 = vpop.f32.mrb[0].mxu0
  %v883 = vadd.f32 0.0, %v882
  %v884 = vpop.f32.mrb[0].mxu0
  %885 = vmatprep.mubr.bf16.mxu0 %v641
  %886 = vmatmul.mubr.bf16.gmra.mrb[0].mxu0 %v464
  %v887 = vpop.f32.mrb[0].mxu0
  %v888 = vadd.f32 0.0, %v887
  %v889 = vpop.f32.mrb[0].mxu0
  %v890 = vpop.f32.mrb[0].mxu0
  %v891 = vadd.f32 0.0, %v890
  %v892 = vpop.f32.mrb[0].mxu0
  %893 = vmatprep.mubr.bf16.mxu0 %v644
  %894 = vmatmul.mubr.bf16.gmra.mrb[0].mxu0 %v466
  %v895 = vpop.f32.mrb[0].mxu0
  %v896 = vadd.f32 0.0, %v895
  %v897 = vpop.f32.mrb[0].mxu0
  %v898 = vpop.f32.mrb[0].mxu0
  %v899 = vadd.f32 0.0, %v898
  %v900 = vpop.f32.mrb[0].mxu0
  %901 = vmatprep.mubr.bf16.mxu0 %v647
  %902 = vmatmul.mubr.bf16.gmra.mrb[0].mxu0 %v468
  %v903 = vpop.f32.mrb[0].mxu0
  %v904 = vadd.f32 0.0, %v903
  %v905 = vpop.f32.mrb[0].mxu0
  %v906 = vpop.f32.mrb[0].mxu0
  %v907 = vadd.f32 0.0, %v906
  %v908 = vpop.f32.mrb[0].mxu0
  %909 = vmatprep.mubr.bf16.mxu0 %v650
  %910 = vmatmul.mubr.bf16.gmra.mrb[0].mxu0 %v470
  %v911 = vpop.f32.mrb[0].mxu0
  %v912 = vadd.f32 0.0, %v911
  %v913 = vpop.f32.mrb[0].mxu0
  %v914 = vpop.f32.mrb[0].mxu0
  %v915 = vadd.f32 0.0, %v914
  %v916 = vpop.f32.mrb[0].mxu0
  %917 = vmatprep.mubr.bf16.mxu0 %v653
  %918 = vmatmul.mubr.bf16.gmra.mrb[0].mxu0 %v472
  %v919 = vpop.f32.mrb[0].mxu0
  %v920 = vadd.f32 0.0, %v919
  %v921 = vpop.f32.mrb[0].mxu0
  %v922 = vpop.f32.mrb[0].mxu0
  %v923 = vadd.f32 0.0, %v922
  %v924 = vpop.f32.mrb[0].mxu0
  %925 = vmatprep.mubr.bf16.mxu0 %v656
  %926 = vmatmul.mubr.bf16.gmra.mrb[0].mxu0 %v474
  %v927 = vpop.f32.mrb[0].mxu0
  %v928 = vadd.f32 0.0, %v927
  %v929 = vpop.f32.mrb[0].mxu0
  %v930 = vpop.f32.mrb[0].mxu0
  %v931 = vadd.f32 0.0, %v930
  %v932 = vpop.f32.mrb[0].mxu0
  %933 = vmatprep.mubr.bf16.mxu0 %v659
  %934 = vmatmul.mubr.bf16.gmra.mrb[0].mxu0 %v476
  %v935 = vpop.f32.mrb[0].mxu0
  %v936 = vadd.f32 0.0, %v935
  %v937 = vpop.f32.mrb[0].mxu0
  %v938 = vpop.f32.mrb[0].mxu0
  %v939 = vadd.f32 0.0, %v938
  %v940 = vpop.f32.mrb[0].mxu0
  %941 = vmatprep.mubr.bf16.mxu0 %v662
  %942 = vmatmul.mubr.bf16.gmra.mrb[0].mxu0 %v478
  %v943 = vpop.f32.mrb[0].mxu0
  %v944 = vadd.f32 0.0, %v943
  %v945 = vpop.f32.mrb[0].mxu0
  %v946 = vpop.f32.mrb[0].mxu0
  %v947 = vadd.f32 0.0, %v946
  %v948 = vpop.f32.mrb[0].mxu0
  %949 = vmatprep.mubr.bf16.mxu0 %v665
  %950 = vmatmul.mubr.bf16.gmra.mrb[0].mxu0 %v480
  %v951 = vpop.f32.mrb[0].mxu0
  %v952 = vadd.f32 0.0, %v951
  %v953 = vpop.f32.mrb[0].mxu0
  %v954 = vpop.f32.mrb[0].mxu0
  %v955 = vadd.f32 0.0, %v954
  %v956 = vpop.f32.mrb[0].mxu0
  %957 = vmatprep.mubr.bf16.mxu0 %v668
  %958 = vmatmul.mubr.bf16.gmra.mrb[0].mxu0 %v482
  %v959 = vpop.f32.mrb[0].mxu0
  %v960 = vadd.f32 0.0, %v959
  %v961 = vpop.f32.mrb[0].mxu0
  %v962 = vpop.f32.mrb[0].mxu0
  %v963 = vadd.f32 0.0, %v962
  %v964 = vpop.f32.mrb[0].mxu0
  %965 = vdwg.mxu0
  %v966 = vadd.f32 %v81, %v712
  %v967 = vadd.f32 %v82, %v715
  %v968 = vadd.f32 %v83, %v720
  %v969 = vadd.f32 %v84, %v723
  %v970 = vadd.f32 %v85, %v728
  %v971 = vadd.f32 %v86, %v731
  %v972 = vadd.f32 %v87, %v736
  %v973 = vadd.f32 %v88, %v739
  %v974 = vadd.f32 %v89, %v744
  %v975 = vadd.f32 %v90, %v747
  %v976 = vadd.f32 %v91, %v752
  %v977 = vadd.f32 %v92, %v755
  %v978 = vadd.f32 %v93, %v760
  %v979 = vadd.f32 %v94, %v763
  %v980 = vadd.f32 %v95, %v768
  %v981 = vadd.f32 %v96, %v771
  %v982 = vadd.f32 %v97, %v776
  %v983 = vadd.f32 %v98, %v779
  %v984 = vadd.f32 %v99, %v784
  %v985 = vadd.f32 %v100, %v787
  %v986 = vadd.f32 %v101, %v792
  %v987 = vadd.f32 %v102, %v795
  %v988 = vadd.f32 %v103, %v800
  %v989 = vadd.f32 %v104, %v803
  %v990 = vadd.f32 %v105, %v808
  %v991 = vadd.f32 %v106, %v811
  %v992 = vadd.f32 %v107, %v816
  %v993 = vadd.f32 %v108, %v819
  %v994 = vadd.f32 %v109, %v824
  %v995 = vadd.f32 %v110, %v827
  %v996 = vadd.f32 %v111, %v832
  %v997 = vadd.f32 %v112, %v835
  %v998 = vadd.f32 %v113, %v840
  %v999 = vadd.f32 %v114, %v843
  %v1000 = vadd.f32 %v115, %v848
  %v1001 = vadd.f32 %v116, %v851
  %v1002 = vadd.f32 %v117, %v856
  %v1003 = vadd.f32 %v118, %v859
  %v1004 = vadd.f32 %v119, %v864
  %v1005 = vadd.f32 %v120, %v867
  %v1006 = vadd.f32 %v121, %v872
  %v1007 = vadd.f32 %v122, %v875
  %v1008 = vadd.f32 %v123, %v880
  %v1009 = vadd.f32 %v124, %v883
  %v1010 = vadd.f32 %v125, %v888
  %v1011 = vadd.f32 %v126, %v891
  %v1012 = vadd.f32 %v127, %v896
  %v1013 = vadd.f32 %v128, %v899
  %v1014 = vadd.f32 %v129, %v904
  %v1015 = vadd.f32 %v130, %v907
  %v1016 = vadd.f32 %v131, %v912
  %v1017 = vadd.f32 %v132, %v915
  %v1018 = vadd.f32 %v133, %v920
  %v1019 = vadd.f32 %v134, %v923
  %v1020 = vadd.f32 %v135, %v928
  %v1021 = vadd.f32 %v136, %v931
  %v1022 = vadd.f32 %v137, %v936
  %v1023 = vadd.f32 %v138, %v939
  %v1024 = vadd.f32 %v139, %v944
  %v1025 = vadd.f32 %v140, %v947
  %v1026 = vadd.f32 %v141, %v952
  %v1027 = vadd.f32 %v142, %v955
  %v1028 = vadd.f32 %v143, %v960
  %v1029 = vadd.f32 %v144, %v963
  %vm1030 = vcmask 261120
  %1031 = vst.msk [vmem:[#allocation2] sm:$0xff] %vm1030, %v966
  %1032 = vst.msk [vmem:[#allocation2 + $0x8] sm:$0xff] %vm1030, %v967
  %1033 = vst.msk [vmem:[#allocation2 + $0x10] sm:$0xff] %vm1030, %v968
  %1034 = vst.msk [vmem:[#allocation2 + $0x18] sm:$0xff] %vm1030, %v969
  %1035 = vst.msk [vmem:[#allocation2 + $0x20] sm:$0xff] %vm1030, %v970
  %1036 = vst.msk [vmem:[#allocation2 + $0x28] sm:$0xff] %vm1030, %v971
  %1037 = vst.msk [vmem:[#allocation2 + $0x30] sm:$0xff] %vm1030, %v972
  %1038 = vst.msk [vmem:[#allocation2 + $0x38] sm:$0xff] %vm1030, %v973
  %1039 = vst.msk [vmem:[#allocation2 + $0x40] sm:$0xff] %vm1030, %v974
  %1040 = vst.msk [vmem:[#allocation2 + $0x48] sm:$0xff] %vm1030, %v975
  %1041 = vst.msk [vmem:[#allocation2 + $0x50] sm:$0xff] %vm1030, %v976
  %1042 = vst.msk [vmem:[#allocation2 + $0x58] sm:$0xff] %vm1030, %v977
  %1043 = vst.msk [vmem:[#allocation2 + $0x60] sm:$0xff] %vm1030, %v978
  %1044 = vst.msk [vmem:[#allocation2 + $0x68] sm:$0xff] %vm1030, %v979
  %1045 = vst.msk [vmem:[#allocation2 + $0x70] sm:$0xff] %vm1030, %v980
  %1046 = vst.msk [vmem:[#allocation2 + $0x78] sm:$0xff] %vm1030, %v981
  %1047 = vst.msk [vmem:[#allocation2 + $0x80] sm:$0xff] %vm1030, %v982
  %1048 = vst.msk [vmem:[#allocation2 + $0x88] sm:$0xff] %vm1030, %v983
  %1049 = vst.msk [vmem:[#allocation2 + $0x90] sm:$0xff] %vm1030, %v984
  %1050 = vst.msk [vmem:[#allocation2 + $0x98] sm:$0xff] %vm1030, %v985
  %1051 = vst.msk [vmem:[#allocation2 + $0xa0] sm:$0xff] %vm1030, %v986
  %1052 = vst.msk [vmem:[#allocation2 + $0xa8] sm:$0xff] %vm1030, %v987
  %1053 = vst.msk [vmem:[#allocation2 + $0xb0] sm:$0xff] %vm1030, %v988
  %1054 = vst.msk [vmem:[#allocation2 + $0xb8] sm:$0xff] %vm1030, %v989
  %1055 = vst.msk [vmem:[#allocation2 + $0xc0] sm:$0xff] %vm1030, %v990
  %1056 = vst.msk [vmem:[#allocation2 + $0xc8] sm:$0xff] %vm1030, %v991
  %1057 = vst.msk [vmem:[#allocation2 + $0xd0] sm:$0xff] %vm1030, %v992
  %1058 = vst.msk [vmem:[#allocation2 + $0xd8] sm:$0xff] %vm1030, %v993
  %1059 = vst.msk [vmem:[#allocation2 + $0xe0] sm:$0xff] %vm1030, %v994
  %1060 = vst.msk [vmem:[#allocation2 + $0xe8] sm:$0xff] %vm1030, %v995
  %1061 = vst.msk [vmem:[#allocation2 + $0xf0] sm:$0xff] %vm1030, %v996
  %1062 = vst.msk [vmem:[#allocation2 + $0xf8] sm:$0xff] %vm1030, %v997
  %1063 = vst.msk [vmem:[#allocation2 + $0x100] sm:$0xff] %vm1030, %v998
  %1064 = vst.msk [vmem:[#allocation2 + $0x108] sm:$0xff] %vm1030, %v999
  %1065 = vst.msk [vmem:[#allocation2 + $0x110] sm:$0xff] %vm1030, %v1000
  %1066 = vst.msk [vmem:[#allocation2 + $0x118] sm:$0xff] %vm1030, %v1001
  %1067 = vst.msk [vmem:[#allocation2 + $0x120] sm:$0xff] %vm1030, %v1002
  %1068 = vst.msk [vmem:[#allocation2 + $0x128] sm:$0xff] %vm1030, %v1003
  %1069 = vst.msk [vmem:[#allocation2 + $0x130] sm:$0xff] %vm1030, %v1004
  %1070 = vst.msk [vmem:[#allocation2 + $0x138] sm:$0xff] %vm1030, %v1005
  %1071 = vst.msk [vmem:[#allocation2 + $0x140] sm:$0xff] %vm1030, %v1006
  %1072 = vst.msk [vmem:[#allocation2 + $0x148] sm:$0xff] %vm1030, %v1007
  %1073 = vst.msk [vmem:[#allocation2 + $0x150] sm:$0xff] %vm1030, %v1008
  %1074 = vst.msk [vmem:[#allocation2 + $0x158] sm:$0xff] %vm1030, %v1009
  %1075 = vst.msk [vmem:[#allocation2 + $0x160] sm:$0xff] %vm1030, %v1010
  %1076 = vst.msk [vmem:[#allocation2 + $0x168] sm:$0xff] %vm1030, %v1011
  %1077 = vst.msk [vmem:[#allocation2 + $0x170] sm:$0xff] %vm1030, %v1012
  %1078 = vst.msk [vmem:[#allocation2 + $0x178] sm:$0xff] %vm1030, %v1013
  %1079 = vst.msk [vmem:[#allocation2 + $0x180] sm:$0xff] %vm1030, %v1014
  %1080 = vst.msk [vmem:[#allocation2 + $0x188] sm:$0xff] %vm1030, %v1015
  %1081 = vst.msk [vmem:[#allocation2 + $0x190] sm:$0xff] %vm1030, %v1016
  %1082 = vst.msk [vmem:[#allocation2 + $0x198] sm:$0xff] %vm1030, %v1017
  %1083 = vst.msk [vmem:[#allocation2 + $0x1a0] sm:$0xff] %vm1030, %v1018
  %1084 = vst.msk [vmem:[#allocation2 + $0x1a8] sm:$0xff] %vm1030, %v1019
  %1085 = vst.msk [vmem:[#allocation2 + $0x1b0] sm:$0xff] %vm1030, %v1020
  %1086 = vst.msk [vmem:[#allocation2 + $0x1b8] sm:$0xff] %vm1030, %v1021
  %1087 = vst.msk [vmem:[#allocation2 + $0x1c0] sm:$0xff] %vm1030, %v1022
  %1088 = vst.msk [vmem:[#allocation2 + $0x1c8] sm:$0xff] %vm1030, %v1023
  %1089 = vst.msk [vmem:[#allocation2 + $0x1d0] sm:$0xff] %vm1030, %v1024
  %1090 = vst.msk [vmem:[#allocation2 + $0x1d8] sm:$0xff] %vm1030, %v1025
  %1091 = vst.msk [vmem:[#allocation2 + $0x1e0] sm:$0xff] %vm1030, %v1026
  %1092 = vst.msk [vmem:[#allocation2 + $0x1e8] sm:$0xff] %vm1030, %v1027
  %1093 = vst.msk [vmem:[#allocation2 + $0x1f0] sm:$0xff] %vm1030, %v1028
  %1094 = vst.msk [vmem:[#allocation2 + $0x1f8] sm:$0xff] %vm1030, %v1029
  // Predicated region
  $region14: #{densenet_forward.21} parent=0 // pred_check
    %p1095 = pneg %p12
  $region15: #{densenet_forward.21} parent=0 // pred_check_branch
    %1097 = sbr.rel (%p1095) target = $region17
  $region16: #{densenet_forward.21} parent=0 // pred_region
    %v1098 = vld [vmem:[#allocation2] sm:$0xff]
    %v1099 = vld [vmem:[#allocation2 + $0x8] sm:$0xff]
    %v1100 = vld [vmem:[#allocation2 + $0x10] sm:$0xff]
    %v1101 = vld [vmem:[#allocation2 + $0x18] sm:$0xff]
    %v1102 = vld [vmem:[#allocation2 + $0x20] sm:$0xff]
    %v1103 = vld [vmem:[#allocation2 + $0x28] sm:$0xff]
    %v1104 = vld [vmem:[#allocation2 + $0x30] sm:$0xff]
    %v1105 = vld [vmem:[#allocation2 + $0x38] sm:$0xff]
    %v1106 = vld [vmem:[#allocation2 + $0x40] sm:$0xff]
    %v1107 = vld [vmem:[#allocation2 + $0x48] sm:$0xff]
    %v1108 = vld [vmem:[#allocation2 + $0x50] sm:$0xff]
    %v1109 = vld [vmem:[#allocation2 + $0x58] sm:$0xff]
    %v1110 = vld [vmem:[#allocation2 + $0x60] sm:$0xff]
    %v1111 = vld [vmem:[#allocation2 + $0x68] sm:$0xff]
    %v1112 = vld [vmem:[#allocation2 + $0x70] sm:$0xff]
    %v1113 = vld [vmem:[#allocation2 + $0x78] sm:$0xff]
    %v1114 = vld [vmem:[#allocation2 + $0x80] sm:$0xff]
    %v1115 = vld [vmem:[#allocation2 + $0x88] sm:$0xff]
    %v1116 = vld [vmem:[#allocation2 + $0x90] sm:$0xff]
    %v1117 = vld [vmem:[#allocation2 + $0x98] sm:$0xff]
    %v1118 = vld [vmem:[#allocation2 + $0xa0] sm:$0xff]
    %v1119 = vld [vmem:[#allocation2 + $0xa8] sm:$0xff]
    %v1120 = vld [vmem:[#allocation2 + $0xb0] sm:$0xff]
    %v1121 = vld [vmem:[#allocation2 + $0xb8] sm:$0xff]
    %v1122 = vld [vmem:[#allocation2 + $0xc0] sm:$0xff]
    %v1123 = vld [vmem:[#allocation2 + $0xc8] sm:$0xff]
    %v1124 = vld [vmem:[#allocation2 + $0xd0] sm:$0xff]
    %v1125 = vld [vmem:[#allocation2 + $0xd8] sm:$0xff]
    %v1126 = vld [vmem:[#allocation2 + $0xe0] sm:$0xff]
    %v1127 = vld [vmem:[#allocation2 + $0xe8] sm:$0xff]
    %v1128 = vld [vmem:[#allocation2 + $0xf0] sm:$0xff]
    %v1129 = vld [vmem:[#allocation2 + $0xf8] sm:$0xff]
    %v1130 = vld [vmem:[#allocation2 + $0x100] sm:$0xff]
    %v1131 = vld [vmem:[#allocation2 + $0x108] sm:$0xff]
    %v1132 = vld [vmem:[#allocation2 + $0x110] sm:$0xff]
    %v1133 = vld [vmem:[#allocation2 + $0x118] sm:$0xff]
    %v1134 = vld [vmem:[#allocation2 + $0x120] sm:$0xff]
    %v1135 = vld [vmem:[#allocation2 + $0x128] sm:$0xff]
    %v1136 = vld [vmem:[#allocation2 + $0x130] sm:$0xff]
    %v1137 = vld [vmem:[#allocation2 + $0x138] sm:$0xff]
    %v1138 = vld [vmem:[#allocation2 + $0x140] sm:$0xff]
    %v1139 = vld [vmem:[#allocation2 + $0x148] sm:$0xff]
    %v1140 = vld [vmem:[#allocation2 + $0x150] sm:$0xff]
    %v1141 = vld [vmem:[#allocation2 + $0x158] sm:$0xff]
    %v1142 = vld [vmem:[#allocation2 + $0x160] sm:$0xff]
    %v1143 = vld [vmem:[#allocation2 + $0x168] sm:$0xff]
    %v1144 = vld [vmem:[#allocation2 + $0x170] sm:$0xff]
    %v1145 = vld [vmem:[#allocation2 + $0x178] sm:$0xff]
    %v1146 = vld [vmem:[#allocation2 + $0x180] sm:$0xff]
    %v1147 = vld [vmem:[#allocation2 + $0x188] sm:$0xff]
    %v1148 = vld [vmem:[#allocation2 + $0x190] sm:$0xff]
    %v1149 = vld [vmem:[#allocation2 + $0x198] sm:$0xff]
    %v1150 = vld [vmem:[#allocation2 + $0x1a0] sm:$0xff]
    %v1151 = vld [vmem:[#allocation2 + $0x1a8] sm:$0xff]
    %v1152 = vld [vmem:[#allocation2 + $0x1b0] sm:$0xff]
    %v1153 = vld [vmem:[#allocation2 + $0x1b8] sm:$0xff]
    %v1154 = vld [vmem:[#allocation2 + $0x1c0] sm:$0xff]
    %v1155 = vld [vmem:[#allocation2 + $0x1c8] sm:$0xff]
    %v1156 = vld [vmem:[#allocation2 + $0x1d0] sm:$0xff]
    %v1157 = vld [vmem:[#allocation2 + $0x1d8] sm:$0xff]
    %v1158 = vld [vmem:[#allocation2 + $0x1e0] sm:$0xff]
    %v1159 = vld [vmem:[#allocation2 + $0x1e8] sm:$0xff]
    %v1160 = vld [vmem:[#allocation2 + $0x1f0] sm:$0xff]
    %v1161 = vld [vmem:[#allocation2 + $0x1f8] sm:$0xff]
    %v1162 = vpack.c.bf16 %v1099, %v1098
    %v1163 = vpack.c.bf16 %v1101, %v1100
    %v1164 = vpack.c.bf16 %v1103, %v1102
    %v1165 = vpack.c.bf16 %v1105, %v1104
    %v1166 = vpack.c.bf16 %v1107, %v1106
    %v1167 = vpack.c.bf16 %v1109, %v1108
    %v1168 = vpack.c.bf16 %v1111, %v1110
    %v1169 = vpack.c.bf16 %v1113, %v1112
    %v1170 = vpack.c.bf16 %v1115, %v1114
    %v1171 = vpack.c.bf16 %v1117, %v1116
    %v1172 = vpack.c.bf16 %v1119, %v1118
    %v1173 = vpack.c.bf16 %v1121, %v1120
    %v1174 = vpack.c.bf16 %v1123, %v1122
    %v1175 = vpack.c.bf16 %v1125, %v1124
    %v1176 = vpack.c.bf16 %v1127, %v1126
    %v1177 = vpack.c.bf16 %v1129, %v1128
    %v1178 = vpack.c.bf16 %v1131, %v1130
    %v1179 = vpack.c.bf16 %v1133, %v1132
    %v1180 = vpack.c.bf16 %v1135, %v1134
    %v1181 = vpack.c.bf16 %v1137, %v1136
    %v1182 = vpack.c.bf16 %v1139, %v1138
    %v1183 = vpack.c.bf16 %v1141, %v1140
    %v1184 = vpack.c.bf16 %v1143, %v1142
    %v1185 = vpack.c.bf16 %v1145, %v1144
    %v1186 = vpack.c.bf16 %v1147, %v1146
    %v1187 = vpack.c.bf16 %v1149, %v1148
    %v1188 = vpack.c.bf16 %v1151, %v1150
    %v1189 = vpack.c.bf16 %v1153, %v1152
    %v1190 = vpack.c.bf16 %v1155, %v1154
    %v1191 = vpack.c.bf16 %v1157, %v1156
    %v1192 = vpack.c.bf16 %v1159, %v1158
    %v1193 = vpack.c.bf16 %v1161, %v1160
    %v1226 = vunpack.c.l.b16 %v1162
    %v1227 = vunpack.c.h.b16 %v1162
    %v1228 = vunpack.c.l.b16 %v1163
    %v1229 = vunpack.c.h.b16 %v1163
    %v1230 = vunpack.c.l.b16 %v1164
    %v1231 = vunpack.c.h.b16 %v1164
    %v1232 = vunpack.c.l.b16 %v1165
    %v1233 = vunpack.c.h.b16 %v1165
    %v1234 = vunpack.c.l.b16 %v1166
    %v1235 = vunpack.c.h.b16 %v1166
    %v1236 = vunpack.c.l.b16 %v1167
    %v1237 = vunpack.c.h.b16 %v1167
    %v1238 = vunpack.c.l.b16 %v1168
    %v1239 = vunpack.c.h.b16 %v1168
    %v1240 = vunpack.c.l.b16 %v1169
    %v1241 = vunpack.c.h.b16 %v1169
    %v1242 = vunpack.c.l.b16 %v1170
    %v1243 = vunpack.c.h.b16 %v1170
    %v1244 = vunpack.c.l.b16 %v1171
    %v1245 = vunpack.c.h.b16 %v1171
    %v1246 = vunpack.c.l.b16 %v1172
    %v1247 = vunpack.c.h.b16 %v1172
    %v1248 = vunpack.c.l.b16 %v1173
    %v1249 = vunpack.c.h.b16 %v1173
    %v1250 = vunpack.c.l.b16 %v1174
    %v1251 = vunpack.c.h.b16 %v1174
    %v1252 = vunpack.c.l.b16 %v1175
    %v1253 = vunpack.c.h.b16 %v1175
    %v1254 = vunpack.c.l.b16 %v1176
    %v1255 = vunpack.c.h.b16 %v1176
    %v1256 = vunpack.c.l.b16 %v1177
    %v1257 = vunpack.c.h.b16 %v1177
    %v1258 = vunpack.c.l.b16 %v1178
    %v1259 = vunpack.c.h.b16 %v1178
    %v1260 = vunpack.c.l.b16 %v1179
    %v1261 = vunpack.c.h.b16 %v1179
    %v1262 = vunpack.c.l.b16 %v1180
    %v1263 = vunpack.c.h.b16 %v1180
    %v1264 = vunpack.c.l.b16 %v1181
    %v1265 = vunpack.c.h.b16 %v1181
    %v1266 = vunpack.c.l.b16 %v1182
    %v1267 = vunpack.c.h.b16 %v1182
    %v1268 = vunpack.c.l.b16 %v1183
    %v1269 = vunpack.c.h.b16 %v1183
    %v1270 = vunpack.c.l.b16 %v1184
    %v1271 = vunpack.c.h.b16 %v1184
    %v1272 = vunpack.c.l.b16 %v1185
    %v1273 = vunpack.c.h.b16 %v1185
    %v1274 = vunpack.c.l.b16 %v1186
    %v1275 = vunpack.c.h.b16 %v1186
    %v1276 = vunpack.c.l.b16 %v1187
    %v1277 = vunpack.c.h.b16 %v1187
    %v1278 = vunpack.c.l.b16 %v1188
    %v1279 = vunpack.c.h.b16 %v1188
    %v1280 = vunpack.c.l.b16 %v1189
    %v1281 = vunpack.c.h.b16 %v1189
    %v1282 = vunpack.c.l.b16 %v1190
    %v1283 = vunpack.c.h.b16 %v1190
    %v1284 = vunpack.c.l.b16 %v1191
    %v1285 = vunpack.c.h.b16 %v1191
    %v1286 = vunpack.c.l.b16 %v1192
    %v1287 = vunpack.c.h.b16 %v1192
    %v1288 = vunpack.c.l.b16 %v1193
    %v1289 = vunpack.c.h.b16 %v1193
    %v1290 = vpack.c.b16 %v1226, %v1226
    %v1291 = vpack.c.b16 %v1227, %v1227
    %v1292 = vpack.c.b16 %v1228, %v1228
    %v1293 = vpack.c.b16 %v1229, %v1229
    %v1294 = vpack.c.b16 %v1230, %v1230
    %v1295 = vpack.c.b16 %v1231, %v1231
    %v1296 = vpack.c.b16 %v1232, %v1232
    %v1297 = vpack.c.b16 %v1233, %v1233
    %v1298 = vpack.c.b16 %v1234, %v1234
    %v1299 = vpack.c.b16 %v1235, %v1235
    %v1300 = vpack.c.b16 %v1236, %v1236
    %v1301 = vpack.c.b16 %v1237, %v1237
    %v1302 = vpack.c.b16 %v1238, %v1238
    %v1303 = vpack.c.b16 %v1239, %v1239
    %v1304 = vpack.c.b16 %v1240, %v1240
    %v1305 = vpack.c.b16 %v1241, %v1241
    %v1306 = vpack.c.b16 %v1242, %v1242
    %v1307 = vpack.c.b16 %v1243, %v1243
    %v1308 = vpack.c.b16 %v1244, %v1244
    %v1309 = vpack.c.b16 %v1245, %v1245
    %v1310 = vpack.c.b16 %v1246, %v1246
    %v1311 = vpack.c.b16 %v1247, %v1247
    %v1312 = vpack.c.b16 %v1248, %v1248
    %v1313 = vpack.c.b16 %v1249, %v1249
    %v1314 = vpack.c.b16 %v1250, %v1250
    %v1315 = vpack.c.b16 %v1251, %v1251
    %v1316 = vpack.c.b16 %v1252, %v1252
    %v1317 = vpack.c.b16 %v1253, %v1253
    %v1318 = vpack.c.b16 %v1254, %v1254
    %v1319 = vpack.c.b16 %v1255, %v1255
    %v1320 = vpack.c.b16 %v1256, %v1256
    %v1321 = vpack.c.b16 %v1257, %v1257
    %v1322 = vpack.c.b16 %v1258, %v1258
    %v1323 = vpack.c.b16 %v1259, %v1259
    %v1324 = vpack.c.b16 %v1260, %v1260
    %v1325 = vpack.c.b16 %v1261, %v1261
    %v1326 = vpack.c.b16 %v1262, %v1262
    %v1327 = vpack.c.b16 %v1263, %v1263
    %v1328 = vpack.c.b16 %v1264, %v1264
    %v1329 = vpack.c.b16 %v1265, %v1265
    %v1330 = vpack.c.b16 %v1266, %v1266
    %v1331 = vpack.c.b16 %v1267, %v1267
    %v1332 = vpack.c.b16 %v1268, %v1268
    %v1333 = vpack.c.b16 %v1269, %v1269
    %v1334 = vpack.c.b16 %v1270, %v1270
    %v1335 = vpack.c.b16 %v1271, %v1271
    %v1336 = vpack.c.b16 %v1272, %v1272
    %v1337 = vpack.c.b16 %v1273, %v1273
    %v1338 = vpack.c.b16 %v1274, %v1274
    %v1339 = vpack.c.b16 %v1275, %v1275
    %v1340 = vpack.c.b16 %v1276, %v1276
    %v1341 = vpack.c.b16 %v1277, %v1277
    %v1342 = vpack.c.b16 %v1278, %v1278
    %v1343 = vpack.c.b16 %v1279, %v1279
    %v1344 = vpack.c.b16 %v1280, %v1280
    %v1345 = vpack.c.b16 %v1281, %v1281
    %v1346 = vpack.c.b16 %v1282, %v1282
    %v1347 = vpack.c.b16 %v1283, %v1283
    %v1348 = vpack.c.b16 %v1284, %v1284
    %v1349 = vpack.c.b16 %v1285, %v1285
    %v1350 = vpack.c.b16 %v1286, %v1286
    %v1351 = vpack.c.b16 %v1287, %v1287
    %v1352 = vpack.c.b16 %v1288, %v1288
    %v1353 = vpack.c.b16 %v1289, %v1289
    %vm1418 = vcmask 257024
    %1419 = vst.msk [vmem:[%s2] sm:$0xf] %vm1418, %v1290
    %1420 = vst.msk [vmem:[%s2 + $0x4] sm:$0xf] %vm1418, %v1291
    %1421 = vst.msk [vmem:[%s2 + $0x8] sm:$0xf] %vm1418, %v1292
    %1422 = vst.msk [vmem:[%s2 + $0xc] sm:$0xf] %vm1418, %v1293
    %1423 = vst.msk [vmem:[%s2 + $0x10] sm:$0xf] %vm1418, %v1294
    %1424 = vst.msk [vmem:[%s2 + $0x14] sm:$0xf] %vm1418, %v1295
    %1425 = vst.msk [vmem:[%s2 + $0x18] sm:$0xf] %vm1418, %v1296
    %1426 = vst.msk [vmem:[%s2 + $0x1c] sm:$0xf] %vm1418, %v1297
    %1427 = vst.msk [vmem:[%s2 + $0x20] sm:$0xf] %vm1418, %v1298
    %1428 = vst.msk [vmem:[%s2 + $0x24] sm:$0xf] %vm1418, %v1299
    %1429 = vst.msk [vmem:[%s2 + $0x28] sm:$0xf] %vm1418, %v1300
    %1430 = vst.msk [vmem:[%s2 + $0x2c] sm:$0xf] %vm1418, %v1301
    %1431 = vst.msk [vmem:[%s2 + $0x30] sm:$0xf] %vm1418, %v1302
    %1432 = vst.msk [vmem:[%s2 + $0x34] sm:$0xf] %vm1418, %v1303
    %1433 = vst.msk [vmem:[%s2 + $0x38] sm:$0xf] %vm1418, %v1304
    %1434 = vst.msk [vmem:[%s2 + $0x3c] sm:$0xf] %vm1418, %v1305
    %1435 = vst.msk [vmem:[%s2 + $0x40] sm:$0xf] %vm1418, %v1306
    %1436 = vst.msk [vmem:[%s2 + $0x44] sm:$0xf] %vm1418, %v1307
    %1437 = vst.msk [vmem:[%s2 + $0x48] sm:$0xf] %vm1418, %v1308
    %1438 = vst.msk [vmem:[%s2 + $0x4c] sm:$0xf] %vm1418, %v1309
    %1439 = vst.msk [vmem:[%s2 + $0x50] sm:$0xf] %vm1418, %v1310
    %1440 = vst.msk [vmem:[%s2 + $0x54] sm:$0xf] %vm1418, %v1311
    %1441 = vst.msk [vmem:[%s2 + $0x58] sm:$0xf] %vm1418, %v1312
    %1442 = vst.msk [vmem:[%s2 + $0x5c] sm:$0xf] %vm1418, %v1313
    %1443 = vst.msk [vmem:[%s2 + $0x60] sm:$0xf] %vm1418, %v1314
    %1444 = vst.msk [vmem:[%s2 + $0x64] sm:$0xf] %vm1418, %v1315
    %1445 = vst.msk [vmem:[%s2 + $0x68] sm:$0xf] %vm1418, %v1316
    %1446 = vst.msk [vmem:[%s2 + $0x6c] sm:$0xf] %vm1418, %v1317
    %1447 = vst.msk [vmem:[%s2 + $0x70] sm:$0xf] %vm1418, %v1318
    %1448 = vst.msk [vmem:[%s2 + $0x74] sm:$0xf] %vm1418, %v1319
    %1449 = vst.msk [vmem:[%s2 + $0x78] sm:$0xf] %vm1418, %v1320
    %1450 = vst.msk [vmem:[%s2 + $0x7c] sm:$0xf] %vm1418, %v1321
    %1451 = vst.msk [vmem:[%s2 + $0x80] sm:$0xf] %vm1418, %v1322
    %1452 = vst.msk [vmem:[%s2 + $0x84] sm:$0xf] %vm1418, %v1323
    %1453 = vst.msk [vmem:[%s2 + $0x88] sm:$0xf] %vm1418, %v1324
    %1454 = vst.msk [vmem:[%s2 + $0x8c] sm:$0xf] %vm1418, %v1325
    %1455 = vst.msk [vmem:[%s2 + $0x90] sm:$0xf] %vm1418, %v1326
    %1456 = vst.msk [vmem:[%s2 + $0x94] sm:$0xf] %vm1418, %v1327
    %1457 = vst.msk [vmem:[%s2 + $0x98] sm:$0xf] %vm1418, %v1328
    %1458 = vst.msk [vmem:[%s2 + $0x9c] sm:$0xf] %vm1418, %v1329
    %1459 = vst.msk [vmem:[%s2 + $0xa0] sm:$0xf] %vm1418, %v1330
    %1460 = vst.msk [vmem:[%s2 + $0xa4] sm:$0xf] %vm1418, %v1331
    %1461 = vst.msk [vmem:[%s2 + $0xa8] sm:$0xf] %vm1418, %v1332
    %1462 = vst.msk [vmem:[%s2 + $0xac] sm:$0xf] %vm1418, %v1333
    %1463 = vst.msk [vmem:[%s2 + $0xb0] sm:$0xf] %vm1418, %v1334
    %1464 = vst.msk [vmem:[%s2 + $0xb4] sm:$0xf] %vm1418, %v1335
    %1465 = vst.msk [vmem:[%s2 + $0xb8] sm:$0xf] %vm1418, %v1336
    %1466 = vst.msk [vmem:[%s2 + $0xbc] sm:$0xf] %vm1418, %v1337
    %1467 = vst.msk [vmem:[%s2 + $0xc0] sm:$0xf] %vm1418, %v1338
    %1468 = vst.msk [vmem:[%s2 + $0xc4] sm:$0xf] %vm1418, %v1339
    %1469 = vst.msk [vmem:[%s2 + $0xc8] sm:$0xf] %vm1418, %v1340
    %1470 = vst.msk [vmem:[%s2 + $0xcc] sm:$0xf] %vm1418, %v1341
    %1471 = vst.msk [vmem:[%s2 + $0xd0] sm:$0xf] %vm1418, %v1342
    %1472 = vst.msk [vmem:[%s2 + $0xd4] sm:$0xf] %vm1418, %v1343
    %1473 = vst.msk [vmem:[%s2 + $0xd8] sm:$0xf] %vm1418, %v1344
    %1474 = vst.msk [vmem:[%s2 + $0xdc] sm:$0xf] %vm1418, %v1345
    %1475 = vst.msk [vmem:[%s2 + $0xe0] sm:$0xf] %vm1418, %v1346
    %1476 = vst.msk [vmem:[%s2 + $0xe4] sm:$0xf] %vm1418, %v1347
    %1477 = vst.msk [vmem:[%s2 + $0xe8] sm:$0xf] %vm1418, %v1348
    %1478 = vst.msk [vmem:[%s2 + $0xec] sm:$0xf] %vm1418, %v1349
    %1479 = vst.msk [vmem:[%s2 + $0xf0] sm:$0xf] %vm1418, %v1350
    %1480 = vst.msk [vmem:[%s2 + $0xf4] sm:$0xf] %vm1418, %v1351
    %1481 = vst.msk [vmem:[%s2 + $0xf8] sm:$0xf] %vm1418, %v1352
    %1482 = vst.msk [vmem:[%s2 + $0xfc] sm:$0xf] %vm1418, %v1353
  $region17: #{densenet_forward.21} parent=0 // pred_fallthru
    _
  // Predicated region
  $region18: #{densenet_forward.21} parent=0 // pred_check
    _
  $region19: #{densenet_forward.21} parent=0 // pred_check_branch
    %1484 = sbr.rel (0) target = $region21
  $region20: #{densenet_forward.21} parent=0 // pred_region
    _
  $region21: #{densenet_forward.21} parent=0 // pred_fallthru
    _
  // Predicated region
  $region22: #{densenet_forward.21} parent=0 // pred_check
    _
  $region23: #{densenet_forward.21} parent=0 // pred_check_branch
    %1486 = sbr.rel (0) target = $region25
  $region24: #{densenet_forward.21} parent=0 // pred_region
    _
  $region25: #{densenet_forward.21} parent=0 // pred_fallthru
    _

// kernel: densenet_forward.24
$region0: #{densenet_forward.24}
  #allocation0 [shape = 'u32[]', space=smem, size = 0x4, offset = 0x4, fixed_abs, tag = 'smem constant byte address 0x4 - core index']
  #allocation1 [shape = 'u32[144,128]{1,0:T(1,128)}', space=vmem, size = 0x12000, scoped, tag = 'internal scratch']
  #allocation2 [shape = 'f32[128,32]{1,0:T(8,128)}', space=vmem, size = 0x10000, scoped, tag = 'scratch operand']
  %s0 = inlined_call_operand.vmem [shape: bf16[128,32], index: 0, kind: input, shape index: {}]
  %s1 = inlined_call_operand.vmem [shape: bf16[32,32], index: 1, kind: input, shape index: {}]
  %s2 = inlined_call_operand.vmem [shape: bf16[128,32], index: 2, kind: output, shape index: {}]
  %s3 = sld [smem:[#allocation0]]
  $region26: #{densenet_forward.24} parent=0
    _
  %s5 = ssub.s32 1, %s3
  %s6 = scalar_select 0, %s5, %s3
  // Predicated region
  $region2: #{densenet_forward.24} parent=0 // pred_check
    _
  $region3: #{densenet_forward.24} parent=0 // pred_check_branch
    %8 = sbr.rel (0) target = $region5
  $region4: #{densenet_forward.24} parent=0 // pred_region
    _
  $region5: #{densenet_forward.24} parent=0 // pred_fallthru
    _
  // Predicated region
  $region6: #{densenet_forward.24} parent=0 // pred_check
    _
  $region7: #{densenet_forward.24} parent=0 // pred_check_branch
    %10 = sbr.rel (0) target = $region9
  $region8: #{densenet_forward.24} parent=0 // pred_region
    _
  $region9: #{densenet_forward.24} parent=0 // pred_fallthru
    _
  %p12 = scmp.eq.s32.totalorder 0, 0
  // Predicated region
  $region10: #{densenet_forward.24} parent=0 // pred_check
    %p13 = pneg %p12
  $region11: #{densenet_forward.24} parent=0 // pred_check_branch
    %15 = sbr.rel (%p13) target = $region13
  $region12: #{densenet_forward.24} parent=0 // pred_region
    %vm16 = vcmask 261120
    %17 = vst.msk [vmem:[#allocation2] sm:$0xff] %vm16, 0.0
    %18 = vst.msk [vmem:[#allocation2 + $0x8] sm:$0xff] %vm16, 0.0
    %19 = vst.msk [vmem:[#allocation2 + $0x10] sm:$0xff] %vm16, 0.0
    %20 = vst.msk [vmem:[#allocation2 + $0x18] sm:$0xff] %vm16, 0.0
    %21 = vst.msk [vmem:[#allocation2 + $0x20] sm:$0xff] %vm16, 0.0
    %22 = vst.msk [vmem:[#allocation2 + $0x28] sm:$0xff] %vm16, 0.0
    %23 = vst.msk [vmem:[#allocation2 + $0x30] sm:$0xff] %vm16, 0.0
    %24 = vst.msk [vmem:[#allocation2 + $0x38] sm:$0xff] %vm16, 0.0
    %25 = vst.msk [vmem:[#allocation2 + $0x40] sm:$0xff] %vm16, 0.0
    %26 = vst.msk [vmem:[#allocation2 + $0x48] sm:$0xff] %vm16, 0.0
    %27 = vst.msk [vmem:[#allocation2 + $0x50] sm:$0xff] %vm16, 0.0
    %28 = vst.msk [vmem:[#allocation2 + $0x58] sm:$0xff] %vm16, 0.0
    %29 = vst.msk [vmem:[#allocation2 + $0x60] sm:$0xff] %vm16, 0.0
    %30 = vst.msk [vmem:[#allocation2 + $0x68] sm:$0xff] %vm16, 0.0
    %31 = vst.msk [vmem:[#allocation2 + $0x70] sm:$0xff] %vm16, 0.0
    %32 = vst.msk [vmem:[#allocation2 + $0x78] sm:$0xff] %vm16, 0.0
  $region13: #{densenet_forward.24} parent=0 // pred_fallthru
    _
  %v33 = vld [vmem:[#allocation2] sm:$0xff]
  %v34 = vld [vmem:[#allocation2 + $0x8] sm:$0xff]
  %v35 = vld [vmem:[#allocation2 + $0x10] sm:$0xff]
  %v36 = vld [vmem:[#allocation2 + $0x18] sm:$0xff]
  %v37 = vld [vmem:[#allocation2 + $0x20] sm:$0xff]
  %v38 = vld [vmem:[#allocation2 + $0x28] sm:$0xff]
  %v39 = vld [vmem:[#allocation2 + $0x30] sm:$0xff]
  %v40 = vld [vmem:[#allocation2 + $0x38] sm:$0xff]
  %v41 = vld [vmem:[#allocation2 + $0x40] sm:$0xff]
  %v42 = vld [vmem:[#allocation2 + $0x48] sm:$0xff]
  %v43 = vld [vmem:[#allocation2 + $0x50] sm:$0xff]
  %v44 = vld [vmem:[#allocation2 + $0x58] sm:$0xff]
  %v45 = vld [vmem:[#allocation2 + $0x60] sm:$0xff]
  %v46 = vld [vmem:[#allocation2 + $0x68] sm:$0xff]
  %v47 = vld [vmem:[#allocation2 + $0x70] sm:$0xff]
  %v48 = vld [vmem:[#allocation2 + $0x78] sm:$0xff]
  %v49 = vld [vmem:[%s0] sm:$0xf]
  %v50 = vld [vmem:[%s0 + $0x4] sm:$0xf]
  %v51 = vld [vmem:[%s0 + $0x8] sm:$0xf]
  %v52 = vld [vmem:[%s0 + $0xc] sm:$0xf]
  %v53 = vld [vmem:[%s0 + $0x10] sm:$0xf]
  %v54 = vld [vmem:[%s0 + $0x14] sm:$0xf]
  %v55 = vld [vmem:[%s0 + $0x18] sm:$0xf]
  %v56 = vld [vmem:[%s0 + $0x1c] sm:$0xf]
  %v57 = vld [vmem:[%s0 + $0x20] sm:$0xf]
  %v58 = vld [vmem:[%s0 + $0x24] sm:$0xf]
  %v59 = vld [vmem:[%s0 + $0x28] sm:$0xf]
  %v60 = vld [vmem:[%s0 + $0x2c] sm:$0xf]
  %v61 = vld [vmem:[%s0 + $0x30] sm:$0xf]
  %v62 = vld [vmem:[%s0 + $0x34] sm:$0xf]
  %v63 = vld [vmem:[%s0 + $0x38] sm:$0xf]
  %v64 = vld [vmem:[%s0 + $0x3c] sm:$0xf]
  %v65 = vld [vmem:[%s1] sm:$0xf]
  %v66 = vld [vmem:[%s1 + $0x4] sm:$0xf]
  %v67 = vld [vmem:[%s1 + $0x8] sm:$0xf]
  %v68 = vld [vmem:[%s1 + $0xc] sm:$0xf]
  %v85 = vunpack.c.l.b16 %v49
  %v86 = vunpack.c.l.b16 %v50
  %v87 = vunpack.c.l.b16 %v51
  %v88 = vunpack.c.l.b16 %v52
  %v89 = vunpack.c.l.b16 %v53
  %v90 = vunpack.c.l.b16 %v54
  %v91 = vunpack.c.l.b16 %v55
  %v92 = vunpack.c.l.b16 %v56
  %v93 = vunpack.c.l.b16 %v57
  %v94 = vunpack.c.l.b16 %v58
  %v95 = vunpack.c.l.b16 %v59
  %v96 = vunpack.c.l.b16 %v60
  %v97 = vunpack.c.l.b16 %v61
  %v98 = vunpack.c.l.b16 %v62
  %v99 = vunpack.c.l.b16 %v63
  %v100 = vunpack.c.l.b16 %v64
  %v101 = vpack.c.b16 %v86, %v85
  %v102 = vpack.c.b16 %v88, %v87
  %v103 = vpack.c.b16 %v90, %v89
  %v104 = vpack.c.b16 %v92, %v91
  %v105 = vpack.c.b16 %v94, %v93
  %v106 = vpack.c.b16 %v96, %v95
  %v107 = vpack.c.b16 %v98, %v97
  %v108 = vpack.c.b16 %v100, %v99
  %v113 = vunpack.c.l.b16 %v65
  %v114 = vunpack.c.l.b16 %v66
  %v115 = vunpack.c.l.b16 %v67
  %v116 = vunpack.c.l.b16 %v68
  %v117 = vpack.c.b16 %v114, %v113
  %v118 = vpack.c.b16 %v116, %v115
  %vm121 = vcmask 261120
  %v123 = vsel %vm121, %v101, 0
  %v126 = vsel %vm121, %v102, 0
  %v129 = vsel %vm121, %v103, 0
  %v132 = vsel %vm121, %v104, 0
  %v135 = vsel %vm121, %v105, 0
  %v138 = vsel %vm121, %v106, 0
  %v141 = vsel %vm121, %v107, 0
  %v144 = vsel %vm121, %v108, 0
  %146 = vmatprep.subr.bf16.mxu0 0
  %147 = vmatpush1.bf16.msra.mxu0 %v117
  %148 = vmatprep.subr.bf16.mxu0 0
  %149 = vmatpush1.bf16.msra.mxu0 %v118
  %150 = vmatprep.subr.bf16.mxu0 0
  %151 = vmatpush1.bf16.msra.mxu0 0
  %152 = vmatprep.subr.bf16.mxu0 0
  %153 = vmatpush1.bf16.msra.mxu0 0
  %154 = vmatprep.subr.bf16.mxu0 0
  %155 = vmatpush1.bf16.msra.mxu0 0
  %156 = vmatprep.subr.bf16.mxu0 0
  %157 = vmatpush1.bf16.msra.mxu0 0
  %158 = vmatprep.subr.bf16.mxu0 0
  %159 = vmatpush1.bf16.msra.mxu0 0
  %160 = vmatprep.subr.bf16.mxu0 0
  %161 = vmatpush1.bf16.msra.mxu0 0
  %162 = vmatprep.subr.bf16.mxu0 0
  %163 = vmatpush1.bf16.msra.mxu0 0
  %164 = vmatprep.subr.bf16.mxu0 0
  %165 = vmatpush1.bf16.msra.mxu0 0
  %166 = vmatprep.subr.bf16.mxu0 0
  %167 = vmatpush1.bf16.msra.mxu0 0
  %168 = vmatprep.subr.bf16.mxu0 0
  %169 = vmatpush1.bf16.msra.mxu0 0
  %170 = vmatprep.subr.bf16.mxu0 0
  %171 = vmatpush1.bf16.msra.mxu0 0
  %172 = vmatprep.subr.bf16.mxu0 0
  %173 = vmatpush1.bf16.msra.mxu0 0
  %174 = vmatprep.subr.bf16.mxu0 0
  %175 = vmatpush1.bf16.msra.mxu0 0
  %176 = vmatprep.subr.bf16.mxu0 0
  %177 = vmatpush1.bf16.msra.mxu0 0
  %178 = vmatprep.mubr.bf16.mxu0 0
  %179 = vmatmul.mubr.bf16.gmra.mrb[0].mxu0 %v123
  %v180 = vpop.f32.mrb[0].mxu0
  %v181 = vadd.f32 0.0, %v180
  %v182 = vpop.f32.mrb[0].mxu0
  %v183 = vpop.f32.mrb[0].mxu0
  %v184 = vadd.f32 0.0, %v183
  %v185 = vpop.f32.mrb[0].mxu0
  %186 = vmatprep.mubr.bf16.mxu0 0
  %187 = vmatmul.mubr.bf16.gmra.mrb[0].mxu0 %v126
  %v188 = vpop.f32.mrb[0].mxu0
  %v189 = vadd.f32 0.0, %v188
  %v190 = vpop.f32.mrb[0].mxu0
  %v191 = vpop.f32.mrb[0].mxu0
  %v192 = vadd.f32 0.0, %v191
  %v193 = vpop.f32.mrb[0].mxu0
  %194 = vmatprep.mubr.bf16.mxu0 0
  %195 = vmatmul.mubr.bf16.gmra.mrb[0].mxu0 %v129
  %v196 = vpop.f32.mrb[0].mxu0
  %v197 = vadd.f32 0.0, %v196
  %v198 = vpop.f32.mrb[0].mxu0
  %v199 = vpop.f32.mrb[0].mxu0
  %v200 = vadd.f32 0.0, %v199
  %v201 = vpop.f32.mrb[0].mxu0
  %202 = vmatprep.mubr.bf16.mxu0 0
  %203 = vmatmul.mubr.bf16.gmra.mrb[0].mxu0 %v132
  %v204 = vpop.f32.mrb[0].mxu0
  %v205 = vadd.f32 0.0, %v204
  %v206 = vpop.f32.mrb[0].mxu0
  %v207 = vpop.f32.mrb[0].mxu0
  %v208 = vadd.f32 0.0, %v207
  %v209 = vpop.f32.mrb[0].mxu0
  %210 = vmatprep.mubr.bf16.mxu0 0
  %211 = vmatmul.mubr.bf16.gmra.mrb[0].mxu0 %v135
  %v212 = vpop.f32.mrb[0].mxu0
  %v213 = vadd.f32 0.0, %v212
  %v214 = vpop.f32.mrb[0].mxu0
  %v215 = vpop.f32.mrb[0].mxu0
  %v216 = vadd.f32 0.0, %v215
  %v217 = vpop.f32.mrb[0].mxu0
  %218 = vmatprep.mubr.bf16.mxu0 0
  %219 = vmatmul.mubr.bf16.gmra.mrb[0].mxu0 %v138
  %v220 = vpop.f32.mrb[0].mxu0
  %v221 = vadd.f32 0.0, %v220
  %v222 = vpop.f32.mrb[0].mxu0
  %v223 = vpop.f32.mrb[0].mxu0
  %v224 = vadd.f32 0.0, %v223
  %v225 = vpop.f32.mrb[0].mxu0
  %226 = vmatprep.mubr.bf16.mxu0 0
  %227 = vmatmul.mubr.bf16.gmra.mrb[0].mxu0 %v141
  %v228 = vpop.f32.mrb[0].mxu0
  %v229 = vadd.f32 0.0, %v228
  %v230 = vpop.f32.mrb[0].mxu0
  %v231 = vpop.f32.mrb[0].mxu0
  %v232 = vadd.f32 0.0, %v231
  %v233 = vpop.f32.mrb[0].mxu0
  %234 = vmatprep.mubr.bf16.mxu0 0
  %235 = vmatmul.mubr.bf16.gmra.mrb[0].mxu0 %v144
  %v236 = vpop.f32.mrb[0].mxu0
  %v237 = vadd.f32 0.0, %v236
  %v238 = vpop.f32.mrb[0].mxu0
  %v239 = vpop.f32.mrb[0].mxu0
  %v240 = vadd.f32 0.0, %v239
  %v241 = vpop.f32.mrb[0].mxu0
  %242 = vdwg.mxu0
  %v243 = vadd.f32 %v33, %v181
  %v244 = vadd.f32 %v34, %v184
  %v245 = vadd.f32 %v35, %v189
  %v246 = vadd.f32 %v36, %v192
  %v247 = vadd.f32 %v37, %v197
  %v248 = vadd.f32 %v38, %v200
  %v249 = vadd.f32 %v39, %v205
  %v250 = vadd.f32 %v40, %v208
  %v251 = vadd.f32 %v41, %v213
  %v252 = vadd.f32 %v42, %v216
  %v253 = vadd.f32 %v43, %v221
  %v254 = vadd.f32 %v44, %v224
  %v255 = vadd.f32 %v45, %v229
  %v256 = vadd.f32 %v46, %v232
  %v257 = vadd.f32 %v47, %v237
  %v258 = vadd.f32 %v48, %v240
  %259 = vst.msk [vmem:[#allocation2] sm:$0xff] %vm121, %v243
  %260 = vst.msk [vmem:[#allocation2 + $0x8] sm:$0xff] %vm121, %v244
  %261 = vst.msk [vmem:[#allocation2 + $0x10] sm:$0xff] %vm121, %v245
  %262 = vst.msk [vmem:[#allocation2 + $0x18] sm:$0xff] %vm121, %v246
  %263 = vst.msk [vmem:[#allocation2 + $0x20] sm:$0xff] %vm121, %v247
  %264 = vst.msk [vmem:[#allocation2 + $0x28] sm:$0xff] %vm121, %v248
  %265 = vst.msk [vmem:[#allocation2 + $0x30] sm:$0xff] %vm121, %v249
  %266 = vst.msk [vmem:[#allocation2 + $0x38] sm:$0xff] %vm121, %v250
  %267 = vst.msk [vmem:[#allocation2 + $0x40] sm:$0xff] %vm121, %v251
  %268 = vst.msk [vmem:[#allocation2 + $0x48] sm:$0xff] %vm121, %v252
  %269 = vst.msk [vmem:[#allocation2 + $0x50] sm:$0xff] %vm121, %v253
  %270 = vst.msk [vmem:[#allocation2 + $0x58] sm:$0xff] %vm121, %v254
  %271 = vst.msk [vmem:[#allocation2 + $0x60] sm:$0xff] %vm121, %v255
  %272 = vst.msk [vmem:[#allocation2 + $0x68] sm:$0xff] %vm121, %v256
  %273 = vst.msk [vmem:[#allocation2 + $0x70] sm:$0xff] %vm121, %v257
  %274 = vst.msk [vmem:[#allocation2 + $0x78] sm:$0xff] %vm121, %v258
  // Predicated region
  $region14: #{densenet_forward.24} parent=0 // pred_check
    %p275 = pneg %p12
  $region15: #{densenet_forward.24} parent=0 // pred_check_branch
    %277 = sbr.rel (%p275) target = $region17
  $region16: #{densenet_forward.24} parent=0 // pred_region
    %v278 = vld [vmem:[#allocation2] sm:$0xff]
    %v279 = vld [vmem:[#allocation2 + $0x8] sm:$0xff]
    %v280 = vld [vmem:[#allocation2 + $0x10] sm:$0xff]
    %v281 = vld [vmem:[#allocation2 + $0x18] sm:$0xff]
    %v282 = vld [vmem:[#allocation2 + $0x20] sm:$0xff]
    %v283 = vld [vmem:[#allocation2 + $0x28] sm:$0xff]
    %v284 = vld [vmem:[#allocation2 + $0x30] sm:$0xff]
    %v285 = vld [vmem:[#allocation2 + $0x38] sm:$0xff]
    %v286 = vld [vmem:[#allocation2 + $0x40] sm:$0xff]
    %v287 = vld [vmem:[#allocation2 + $0x48] sm:$0xff]
    %v288 = vld [vmem:[#allocation2 + $0x50] sm:$0xff]
    %v289 = vld [vmem:[#allocation2 + $0x58] sm:$0xff]
    %v290 = vld [vmem:[#allocation2 + $0x60] sm:$0xff]
    %v291 = vld [vmem:[#allocation2 + $0x68] sm:$0xff]
    %v292 = vld [vmem:[#allocation2 + $0x70] sm:$0xff]
    %v293 = vld [vmem:[#allocation2 + $0x78] sm:$0xff]
    %v294 = vpack.c.bf16 %v279, %v278
    %v295 = vpack.c.bf16 %v281, %v280
    %v296 = vpack.c.bf16 %v283, %v282
    %v297 = vpack.c.bf16 %v285, %v284
    %v298 = vpack.c.bf16 %v287, %v286
    %v299 = vpack.c.bf16 %v289, %v288
    %v300 = vpack.c.bf16 %v291, %v290
    %v301 = vpack.c.bf16 %v293, %v292
    %v310 = vunpack.c.l.b16 %v294
    %v311 = vunpack.c.h.b16 %v294
    %v312 = vunpack.c.l.b16 %v295
    %v313 = vunpack.c.h.b16 %v295
    %v314 = vunpack.c.l.b16 %v296
    %v315 = vunpack.c.h.b16 %v296
    %v316 = vunpack.c.l.b16 %v297
    %v317 = vunpack.c.h.b16 %v297
    %v318 = vunpack.c.l.b16 %v298
    %v319 = vunpack.c.h.b16 %v298
    %v320 = vunpack.c.l.b16 %v299
    %v321 = vunpack.c.h.b16 %v299
    %v322 = vunpack.c.l.b16 %v300
    %v323 = vunpack.c.h.b16 %v300
    %v324 = vunpack.c.l.b16 %v301
    %v325 = vunpack.c.h.b16 %v301
    %v326 = vpack.c.b16 %v310, %v310
    %v327 = vpack.c.b16 %v311, %v311
    %v328 = vpack.c.b16 %v312, %v312
    %v329 = vpack.c.b16 %v313, %v313
    %v330 = vpack.c.b16 %v314, %v314
    %v331 = vpack.c.b16 %v315, %v315
    %v332 = vpack.c.b16 %v316, %v316
    %v333 = vpack.c.b16 %v317, %v317
    %v334 = vpack.c.b16 %v318, %v318
    %v335 = vpack.c.b16 %v319, %v319
    %v336 = vpack.c.b16 %v320, %v320
    %v337 = vpack.c.b16 %v321, %v321
    %v338 = vpack.c.b16 %v322, %v322
    %v339 = vpack.c.b16 %v323, %v323
    %v340 = vpack.c.b16 %v324, %v324
    %v341 = vpack.c.b16 %v325, %v325
    %vm358 = vcmask 257024
    %359 = vst.msk [vmem:[%s2] sm:$0xf] %vm358, %v326
    %360 = vst.msk [vmem:[%s2 + $0x4] sm:$0xf] %vm358, %v327
    %361 = vst.msk [vmem:[%s2 + $0x8] sm:$0xf] %vm358, %v328
    %362 = vst.msk [vmem:[%s2 + $0xc] sm:$0xf] %vm358, %v329
    %363 = vst.msk [vmem:[%s2 + $0x10] sm:$0xf] %vm358, %v330
    %364 = vst.msk [vmem:[%s2 + $0x14] sm:$0xf] %vm358, %v331
    %365 = vst.msk [vmem:[%s2 + $0x18] sm:$0xf] %vm358, %v332
    %366 = vst.msk [vmem:[%s2 + $0x1c] sm:$0xf] %vm358, %v333
    %367 = vst.msk [vmem:[%s2 + $0x20] sm:$0xf] %vm358, %v334
    %368 = vst.msk [vmem:[%s2 + $0x24] sm:$0xf] %vm358, %v335
    %369 = vst.msk [vmem:[%s2 + $0x28] sm:$0xf] %vm358, %v336
    %370 = vst.msk [vmem:[%s2 + $0x2c] sm:$0xf] %vm358, %v337
    %371 = vst.msk [vmem:[%s2 + $0x30] sm:$0xf] %vm358, %v338
    %372 = vst.msk [vmem:[%s2 + $0x34] sm:$0xf] %vm358, %v339
    %373 = vst.msk [vmem:[%s2 + $0x38] sm:$0xf] %vm358, %v340
    %374 = vst.msk [vmem:[%s2 + $0x3c] sm:$0xf] %vm358, %v341
  $region17: #{densenet_forward.24} parent=0 // pred_fallthru
    _
  // Predicated region
  $region18: #{densenet_forward.24} parent=0 // pred_check
    _
  $region19: #{densenet_forward.24} parent=0 // pred_check_branch
    %376 = sbr.rel (0) target = $region21
  $region20: #{densenet_forward.24} parent=0 // pred_region
    _
  $region21: #{densenet_forward.24} parent=0 // pred_fallthru
    _
  // Predicated region
  $region22: #{densenet_forward.24} parent=0 // pred_check
    _
  $region23: #{densenet_forward.24} parent=0 // pred_check_branch
    %378 = sbr.rel (0) target = $region25
  $region24: #{densenet_forward.24} parent=0 // pred_region
    _
  $region25: #{densenet_forward.24} parent=0 // pred_fallthru
    _

// kernel: densenet_forward.27
$region0: #{densenet_forward.27}
  #allocation0 [shape = 'u32[]', space=smem, size = 0x4, offset = 0x4, fixed_abs, tag = 'smem constant byte address 0x4 - core index']
  #allocation1 [shape = 'u32[144,128]{1,0:T(1,128)}', space=vmem, size = 0x12000, scoped, tag = 'internal scratch']
  %s0 = inlined_call_operand.vmem [shape: bf16[2,64,48], index: 0, kind: input, shape index: {}]
  %s1 = inlined_call_operand.vmem [shape: f32[1,48], index: 1, kind: input, shape index: {}]
  %s2 = inlined_call_operand.vmem [shape: f32[1,48], index: 2, kind: input, shape index: {}]
  %s3 = inlined_call_operand.vmem [shape: bf16[2,64,48], index: 3, kind: output, shape index: {}]
  %s4 = sld [smem:[#allocation0]]
  $region45: #{densenet_forward.27} parent=0
    _
  %s6 = ssub.s32 1, %s4
  %s7 = scalar_select 0, %s6, %s4
  loop: start=0, step=1, limit=4
  $region2: #{densenet_forward.27} parent=0 // loop_pre_header
    _
  $region3: #{densenet_forward.27} parent=0 // loop_header
    %s9 = sphi 0, %s13
    %p10 = scmp.ge.s32.totalorder %s9, 4
    %s16 = sphi 0, %s28
    %s17 = sphi 0, %s24
    %s18 = sphi 0, %s16
    %s19 = sphi 0, %s17
    %s20 = sphi 0, %s18
    %s21 = sphi 0, %s19
    %s33 = sphi 0, %s35
    %s36 = sphi 0, %s33
    %s37 = sphi 0, %s36
    %s53 = sphi 0, %s37
    %s59 = sphi 0, %s61
    %s62 = sphi 0, %s59
    %s63 = sphi 0, %s62
    %s79 = sphi 0, %s63
    %s85 = sphi 0, %s87
    %s88 = sphi 0, %s85
    %s89 = sphi 0, %s88
    %s105 = sphi 0, %s89
    %s113 = sphi 0, %s115
    %s116 = sphi 0, %s113
    %s117 = sphi 0, %s116
    %s133 = sphi 0, %s117
  $region4: #{densenet_forward.27} parent=0 // loop_header_branch
    %12 = sbr.rel (%p10) target = $region8
  $region5: #{densenet_forward.27} parent=0 // loop_body
    %s14 = ssub.s32 %s9, 1
    %s15 = ssub.s32 %s9, 2
    %s22 = sadd.s32 1, %s17
    %p23 = scmp.ge.s32.totalorder %s22, 1
    %s24 = scalar_select %p23, 0, %s22
    %s25 = sadd.s32 1, %s16
    %s26 = scalar_select %p23, %s25, %s16
    %p27 = scmp.ge.s32.totalorder %s26, 2
    %s28 = scalar_select %p27, 0, %s26
    %s29 = ssub.s32 %s16, %s28
    %s30 = ssub.s32 %s17, %s24
    %s31 = sor.u32 %s29, %s30
    %p32 = scmp.eq.s32.totalorder %s31, 0
    %s34 = sadd.s32 %s33, 1
    %s35 = scalar_select %p32, %s33, %s34
    %p38 = pneg %p32
    %p39 = scmp.eq.s32.totalorder %s9, 1
    %p40 = por %p38, %p39
    %p41 = scmp.ne.s32.totalorder %s33, %s36
    %p42 = scmp.eq.s32.totalorder %s9, 0
    %p43 = por %p41, %p42
    %p44 = scmp.ne.s32.totalorder %s33, %s36
    %p45 = scmp.eq.s32.totalorder %s14, 1
    %p46 = por %p44, %p45
    %p47 = scmp.ne.s32.totalorder %s36, %s37
    %p48 = scmp.eq.s32.totalorder %s14, 0
    %p49 = por %p47, %p48
    %p50 = scmp.ne.s32.totalorder %s36, %s37
    %p51 = scmp.eq.s32.totalorder %s15, 1
    %p52 = por %p50, %p51
    %p54 = scmp.ne.s32.totalorder %s37, %s53
    %p55 = scmp.eq.s32.totalorder %s15, 0
    %p56 = por %p54, %p55
    %s57 = ssub.s32 %s17, %s24
    %p58 = scmp.eq.s32.totalorder %s57, 0
    %s60 = sadd.s32 %s59, 1
    %s61 = scalar_select %p58, %s59, %s60
    %p64 = pneg %p58
    %p65 = scmp.eq.s32.totalorder %s9, 1
    %p66 = por %p64, %p65
    %p67 = scmp.ne.s32.totalorder %s59, %s62
    %p68 = scmp.eq.s32.totalorder %s9, 0
    %p69 = por %p67, %p68
    %p70 = scmp.ne.s32.totalorder %s59, %s62
    %p71 = scmp.eq.s32.totalorder %s14, 1
    %p72 = por %p70, %p71
    %p73 = scmp.ne.s32.totalorder %s62, %s63
    %p74 = scmp.eq.s32.totalorder %s14, 0
    %p75 = por %p73, %p74
    %p76 = scmp.ne.s32.totalorder %s62, %s63
    %p77 = scmp.eq.s32.totalorder %s15, 1
    %p78 = por %p76, %p77
    %p80 = scmp.ne.s32.totalorder %s63, %s79
    %p81 = scmp.eq.s32.totalorder %s15, 0
    %p82 = por %p80, %p81
    %s83 = ssub.s32 %s17, %s24
    %p84 = scmp.eq.s32.totalorder %s83, 0
    %s86 = sadd.s32 %s85, 1
    %s87 = scalar_select %p84, %s85, %s86
    %p90 = pneg %p84
    %p91 = scmp.eq.s32.totalorder %s9, 1
    %p92 = por %p90, %p91
    %p93 = scmp.ne.s32.totalorder %s85, %s88
    %p94 = scmp.eq.s32.totalorder %s9, 0
    %p95 = por %p93, %p94
    %p96 = scmp.ne.s32.totalorder %s85, %s88
    %p97 = scmp.eq.s32.totalorder %s14, 1
    %p98 = por %p96, %p97
    %p99 = scmp.ne.s32.totalorder %s88, %s89
    %p100 = scmp.eq.s32.totalorder %s14, 0
    %p101 = por %p99, %p100
    %p102 = scmp.ne.s32.totalorder %s88, %s89
    %p103 = scmp.eq.s32.totalorder %s15, 1
    %p104 = por %p102, %p103
    %p106 = scmp.ne.s32.totalorder %s89, %s105
    %p107 = scmp.eq.s32.totalorder %s15, 0
    %p108 = por %p106, %p107
    %s109 = ssub.s32 %s16, %s28
    %s110 = ssub.s32 %s17, %s24
    %s111 = sor.u32 %s109, %s110
    %p112 = scmp.eq.s32.totalorder %s111, 0
    %s114 = sadd.s32 %s113, 1
    %s115 = scalar_select %p112, %s113, %s114
    %p118 = pneg %p112
    %p119 = scmp.eq.s32.totalorder %s9, 1
    %p120 = por %p118, %p119
    %p121 = scmp.ne.s32.totalorder %s113, %s116
    %p122 = scmp.eq.s32.totalorder %s9, 0
    %p123 = por %p121, %p122
    %p124 = scmp.ne.s32.totalorder %s113, %s116
    %p125 = scmp.eq.s32.totalorder %s14, 1
    %p126 = por %p124, %p125
    %p127 = scmp.ne.s32.totalorder %s116, %s117
    %p128 = scmp.eq.s32.totalorder %s14, 0
    %p129 = por %p127, %p128
    %p130 = scmp.ne.s32.totalorder %s116, %s117
    %p131 = scmp.eq.s32.totalorder %s15, 1
    %p132 = por %p130, %p131
    %p134 = scmp.ne.s32.totalorder %s117, %s133
    %p135 = scmp.eq.s32.totalorder %s15, 0
    %p136 = por %p134, %p135
    %p137 = scmp.le.s32.totalorder 1, %s9
    %p138 = scmp.lt.s32.totalorder %s9, 3
    %p139 = pnand %p137, %p138
    %p140 = pneg %p139
    // Predicated region
    $region9: #{densenet_forward.27} parent=5 // pred_check
      _
    $region10: #{densenet_forward.27} parent=5 // pred_check_branch
      %142 = sbr.rel (%p139) target = $region12
    $region11: #{densenet_forward.27} parent=5 // pred_region
      %s143 = ssub.s32 %s9, 1
      // Predicated region
      $region13: #{densenet_forward.27} parent=11 // pred_check
        %p144 = pneg %p75
      $region14: #{densenet_forward.27} parent=11 // pred_check_branch
        %146 = sbr.rel (%p144) target = $region16
      $region15: #{densenet_forward.27} parent=11 // pred_region
        %p147 = scmp.lt.s32.totalorder %s19, 0
        %s148 = scalar_select %p147, %s19, 0
        %s149 = scalar_lea.vmem %s1, %s148
      $region16: #{densenet_forward.27} parent=11 // pred_fallthru
        _
      // Predicated region
      $region17: #{densenet_forward.27} parent=11 // pred_check
        %p150 = pneg %p101
      $region18: #{densenet_forward.27} parent=11 // pred_check_branch
        %152 = sbr.rel (%p150) target = $region20
      $region19: #{densenet_forward.27} parent=11 // pred_region
        %p153 = scmp.lt.s32.totalorder %s19, 0
        %s154 = scalar_select %p153, %s19, 0
        %s155 = scalar_lea.vmem %s2, %s154
      $region20: #{densenet_forward.27} parent=11 // pred_fallthru
        _
    $region12: #{densenet_forward.27} parent=5 // pred_fallthru
      _
    %p156 = scmp.lt.s32.totalorder %s9, 2
    // Predicated region
    $region21: #{densenet_forward.27} parent=5 // pred_check
      %p157 = pneg %p156
    $region22: #{densenet_forward.27} parent=5 // pred_check_branch
      %159 = sbr.rel (%p157) target = $region24
    $region23: #{densenet_forward.27} parent=5 // pred_region
      // Predicated region
      $region25: #{densenet_forward.27} parent=23 // pred_check
        %p160 = pneg %p43
      $region26: #{densenet_forward.27} parent=23 // pred_check_branch
        %162 = sbr.rel (%p160) target = $region28
      $region27: #{densenet_forward.27} parent=23 // pred_region
        %p163 = scmp.lt.s32.totalorder %s16, 1
        %s164 = scalar_select %p163, %s16, 1
        %p165 = scmp.lt.s32.totalorder %s17, 0
        %s166 = scalar_select %p165, %s17, 0
        %s167 = smul.addr %s164, 8
        %s168 = sadd.s32 %s166, %s167
        %s169 = smul.addr %s168, 4
        %s170 = scalar_lea.vmem %s0, %s169
      $region28: #{densenet_forward.27} parent=23 // pred_fallthru
        _
    $region24: #{densenet_forward.27} parent=5 // pred_fallthru
      _
    %p171 = scmp.le.s32.totalorder 1, %s9
    %p172 = scmp.lt.s32.totalorder %s9, 3
    %p173 = pnand %p171, %p172
    %p174 = pneg %p173
    // Predicated region
    $region29: #{densenet_forward.27} parent=5 // pred_check
      _
    $region30: #{densenet_forward.27} parent=5 // pred_check_branch
      %176 = sbr.rel (%p173) target = $region32
    $region31: #{densenet_forward.27} parent=5 // pred_region
      %s177 = ssub.s32 %s9, 1
      %p178 = scmp.lt.s32.totalorder %s18, 1
      %s179 = scalar_select %p178, %s18, 1
      %p180 = scmp.lt.s32.totalorder %s19, 0
      %s181 = scalar_select %p180, %s19, 0
      %s182 = smul.addr %s179, 8
      %s183 = sadd.s32 %s181, %s182
      %s184 = smul.addr %s183, 4
      %s185 = scalar_lea.vmem %s0, %s184
      %p186 = pneg %p49
      %p187 = pneg %p46
      %p188 = scmp.lt.s32.totalorder %s19, 0
      %s189 = scalar_select %p188, %s19, 0
      %s190 = scalar_lea.vmem %s1, %s189
      %p191 = pneg %p75
      %p192 = pneg %p72
      %p193 = scmp.lt.s32.totalorder %s19, 0
      %s194 = scalar_select %p193, %s19, 0
      %s195 = scalar_lea.vmem %s2, %s194
      %p196 = pneg %p101
      %p197 = pneg %p98
      %p198 = pneg %p129
      %p199 = pneg %p126
      %p200 = scmp.lt.s32.totalorder %s18, 1
      %s201 = scalar_select %p200, %s18, 1
      %p202 = scmp.lt.s32.totalorder %s19, 0
      %s203 = scalar_select %p202, %s19, 0
      %s204 = smul.addr %s201, 8
      %s205 = sadd.s32 %s203, %s204
      %s206 = smul.addr %s205, 4
      %s207 = scalar_lea.vmem %s3, %s206
      %p208 = scmp.lt.s32.totalorder %s18, 1
      %s209 = scalar_select %p208, %s18, 1
      %p210 = scmp.lt.s32.totalorder %s19, 0
      %s211 = scalar_select %p210, %s19, 0
      %s212 = smul.addr %s209, 8
      %s213 = sadd.s32 %s211, %s212
      %s214 = smul.addr %s213, 4
      %s215 = scalar_lea.vmem %s0, %s214
      %p216 = scmp.lt.s32.totalorder %s19, 0
      %s217 = scalar_select %p216, %s19, 0
      %s218 = scalar_lea.vmem %s1, %s217
      %p219 = scmp.lt.s32.totalorder %s19, 0
      %s220 = scalar_select %p219, %s19, 0
      %s221 = scalar_lea.vmem %s2, %s220
      %p222 = scmp.lt.s32.totalorder %s18, 1
      %s223 = scalar_select %p222, %s18, 1
      %p224 = scmp.lt.s32.totalorder %s19, 0
      %s225 = scalar_select %p224, %s19, 0
      %s226 = smul.addr %s223, 8
      %s227 = sadd.s32 %s225, %s226
      %s228 = smul.addr %s227, 4
      %s229 = scalar_lea.vmem %s3, %s228
      %v230 = vld [vmem:[%s215] sm:$0xf]
      %v231 = vld [vmem:[%s215 + $0x4] sm:$0xf]
      %v232 = vld [vmem:[%s215 + $0x8] sm:$0xf]
      %v233 = vld [vmem:[%s215 + $0xc] sm:$0xf]
      %v234 = vld [vmem:[%s215 + $0x10] sm:$0xf]
      %v235 = vld [vmem:[%s215 + $0x14] sm:$0xf]
      %v236 = vld [vmem:[%s215 + $0x18] sm:$0xf]
      %v237 = vld [vmem:[%s215 + $0x1c] sm:$0xf]
      %v238 = vunpack.c.l.bf16 %v230
      %v239 = vunpack.c.l.bf16 %v231
      %v240 = vunpack.c.l.bf16 %v232
      %v241 = vunpack.c.l.bf16 %v233
      %v242 = vunpack.c.l.bf16 %v234
      %v243 = vunpack.c.l.bf16 %v235
      %v244 = vunpack.c.l.bf16 %v236
      %v245 = vunpack.c.l.bf16 %v237
      %vm246 = vcmask 392192
      %v247 = vsel %vm246, %v238, 0.0
      %v248 = vsel %vm246, %v239, 0.0
      %v249 = vadd.f32 %v247, %v248
      %v250 = vsel %vm246, %v240, 0.0
      %v251 = vadd.f32 %v249, %v250
      %v252 = vsel %vm246, %v241, 0.0
      %v253 = vadd.f32 %v251, %v252
      %v254 = vsel %vm246, %v242, 0.0
      %v255 = vadd.f32 %v253, %v254
      %v256 = vsel %vm246, %v243, 0.0
      %v257 = vadd.f32 %v255, %v256
      %v258 = vsel %vm246, %v244, 0.0
      %v259 = vadd.f32 %v257, %v258
      %v260 = vsel %vm246, %v245, 0.0
      %v261 = vadd.f32 %v259, %v260
      %v262 = vrot.slane %v261, 4
      %v263 = vadd.f32 %v261, %v262
      %v264 = vrot.slane %v263, 2
      %v265 = vadd.f32 %v263, %v264
      %v266 = vrot.slane %v265, 1
      %v267 = vadd.f32 %v265, %v266
      %v268 = vmul.f32 %v267, 0.015625
      %v269 = vsub.f32 %v238, %v268
      %v270 = vsub.f32 %v239, %v268
      %v271 = vsub.f32 %v240, %v268
      %v272 = vsub.f32 %v241, %v268
      %v273 = vsub.f32 %v242, %v268
      %v274 = vsub.f32 %v243, %v268
      %v275 = vsub.f32 %v244, %v268
      %v276 = vsub.f32 %v245, %v268
      %v277 = vmul.f32 %v269, %v269
      %v278 = vmul.f32 %v270, %v270
      %v279 = vmul.f32 %v271, %v271
      %v280 = vmul.f32 %v272, %v272
      %v281 = vmul.f32 %v273, %v273
      %v282 = vmul.f32 %v274, %v274
      %v283 = vmul.f32 %v275, %v275
      %v284 = vmul.f32 %v276, %v276
      %v285 = vsel %vm246, %v277, 0.0
      %v286 = vsel %vm246, %v278, 0.0
      %v287 = vadd.f32 %v285, %v286
      %v288 = vsel %vm246, %v279, 0.0
      %v289 = vadd.f32 %v287, %v288
      %v290 = vsel %vm246, %v280, 0.0
      %v291 = vadd.f32 %v289, %v290
      %v292 = vsel %vm246, %v281, 0.0
      %v293 = vadd.f32 %v291, %v292
      %v294 = vsel %vm246, %v282, 0.0
      %v295 = vadd.f32 %v293, %v294
      %v296 = vsel %vm246, %v283, 0.0
      %v297 = vadd.f32 %v295, %v296
      %v298 = vsel %vm246, %v284, 0.0
      %v299 = vadd.f32 %v297, %v298
      %v300 = vrot.slane %v299, 4
      %v301 = vadd.f32 %v299, %v300
      %v302 = vrot.slane %v301, 2
      %v303 = vadd.f32 %v301, %v302
      %v304 = vrot.slane %v303, 1
      %v305 = vadd.f32 %v303, %v304
      %v306 = vmul.f32 %v305, 0.015625
      %v307 = vadd.f32 %v306, 1e-05
      %v308 = vrsqrt.pop %v307
      %v309 = vld [vmem:[%s218] sm:$0x1]
      %v310 = vmul.f32 %v308, %v309
      %v311 = vlaneseq
      %v312 = vshrl.u32 %v311, 7
      %v313 = vsub.s32 0, %v312
      %v314 = vrot.slane %v310, %v313
      %v315 = vmul.f32 %v269, %v314
      %v316 = vmul.f32 %v270, %v314
      %v317 = vmul.f32 %v271, %v314
      %v318 = vmul.f32 %v272, %v314
      %v319 = vmul.f32 %v273, %v314
      %v320 = vmul.f32 %v274, %v314
      %v321 = vmul.f32 %v275, %v314
      %v322 = vmul.f32 %v276, %v314
      %v323 = vld [vmem:[%s221] sm:$0x1]
      %v325 = vlaneseq
      %v326 = vshrl.u32 %v325, 7
      %v327 = vsub.s32 0, %v326
      %v328 = vrot.slane %v323, %v327
      %v330 = vadd.f32 %v315, %v328
      %v331 = vadd.f32 %v316, %v328
      %v332 = vadd.f32 %v317, %v328
      %v333 = vadd.f32 %v318, %v328
      %v334 = vadd.f32 %v319, %v328
      %v335 = vadd.f32 %v320, %v328
      %v336 = vadd.f32 %v321, %v328
      %v337 = vadd.f32 %v322, %v328
      %v338 = vmax.f32 %v330, 0.0
      %v339 = vmax.f32 %v331, 0.0
      %v340 = vmax.f32 %v332, 0.0
      %v341 = vmax.f32 %v333, 0.0
      %v342 = vmax.f32 %v334, 0.0
      %v343 = vmax.f32 %v335, 0.0
      %v344 = vmax.f32 %v336, 0.0
      %v345 = vmax.f32 %v337, 0.0
      %v346 = vpack.c.bf16 %v339, %v338
      %v347 = vpack.c.bf16 %v341, %v340
      %v348 = vpack.c.bf16 %v343, %v342
      %v349 = vpack.c.bf16 %v345, %v344
      %v354 = vunpack.c.l.b16 %v346
      %v355 = vunpack.c.h.b16 %v346
      %v356 = vunpack.c.l.b16 %v347
      %v357 = vunpack.c.h.b16 %v347
      %v358 = vunpack.c.l.b16 %v348
      %v359 = vunpack.c.h.b16 %v348
      %v360 = vunpack.c.l.b16 %v349
      %v361 = vunpack.c.h.b16 %v349
      %v362 = vpack.c.b16 %v354, %v354
      %v363 = vpack.c.b16 %v355, %v355
      %v364 = vpack.c.b16 %v356, %v356
      %v365 = vpack.c.b16 %v357, %v357
      %v366 = vpack.c.b16 %v358, %v358
      %v367 = vpack.c.b16 %v359, %v359
      %v368 = vpack.c.b16 %v360, %v360
      %v369 = vpack.c.b16 %v361, %v361
      %vm378 = vcmask 388096
      %379 = vst.msk [vmem:[%s229] sm:$0xf] %vm378, %v362
      %380 = vst.msk [vmem:[%s229 + $0x4] sm:$0xf] %vm378, %v363
      %381 = vst.msk [vmem:[%s229 + $0x8] sm:$0xf] %vm378, %v364
      %382 = vst.msk [vmem:[%s229 + $0xc] sm:$0xf] %vm378, %v365
      %383 = vst.msk [vmem:[%s229 + $0x10] sm:$0xf] %vm378, %v366
      %384 = vst.msk [vmem:[%s229 + $0x14] sm:$0xf] %vm378, %v367
      %385 = vst.msk [vmem:[%s229 + $0x18] sm:$0xf] %vm378, %v368
      %386 = vst.msk [vmem:[%s229 + $0x1c] sm:$0xf] %vm378, %v369
      %p387 = scmp.lt.s32.totalorder %s18, 1
      %s388 = scalar_select %p387, %s18, 1
      %p389 = scmp.lt.s32.totalorder %s19, 0
      %s390 = scalar_select %p389, %s19, 0
      %s391 = smul.addr %s388, 8
      %s392 = sadd.s32 %s390, %s391
      %s393 = smul.addr %s392, 4
      %s394 = scalar_lea.vmem %s3, %s393
      // Predicated region
      $region33: #{densenet_forward.27} parent=31 // pred_check
        %p395 = pneg %p126
      $region34: #{densenet_forward.27} parent=31 // pred_check_branch
        %397 = sbr.rel (%p395) target = $region36
      $region35: #{densenet_forward.27} parent=31 // pred_region
        _
      $region36: #{densenet_forward.27} parent=31 // pred_fallthru
        _
    $region32: #{densenet_forward.27} parent=5 // pred_fallthru
      _
    %p398 = scmp.le.s32.totalorder 2, %s9
    // Predicated region
    $region37: #{densenet_forward.27} parent=5 // pred_check
      %p399 = pneg %p398
    $region38: #{densenet_forward.27} parent=5 // pred_check_branch
      %401 = sbr.rel (%p399) target = $region40
    $region39: #{densenet_forward.27} parent=5 // pred_region
      %s402 = ssub.s32 %s9, 2
      // Predicated region
      $region41: #{densenet_forward.27} parent=39 // pred_check
        %p403 = pneg %p132
      $region42: #{densenet_forward.27} parent=39 // pred_check_branch
        %405 = sbr.rel (%p403) target = $region44
      $region43: #{densenet_forward.27} parent=39 // pred_region
        %p406 = scmp.lt.s32.totalorder %s20, 1
        %s407 = scalar_select %p406, %s20, 1
        %p408 = scmp.lt.s32.totalorder %s21, 0
        %s409 = scalar_select %p408, %s21, 0
        %s410 = smul.addr %s407, 8
        %s411 = sadd.s32 %s409, %s410
        %s412 = smul.addr %s411, 4
        %s413 = scalar_lea.vmem %s3, %s412
      $region44: #{densenet_forward.27} parent=39 // pred_fallthru
        _
    $region40: #{densenet_forward.27} parent=5 // pred_fallthru
      _
  $region6: #{densenet_forward.27} parent=0 // loop_footer
    %s13 = sadd.s32 1, %s9
  $region7: #{densenet_forward.27} parent=0 // loop_footer_branch
    %8 = sbr.rel target = $region3
  $region8: #{densenet_forward.27} parent=0 // loop_exit
    _

// kernel: densenet_forward.31
$region0: #{densenet_forward.31}
  #allocation0 [shape = 'u32[]', space=smem, size = 0x4, offset = 0x4, fixed_abs, tag = 'smem constant byte address 0x4 - core index']
  #allocation1 [shape = 'u32[144,128]{1,0:T(1,128)}', space=vmem, size = 0x12000, scoped, tag = 'internal scratch']
  %s0 = inlined_call_operand.vmem [shape: bf16[2,64,64], index: 0, kind: input, shape index: {}]
  %s1 = inlined_call_operand.vmem [shape: f32[1,64], index: 1, kind: input, shape index: {}]
  %s2 = inlined_call_operand.vmem [shape: f32[1,64], index: 2, kind: input, shape index: {}]
  %s3 = inlined_call_operand.vmem [shape: f32[64,32], index: 3, kind: input, shape index: {}]
  %s4 = inlined_call_operand.vmem [shape: f32[32,64], index: 4, kind: input, shape index: {}]
  %s5 = inlined_call_operand.vmem [shape: bf16[2,64,64], index: 5, kind: output, shape index: {}]
  %s6 = sld [smem:[#allocation0]]
  $region53: #{densenet_forward.31} parent=0
    _
  %s8 = ssub.s32 1, %s6
  %s9 = scalar_select 0, %s8, %s6
  loop: start=0, step=1, limit=4
  $region2: #{densenet_forward.31} parent=0 // loop_pre_header
    _
  $region3: #{densenet_forward.31} parent=0 // loop_header
    %s11 = sphi 0, %s15
    %p12 = scmp.ge.s32.totalorder %s11, 4
    %s18 = sphi 0, %s30
    %s19 = sphi 0, %s26
    %s20 = sphi 0, %s18
    %s21 = sphi 0, %s19
    %s22 = sphi 0, %s20
    %s23 = sphi 0, %s21
    %s35 = sphi 0, %s37
    %s38 = sphi 0, %s35
    %s39 = sphi 0, %s38
    %s55 = sphi 0, %s39
    %s61 = sphi 0, %s63
    %s64 = sphi 0, %s61
    %s65 = sphi 0, %s64
    %s81 = sphi 0, %s65
    %s87 = sphi 0, %s89
    %s90 = sphi 0, %s87
    %s91 = sphi 0, %s90
    %s107 = sphi 0, %s91
    %s111 = sphi 0, %s111
    %s113 = sphi 0, %s111
    %s114 = sphi 0, %s113
    %s128 = sphi 0, %s114
    %s132 = sphi 0, %s132
    %s134 = sphi 0, %s132
    %s135 = sphi 0, %s134
    %s149 = sphi 0, %s135
    %s157 = sphi 0, %s159
    %s160 = sphi 0, %s157
    %s161 = sphi 0, %s160
    %s177 = sphi 0, %s161
  $region4: #{densenet_forward.31} parent=0 // loop_header_branch
    %14 = sbr.rel (%p12) target = $region8
  $region5: #{densenet_forward.31} parent=0 // loop_body
    %s16 = ssub.s32 %s11, 1
    %s17 = ssub.s32 %s11, 2
    %s24 = sadd.s32 1, %s19
    %p25 = scmp.ge.s32.totalorder %s24, 1
    %s26 = scalar_select %p25, 0, %s24
    %s27 = sadd.s32 1, %s18
    %s28 = scalar_select %p25, %s27, %s18
    %p29 = scmp.ge.s32.totalorder %s28, 2
    %s30 = scalar_select %p29, 0, %s28
    %s31 = ssub.s32 %s18, %s30
    %s32 = ssub.s32 %s19, %s26
    %s33 = sor.u32 %s31, %s32
    %p34 = scmp.eq.s32.totalorder %s33, 0
    %s36 = sadd.s32 %s35, 1
    %s37 = scalar_select %p34, %s35, %s36
    %p40 = pneg %p34
    %p41 = scmp.eq.s32.totalorder %s11, 1
    %p42 = por %p40, %p41
    %p43 = scmp.ne.s32.totalorder %s35, %s38
    %p44 = scmp.eq.s32.totalorder %s11, 0
    %p45 = por %p43, %p44
    %p46 = scmp.ne.s32.totalorder %s35, %s38
    %p47 = scmp.eq.s32.totalorder %s16, 1
    %p48 = por %p46, %p47
    %p49 = scmp.ne.s32.totalorder %s38, %s39
    %p50 = scmp.eq.s32.totalorder %s16, 0
    %p51 = por %p49, %p50
    %p52 = scmp.ne.s32.totalorder %s38, %s39
    %p53 = scmp.eq.s32.totalorder %s17, 1
    %p54 = por %p52, %p53
    %p56 = scmp.ne.s32.totalorder %s39, %s55
    %p57 = scmp.eq.s32.totalorder %s17, 0
    %p58 = por %p56, %p57
    %s59 = ssub.s32 %s19, %s26
    %p60 = scmp.eq.s32.totalorder %s59, 0
    %s62 = sadd.s32 %s61, 1
    %s63 = scalar_select %p60, %s61, %s62
    %p66 = pneg %p60
    %p67 = scmp.eq.s32.totalorder %s11, 1
    %p68 = por %p66, %p67
    %p69 = scmp.ne.s32.totalorder %s61, %s64
    %p70 = scmp.eq.s32.totalorder %s11, 0
    %p71 = por %p69, %p70
    %p72 = scmp.ne.s32.totalorder %s61, %s64
    %p73 = scmp.eq.s32.totalorder %s16, 1
    %p74 = por %p72, %p73
    %p75 = scmp.ne.s32.totalorder %s64, %s65
    %p76 = scmp.eq.s32.totalorder %s16, 0
    %p77 = por %p75, %p76
    %p78 = scmp.ne.s32.totalorder %s64, %s65
    %p79 = scmp.eq.s32.totalorder %s17, 1
    %p80 = por %p78, %p79
    %p82 = scmp.ne.s32.totalorder %s65, %s81
    %p83 = scmp.eq.s32.totalorder %s17, 0
    %p84 = por %p82, %p83
    %s85 = ssub.s32 %s19, %s26
    %p86 = scmp.eq.s32.totalorder %s85, 0
    %s88 = sadd.s32 %s87, 1
    %s89 = scalar_select %p86, %s87, %s88
    %p92 = pneg %p86
    %p93 = scmp.eq.s32.totalorder %s11, 1
    %p94 = por %p92, %p93
    %p95 = scmp.ne.s32.totalorder %s87, %s90
    %p96 = scmp.eq.s32.totalorder %s11, 0
    %p97 = por %p95, %p96
    %p98 = scmp.ne.s32.totalorder %s87, %s90
    %p99 = scmp.eq.s32.totalorder %s16, 1
    %p100 = por %p98, %p99
    %p101 = scmp.ne.s32.totalorder %s90, %s91
    %p102 = scmp.eq.s32.totalorder %s16, 0
    %p103 = por %p101, %p102
    %p104 = scmp.ne.s32.totalorder %s90, %s91
    %p105 = scmp.eq.s32.totalorder %s17, 1
    %p106 = por %p104, %p105
    %p108 = scmp.ne.s32.totalorder %s91, %s107
    %p109 = scmp.eq.s32.totalorder %s17, 0
    %p110 = por %p108, %p109
    %s112 = sadd.s32 %s111, 1
    %p115 = scmp.eq.s32.totalorder %s11, 1
    %p116 = scmp.ne.s32.totalorder %s111, %s113
    %p117 = scmp.eq.s32.totalorder %s11, 0
    %p118 = por %p116, %p117
    %p119 = scmp.ne.s32.totalorder %s111, %s113
    %p120 = scmp.eq.s32.totalorder %s16, 1
    %p121 = por %p119, %p120
    %p122 = scmp.ne.s32.totalorder %s113, %s114
    %p123 = scmp.eq.s32.totalorder %s16, 0
    %p124 = por %p122, %p123
    %p125 = scmp.ne.s32.totalorder %s113, %s114
    %p126 = scmp.eq.s32.totalorder %s17, 1
    %p127 = por %p125, %p126
    %p129 = scmp.ne.s32.totalorder %s114, %s128
    %p130 = scmp.eq.s32.totalorder %s17, 0
    %p131 = por %p129, %p130
    %s133 = sadd.s32 %s132, 1
    %p136 = scmp.eq.s32.totalorder %s11, 1
    %p137 = scmp.ne.s32.totalorder %s132, %s134
    %p138 = scmp.eq.s32.totalorder %s11, 0
    %p139 = por %p137, %p138
    %p140 = scmp.ne.s32.totalorder %s132, %s134
    %p141 = scmp.eq.s32.totalorder %s16, 1
    %p142 = por %p140, %p141
    %p143 = scmp.ne.s32.totalorder %s134, %s135
    %p144 = scmp.eq.s32.totalorder %s16, 0
    %p145 = por %p143, %p144
    %p146 = scmp.ne.s32.totalorder %s134, %s135
    %p147 = scmp.eq.s32.totalorder %s17, 1
    %p148 = por %p146, %p147
    %p150 = scmp.ne.s32.totalorder %s135, %s149
    %p151 = scmp.eq.s32.totalorder %s17, 0
    %p152 = por %p150, %p151
    %s153 = ssub.s32 %s18, %s30
    %s154 = ssub.s32 %s19, %s26
    %s155 = sor.u32 %s153, %s154
    %p156 = scmp.eq.s32.totalorder %s155, 0
    %s158 = sadd.s32 %s157, 1
    %s159 = scalar_select %p156, %s157, %s158
    %p162 = pneg %p156
    %p163 = scmp.eq.s32.totalorder %s11, 1
    %p164 = por %p162, %p163
    %p165 = scmp.ne.s32.totalorder %s157, %s160
    %p166 = scmp.eq.s32.totalorder %s11, 0
    %p167 = por %p165, %p166
    %p168 = scmp.ne.s32.totalorder %s157, %s160
    %p169 = scmp.eq.s32.totalorder %s16, 1
    %p170 = por %p168, %p169
    %p171 = scmp.ne.s32.totalorder %s160, %s161
    %p172 = scmp.eq.s32.totalorder %s16, 0
    %p173 = por %p171, %p172
    %p174 = scmp.ne.s32.totalorder %s160, %s161
    %p175 = scmp.eq.s32.totalorder %s17, 1
    %p176 = por %p174, %p175
    %p178 = scmp.ne.s32.totalorder %s161, %s177
    %p179 = scmp.eq.s32.totalorder %s17, 0
    %p180 = por %p178, %p179
    %p181 = scmp.le.s32.totalorder 1, %s11
    %p182 = scmp.lt.s32.totalorder %s11, 3
    %p183 = pnand %p181, %p182
    %p184 = pneg %p183
    // Predicated region
    $region9: #{densenet_forward.31} parent=5 // pred_check
      _
    $region10: #{densenet_forward.31} parent=5 // pred_check_branch
      %186 = sbr.rel (%p183) target = $region12
    $region11: #{densenet_forward.31} parent=5 // pred_region
      %s187 = ssub.s32 %s11, 1
      // Predicated region
      $region13: #{densenet_forward.31} parent=11 // pred_check
        %p188 = pneg %p77
      $region14: #{densenet_forward.31} parent=11 // pred_check_branch
        %190 = sbr.rel (%p188) target = $region16
      $region15: #{densenet_forward.31} parent=11 // pred_region
        %p191 = scmp.lt.s32.totalorder %s21, 0
        %s192 = scalar_select %p191, %s21, 0
        %s193 = scalar_lea.vmem %s1, %s192
      $region16: #{densenet_forward.31} parent=11 // pred_fallthru
        _
      // Predicated region
      $region17: #{densenet_forward.31} parent=11 // pred_check
        %p194 = pneg %p103
      $region18: #{densenet_forward.31} parent=11 // pred_check_branch
        %196 = sbr.rel (%p194) target = $region20
      $region19: #{densenet_forward.31} parent=11 // pred_region
        %p197 = scmp.lt.s32.totalorder %s21, 0
        %s198 = scalar_select %p197, %s21, 0
        %s199 = scalar_lea.vmem %s2, %s198
      $region20: #{densenet_forward.31} parent=11 // pred_fallthru
        _
      // Predicated region
      $region21: #{densenet_forward.31} parent=11 // pred_check
        %p200 = pneg %p124
      $region22: #{densenet_forward.31} parent=11 // pred_check_branch
        %202 = sbr.rel (%p200) target = $region24
      $region23: #{densenet_forward.31} parent=11 // pred_region
        _
      $region24: #{densenet_forward.31} parent=11 // pred_fallthru
        _
      // Predicated region
      $region25: #{densenet_forward.31} parent=11 // pred_check
        %p203 = pneg %p145
      $region26: #{densenet_forward.31} parent=11 // pred_check_branch
        %205 = sbr.rel (%p203) target = $region28
      $region27: #{densenet_forward.31} parent=11 // pred_region
        _
      $region28: #{densenet_forward.31} parent=11 // pred_fallthru
        _
    $region12: #{densenet_forward.31} parent=5 // pred_fallthru
      _
    %p206 = scmp.lt.s32.totalorder %s11, 2
    // Predicated region
    $region29: #{densenet_forward.31} parent=5 // pred_check
      %p207 = pneg %p206
    $region30: #{densenet_forward.31} parent=5 // pred_check_branch
      %209 = sbr.rel (%p207) target = $region32
    $region31: #{densenet_forward.31} parent=5 // pred_region
      // Predicated region
      $region33: #{densenet_forward.31} parent=31 // pred_check
        %p210 = pneg %p45
      $region34: #{densenet_forward.31} parent=31 // pred_check_branch
        %212 = sbr.rel (%p210) target = $region36
      $region35: #{densenet_forward.31} parent=31 // pred_region
        %p213 = scmp.lt.s32.totalorder %s18, 1
        %s214 = scalar_select %p213, %s18, 1
        %p215 = scmp.lt.s32.totalorder %s19, 0
        %s216 = scalar_select %p215, %s19, 0
        %s217 = smul.addr %s214, 8
        %s218 = sadd.s32 %s216, %s217
        %s219 = smul.addr %s218, 4
        %s220 = scalar_lea.vmem %s0, %s219
      $region36: #{densenet_forward.31} parent=31 // pred_fallthru
        _
    $region32: #{densenet_forward.31} parent=5 // pred_fallthru
      _
    %p221 = scmp.le.s32.totalorder 1, %s11
    %p222 = scmp.lt.s32.totalorder %s11, 3
    %p223 = pnand %p221, %p222
    %p224 = pneg %p223
    // Predicated region
    $region37: #{densenet_forward.31} parent=5 // pred_check
      _
    $region38: #{densenet_forward.31} parent=5 // pred_check_branch
      %226 = sbr.rel (%p223) target = $region40
    $region39: #{densenet_forward.31} parent=5 // pred_region
      %s227 = ssub.s32 %s11, 1
      %p228 = scmp.lt.s32.totalorder %s20, 1
      %s229 = scalar_select %p228, %s20, 1
      %p230 = scmp.lt.s32.totalorder %s21, 0
      %s231 = scalar_select %p230, %s21, 0
      %s232 = smul.addr %s229, 8
      %s233 = sadd.s32 %s231, %s232
      %s234 = smul.addr %s233, 4
      %s235 = scalar_lea.vmem %s0, %s234
      %p236 = pneg %p51
      %p237 = pneg %p48
      %p238 = scmp.lt.s32.totalorder %s21, 0
      %s239 = scalar_select %p238, %s21, 0
      %s240 = scalar_lea.vmem %s1, %s239
      %p241 = pneg %p77
      %p242 = pneg %p74
      %p243 = scmp.lt.s32.totalorder %s21, 0
      %s244 = scalar_select %p243, %s21, 0
      %s245 = scalar_lea.vmem %s2, %s244
      %p246 = pneg %p103
      %p247 = pneg %p100
      %p248 = pneg %p124
      %p249 = pneg %p121
      %p250 = pneg %p145
      %p251 = pneg %p142
      %p252 = pneg %p173
      %p253 = pneg %p170
      %p254 = scmp.lt.s32.totalorder %s20, 1
      %s255 = scalar_select %p254, %s20, 1
      %p256 = scmp.lt.s32.totalorder %s21, 0
      %s257 = scalar_select %p256, %s21, 0
      %s258 = smul.addr %s255, 8
      %s259 = sadd.s32 %s257, %s258
      %s260 = smul.addr %s259, 4
      %s261 = scalar_lea.vmem %s5, %s260
      %p262 = scmp.lt.s32.totalorder %s20, 1
      %s263 = scalar_select %p262, %s20, 1
      %p264 = scmp.lt.s32.totalorder %s21, 0
      %s265 = scalar_select %p264, %s21, 0
      %s266 = smul.addr %s263, 8
      %s267 = sadd.s32 %s265, %s266
      %s268 = smul.addr %s267, 4
      %s269 = scalar_lea.vmem %s0, %s268
      %p270 = scmp.lt.s32.totalorder %s21, 0
      %s271 = scalar_select %p270, %s21, 0
      %s272 = scalar_lea.vmem %s1, %s271
      %p273 = scmp.lt.s32.totalorder %s21, 0
      %s274 = scalar_select %p273, %s21, 0
      %s275 = scalar_lea.vmem %s2, %s274
      %p276 = scmp.lt.s32.totalorder %s20, 1
      %s277 = scalar_select %p276, %s20, 1
      %p278 = scmp.lt.s32.totalorder %s21, 0
      %s279 = scalar_select %p278, %s21, 0
      %s280 = smul.addr %s277, 8
      %s281 = sadd.s32 %s279, %s280
      %s282 = smul.addr %s281, 4
      %s283 = scalar_lea.vmem %s5, %s282
      %v284 = vld [vmem:[%s269] sm:$0xf]
      %v285 = vld [vmem:[%s269 + $0x4] sm:$0xf]
      %v286 = vld [vmem:[%s269 + $0x8] sm:$0xf]
      %v287 = vld [vmem:[%s269 + $0xc] sm:$0xf]
      %v288 = vld [vmem:[%s269 + $0x10] sm:$0xf]
      %v289 = vld [vmem:[%s269 + $0x14] sm:$0xf]
      %v290 = vld [vmem:[%s269 + $0x18] sm:$0xf]
      %v291 = vld [vmem:[%s269 + $0x1c] sm:$0xf]
      %v292 = vunpack.c.l.bf16 %v284
      %v293 = vunpack.c.l.bf16 %v285
      %v294 = vunpack.c.l.bf16 %v286
      %v295 = vunpack.c.l.bf16 %v287
      %v296 = vunpack.c.l.bf16 %v288
      %v297 = vunpack.c.l.bf16 %v289
      %v298 = vunpack.c.l.bf16 %v290
      %v299 = vunpack.c.l.bf16 %v291
      %v300 = vld [vmem:[%s3] sm:$0xff]
      %v301 = vld [vmem:[%s3 + $0x8] sm:$0xff]
      %v302 = vld [vmem:[%s3 + $0x10] sm:$0xff]
      %v303 = vld [vmem:[%s3 + $0x18] sm:$0xff]
      %v304 = vld [vmem:[%s3 + $0x20] sm:$0xff]
      %v305 = vld [vmem:[%s3 + $0x28] sm:$0xff]
      %v306 = vld [vmem:[%s3 + $0x30] sm:$0xff]
      %v307 = vld [vmem:[%s3 + $0x38] sm:$0xff]
      %v308 = vld [vmem:[%s4] sm:$0xff]
      %v309 = vld [vmem:[%s4 + $0x8] sm:$0xff]
      %v310 = vld [vmem:[%s4 + $0x10] sm:$0xff]
      %v311 = vld [vmem:[%s4 + $0x18] sm:$0xff]
      %vm312 = vcmask 523264
      %v313 = vsel %vm312, %v292, 0.0
      %v314 = vsel %vm312, %v293, 0.0
      %v315 = vadd.f32 %v313, %v314
      %v316 = vsel %vm312, %v294, 0.0
      %v317 = vadd.f32 %v315, %v316
      %v318 = vsel %vm312, %v295, 0.0
      %v319 = vadd.f32 %v317, %v318
      %v320 = vsel %vm312, %v296, 0.0
      %v321 = vadd.f32 %v319, %v320
      %v322 = vsel %vm312, %v297, 0.0
      %v323 = vadd.f32 %v321, %v322
      %v324 = vsel %vm312, %v298, 0.0
      %v325 = vadd.f32 %v323, %v324
      %v326 = vsel %vm312, %v299, 0.0
      %v327 = vadd.f32 %v325, %v326
      %v328 = vrot.slane %v327, 4
      %v329 = vadd.f32 %v327, %v328
      %v330 = vrot.slane %v329, 2
      %v331 = vadd.f32 %v329, %v330
      %v332 = vrot.slane %v331, 1
      %v333 = vadd.f32 %v331, %v332
      %v335 = vsel %vm312, %v333, 0
      %337 = vmatprep.subr.mxu0 0.0
      %338 = vmatpush1.msra.mxu0 %v300
      %339 = vmatprep.subr.mxu0 0.0
      %340 = vmatpush1.msra.mxu0 %v301
      %341 = vmatprep.subr.mxu0 0.0
      %342 = vmatpush1.msra.mxu0 %v302
      %343 = vmatprep.subr.mxu0 0.0
      %344 = vmatpush1.msra.mxu0 %v303
      %345 = vmatprep.subr.mxu0 0.0
      %346 = vmatpush1.msra.mxu0 %v304
      %347 = vmatprep.subr.mxu0 0.0
      %348 = vmatpush1.msra.mxu0 %v305
      %349 = vmatprep.subr.mxu0 0.0
      %350 = vmatpush1.msra.mxu0 %v306
      %351 = vmatprep.subr.mxu0 0.0
      %352 = vmatpush1.msra.mxu0 %v307
      %353 = vmatprep.subr.mxu0 0.0
      %354 = vmatpush1.msra.mxu0 0.0
      %355 = vmatprep.subr.mxu0 0.0
      %356 = vmatpush1.msra.mxu0 0.0
      %357 = vmatprep.subr.mxu0 0.0
      %358 = vmatpush1.msra.mxu0 0.0
      %359 = vmatprep.subr.mxu0 0.0
      %360 = vmatpush1.msra.mxu0 0.0
      %361 = vmatprep.subr.mxu0 0.0
      %362 = vmatpush1.msra.mxu0 0.0
      %363 = vmatprep.subr.mxu0 0.0
      %364 = vmatpush1.msra.mxu0 0.0
      %365 = vmatprep.subr.mxu0 0.0
      %366 = vmatpush1.msra.mxu0 0.0
      %367 = vmatprep.subr.mxu0 0.0
      %368 = vmatpush1.msra.mxu0 0.0
      %369 = vmatprep.subr.mxu0 0.0
      %370 = vmatpush1.msra.mxu0 0.0
      %371 = vmatprep.subr.mxu0 0.0
      %372 = vmatpush1.msra.mxu0 0.0
      %373 = vmatprep.subr.mxu0 0.0
      %374 = vmatpush1.msra.mxu0 0.0
      %375 = vmatprep.subr.mxu0 0.0
      %376 = vmatpush1.msra.mxu0 0.0
      %377 = vmatprep.subr.mxu0 0.0
      %378 = vmatpush1.msra.mxu0 0.0
      %379 = vmatprep.subr.mxu0 0.0
      %380 = vmatpush1.msra.mxu0 0.0
      %381 = vmatprep.subr.mxu0 0.0
      %382 = vmatpush1.msra.mxu0 0.0
      %383 = vmatprep.subr.mxu0 0.0
      %384 = vmatpush1.msra.mxu0 0.0
      %385 = vmatprep.subr.mxu0 0.0
      %386 = vmatpush1.msra.mxu0 0.0
      %387 = vmatprep.subr.mxu0 0.0
      %388 = vmatpush1.msra.mxu0 0.0
      %389 = vmatprep.subr.mxu0 0.0
      %390 = vmatpush1.msra.mxu0 0.0
      %391 = vmatprep.subr.mxu0 0.0
      %392 = vmatpush1.msra.mxu0 0.0
      %393 = vmatprep.subr.mxu0 0.0
      %394 = vmatpush1.msra.mxu0 0.0
      %395 = vmatprep.subr.mxu0 0.0
      %396 = vmatpush1.msra.mxu0 0.0
      %397 = vmatprep.subr.mxu0 0.0
      %398 = vmatpush1.msra.mxu0 0.0
      %399 = vmatprep.subr.mxu0 0.0
      %400 = vmatpush1.msra.mxu0 0.0
      %401 = vmatprep.mubr.f32.mxu0 0.0
      %402 = vmatmul.mubr.f32.gmra.mrb[0].mxu0 %v335
      %v403 = vpop.f32.mrb[0].mxu0
      %v404 = vadd.f32 0.0, %v403
      %v405 = vpop.f32.mrb[0].mxu0
      %406 = vdwg.mxu0
      %v407 = vmul.f32 %v404, 0.0078125
      %vm408 = vcmask 261120
      %v410 = vsel %vm408, %v407, 0
      %412 = vmatprep.subr.mxu0 0.0
      %413 = vmatpush1.msra.mxu0 %v308
      %414 = vmatprep.subr.mxu0 0.0
      %415 = vmatpush1.msra.mxu0 %v309
      %416 = vmatprep.subr.mxu0 0.0
      %417 = vmatpush1.msra.mxu0 %v310
      %418 = vmatprep.subr.mxu0 0.0
      %419 = vmatpush1.msra.mxu0 %v311
      %420 = vmatprep.subr.mxu0 0.0
      %421 = vmatpush1.msra.mxu0 0.0
      %422 = vmatprep.subr.mxu0 0.0
      %423 = vmatpush1.msra.mxu0 0.0
      %424 = vmatprep.subr.mxu0 0.0
      %425 = vmatpush1.msra.mxu0 0.0
      %426 = vmatprep.subr.mxu0 0.0
      %427 = vmatpush1.msra.mxu0 0.0
      %428 = vmatprep.subr.mxu0 0.0
      %429 = vmatpush1.msra.mxu0 0.0
      %430 = vmatprep.subr.mxu0 0.0
      %431 = vmatpush1.msra.mxu0 0.0
      %432 = vmatprep.subr.mxu0 0.0
      %433 = vmatpush1.msra.mxu0 0.0
      %434 = vmatprep.subr.mxu0 0.0
      %435 = vmatpush1.msra.mxu0 0.0
      %436 = vmatprep.subr.mxu0 0.0
      %437 = vmatpush1.msra.mxu0 0.0
      %438 = vmatprep.subr.mxu0 0.0
      %439 = vmatpush1.msra.mxu0 0.0
      %440 = vmatprep.subr.mxu0 0.0
      %441 = vmatpush1.msra.mxu0 0.0
      %442 = vmatprep.subr.mxu0 0.0
      %443 = vmatpush1.msra.mxu0 0.0
      %444 = vmatprep.subr.mxu0 0.0
      %445 = vmatpush1.msra.mxu0 0.0
      %446 = vmatprep.subr.mxu0 0.0
      %447 = vmatpush1.msra.mxu0 0.0
      %448 = vmatprep.subr.mxu0 0.0
      %449 = vmatpush1.msra.mxu0 0.0
      %450 = vmatprep.subr.mxu0 0.0
      %451 = vmatpush1.msra.mxu0 0.0
      %452 = vmatprep.subr.mxu0 0.0
      %453 = vmatpush1.msra.mxu0 0.0
      %454 = vmatprep.subr.mxu0 0.0
      %455 = vmatpush1.msra.mxu0 0.0
      %456 = vmatprep.subr.mxu0 0.0
      %457 = vmatpush1.msra.mxu0 0.0
      %458 = vmatprep.subr.mxu0 0.0
      %459 = vmatpush1.msra.mxu0 0.0
      %460 = vmatprep.subr.mxu0 0.0
      %461 = vmatpush1.msra.mxu0 0.0
      %462 = vmatprep.subr.mxu0 0.0
      %463 = vmatpush1.msra.mxu0 0.0
      %464 = vmatprep.subr.mxu0 0.0
      %465 = vmatpush1.msra.mxu0 0.0
      %466 = vmatprep.subr.mxu0 0.0
      %467 = vmatpush1.msra.mxu0 0.0
      %468 = vmatprep.subr.mxu0 0.0
      %469 = vmatpush1.msra.mxu0 0.0
      %470 = vmatprep.subr.mxu0 0.0
      %471 = vmatpush1.msra.mxu0 0.0
      %472 = vmatprep.subr.mxu0 0.0
      %473 = vmatpush1.msra.mxu0 0.0
      %474 = vmatprep.subr.mxu0 0.0
      %475 = vmatpush1.msra.mxu0 0.0
      %476 = vmatprep.mubr.f32.mxu0 0.0
      %477 = vmatmul.mubr.f32.gmra.mrb[0].mxu0 %v410
      %v478 = vpop.f32.mrb[0].mxu0
      %v479 = vadd.f32 0.0, %v478
      %v480 = vpop.f32.mrb[0].mxu0
      %481 = vdwg.mxu0
      %v482 = vlaneseq
      %v483 = vshrl.u32 %v482, 7
      %v484 = vsub.s32 0, %v483
      %v485 = vrot.slane %v479, %v484
      %v486 = vsub.f32 %v292, %v485
      %v487 = vsub.f32 %v293, %v485
      %v488 = vsub.f32 %v294, %v485
      %v489 = vsub.f32 %v295, %v485
      %v490 = vsub.f32 %v296, %v485
      %v491 = vsub.f32 %v297, %v485
      %v492 = vsub.f32 %v298, %v485
      %v493 = vsub.f32 %v299, %v485
      %v494 = vmul.f32 %v486, %v486
      %v495 = vmul.f32 %v487, %v487
      %v496 = vmul.f32 %v488, %v488
      %v497 = vmul.f32 %v489, %v489
      %v498 = vmul.f32 %v490, %v490
      %v499 = vmul.f32 %v491, %v491
      %v500 = vmul.f32 %v492, %v492
      %v501 = vmul.f32 %v493, %v493
      %v502 = vsel %vm312, %v494, 0.0
      %v503 = vsel %vm312, %v495, 0.0
      %v504 = vadd.f32 %v502, %v503
      %v505 = vsel %vm312, %v496, 0.0
      %v506 = vadd.f32 %v504, %v505
      %v507 = vsel %vm312, %v497, 0.0
      %v508 = vadd.f32 %v506, %v507
      %v509 = vsel %vm312, %v498, 0.0
      %v510 = vadd.f32 %v508, %v509
      %v511 = vsel %vm312, %v499, 0.0
      %v512 = vadd.f32 %v510, %v511
      %v513 = vsel %vm312, %v500, 0.0
      %v514 = vadd.f32 %v512, %v513
      %v515 = vsel %vm312, %v501, 0.0
      %v516 = vadd.f32 %v514, %v515
      %v517 = vrot.slane %v516, 4
      %v518 = vadd.f32 %v516, %v517
      %v519 = vrot.slane %v518, 2
      %v520 = vadd.f32 %v518, %v519
      %v521 = vrot.slane %v520, 1
      %v522 = vadd.f32 %v520, %v521
      %v524 = vsel %vm312, %v522, 0
      %526 = vmatprep.subr.mxu0 0.0
      %527 = vmatpush1.msra.mxu0 %v300
      %528 = vmatprep.subr.mxu0 0.0
      %529 = vmatpush1.msra.mxu0 %v301
      %530 = vmatprep.subr.mxu0 0.0
      %531 = vmatpush1.msra.mxu0 %v302
      %532 = vmatprep.subr.mxu0 0.0
      %533 = vmatpush1.msra.mxu0 %v303
      %534 = vmatprep.subr.mxu0 0.0
      %535 = vmatpush1.msra.mxu0 %v304
      %536 = vmatprep.subr.mxu0 0.0
      %537 = vmatpush1.msra.mxu0 %v305
      %538 = vmatprep.subr.mxu0 0.0
      %539 = vmatpush1.msra.mxu0 %v306
      %540 = vmatprep.subr.mxu0 0.0
      %541 = vmatpush1.msra.mxu0 %v307
      %542 = vmatprep.subr.mxu0 0.0
      %543 = vmatpush1.msra.mxu0 0.0
      %544 = vmatprep.subr.mxu0 0.0
      %545 = vmatpush1.msra.mxu0 0.0
      %546 = vmatprep.subr.mxu0 0.0
      %547 = vmatpush1.msra.mxu0 0.0
      %548 = vmatprep.subr.mxu0 0.0
      %549 = vmatpush1.msra.mxu0 0.0
      %550 = vmatprep.subr.mxu0 0.0
      %551 = vmatpush1.msra.mxu0 0.0
      %552 = vmatprep.subr.mxu0 0.0
      %553 = vmatpush1.msra.mxu0 0.0
      %554 = vmatprep.subr.mxu0 0.0
      %555 = vmatpush1.msra.mxu0 0.0
      %556 = vmatprep.subr.mxu0 0.0
      %557 = vmatpush1.msra.mxu0 0.0
      %558 = vmatprep.subr.mxu0 0.0
      %559 = vmatpush1.msra.mxu0 0.0
      %560 = vmatprep.subr.mxu0 0.0
      %561 = vmatpush1.msra.mxu0 0.0
      %562 = vmatprep.subr.mxu0 0.0
      %563 = vmatpush1.msra.mxu0 0.0
      %564 = vmatprep.subr.mxu0 0.0
      %565 = vmatpush1.msra.mxu0 0.0
      %566 = vmatprep.subr.mxu0 0.0
      %567 = vmatpush1.msra.mxu0 0.0
      %568 = vmatprep.subr.mxu0 0.0
      %569 = vmatpush1.msra.mxu0 0.0
      %570 = vmatprep.subr.mxu0 0.0
      %571 = vmatpush1.msra.mxu0 0.0
      %572 = vmatprep.subr.mxu0 0.0
      %573 = vmatpush1.msra.mxu0 0.0
      %574 = vmatprep.subr.mxu0 0.0
      %575 = vmatpush1.msra.mxu0 0.0
      %576 = vmatprep.subr.mxu0 0.0
      %577 = vmatpush1.msra.mxu0 0.0
      %578 = vmatprep.subr.mxu0 0.0
      %579 = vmatpush1.msra.mxu0 0.0
      %580 = vmatprep.subr.mxu0 0.0
      %581 = vmatpush1.msra.mxu0 0.0
      %582 = vmatprep.subr.mxu0 0.0
      %583 = vmatpush1.msra.mxu0 0.0
      %584 = vmatprep.subr.mxu0 0.0
      %585 = vmatpush1.msra.mxu0 0.0
      %586 = vmatprep.subr.mxu0 0.0
      %587 = vmatpush1.msra.mxu0 0.0
      %588 = vmatprep.subr.mxu0 0.0
      %589 = vmatpush1.msra.mxu0 0.0
      %590 = vmatprep.mubr.f32.mxu0 0.0
      %591 = vmatmul.mubr.f32.gmra.mrb[0].mxu0 %v524
      %v592 = vpop.f32.mrb[0].mxu0
      %v593 = vadd.f32 0.0, %v592
      %v594 = vpop.f32.mrb[0].mxu0
      %595 = vdwg.mxu0
      %v596 = vmul.f32 %v593, 0.0078125
      %v597 = vadd.f32 %v596, 1e-05
      %v598 = vrsqrt.pop %v597
      %v600 = vsel %vm408, %v598, 0
      %602 = vmatprep.subr.mxu0 0.0
      %603 = vmatpush1.msra.mxu0 %v308
      %604 = vmatprep.subr.mxu0 0.0
      %605 = vmatpush1.msra.mxu0 %v309
      %606 = vmatprep.subr.mxu0 0.0
      %607 = vmatpush1.msra.mxu0 %v310
      %608 = vmatprep.subr.mxu0 0.0
      %609 = vmatpush1.msra.mxu0 %v311
      %610 = vmatprep.subr.mxu0 0.0
      %611 = vmatpush1.msra.mxu0 0.0
      %612 = vmatprep.subr.mxu0 0.0
      %613 = vmatpush1.msra.mxu0 0.0
      %614 = vmatprep.subr.mxu0 0.0
      %615 = vmatpush1.msra.mxu0 0.0
      %616 = vmatprep.subr.mxu0 0.0
      %617 = vmatpush1.msra.mxu0 0.0
      %618 = vmatprep.subr.mxu0 0.0
      %619 = vmatpush1.msra.mxu0 0.0
      %620 = vmatprep.subr.mxu0 0.0
      %621 = vmatpush1.msra.mxu0 0.0
      %622 = vmatprep.subr.mxu0 0.0
      %623 = vmatpush1.msra.mxu0 0.0
      %624 = vmatprep.subr.mxu0 0.0
      %625 = vmatpush1.msra.mxu0 0.0
      %626 = vmatprep.subr.mxu0 0.0
      %627 = vmatpush1.msra.mxu0 0.0
      %628 = vmatprep.subr.mxu0 0.0
      %629 = vmatpush1.msra.mxu0 0.0
      %630 = vmatprep.subr.mxu0 0.0
      %631 = vmatpush1.msra.mxu0 0.0
      %632 = vmatprep.subr.mxu0 0.0
      %633 = vmatpush1.msra.mxu0 0.0
      %634 = vmatprep.subr.mxu0 0.0
      %635 = vmatpush1.msra.mxu0 0.0
      %636 = vmatprep.subr.mxu0 0.0
      %637 = vmatpush1.msra.mxu0 0.0
      %638 = vmatprep.subr.mxu0 0.0
      %639 = vmatpush1.msra.mxu0 0.0
      %640 = vmatprep.subr.mxu0 0.0
      %641 = vmatpush1.msra.mxu0 0.0
      %642 = vmatprep.subr.mxu0 0.0
      %643 = vmatpush1.msra.mxu0 0.0
      %644 = vmatprep.subr.mxu0 0.0
      %645 = vmatpush1.msra.mxu0 0.0
      %646 = vmatprep.subr.mxu0 0.0
      %647 = vmatpush1.msra.mxu0 0.0
      %648 = vmatprep.subr.mxu0 0.0
      %649 = vmatpush1.msra.mxu0 0.0
      %650 = vmatprep.subr.mxu0 0.0
      %651 = vmatpush1.msra.mxu0 0.0
      %652 = vmatprep.subr.mxu0 0.0
      %653 = vmatpush1.msra.mxu0 0.0
      %654 = vmatprep.subr.mxu0 0.0
      %655 = vmatpush1.msra.mxu0 0.0
      %656 = vmatprep.subr.mxu0 0.0
      %657 = vmatpush1.msra.mxu0 0.0
      %658 = vmatprep.subr.mxu0 0.0
      %659 = vmatpush1.msra.mxu0 0.0
      %660 = vmatprep.subr.mxu0 0.0
      %661 = vmatpush1.msra.mxu0 0.0
      %662 = vmatprep.subr.mxu0 0.0
      %663 = vmatpush1.msra.mxu0 0.0
      %664 = vmatprep.subr.mxu0 0.0
      %665 = vmatpush1.msra.mxu0 0.0
      %666 = vmatprep.mubr.f32.mxu0 0.0
      %667 = vmatmul.mubr.f32.gmra.mrb[0].mxu0 %v600
      %v668 = vpop.f32.mrb[0].mxu0
      %v669 = vadd.f32 0.0, %v668
      %v670 = vpop.f32.mrb[0].mxu0
      %671 = vdwg.mxu0
      %v672 = vld [vmem:[%s272] sm:$0x1]
      %v673 = vmul.f32 %v669, %v672
      %v674 = vlaneseq
      %v675 = vshrl.u32 %v674, 7
      %v676 = vsub.s32 0, %v675
      %v677 = vrot.slane %v673, %v676
      %v678 = vmul.f32 %v486, %v677
      %v679 = vmul.f32 %v487, %v677
      %v680 = vmul.f32 %v488, %v677
      %v681 = vmul.f32 %v489, %v677
      %v682 = vmul.f32 %v490, %v677
      %v683 = vmul.f32 %v491, %v677
      %v684 = vmul.f32 %v492, %v677
      %v685 = vmul.f32 %v493, %v677
      %v686 = vld [vmem:[%s275] sm:$0x1]
      %v688 = vlaneseq
      %v689 = vshrl.u32 %v688, 7
      %v690 = vsub.s32 0, %v689
      %v691 = vrot.slane %v686, %v690
      %v693 = vadd.f32 %v678, %v691
      %v694 = vadd.f32 %v679, %v691
      %v695 = vadd.f32 %v680, %v691
      %v696 = vadd.f32 %v681, %v691
      %v697 = vadd.f32 %v682, %v691
      %v698 = vadd.f32 %v683, %v691
      %v699 = vadd.f32 %v684, %v691
      %v700 = vadd.f32 %v685, %v691
      %v701 = vmax.f32 %v693, 0.0
      %v702 = vmax.f32 %v694, 0.0
      %v703 = vmax.f32 %v695, 0.0
      %v704 = vmax.f32 %v696, 0.0
      %v705 = vmax.f32 %v697, 0.0
      %v706 = vmax.f32 %v698, 0.0
      %v707 = vmax.f32 %v699, 0.0
      %v708 = vmax.f32 %v700, 0.0
      %v709 = vpack.c.bf16 %v702, %v701
      %v710 = vpack.c.bf16 %v704, %v703
      %v711 = vpack.c.bf16 %v706, %v705
      %v712 = vpack.c.bf16 %v708, %v707
      %v717 = vunpack.c.l.b16 %v709
      %v718 = vunpack.c.h.b16 %v709
      %v719 = vunpack.c.l.b16 %v710
      %v720 = vunpack.c.h.b16 %v710
      %v721 = vunpack.c.l.b16 %v711
      %v722 = vunpack.c.h.b16 %v711
      %v723 = vunpack.c.l.b16 %v712
      %v724 = vunpack.c.h.b16 %v712
      %v725 = vpack.c.b16 %v717, %v717
      %v726 = vpack.c.b16 %v718, %v718
      %v727 = vpack.c.b16 %v719, %v719
      %v728 = vpack.c.b16 %v720, %v720
      %v729 = vpack.c.b16 %v721, %v721
      %v730 = vpack.c.b16 %v722, %v722
      %v731 = vpack.c.b16 %v723, %v723
      %v732 = vpack.c.b16 %v724, %v724
      %vm741 = vcmask 519168
      %742 = vst.msk [vmem:[%s283] sm:$0xf] %vm741, %v725
      %743 = vst.msk [vmem:[%s283 + $0x4] sm:$0xf] %vm741, %v726
      %744 = vst.msk [vmem:[%s283 + $0x8] sm:$0xf] %vm741, %v727
      %745 = vst.msk [vmem:[%s283 + $0xc] sm:$0xf] %vm741, %v728
      %746 = vst.msk [vmem:[%s283 + $0x10] sm:$0xf] %vm741, %v729
      %747 = vst.msk [vmem:[%s283 + $0x14] sm:$0xf] %vm741, %v730
      %748 = vst.msk [vmem:[%s283 + $0x18] sm:$0xf] %vm741, %v731
      %749 = vst.msk [vmem:[%s283 + $0x1c] sm:$0xf] %vm741, %v732
      %p750 = scmp.lt.s32.totalorder %s20, 1
      %s751 = scalar_select %p750, %s20, 1
      %p752 = scmp.lt.s32.totalorder %s21, 0
      %s753 = scalar_select %p752, %s21, 0
      %s754 = smul.addr %s751, 8
      %s755 = sadd.s32 %s753, %s754
      %s756 = smul.addr %s755, 4
      %s757 = scalar_lea.vmem %s5, %s756
      // Predicated region
      $region41: #{densenet_forward.31} parent=39 // pred_check
        %p758 = pneg %p170
      $region42: #{densenet_forward.31} parent=39 // pred_check_branch
        %760 = sbr.rel (%p758) target = $region44
      $region43: #{densenet_forward.31} parent=39 // pred_region
        _
      $region44: #{densenet_forward.31} parent=39 // pred_fallthru
        _
    $region40: #{densenet_forward.31} parent=5 // pred_fallthru
      _
    %p761 = scmp.le.s32.totalorder 2, %s11
    // Predicated region
    $region45: #{densenet_forward.31} parent=5 // pred_check
      %p762 = pneg %p761
    $region46: #{densenet_forward.31} parent=5 // pred_check_branch
      %764 = sbr.rel (%p762) target = $region48
    $region47: #{densenet_forward.31} parent=5 // pred_region
      %s765 = ssub.s32 %s11, 2
      // Predicated region
      $region49: #{densenet_forward.31} parent=47 // pred_check
        %p766 = pneg %p176
      $region50: #{densenet_forward.31} parent=47 // pred_check_branch
        %768 = sbr.rel (%p766) target = $region52
      $region51: #{densenet_forward.31} parent=47 // pred_region
        %p769 = scmp.lt.s32.totalorder %s22, 1
        %s770 = scalar_select %p769, %s22, 1
        %p771 = scmp.lt.s32.totalorder %s23, 0
        %s772 = scalar_select %p771, %s23, 0
        %s773 = smul.addr %s770, 8
        %s774 = sadd.s32 %s772, %s773
        %s775 = smul.addr %s774, 4
        %s776 = scalar_lea.vmem %s5, %s775
      $region52: #{densenet_forward.31} parent=47 // pred_fallthru
        _
    $region48: #{densenet_forward.31} parent=5 // pred_fallthru
      _
  $region6: #{densenet_forward.31} parent=0 // loop_footer
    %s15 = sadd.s32 1, %s11
  $region7: #{densenet_forward.31} parent=0 // loop_footer_branch
    %10 = sbr.rel target = $region3
  $region8: #{densenet_forward.31} parent=0 // loop_exit
    _

// kernel: densenet_forward.28
$region0: #{densenet_forward.28}
  #allocation0 [shape = 'u32[]', space=smem, size = 0x4, offset = 0x4, fixed_abs, tag = 'smem constant byte address 0x4 - core index']
  #allocation1 [shape = 'u32[144,128]{1,0:T(1,128)}', space=vmem, size = 0x12000, scoped, tag = 'internal scratch']
  #allocation2 [shape = 'f32[128,32]{1,0:T(8,128)}', space=vmem, size = 0x10000, scoped, tag = 'scratch operand']
  %s0 = inlined_call_operand.vmem [shape: bf16[128,48], index: 0, kind: input, shape index: {}]
  %s1 = inlined_call_operand.vmem [shape: bf16[48,32], index: 1, kind: input, shape index: {}]
  %s2 = inlined_call_operand.vmem [shape: bf16[128,32], index: 2, kind: output, shape index: {}]
  %s3 = sld [smem:[#allocation0]]
  $region26: #{densenet_forward.28} parent=0
    _
  %s5 = ssub.s32 1, %s3
  %s6 = scalar_select 0, %s5, %s3
  // Predicated region
  $region2: #{densenet_forward.28} parent=0 // pred_check
    _
  $region3: #{densenet_forward.28} parent=0 // pred_check_branch
    %8 = sbr.rel (0) target = $region5
  $region4: #{densenet_forward.28} parent=0 // pred_region
    _
  $region5: #{densenet_forward.28} parent=0 // pred_fallthru
    _
  // Predicated region
  $region6: #{densenet_forward.28} parent=0 // pred_check
    _
  $region7: #{densenet_forward.28} parent=0 // pred_check_branch
    %10 = sbr.rel (0) target = $region9
  $region8: #{densenet_forward.28} parent=0 // pred_region
    _
  $region9: #{densenet_forward.28} parent=0 // pred_fallthru
    _
  %p12 = scmp.eq.s32.totalorder 0, 0
  // Predicated region
  $region10: #{densenet_forward.28} parent=0 // pred_check
    %p13 = pneg %p12
  $region11: #{densenet_forward.28} parent=0 // pred_check_branch
    %15 = sbr.rel (%p13) target = $region13
  $region12: #{densenet_forward.28} parent=0 // pred_region
    %vm16 = vcmask 261120
    %17 = vst.msk [vmem:[#allocation2] sm:$0xff] %vm16, 0.0
    %18 = vst.msk [vmem:[#allocation2 + $0x8] sm:$0xff] %vm16, 0.0
    %19 = vst.msk [vmem:[#allocation2 + $0x10] sm:$0xff] %vm16, 0.0
    %20 = vst.msk [vmem:[#allocation2 + $0x18] sm:$0xff] %vm16, 0.0
    %21 = vst.msk [vmem:[#allocation2 + $0x20] sm:$0xff] %vm16, 0.0
    %22 = vst.msk [vmem:[#allocation2 + $0x28] sm:$0xff] %vm16, 0.0
    %23 = vst.msk [vmem:[#allocation2 + $0x30] sm:$0xff] %vm16, 0.0
    %24 = vst.msk [vmem:[#allocation2 + $0x38] sm:$0xff] %vm16, 0.0
    %25 = vst.msk [vmem:[#allocation2 + $0x40] sm:$0xff] %vm16, 0.0
    %26 = vst.msk [vmem:[#allocation2 + $0x48] sm:$0xff] %vm16, 0.0
    %27 = vst.msk [vmem:[#allocation2 + $0x50] sm:$0xff] %vm16, 0.0
    %28 = vst.msk [vmem:[#allocation2 + $0x58] sm:$0xff] %vm16, 0.0
    %29 = vst.msk [vmem:[#allocation2 + $0x60] sm:$0xff] %vm16, 0.0
    %30 = vst.msk [vmem:[#allocation2 + $0x68] sm:$0xff] %vm16, 0.0
    %31 = vst.msk [vmem:[#allocation2 + $0x70] sm:$0xff] %vm16, 0.0
    %32 = vst.msk [vmem:[#allocation2 + $0x78] sm:$0xff] %vm16, 0.0
  $region13: #{densenet_forward.28} parent=0 // pred_fallthru
    _
  %v33 = vld [vmem:[#allocation2] sm:$0xff]
  %v34 = vld [vmem:[#allocation2 + $0x8] sm:$0xff]
  %v35 = vld [vmem:[#allocation2 + $0x10] sm:$0xff]
  %v36 = vld [vmem:[#allocation2 + $0x18] sm:$0xff]
  %v37 = vld [vmem:[#allocation2 + $0x20] sm:$0xff]
  %v38 = vld [vmem:[#allocation2 + $0x28] sm:$0xff]
  %v39 = vld [vmem:[#allocation2 + $0x30] sm:$0xff]
  %v40 = vld [vmem:[#allocation2 + $0x38] sm:$0xff]
  %v41 = vld [vmem:[#allocation2 + $0x40] sm:$0xff]
  %v42 = vld [vmem:[#allocation2 + $0x48] sm:$0xff]
  %v43 = vld [vmem:[#allocation2 + $0x50] sm:$0xff]
  %v44 = vld [vmem:[#allocation2 + $0x58] sm:$0xff]
  %v45 = vld [vmem:[#allocation2 + $0x60] sm:$0xff]
  %v46 = vld [vmem:[#allocation2 + $0x68] sm:$0xff]
  %v47 = vld [vmem:[#allocation2 + $0x70] sm:$0xff]
  %v48 = vld [vmem:[#allocation2 + $0x78] sm:$0xff]
  %v49 = vld [vmem:[%s0] sm:$0xf]
  %v50 = vld [vmem:[%s0 + $0x4] sm:$0xf]
  %v51 = vld [vmem:[%s0 + $0x8] sm:$0xf]
  %v52 = vld [vmem:[%s0 + $0xc] sm:$0xf]
  %v53 = vld [vmem:[%s0 + $0x10] sm:$0xf]
  %v54 = vld [vmem:[%s0 + $0x14] sm:$0xf]
  %v55 = vld [vmem:[%s0 + $0x18] sm:$0xf]
  %v56 = vld [vmem:[%s0 + $0x1c] sm:$0xf]
  %v57 = vld [vmem:[%s0 + $0x20] sm:$0xf]
  %v58 = vld [vmem:[%s0 + $0x24] sm:$0xf]
  %v59 = vld [vmem:[%s0 + $0x28] sm:$0xf]
  %v60 = vld [vmem:[%s0 + $0x2c] sm:$0xf]
  %v61 = vld [vmem:[%s0 + $0x30] sm:$0xf]
  %v62 = vld [vmem:[%s0 + $0x34] sm:$0xf]
  %v63 = vld [vmem:[%s0 + $0x38] sm:$0xf]
  %v64 = vld [vmem:[%s0 + $0x3c] sm:$0xf]
  %v65 = vld [vmem:[%s1] sm:$0xf]
  %v66 = vld [vmem:[%s1 + $0x4] sm:$0xf]
  %v67 = vld [vmem:[%s1 + $0x8] sm:$0xf]
  %v68 = vld [vmem:[%s1 + $0xc] sm:$0xf]
  %v69 = vld [vmem:[%s1 + $0x10] sm:$0xf]
  %v70 = vld [vmem:[%s1 + $0x14] sm:$0xf]
  %v87 = vunpack.c.l.b16 %v49
  %v88 = vunpack.c.l.b16 %v50
  %v89 = vunpack.c.l.b16 %v51
  %v90 = vunpack.c.l.b16 %v52
  %v91 = vunpack.c.l.b16 %v53
  %v92 = vunpack.c.l.b16 %v54
  %v93 = vunpack.c.l.b16 %v55
  %v94 = vunpack.c.l.b16 %v56
  %v95 = vunpack.c.l.b16 %v57
  %v96 = vunpack.c.l.b16 %v58
  %v97 = vunpack.c.l.b16 %v59
  %v98 = vunpack.c.l.b16 %v60
  %v99 = vunpack.c.l.b16 %v61
  %v100 = vunpack.c.l.b16 %v62
  %v101 = vunpack.c.l.b16 %v63
  %v102 = vunpack.c.l.b16 %v64
  %v103 = vpack.c.b16 %v88, %v87
  %v104 = vpack.c.b16 %v90, %v89
  %v105 = vpack.c.b16 %v92, %v91
  %v106 = vpack.c.b16 %v94, %v93
  %v107 = vpack.c.b16 %v96, %v95
  %v108 = vpack.c.b16 %v98, %v97
  %v109 = vpack.c.b16 %v100, %v99
  %v110 = vpack.c.b16 %v102, %v101
  %v117 = vunpack.c.l.b16 %v65
  %v118 = vunpack.c.l.b16 %v66
  %v119 = vunpack.c.l.b16 %v67
  %v120 = vunpack.c.l.b16 %v68
  %v121 = vunpack.c.l.b16 %v69
  %v122 = vunpack.c.l.b16 %v70
  %v123 = vpack.c.b16 %v118, %v117
  %v124 = vpack.c.b16 %v120, %v119
  %v125 = vpack.c.b16 %v122, %v121
  %vm129 = vcmask 392192
  %v131 = vsel %vm129, %v103, 0
  %v134 = vsel %vm129, %v104, 0
  %v137 = vsel %vm129, %v105, 0
  %v140 = vsel %vm129, %v106, 0
  %v143 = vsel %vm129, %v107, 0
  %v146 = vsel %vm129, %v108, 0
  %v149 = vsel %vm129, %v109, 0
  %v152 = vsel %vm129, %v110, 0
  %154 = vmatprep.subr.bf16.mxu0 0
  %155 = vmatpush1.bf16.msra.mxu0 %v123
  %156 = vmatprep.subr.bf16.mxu0 0
  %157 = vmatpush1.bf16.msra.mxu0 %v124
  %158 = vmatprep.subr.bf16.mxu0 0
  %159 = vmatpush1.bf16.msra.mxu0 %v125
  %160 = vmatprep.subr.bf16.mxu0 0
  %161 = vmatpush1.bf16.msra.mxu0 0
  %162 = vmatprep.subr.bf16.mxu0 0
  %163 = vmatpush1.bf16.msra.mxu0 0
  %164 = vmatprep.subr.bf16.mxu0 0
  %165 = vmatpush1.bf16.msra.mxu0 0
  %166 = vmatprep.subr.bf16.mxu0 0
  %167 = vmatpush1.bf16.msra.mxu0 0
  %168 = vmatprep.subr.bf16.mxu0 0
  %169 = vmatpush1.bf16.msra.mxu0 0
  %170 = vmatprep.subr.bf16.mxu0 0
  %171 = vmatpush1.bf16.msra.mxu0 0
  %172 = vmatprep.subr.bf16.mxu0 0
  %173 = vmatpush1.bf16.msra.mxu0 0
  %174 = vmatprep.subr.bf16.mxu0 0
  %175 = vmatpush1.bf16.msra.mxu0 0
  %176 = vmatprep.subr.bf16.mxu0 0
  %177 = vmatpush1.bf16.msra.mxu0 0
  %178 = vmatprep.subr.bf16.mxu0 0
  %179 = vmatpush1.bf16.msra.mxu0 0
  %180 = vmatprep.subr.bf16.mxu0 0
  %181 = vmatpush1.bf16.msra.mxu0 0
  %182 = vmatprep.subr.bf16.mxu0 0
  %183 = vmatpush1.bf16.msra.mxu0 0
  %184 = vmatprep.subr.bf16.mxu0 0
  %185 = vmatpush1.bf16.msra.mxu0 0
  %186 = vmatprep.mubr.bf16.mxu0 0
  %187 = vmatmul.mubr.bf16.gmra.mrb[0].mxu0 %v131
  %v188 = vpop.f32.mrb[0].mxu0
  %v189 = vadd.f32 0.0, %v188
  %v190 = vpop.f32.mrb[0].mxu0
  %v191 = vpop.f32.mrb[0].mxu0
  %v192 = vadd.f32 0.0, %v191
  %v193 = vpop.f32.mrb[0].mxu0
  %194 = vmatprep.mubr.bf16.mxu0 0
  %195 = vmatmul.mubr.bf16.gmra.mrb[0].mxu0 %v134
  %v196 = vpop.f32.mrb[0].mxu0
  %v197 = vadd.f32 0.0, %v196
  %v198 = vpop.f32.mrb[0].mxu0
  %v199 = vpop.f32.mrb[0].mxu0
  %v200 = vadd.f32 0.0, %v199
  %v201 = vpop.f32.mrb[0].mxu0
  %202 = vmatprep.mubr.bf16.mxu0 0
  %203 = vmatmul.mubr.bf16.gmra.mrb[0].mxu0 %v137
  %v204 = vpop.f32.mrb[0].mxu0
  %v205 = vadd.f32 0.0, %v204
  %v206 = vpop.f32.mrb[0].mxu0
  %v207 = vpop.f32.mrb[0].mxu0
  %v208 = vadd.f32 0.0, %v207
  %v209 = vpop.f32.mrb[0].mxu0
  %210 = vmatprep.mubr.bf16.mxu0 0
  %211 = vmatmul.mubr.bf16.gmra.mrb[0].mxu0 %v140
  %v212 = vpop.f32.mrb[0].mxu0
  %v213 = vadd.f32 0.0, %v212
  %v214 = vpop.f32.mrb[0].mxu0
  %v215 = vpop.f32.mrb[0].mxu0
  %v216 = vadd.f32 0.0, %v215
  %v217 = vpop.f32.mrb[0].mxu0
  %218 = vmatprep.mubr.bf16.mxu0 0
  %219 = vmatmul.mubr.bf16.gmra.mrb[0].mxu0 %v143
  %v220 = vpop.f32.mrb[0].mxu0
  %v221 = vadd.f32 0.0, %v220
  %v222 = vpop.f32.mrb[0].mxu0
  %v223 = vpop.f32.mrb[0].mxu0
  %v224 = vadd.f32 0.0, %v223
  %v225 = vpop.f32.mrb[0].mxu0
  %226 = vmatprep.mubr.bf16.mxu0 0
  %227 = vmatmul.mubr.bf16.gmra.mrb[0].mxu0 %v146
  %v228 = vpop.f32.mrb[0].mxu0
  %v229 = vadd.f32 0.0, %v228
  %v230 = vpop.f32.mrb[0].mxu0
  %v231 = vpop.f32.mrb[0].mxu0
  %v232 = vadd.f32 0.0, %v231
  %v233 = vpop.f32.mrb[0].mxu0
  %234 = vmatprep.mubr.bf16.mxu0 0
  %235 = vmatmul.mubr.bf16.gmra.mrb[0].mxu0 %v149
  %v236 = vpop.f32.mrb[0].mxu0
  %v237 = vadd.f32 0.0, %v236
  %v238 = vpop.f32.mrb[0].mxu0
  %v239 = vpop.f32.mrb[0].mxu0
  %v240 = vadd.f32 0.0, %v239
  %v241 = vpop.f32.mrb[0].mxu0
  %242 = vmatprep.mubr.bf16.mxu0 0
  %243 = vmatmul.mubr.bf16.gmra.mrb[0].mxu0 %v152
  %v244 = vpop.f32.mrb[0].mxu0
  %v245 = vadd.f32 0.0, %v244
  %v246 = vpop.f32.mrb[0].mxu0
  %v247 = vpop.f32.mrb[0].mxu0
  %v248 = vadd.f32 0.0, %v247
  %v249 = vpop.f32.mrb[0].mxu0
  %250 = vdwg.mxu0
  %v251 = vadd.f32 %v33, %v189
  %v252 = vadd.f32 %v34, %v192
  %v253 = vadd.f32 %v35, %v197
  %v254 = vadd.f32 %v36, %v200
  %v255 = vadd.f32 %v37, %v205
  %v256 = vadd.f32 %v38, %v208
  %v257 = vadd.f32 %v39, %v213
  %v258 = vadd.f32 %v40, %v216
  %v259 = vadd.f32 %v41, %v221
  %v260 = vadd.f32 %v42, %v224
  %v261 = vadd.f32 %v43, %v229
  %v262 = vadd.f32 %v44, %v232
  %v263 = vadd.f32 %v45, %v237
  %v264 = vadd.f32 %v46, %v240
  %v265 = vadd.f32 %v47, %v245
  %v266 = vadd.f32 %v48, %v248
  %vm267 = vcmask 261120
  %268 = vst.msk [vmem:[#allocation2] sm:$0xff] %vm267, %v251
  %269 = vst.msk [vmem:[#allocation2 + $0x8] sm:$0xff] %vm267, %v252
  %270 = vst.msk [vmem:[#allocation2 + $0x10] sm:$0xff] %vm267, %v253
  %271 = vst.msk [vmem:[#allocation2 + $0x18] sm:$0xff] %vm267, %v254
  %272 = vst.msk [vmem:[#allocation2 + $0x20] sm:$0xff] %vm267, %v255
  %273 = vst.msk [vmem:[#allocation2 + $0x28] sm:$0xff] %vm267, %v256
  %274 = vst.msk [vmem:[#allocation2 + $0x30] sm:$0xff] %vm267, %v257
  %275 = vst.msk [vmem:[#allocation2 + $0x38] sm:$0xff] %vm267, %v258
  %276 = vst.msk [vmem:[#allocation2 + $0x40] sm:$0xff] %vm267, %v259
  %277 = vst.msk [vmem:[#allocation2 + $0x48] sm:$0xff] %vm267, %v260
  %278 = vst.msk [vmem:[#allocation2 + $0x50] sm:$0xff] %vm267, %v261
  %279 = vst.msk [vmem:[#allocation2 + $0x58] sm:$0xff] %vm267, %v262
  %280 = vst.msk [vmem:[#allocation2 + $0x60] sm:$0xff] %vm267, %v263
  %281 = vst.msk [vmem:[#allocation2 + $0x68] sm:$0xff] %vm267, %v264
  %282 = vst.msk [vmem:[#allocation2 + $0x70] sm:$0xff] %vm267, %v265
  %283 = vst.msk [vmem:[#allocation2 + $0x78] sm:$0xff] %vm267, %v266
  // Predicated region
  $region14: #{densenet_forward.28} parent=0 // pred_check
    %p284 = pneg %p12
  $region15: #{densenet_forward.28} parent=0 // pred_check_branch
    %286 = sbr.rel (%p284) target = $region17
  $region16: #{densenet_forward.28} parent=0 // pred_region
    %v287 = vld [vmem:[#allocation2] sm:$0xff]
    %v288 = vld [vmem:[#allocation2 + $0x8] sm:$0xff]
    %v289 = vld [vmem:[#allocation2 + $0x10] sm:$0xff]
    %v290 = vld [vmem:[#allocation2 + $0x18] sm:$0xff]
    %v291 = vld [vmem:[#allocation2 + $0x20] sm:$0xff]
    %v292 = vld [vmem:[#allocation2 + $0x28] sm:$0xff]
    %v293 = vld [vmem:[#allocation2 + $0x30] sm:$0xff]
    %v294 = vld [vmem:[#allocation2 + $0x38] sm:$0xff]
    %v295 = vld [vmem:[#allocation2 + $0x40] sm:$0xff]
    %v296 = vld [vmem:[#allocation2 + $0x48] sm:$0xff]
    %v297 = vld [vmem:[#allocation2 + $0x50] sm:$0xff]
    %v298 = vld [vmem:[#allocation2 + $0x58] sm:$0xff]
    %v299 = vld [vmem:[#allocation2 + $0x60] sm:$0xff]
    %v300 = vld [vmem:[#allocation2 + $0x68] sm:$0xff]
    %v301 = vld [vmem:[#allocation2 + $0x70] sm:$0xff]
    %v302 = vld [vmem:[#allocation2 + $0x78] sm:$0xff]
    %v303 = vpack.c.bf16 %v288, %v287
    %v304 = vpack.c.bf16 %v290, %v289
    %v305 = vpack.c.bf16 %v292, %v291
    %v306 = vpack.c.bf16 %v294, %v293
    %v307 = vpack.c.bf16 %v296, %v295
    %v308 = vpack.c.bf16 %v298, %v297
    %v309 = vpack.c.bf16 %v300, %v299
    %v310 = vpack.c.bf16 %v302, %v301
    %v319 = vunpack.c.l.b16 %v303
    %v320 = vunpack.c.h.b16 %v303
    %v321 = vunpack.c.l.b16 %v304
    %v322 = vunpack.c.h.b16 %v304
    %v323 = vunpack.c.l.b16 %v305
    %v324 = vunpack.c.h.b16 %v305
    %v325 = vunpack.c.l.b16 %v306
    %v326 = vunpack.c.h.b16 %v306
    %v327 = vunpack.c.l.b16 %v307
    %v328 = vunpack.c.h.b16 %v307
    %v329 = vunpack.c.l.b16 %v308
    %v330 = vunpack.c.h.b16 %v308
    %v331 = vunpack.c.l.b16 %v309
    %v332 = vunpack.c.h.b16 %v309
    %v333 = vunpack.c.l.b16 %v310
    %v334 = vunpack.c.h.b16 %v310
    %v335 = vpack.c.b16 %v319, %v319
    %v336 = vpack.c.b16 %v320, %v320
    %v337 = vpack.c.b16 %v321, %v321
    %v338 = vpack.c.b16 %v322, %v322
    %v339 = vpack.c.b16 %v323, %v323
    %v340 = vpack.c.b16 %v324, %v324
    %v341 = vpack.c.b16 %v325, %v325
    %v342 = vpack.c.b16 %v326, %v326
    %v343 = vpack.c.b16 %v327, %v327
    %v344 = vpack.c.b16 %v328, %v328
    %v345 = vpack.c.b16 %v329, %v329
    %v346 = vpack.c.b16 %v330, %v330
    %v347 = vpack.c.b16 %v331, %v331
    %v348 = vpack.c.b16 %v332, %v332
    %v349 = vpack.c.b16 %v333, %v333
    %v350 = vpack.c.b16 %v334, %v334
    %vm367 = vcmask 257024
    %368 = vst.msk [vmem:[%s2] sm:$0xf] %vm367, %v335
    %369 = vst.msk [vmem:[%s2 + $0x4] sm:$0xf] %vm367, %v336
    %370 = vst.msk [vmem:[%s2 + $0x8] sm:$0xf] %vm367, %v337
    %371 = vst.msk [vmem:[%s2 + $0xc] sm:$0xf] %vm367, %v338
    %372 = vst.msk [vmem:[%s2 + $0x10] sm:$0xf] %vm367, %v339
    %373 = vst.msk [vmem:[%s2 + $0x14] sm:$0xf] %vm367, %v340
    %374 = vst.msk [vmem:[%s2 + $0x18] sm:$0xf] %vm367, %v341
    %375 = vst.msk [vmem:[%s2 + $0x1c] sm:$0xf] %vm367, %v342
    %376 = vst.msk [vmem:[%s2 + $0x20] sm:$0xf] %vm367, %v343
    %377 = vst.msk [vmem:[%s2 + $0x24] sm:$0xf] %vm367, %v344
    %378 = vst.msk [vmem:[%s2 + $0x28] sm:$0xf] %vm367, %v345
    %379 = vst.msk [vmem:[%s2 + $0x2c] sm:$0xf] %vm367, %v346
    %380 = vst.msk [vmem:[%s2 + $0x30] sm:$0xf] %vm367, %v347
    %381 = vst.msk [vmem:[%s2 + $0x34] sm:$0xf] %vm367, %v348
    %382 = vst.msk [vmem:[%s2 + $0x38] sm:$0xf] %vm367, %v349
    %383 = vst.msk [vmem:[%s2 + $0x3c] sm:$0xf] %vm367, %v350
  $region17: #{densenet_forward.28} parent=0 // pred_fallthru
    _
  // Predicated region
  $region18: #{densenet_forward.28} parent=0 // pred_check
    _
  $region19: #{densenet_forward.28} parent=0 // pred_check_branch
    %385 = sbr.rel (0) target = $region21
  $region20: #{densenet_forward.28} parent=0 // pred_region
    _
  $region21: #{densenet_forward.28} parent=0 // pred_fallthru
    _
  // Predicated region
  $region22: #{densenet_forward.28} parent=0 // pred_check
    _
  $region23: #{densenet_forward.28} parent=0 // pred_check_branch
    %387 = sbr.rel (0) target = $region25
  $region24: #{densenet_forward.28} parent=0 // pred_region
    _
  $region25: #{densenet_forward.28} parent=0 // pred_fallthru
    _

// kernel: densenet_forward.26
$region0: #{densenet_forward.26}
  #allocation0 [shape = 'u32[]', space=smem, size = 0x4, offset = 0x4, fixed_abs, tag = 'smem constant byte address 0x4 - core index']
  #allocation1 [shape = 'u32[144,128]{1,0:T(1,128)}', space=vmem, size = 0x12000, scoped, tag = 'internal scratch']
  %s0 = inlined_call_operand.vmem [shape: bf16[2,110,32], index: 0, kind: input, shape index: {}]
  %s1 = inlined_call_operand.vmem [shape: bf16[9,32,16], index: 1, kind: input, shape index: {}]
  %s2 = inlined_call_operand.vmem [shape: bf16[2,80,16], index: 2, kind: output, shape index: {}]
  %s3 = sld [smem:[#allocation0]]
  $region41: #{densenet_forward.26} parent=0
    _
  %s5 = ssub.s32 1, %s3
  %s6 = scalar_select 0, %s5, %s3
  loop: start=0, step=1, limit=4
  $region2: #{densenet_forward.26} parent=0 // loop_pre_header
    _
  $region3: #{densenet_forward.26} parent=0 // loop_header
    %s8 = sphi 0, %s12
    %p9 = scmp.ge.s32.totalorder %s8, 4
    %s18 = sphi 0, %s20
    %s21 = sphi 0, %s18
    %s22 = sphi 0, %s21
    %s38 = sphi 0, %s22
    %s42 = sphi 0, %s42
    %s44 = sphi 0, %s42
    %s45 = sphi 0, %s44
    %s59 = sphi 0, %s45
    %s65 = sphi 0, %s67
    %s68 = sphi 0, %s65
    %s69 = sphi 0, %s68
    %s85 = sphi 0, %s69
  $region4: #{densenet_forward.26} parent=0 // loop_header_branch
    %11 = sbr.rel (%p9) target = $region8
  $region5: #{densenet_forward.26} parent=0 // loop_body
    %s13 = ssub.s32 %s8, 1
    %s14 = ssub.s32 %s8, 2
    %s15 = sadd.s32 %s8, 1
    %s16 = ssub.s32 %s8, %s15
    %p17 = scmp.eq.s32.totalorder %s16, 0
    %s19 = sadd.s32 %s18, 1
    %s20 = scalar_select %p17, %s18, %s19
    %p23 = pneg %p17
    %p24 = scmp.eq.s32.totalorder %s8, 1
    %p25 = por %p23, %p24
    %p26 = scmp.ne.s32.totalorder %s18, %s21
    %p27 = scmp.eq.s32.totalorder %s8, 0
    %p28 = por %p26, %p27
    %p29 = scmp.ne.s32.totalorder %s18, %s21
    %p30 = scmp.eq.s32.totalorder %s13, 1
    %p31 = por %p29, %p30
    %p32 = scmp.ne.s32.totalorder %s21, %s22
    %p33 = scmp.eq.s32.totalorder %s13, 0
    %p34 = por %p32, %p33
    %p35 = scmp.ne.s32.totalorder %s21, %s22
    %p36 = scmp.eq.s32.totalorder %s14, 1
    %p37 = por %p35, %p36
    %p39 = scmp.ne.s32.totalorder %s22, %s38
    %p40 = scmp.eq.s32.totalorder %s14, 0
    %p41 = por %p39, %p40
    %s43 = sadd.s32 %s42, 1
    %p46 = scmp.eq.s32.totalorder %s8, 1
    %p47 = scmp.ne.s32.totalorder %s42, %s44
    %p48 = scmp.eq.s32.totalorder %s8, 0
    %p49 = por %p47, %p48
    %p50 = scmp.ne.s32.totalorder %s42, %s44
    %p51 = scmp.eq.s32.totalorder %s13, 1
    %p52 = por %p50, %p51
    %p53 = scmp.ne.s32.totalorder %s44, %s45
    %p54 = scmp.eq.s32.totalorder %s13, 0
    %p55 = por %p53, %p54
    %p56 = scmp.ne.s32.totalorder %s44, %s45
    %p57 = scmp.eq.s32.totalorder %s14, 1
    %p58 = por %p56, %p57
    %p60 = scmp.ne.s32.totalorder %s45, %s59
    %p61 = scmp.eq.s32.totalorder %s14, 0
    %p62 = por %p60, %p61
    %s63 = ssub.s32 %s8, %s15
    %p64 = scmp.eq.s32.totalorder %s63, 0
    %s66 = sadd.s32 %s65, 1
    %s67 = scalar_select %p64, %s65, %s66
    %p70 = pneg %p64
    %p71 = scmp.eq.s32.totalorder %s8, 1
    %p72 = por %p70, %p71
    %p73 = scmp.ne.s32.totalorder %s65, %s68
    %p74 = scmp.eq.s32.totalorder %s8, 0
    %p75 = por %p73, %p74
    %p76 = scmp.ne.s32.totalorder %s65, %s68
    %p77 = scmp.eq.s32.totalorder %s13, 1
    %p78 = por %p76, %p77
    %p79 = scmp.ne.s32.totalorder %s68, %s69
    %p80 = scmp.eq.s32.totalorder %s13, 0
    %p81 = por %p79, %p80
    %p82 = scmp.ne.s32.totalorder %s68, %s69
    %p83 = scmp.eq.s32.totalorder %s14, 1
    %p84 = por %p82, %p83
    %p86 = scmp.ne.s32.totalorder %s69, %s85
    %p87 = scmp.eq.s32.totalorder %s14, 0
    %p88 = por %p86, %p87
    %p89 = scmp.le.s32.totalorder 1, %s8
    %p90 = scmp.lt.s32.totalorder %s8, 3
    %p91 = pnand %p89, %p90
    %p92 = pneg %p91
    // Predicated region
    $region9: #{densenet_forward.26} parent=5 // pred_check
      _
    $region10: #{densenet_forward.26} parent=5 // pred_check_branch
      %94 = sbr.rel (%p91) target = $region12
    $region11: #{densenet_forward.26} parent=5 // pred_region
      %s95 = ssub.s32 %s8, 1
      // Predicated region
      $region13: #{densenet_forward.26} parent=11 // pred_check
        %p96 = pneg %p55
      $region14: #{densenet_forward.26} parent=11 // pred_check_branch
        %98 = sbr.rel (%p96) target = $region16
      $region15: #{densenet_forward.26} parent=11 // pred_region
        _
      $region16: #{densenet_forward.26} parent=11 // pred_fallthru
        _
    $region12: #{densenet_forward.26} parent=5 // pred_fallthru
      _
    %p99 = scmp.lt.s32.totalorder %s8, 2
    // Predicated region
    $region17: #{densenet_forward.26} parent=5 // pred_check
      %p100 = pneg %p99
    $region18: #{densenet_forward.26} parent=5 // pred_check_branch
      %102 = sbr.rel (%p100) target = $region20
    $region19: #{densenet_forward.26} parent=5 // pred_region
      // Predicated region
      $region21: #{densenet_forward.26} parent=19 // pred_check
        %p103 = pneg %p28
      $region22: #{densenet_forward.26} parent=19 // pred_check_branch
        %105 = sbr.rel (%p103) target = $region24
      $region23: #{densenet_forward.26} parent=19 // pred_region
        %p106 = scmp.lt.s32.totalorder %s8, 1
        %s107 = scalar_select %p106, %s8, 1
        %s108 = smul.addr %s107, 14
        %s109 = smul.addr %s108, 4
        %s110 = scalar_lea.vmem %s0, %s109
      $region24: #{densenet_forward.26} parent=19 // pred_fallthru
        _
    $region20: #{densenet_forward.26} parent=5 // pred_fallthru
      _
    %p111 = scmp.le.s32.totalorder 1, %s8
    %p112 = scmp.lt.s32.totalorder %s8, 3
    %p113 = pnand %p111, %p112
    %p114 = pneg %p113
    // Predicated region
    $region25: #{densenet_forward.26} parent=5 // pred_check
      _
    $region26: #{densenet_forward.26} parent=5 // pred_check_branch
      %116 = sbr.rel (%p113) target = $region28
    $region27: #{densenet_forward.26} parent=5 // pred_region
      %s117 = ssub.s32 %s8, 1
      %p118 = scmp.lt.s32.totalorder %s13, 1
      %s119 = scalar_select %p118, %s13, 1
      %s120 = smul.addr %s119, 14
      %s121 = smul.addr %s120, 4
      %s122 = scalar_lea.vmem %s0, %s121
      %p123 = pneg %p34
      %p124 = pneg %p31
      %p125 = pneg %p55
      %p126 = pneg %p52
      %p127 = pneg %p81
      %p128 = pneg %p78
      %p129 = scmp.lt.s32.totalorder %s13, 1
      %s130 = scalar_select %p129, %s13, 1
      %s131 = smul.addr %s130, 10
      %s132 = smul.addr %s131, 4
      %s133 = scalar_lea.vmem %s2, %s132
      %p134 = scmp.lt.s32.totalorder %s13, 1
      %s135 = scalar_select %p134, %s13, 1
      %s136 = smul.addr %s135, 14
      %s137 = smul.addr %s136, 4
      %s138 = scalar_lea.vmem %s0, %s137
      %p139 = scmp.lt.s32.totalorder %s13, 1
      %s140 = scalar_select %p139, %s13, 1
      %s141 = smul.addr %s140, 10
      %s142 = smul.addr %s141, 4
      %s143 = scalar_lea.vmem %s2, %s142
      %v145 = vld [vmem:[%s138] sm:$0xf]
      %v146 = vld [vmem:[%s138 + $0x4] sm:$0xf]
      %v147 = vld [vmem:[%s138 + $0x8] sm:$0xf]
      %v148 = vld [vmem:[%s138 + $0xc] sm:$0xf]
      %v149 = vld [vmem:[%s138 + $0x10] sm:$0xf]
      %v150 = vld [vmem:[%s138 + $0x14] sm:$0xf]
      %v151 = vld [vmem:[%s138 + $0x18] sm:$0xf]
      %v152 = vld [vmem:[%s138 + $0x1c] sm:$0xf]
      %v153 = vld [vmem:[%s138 + $0x20] sm:$0xf]
      %v154 = vld [vmem:[%s138 + $0x24] sm:$0xf]
      %v155 = vld [vmem:[%s1] sm:$0xf]
      %v156 = vld [vmem:[%s1 + $0x4] sm:$0xf]
      %v157 = vld [vmem:[%s1 + $0x8] sm:$0xf]
      %v158 = vld [vmem:[%s1 + $0xc] sm:$0xf]
      %v159 = vld [vmem:[%s138 + $0x28] sm:$0x1]
      %s160 = scalar_lea.vmem %s1, 16
      %v161 = vld [vmem:[%s160] sm:$0xf]
      %v162 = vld [vmem:[%s160 + $0x4] sm:$0xf]
      %v163 = vld [vmem:[%s160 + $0x8] sm:$0xf]
      %v164 = vld [vmem:[%s160 + $0xc] sm:$0xf]
      %v176 = vunpack.c.l.b16 %v145
      %v177 = vunpack.c.l.b16 %v146
      %v178 = vunpack.c.l.b16 %v147
      %v179 = vunpack.c.l.b16 %v148
      %v180 = vunpack.c.l.b16 %v149
      %v181 = vunpack.c.l.b16 %v150
      %v182 = vunpack.c.l.b16 %v151
      %v183 = vunpack.c.l.b16 %v152
      %v184 = vunpack.c.l.b16 %v153
      %v185 = vunpack.c.l.b16 %v154
      %v186 = vunpack.c.l.b16 %v159
      %v187 = vpack.c.b16 %v177, %v176
      %v188 = vpack.c.b16 %v179, %v178
      %v189 = vpack.c.b16 %v181, %v180
      %v190 = vpack.c.b16 %v183, %v182
      %v191 = vpack.c.b16 %v185, %v184
      %v192 = vpack.c.b16 %v186, %v186
      %vm193 = vsmask.f32 7424
      %v195 = vshrl.u32 %v187, 16
      %v197 = vshll.u32 %v187, 16
      %v199 = vrot.slane %v197, 1
      %v200 = vor.u32 %v195, %v199
      %v202 = vshll.u32 %v188, 16
      %v204 = vrot.slane %v202, 1
      %v205 = vsel %vm193, %v200, %v204
      %v206 = vshrl.u32 %v188, 16
      %v208 = vor.u32 %v206, %v204
      %v210 = vshll.u32 %v189, 16
      %v212 = vrot.slane %v210, 1
      %v213 = vsel %vm193, %v208, %v212
      %v214 = vshrl.u32 %v189, 16
      %v216 = vor.u32 %v214, %v212
      %v218 = vshll.u32 %v190, 16
      %v220 = vrot.slane %v218, 1
      %v221 = vsel %vm193, %v216, %v220
      %v222 = vshrl.u32 %v190, 16
      %v224 = vor.u32 %v222, %v220
      %v226 = vshll.u32 %v191, 16
      %v228 = vrot.slane %v226, 1
      %v229 = vsel %vm193, %v224, %v228
      %v230 = vshrl.u32 %v191, 16
      %v232 = vor.u32 %v230, %v228
      %v234 = vshll.u32 %v192, 16
      %v236 = vrot.slane %v234, 1
      %v237 = vsel %vm193, %v232, %v236
      %v242 = vunpack.c.l.b16 %v161
      %v243 = vunpack.c.l.b16 %v162
      %v244 = vunpack.c.l.b16 %v163
      %v245 = vunpack.c.l.b16 %v164
      %v246 = vpack.c.b16 %v243, %v242
      %v247 = vpack.c.b16 %v245, %v244
      %vm250 = vcmask 261120
      %v252 = vsel %vm250, %v205, 0
      %v255 = vsel %vm250, %v213, 0
      %v258 = vsel %vm250, %v221, 0
      %v261 = vsel %vm250, %v229, 0
      %v264 = vsel %vm250, %v237, 0
      %266 = vmatprep.subr.bf16.mxu0 0
      %267 = vmatpush1.bf16.msra.mxu0 %v246
      %268 = vmatprep.subr.bf16.mxu0 0
      %269 = vmatpush1.bf16.msra.mxu0 %v247
      %270 = vmatprep.subr.bf16.mxu0 0
      %271 = vmatpush1.bf16.msra.mxu0 0
      %272 = vmatprep.subr.bf16.mxu0 0
      %273 = vmatpush1.bf16.msra.mxu0 0
      %274 = vmatprep.subr.bf16.mxu0 0
      %275 = vmatpush1.bf16.msra.mxu0 0
      %276 = vmatprep.subr.bf16.mxu0 0
      %277 = vmatpush1.bf16.msra.mxu0 0
      %278 = vmatprep.subr.bf16.mxu0 0
      %279 = vmatpush1.bf16.msra.mxu0 0
      %280 = vmatprep.subr.bf16.mxu0 0
      %281 = vmatpush1.bf16.msra.mxu0 0
      %282 = vmatprep.subr.bf16.mxu0 0
      %283 = vmatpush1.bf16.msra.mxu0 0
      %284 = vmatprep.subr.bf16.mxu0 0
      %285 = vmatpush1.bf16.msra.mxu0 0
      %286 = vmatprep.subr.bf16.mxu0 0
      %287 = vmatpush1.bf16.msra.mxu0 0
      %288 = vmatprep.subr.bf16.mxu0 0
      %289 = vmatpush1.bf16.msra.mxu0 0
      %290 = vmatprep.subr.bf16.mxu0 0
      %291 = vmatpush1.bf16.msra.mxu0 0
      %292 = vmatprep.subr.bf16.mxu0 0
      %293 = vmatpush1.bf16.msra.mxu0 0
      %294 = vmatprep.subr.bf16.mxu0 0
      %295 = vmatpush1.bf16.msra.mxu0 0
      %296 = vmatprep.subr.bf16.mxu0 0
      %297 = vmatpush1.bf16.msra.mxu0 0
      %298 = vmatprep.mubr.bf16.mxu0 0
      %299 = vmatmul.mubr.bf16.gmra.mrb[0].mxu0 %v252
      %v300 = vpop.f32.mrb[0].mxu0
      %v301 = vadd.f32 0.0, %v300
      %v302 = vpop.f32.mrb[0].mxu0
      %v303 = vpop.f32.mrb[0].mxu0
      %v304 = vadd.f32 0.0, %v303
      %v305 = vpop.f32.mrb[0].mxu0
      %306 = vmatprep.mubr.bf16.mxu0 0
      %307 = vmatmul.mubr.bf16.gmra.mrb[0].mxu0 %v255
      %v308 = vpop.f32.mrb[0].mxu0
      %v309 = vadd.f32 0.0, %v308
      %v310 = vpop.f32.mrb[0].mxu0
      %v311 = vpop.f32.mrb[0].mxu0
      %v312 = vadd.f32 0.0, %v311
      %v313 = vpop.f32.mrb[0].mxu0
      %314 = vmatprep.mubr.bf16.mxu0 0
      %315 = vmatmul.mubr.bf16.gmra.mrb[0].mxu0 %v258
      %v316 = vpop.f32.mrb[0].mxu0
      %v317 = vadd.f32 0.0, %v316
      %v318 = vpop.f32.mrb[0].mxu0
      %v319 = vpop.f32.mrb[0].mxu0
      %v320 = vadd.f32 0.0, %v319
      %v321 = vpop.f32.mrb[0].mxu0
      %322 = vmatprep.mubr.bf16.mxu0 0
      %323 = vmatmul.mubr.bf16.gmra.mrb[0].mxu0 %v261
      %v324 = vpop.f32.mrb[0].mxu0
      %v325 = vadd.f32 0.0, %v324
      %v326 = vpop.f32.mrb[0].mxu0
      %v327 = vpop.f32.mrb[0].mxu0
      %v328 = vadd.f32 0.0, %v327
      %v329 = vpop.f32.mrb[0].mxu0
      %330 = vmatprep.mubr.bf16.mxu0 0
      %331 = vmatmul.mubr.bf16.gmra.mrb[0].mxu0 %v264
      %v332 = vpop.f32.mrb[0].mxu0
      %v333 = vadd.f32 0.0, %v332
      %v334 = vpop.f32.mrb[0].mxu0
      %v335 = vpop.f32.mrb[0].mxu0
      %v336 = vadd.f32 0.0, %v335
      %v337 = vpop.f32.mrb[0].mxu0
      %338 = vdwg.mxu0
      %v343 = vunpack.c.l.b16 %v155
      %v344 = vunpack.c.l.b16 %v156
      %v345 = vunpack.c.l.b16 %v157
      %v346 = vunpack.c.l.b16 %v158
      %v347 = vpack.c.b16 %v344, %v343
      %v348 = vpack.c.b16 %v346, %v345
      %v351 = vsel %vm250, %v187, 0
      %v353 = vsel %vm250, %v188, 0
      %v355 = vsel %vm250, %v189, 0
      %v357 = vsel %vm250, %v190, 0
      %v359 = vsel %vm250, %v191, 0
      %361 = vmatprep.subr.bf16.mxu0 0
      %362 = vmatpush1.bf16.msra.mxu0 %v347
      %363 = vmatprep.subr.bf16.mxu0 0
      %364 = vmatpush1.bf16.msra.mxu0 %v348
      %365 = vmatprep.subr.bf16.mxu0 0
      %366 = vmatpush1.bf16.msra.mxu0 0
      %367 = vmatprep.subr.bf16.mxu0 0
      %368 = vmatpush1.bf16.msra.mxu0 0
      %369 = vmatprep.subr.bf16.mxu0 0
      %370 = vmatpush1.bf16.msra.mxu0 0
      %371 = vmatprep.subr.bf16.mxu0 0
      %372 = vmatpush1.bf16.msra.mxu0 0
      %373 = vmatprep.subr.bf16.mxu0 0
      %374 = vmatpush1.bf16.msra.mxu0 0
      %375 = vmatprep.subr.bf16.mxu0 0
      %376 = vmatpush1.bf16.msra.mxu0 0
      %377 = vmatprep.subr.bf16.mxu0 0
      %378 = vmatpush1.bf16.msra.mxu0 0
      %379 = vmatprep.subr.bf16.mxu0 0
      %380 = vmatpush1.bf16.msra.mxu0 0
      %381 = vmatprep.subr.bf16.mxu0 0
      %382 = vmatpush1.bf16.msra.mxu0 0
      %383 = vmatprep.subr.bf16.mxu0 0
      %384 = vmatpush1.bf16.msra.mxu0 0
      %385 = vmatprep.subr.bf16.mxu0 0
      %386 = vmatpush1.bf16.msra.mxu0 0
      %387 = vmatprep.subr.bf16.mxu0 0
      %388 = vmatpush1.bf16.msra.mxu0 0
      %389 = vmatprep.subr.bf16.mxu0 0
      %390 = vmatpush1.bf16.msra.mxu0 0
      %391 = vmatprep.subr.bf16.mxu0 0
      %392 = vmatpush1.bf16.msra.mxu0 0
      %393 = vmatprep.mubr.bf16.mxu0 0
      %394 = vmatmul.mubr.bf16.gmra.mrb[0].mxu0 %v351
      %v395 = vpop.f32.mrb[0].mxu0
      %v396 = vadd.f32 %v301, %v395
      %v397 = vpop.f32.mrb[0].mxu0
      %v398 = vpop.f32.mrb[0].mxu0
      %v399 = vadd.f32 %v304, %v398
      %v400 = vpop.f32.mrb[0].mxu0
      %401 = vmatprep.mubr.bf16.mxu0 0
      %402 = vmatmul.mubr.bf16.gmra.mrb[0].mxu0 %v353
      %v403 = vpop.f32.mrb[0].mxu0
      %v404 = vadd.f32 %v309, %v403
      %v405 = vpop.f32.mrb[0].mxu0
      %v406 = vpop.f32.mrb[0].mxu0
      %v407 = vadd.f32 %v312, %v406
      %v408 = vpop.f32.mrb[0].mxu0
      %409 = vmatprep.mubr.bf16.mxu0 0
      %410 = vmatmul.mubr.bf16.gmra.mrb[0].mxu0 %v355
      %v411 = vpop.f32.mrb[0].mxu0
      %v412 = vadd.f32 %v317, %v411
      %v413 = vpop.f32.mrb[0].mxu0
      %v414 = vpop.f32.mrb[0].mxu0
      %v415 = vadd.f32 %v320, %v414
      %v416 = vpop.f32.mrb[0].mxu0
      %417 = vmatprep.mubr.bf16.mxu0 0
      %418 = vmatmul.mubr.bf16.gmra.mrb[0].mxu0 %v357
      %v419 = vpop.f32.mrb[0].mxu0
      %v420 = vadd.f32 %v325, %v419
      %v421 = vpop.f32.mrb[0].mxu0
      %v422 = vpop.f32.mrb[0].mxu0
      %v423 = vadd.f32 %v328, %v422
      %v424 = vpop.f32.mrb[0].mxu0
      %425 = vmatprep.mubr.bf16.mxu0 0
      %426 = vmatmul.mubr.bf16.gmra.mrb[0].mxu0 %v359
      %v427 = vpop.f32.mrb[0].mxu0
      %v428 = vadd.f32 %v333, %v427
      %v429 = vpop.f32.mrb[0].mxu0
      %v430 = vpop.f32.mrb[0].mxu0
      %v431 = vadd.f32 %v336, %v430
      %v432 = vpop.f32.mrb[0].mxu0
      %433 = vdwg.mxu0
      %v434 = vld [vmem:[%s138] sm:$0xe]
      %s435 = scalar_lea.vmem %s1, 32
      %v436 = vld [vmem:[%s435] sm:$0xf]
      %v437 = vld [vmem:[%s435 + $0x4] sm:$0xf]
      %v438 = vld [vmem:[%s435 + $0x8] sm:$0xf]
      %v439 = vld [vmem:[%s435 + $0xc] sm:$0xf]
      %v441 = vunpack.c.l.b16 %v434
      %v442 = vpack.c.b16 %v177, %v441
      %vm443 = vcmask 1046528
      %v444 = vrot.slane %v442, 1
      %v445 = vrot.slane %v188, 1
      %v446 = vsel %vm443, %v444, %v445
      %v447 = vrot.slane %v189, 1
      %v448 = vsel %vm443, %v445, %v447
      %v449 = vrot.slane %v190, 1
      %v450 = vsel %vm443, %v447, %v449
      %v451 = vrot.slane %v191, 1
      %v452 = vsel %vm443, %v449, %v451
      %v453 = vrot.slane %v192, 1
      %v454 = vsel %vm443, %v451, %v453
      %v459 = vunpack.c.l.b16 %v436
      %v460 = vunpack.c.l.b16 %v437
      %v461 = vunpack.c.l.b16 %v438
      %v462 = vunpack.c.l.b16 %v439
      %v463 = vpack.c.b16 %v460, %v459
      %v464 = vpack.c.b16 %v462, %v461
      %v468 = vsel %vm250, %v446, 0
      %v471 = vsel %vm250, %v448, 0
      %v474 = vsel %vm250, %v450, 0
      %v477 = vsel %vm250, %v452, 0
      %v480 = vsel %vm250, %v454, 0
      %482 = vmatprep.subr.bf16.mxu0 0
      %483 = vmatpush1.bf16.msra.mxu0 %v463
      %484 = vmatprep.subr.bf16.mxu0 0
      %485 = vmatpush1.bf16.msra.mxu0 %v464
      %486 = vmatprep.subr.bf16.mxu0 0
      %487 = vmatpush1.bf16.msra.mxu0 0
      %488 = vmatprep.subr.bf16.mxu0 0
      %489 = vmatpush1.bf16.msra.mxu0 0
      %490 = vmatprep.subr.bf16.mxu0 0
      %491 = vmatpush1.bf16.msra.mxu0 0
      %492 = vmatprep.subr.bf16.mxu0 0
      %493 = vmatpush1.bf16.msra.mxu0 0
      %494 = vmatprep.subr.bf16.mxu0 0
      %495 = vmatpush1.bf16.msra.mxu0 0
      %496 = vmatprep.subr.bf16.mxu0 0
      %497 = vmatpush1.bf16.msra.mxu0 0
      %498 = vmatprep.subr.bf16.mxu0 0
      %499 = vmatpush1.bf16.msra.mxu0 0
      %500 = vmatprep.subr.bf16.mxu0 0
      %501 = vmatpush1.bf16.msra.mxu0 0
      %502 = vmatprep.subr.bf16.mxu0 0
      %503 = vmatpush1.bf16.msra.mxu0 0
      %504 = vmatprep.subr.bf16.mxu0 0
      %505 = vmatpush1.bf16.msra.mxu0 0
      %506 = vmatprep.subr.bf16.mxu0 0
      %507 = vmatpush1.bf16.msra.mxu0 0
      %508 = vmatprep.subr.bf16.mxu0 0
      %509 = vmatpush1.bf16.msra.mxu0 0
      %510 = vmatprep.subr.bf16.mxu0 0
      %511 = vmatpush1.bf16.msra.mxu0 0
      %512 = vmatprep.subr.bf16.mxu0 0
      %513 = vmatpush1.bf16.msra.mxu0 0
      %514 = vmatprep.mubr.bf16.mxu0 0
      %515 = vmatmul.mubr.bf16.gmra.mrb[0].mxu0 %v468
      %v516 = vpop.f32.mrb[0].mxu0
      %v517 = vadd.f32 0.0, %v516
      %v518 = vpop.f32.mrb[0].mxu0
      %v519 = vpop.f32.mrb[0].mxu0
      %v520 = vadd.f32 0.0, %v519
      %v521 = vpop.f32.mrb[0].mxu0
      %522 = vmatprep.mubr.bf16.mxu0 0
      %523 = vmatmul.mubr.bf16.gmra.mrb[0].mxu0 %v471
      %v524 = vpop.f32.mrb[0].mxu0
      %v525 = vadd.f32 0.0, %v524
      %v526 = vpop.f32.mrb[0].mxu0
      %v527 = vpop.f32.mrb[0].mxu0
      %v528 = vadd.f32 0.0, %v527
      %v529 = vpop.f32.mrb[0].mxu0
      %530 = vmatprep.mubr.bf16.mxu0 0
      %531 = vmatmul.mubr.bf16.gmra.mrb[0].mxu0 %v474
      %v532 = vpop.f32.mrb[0].mxu0
      %v533 = vadd.f32 0.0, %v532
      %v534 = vpop.f32.mrb[0].mxu0
      %v535 = vpop.f32.mrb[0].mxu0
      %v536 = vadd.f32 0.0, %v535
      %v537 = vpop.f32.mrb[0].mxu0
      %538 = vmatprep.mubr.bf16.mxu0 0
      %539 = vmatmul.mubr.bf16.gmra.mrb[0].mxu0 %v477
      %v540 = vpop.f32.mrb[0].mxu0
      %v541 = vadd.f32 0.0, %v540
      %v542 = vpop.f32.mrb[0].mxu0
      %v543 = vpop.f32.mrb[0].mxu0
      %v544 = vadd.f32 0.0, %v543
      %v545 = vpop.f32.mrb[0].mxu0
      %546 = vmatprep.mubr.bf16.mxu0 0
      %547 = vmatmul.mubr.bf16.gmra.mrb[0].mxu0 %v480
      %v548 = vpop.f32.mrb[0].mxu0
      %v549 = vadd.f32 0.0, %v548
      %v550 = vpop.f32.mrb[0].mxu0
      %v551 = vpop.f32.mrb[0].mxu0
      %v552 = vadd.f32 0.0, %v551
      %v553 = vpop.f32.mrb[0].mxu0
      %554 = vdwg.mxu0
      %v555 = vadd.f32 %v396, %v517
      %v556 = vadd.f32 %v399, %v520
      %v557 = vadd.f32 %v404, %v525
      %v558 = vadd.f32 %v407, %v528
      %v559 = vadd.f32 %v412, %v533
      %v560 = vadd.f32 %v415, %v536
      %v561 = vadd.f32 %v420, %v541
      %v562 = vadd.f32 %v423, %v544
      %v563 = vadd.f32 %v428, %v549
      %v564 = vadd.f32 %v431, %v552
      %v565 = vld [vmem:[%s138 + $0x4] sm:$0xe]
      %v566 = vld [vmem:[%s138 + $0x8] sm:$0xf]
      %v567 = vld [vmem:[%s138 + $0xc] sm:$0xf]
      %v568 = vld [vmem:[%s138 + $0x10] sm:$0xf]
      %v569 = vld [vmem:[%s138 + $0x14] sm:$0xf]
      %v570 = vld [vmem:[%s138 + $0x18] sm:$0xf]
      %v571 = vld [vmem:[%s138 + $0x1c] sm:$0xf]
      %v572 = vld [vmem:[%s138 + $0x20] sm:$0xf]
      %v573 = vld [vmem:[%s138 + $0x24] sm:$0xf]
      %v574 = vld [vmem:[%s138 + $0x28] sm:$0xf]
      %v575 = vld [vmem:[%s138 + $0x2c] sm:$0x1]
      %s576 = scalar_lea.vmem %s1, 48
      %v577 = vld [vmem:[%s576] sm:$0xf]
      %v578 = vld [vmem:[%s576 + $0x4] sm:$0xf]
      %v579 = vld [vmem:[%s576 + $0x8] sm:$0xf]
      %v580 = vld [vmem:[%s576 + $0xc] sm:$0xf]
      %v592 = vunpack.c.l.b16 %v565
      %v593 = vunpack.c.l.b16 %v566
      %v594 = vunpack.c.l.b16 %v567
      %v595 = vunpack.c.l.b16 %v568
      %v596 = vunpack.c.l.b16 %v569
      %v597 = vunpack.c.l.b16 %v570
      %v598 = vunpack.c.l.b16 %v571
      %v599 = vunpack.c.l.b16 %v572
      %v600 = vunpack.c.l.b16 %v573
      %v601 = vunpack.c.l.b16 %v574
      %v602 = vunpack.c.l.b16 %v575
      %v603 = vpack.c.b16 %v593, %v592
      %v604 = vpack.c.b16 %v595, %v594
      %v605 = vpack.c.b16 %v597, %v596
      %v606 = vpack.c.b16 %v599, %v598
      %v607 = vpack.c.b16 %v601, %v600
      %v608 = vpack.c.b16 %v602, %v602
      %v609 = vrot.slane %v603, 1
      %v610 = vrot.slane %v604, 1
      %v611 = vsel %vm443, %v609, %v610
      %v612 = vrot.slane %v605, 1
      %v613 = vsel %vm443, %v610, %v612
      %v614 = vrot.slane %v606, 1
      %v615 = vsel %vm443, %v612, %v614
      %v616 = vrot.slane %v607, 1
      %v617 = vsel %vm443, %v614, %v616
      %v618 = vrot.slane %v608, 1
      %v619 = vsel %vm443, %v616, %v618
      %v624 = vunpack.c.l.b16 %v577
      %v625 = vunpack.c.l.b16 %v578
      %v626 = vunpack.c.l.b16 %v579
      %v627 = vunpack.c.l.b16 %v580
      %v628 = vpack.c.b16 %v625, %v624
      %v629 = vpack.c.b16 %v627, %v626
      %v633 = vsel %vm250, %v611, 0
      %v636 = vsel %vm250, %v613, 0
      %v639 = vsel %vm250, %v615, 0
      %v642 = vsel %vm250, %v617, 0
      %v645 = vsel %vm250, %v619, 0
      %647 = vmatprep.subr.bf16.mxu0 0
      %648 = vmatpush1.bf16.msra.mxu0 %v628
      %649 = vmatprep.subr.bf16.mxu0 0
      %650 = vmatpush1.bf16.msra.mxu0 %v629
      %651 = vmatprep.subr.bf16.mxu0 0
      %652 = vmatpush1.bf16.msra.mxu0 0
      %653 = vmatprep.subr.bf16.mxu0 0
      %654 = vmatpush1.bf16.msra.mxu0 0
      %655 = vmatprep.subr.bf16.mxu0 0
      %656 = vmatpush1.bf16.msra.mxu0 0
      %657 = vmatprep.subr.bf16.mxu0 0
      %658 = vmatpush1.bf16.msra.mxu0 0
      %659 = vmatprep.subr.bf16.mxu0 0
      %660 = vmatpush1.bf16.msra.mxu0 0
      %661 = vmatprep.subr.bf16.mxu0 0
      %662 = vmatpush1.bf16.msra.mxu0 0
      %663 = vmatprep.subr.bf16.mxu0 0
      %664 = vmatpush1.bf16.msra.mxu0 0
      %665 = vmatprep.subr.bf16.mxu0 0
      %666 = vmatpush1.bf16.msra.mxu0 0
      %667 = vmatprep.subr.bf16.mxu0 0
      %668 = vmatpush1.bf16.msra.mxu0 0
      %669 = vmatprep.subr.bf16.mxu0 0
      %670 = vmatpush1.bf16.msra.mxu0 0
      %671 = vmatprep.subr.bf16.mxu0 0
      %672 = vmatpush1.bf16.msra.mxu0 0
      %673 = vmatprep.subr.bf16.mxu0 0
      %674 = vmatpush1.bf16.msra.mxu0 0
      %675 = vmatprep.subr.bf16.mxu0 0
      %676 = vmatpush1.bf16.msra.mxu0 0
      %677 = vmatprep.subr.bf16.mxu0 0
      %678 = vmatpush1.bf16.msra.mxu0 0
      %679 = vmatprep.mubr.bf16.mxu0 0
      %680 = vmatmul.mubr.bf16.gmra.mrb[0].mxu0 %v633
      %v681 = vpop.f32.mrb[0].mxu0
      %v682 = vadd.f32 0.0, %v681
      %v683 = vpop.f32.mrb[0].mxu0
      %v684 = vpop.f32.mrb[0].mxu0
      %v685 = vadd.f32 0.0, %v684
      %v686 = vpop.f32.mrb[0].mxu0
      %687 = vmatprep.mubr.bf16.mxu0 0
      %688 = vmatmul.mubr.bf16.gmra.mrb[0].mxu0 %v636
      %v689 = vpop.f32.mrb[0].mxu0
      %v690 = vadd.f32 0.0, %v689
      %v691 = vpop.f32.mrb[0].mxu0
      %v692 = vpop.f32.mrb[0].mxu0
      %v693 = vadd.f32 0.0, %v692
      %v694 = vpop.f32.mrb[0].mxu0
      %695 = vmatprep.mubr.bf16.mxu0 0
      %696 = vmatmul.mubr.bf16.gmra.mrb[0].mxu0 %v639
      %v697 = vpop.f32.mrb[0].mxu0
      %v698 = vadd.f32 0.0, %v697
      %v699 = vpop.f32.mrb[0].mxu0
      %v700 = vpop.f32.mrb[0].mxu0
      %v701 = vadd.f32 0.0, %v700
      %v702 = vpop.f32.mrb[0].mxu0
      %703 = vmatprep.mubr.bf16.mxu0 0
      %704 = vmatmul.mubr.bf16.gmra.mrb[0].mxu0 %v642
      %v705 = vpop.f32.mrb[0].mxu0
      %v706 = vadd.f32 0.0, %v705
      %v707 = vpop.f32.mrb[0].mxu0
      %v708 = vpop.f32.mrb[0].mxu0
      %v709 = vadd.f32 0.0, %v708
      %v710 = vpop.f32.mrb[0].mxu0
      %711 = vmatprep.mubr.bf16.mxu0 0
      %712 = vmatmul.mubr.bf16.gmra.mrb[0].mxu0 %v645
      %v713 = vpop.f32.mrb[0].mxu0
      %v714 = vadd.f32 0.0, %v713
      %v715 = vpop.f32.mrb[0].mxu0
      %v716 = vpop.f32.mrb[0].mxu0
      %v717 = vadd.f32 0.0, %v716
      %v718 = vpop.f32.mrb[0].mxu0
      %719 = vdwg.mxu0
      %v720 = vadd.f32 %v555, %v682
      %v721 = vadd.f32 %v556, %v685
      %v722 = vadd.f32 %v557, %v690
      %v723 = vadd.f32 %v558, %v693
      %v724 = vadd.f32 %v559, %v698
      %v725 = vadd.f32 %v560, %v701
      %v726 = vadd.f32 %v561, %v706
      %v727 = vadd.f32 %v562, %v709
      %v728 = vadd.f32 %v563, %v714
      %v729 = vadd.f32 %v564, %v717
      %v730 = vld [vmem:[%s138 + $0x2c] sm:$0x3]
      %s731 = scalar_lea.vmem %s1, 64
      %v732 = vld [vmem:[%s731] sm:$0xf]
      %v733 = vld [vmem:[%s731 + $0x4] sm:$0xf]
      %v734 = vld [vmem:[%s731 + $0x8] sm:$0xf]
      %v735 = vld [vmem:[%s731 + $0xc] sm:$0xf]
      %v737 = vunpack.c.l.b16 %v730
      %v738 = vpack.c.b16 %v737, %v737
      %vm739 = vsmask.f32 6400
      %v741 = vshrl.u32 %v603, 16
      %v743 = vrot.slane %v741, 1
      %v744 = vshll.u32 %v603, 16
      %v746 = vrot.slane %v744, 2
      %v747 = vor.u32 %v743, %v746
      %v749 = vshrl.u32 %v604, 16
      %v751 = vrot.slane %v749, 1
      %v752 = vshll.u32 %v604, 16
      %v754 = vrot.slane %v752, 2
      %v755 = vor.u32 %v751, %v754
      %v756 = vsel %vm739, %v747, %v755
      %v758 = vshrl.u32 %v605, 16
      %v760 = vrot.slane %v758, 1
      %v761 = vshll.u32 %v605, 16
      %v763 = vrot.slane %v761, 2
      %v764 = vor.u32 %v760, %v763
      %v765 = vsel %vm739, %v755, %v764
      %v767 = vshrl.u32 %v606, 16
      %v769 = vrot.slane %v767, 1
      %v770 = vshll.u32 %v606, 16
      %v772 = vrot.slane %v770, 2
      %v773 = vor.u32 %v769, %v772
      %v774 = vsel %vm739, %v764, %v773
      %v776 = vshrl.u32 %v607, 16
      %v778 = vrot.slane %v776, 1
      %v779 = vshll.u32 %v607, 16
      %v781 = vrot.slane %v779, 2
      %v782 = vor.u32 %v778, %v781
      %v783 = vsel %vm739, %v773, %v782
      %v785 = vshrl.u32 %v738, 16
      %v787 = vrot.slane %v785, 1
      %v788 = vshll.u32 %v738, 16
      %v790 = vrot.slane %v788, 2
      %v791 = vor.u32 %v787, %v790
      %v792 = vsel %vm739, %v782, %v791
      %v797 = vunpack.c.l.b16 %v732
      %v798 = vunpack.c.l.b16 %v733
      %v799 = vunpack.c.l.b16 %v734
      %v800 = vunpack.c.l.b16 %v735
      %v801 = vpack.c.b16 %v798, %v797
      %v802 = vpack.c.b16 %v800, %v799
      %v806 = vsel %vm250, %v756, 0
      %v809 = vsel %vm250, %v765, 0
      %v812 = vsel %vm250, %v774, 0
      %v815 = vsel %vm250, %v783, 0
      %v818 = vsel %vm250, %v792, 0
      %820 = vmatprep.subr.bf16.mxu0 0
      %821 = vmatpush1.bf16.msra.mxu0 %v801
      %822 = vmatprep.subr.bf16.mxu0 0
      %823 = vmatpush1.bf16.msra.mxu0 %v802
      %824 = vmatprep.subr.bf16.mxu0 0
      %825 = vmatpush1.bf16.msra.mxu0 0
      %826 = vmatprep.subr.bf16.mxu0 0
      %827 = vmatpush1.bf16.msra.mxu0 0
      %828 = vmatprep.subr.bf16.mxu0 0
      %829 = vmatpush1.bf16.msra.mxu0 0
      %830 = vmatprep.subr.bf16.mxu0 0
      %831 = vmatpush1.bf16.msra.mxu0 0
      %832 = vmatprep.subr.bf16.mxu0 0
      %833 = vmatpush1.bf16.msra.mxu0 0
      %834 = vmatprep.subr.bf16.mxu0 0
      %835 = vmatpush1.bf16.msra.mxu0 0
      %836 = vmatprep.subr.bf16.mxu0 0
      %837 = vmatpush1.bf16.msra.mxu0 0
      %838 = vmatprep.subr.bf16.mxu0 0
      %839 = vmatpush1.bf16.msra.mxu0 0
      %840 = vmatprep.subr.bf16.mxu0 0
      %841 = vmatpush1.bf16.msra.mxu0 0
      %842 = vmatprep.subr.bf16.mxu0 0
      %843 = vmatpush1.bf16.msra.mxu0 0
      %844 = vmatprep.subr.bf16.mxu0 0
      %845 = vmatpush1.bf16.msra.mxu0 0
      %846 = vmatprep.subr.bf16.mxu0 0
      %847 = vmatpush1.bf16.msra.mxu0 0
      %848 = vmatprep.subr.bf16.mxu0 0
      %849 = vmatpush1.bf16.msra.mxu0 0
      %850 = vmatprep.subr.bf16.mxu0 0
      %851 = vmatpush1.bf16.msra.mxu0 0
      %852 = vmatprep.mubr.bf16.mxu0 0
      %853 = vmatmul.mubr.bf16.gmra.mrb[0].mxu0 %v806
      %v854 = vpop.f32.mrb[0].mxu0
      %v855 = vadd.f32 0.0, %v854
      %v856 = vpop.f32.mrb[0].mxu0
      %v857 = vpop.f32.mrb[0].mxu0
      %v858 = vadd.f32 0.0, %v857
      %v859 = vpop.f32.mrb[0].mxu0
      %860 = vmatprep.mubr.bf16.mxu0 0
      %861 = vmatmul.mubr.bf16.gmra.mrb[0].mxu0 %v809
      %v862 = vpop.f32.mrb[0].mxu0
      %v863 = vadd.f32 0.0, %v862
      %v864 = vpop.f32.mrb[0].mxu0
      %v865 = vpop.f32.mrb[0].mxu0
      %v866 = vadd.f32 0.0, %v865
      %v867 = vpop.f32.mrb[0].mxu0
      %868 = vmatprep.mubr.bf16.mxu0 0
      %869 = vmatmul.mubr.bf16.gmra.mrb[0].mxu0 %v812
      %v870 = vpop.f32.mrb[0].mxu0
      %v871 = vadd.f32 0.0, %v870
      %v872 = vpop.f32.mrb[0].mxu0
      %v873 = vpop.f32.mrb[0].mxu0
      %v874 = vadd.f32 0.0, %v873
      %v875 = vpop.f32.mrb[0].mxu0
      %876 = vmatprep.mubr.bf16.mxu0 0
      %877 = vmatmul.mubr.bf16.gmra.mrb[0].mxu0 %v815
      %v878 = vpop.f32.mrb[0].mxu0
      %v879 = vadd.f32 0.0, %v878
      %v880 = vpop.f32.mrb[0].mxu0
      %v881 = vpop.f32.mrb[0].mxu0
      %v882 = vadd.f32 0.0, %v881
      %v883 = vpop.f32.mrb[0].mxu0
      %884 = vmatprep.mubr.bf16.mxu0 0
      %885 = vmatmul.mubr.bf16.gmra.mrb[0].mxu0 %v818
      %v886 = vpop.f32.mrb[0].mxu0
      %v887 = vadd.f32 0.0, %v886
      %v888 = vpop.f32.mrb[0].mxu0
      %v889 = vpop.f32.mrb[0].mxu0
      %v890 = vadd.f32 0.0, %v889
      %v891 = vpop.f32.mrb[0].mxu0
      %892 = vdwg.mxu0
      %v893 = vadd.f32 %v720, %v855
      %v894 = vadd.f32 %v721, %v858
      %v895 = vadd.f32 %v722, %v863
      %v896 = vadd.f32 %v723, %v866
      %v897 = vadd.f32 %v724, %v871
      %v898 = vadd.f32 %v725, %v874
      %v899 = vadd.f32 %v726, %v879
      %v900 = vadd.f32 %v727, %v882
      %v901 = vadd.f32 %v728, %v887
      %v902 = vadd.f32 %v729, %v890
      %v903 = vld [vmem:[%s138 + $0x4] sm:$0xc]
      %s904 = scalar_lea.vmem %s1, 80
      %v905 = vld [vmem:[%s904] sm:$0xf]
      %v906 = vld [vmem:[%s904 + $0x4] sm:$0xf]
      %v907 = vld [vmem:[%s904 + $0x8] sm:$0xf]
      %v908 = vld [vmem:[%s904 + $0xc] sm:$0xf]
      %v910 = vunpack.c.l.b16 %v903
      %v911 = vpack.c.b16 %v593, %v910
      %vm912 = vcmask 1045504
      %v913 = vrot.slane %v911, 2
      %v914 = vrot.slane %v604, 2
      %v915 = vsel %vm912, %v913, %v914
      %v916 = vrot.slane %v605, 2
      %v917 = vsel %vm912, %v914, %v916
      %v918 = vrot.slane %v606, 2
      %v919 = vsel %vm912, %v916, %v918
      %v920 = vrot.slane %v607, 2
      %v921 = vsel %vm912, %v918, %v920
      %v922 = vrot.slane %v738, 2
      %v923 = vsel %vm912, %v920, %v922
      %v928 = vunpack.c.l.b16 %v905
      %v929 = vunpack.c.l.b16 %v906
      %v930 = vunpack.c.l.b16 %v907
      %v931 = vunpack.c.l.b16 %v908
      %v932 = vpack.c.b16 %v929, %v928
      %v933 = vpack.c.b16 %v931, %v930
      %v937 = vsel %vm250, %v915, 0
      %v940 = vsel %vm250, %v917, 0
      %v943 = vsel %vm250, %v919, 0
      %v946 = vsel %vm250, %v921, 0
      %v949 = vsel %vm250, %v923, 0
      %951 = vmatprep.subr.bf16.mxu0 0
      %952 = vmatpush1.bf16.msra.mxu0 %v932
      %953 = vmatprep.subr.bf16.mxu0 0
      %954 = vmatpush1.bf16.msra.mxu0 %v933
      %955 = vmatprep.subr.bf16.mxu0 0
      %956 = vmatpush1.bf16.msra.mxu0 0
      %957 = vmatprep.subr.bf16.mxu0 0
      %958 = vmatpush1.bf16.msra.mxu0 0
      %959 = vmatprep.subr.bf16.mxu0 0
      %960 = vmatpush1.bf16.msra.mxu0 0
      %961 = vmatprep.subr.bf16.mxu0 0
      %962 = vmatpush1.bf16.msra.mxu0 0
      %963 = vmatprep.subr.bf16.mxu0 0
      %964 = vmatpush1.bf16.msra.mxu0 0
      %965 = vmatprep.subr.bf16.mxu0 0
      %966 = vmatpush1.bf16.msra.mxu0 0
      %967 = vmatprep.subr.bf16.mxu0 0
      %968 = vmatpush1.bf16.msra.mxu0 0
      %969 = vmatprep.subr.bf16.mxu0 0
      %970 = vmatpush1.bf16.msra.mxu0 0
      %971 = vmatprep.subr.bf16.mxu0 0
      %972 = vmatpush1.bf16.msra.mxu0 0
      %973 = vmatprep.subr.bf16.mxu0 0
      %974 = vmatpush1.bf16.msra.mxu0 0
      %975 = vmatprep.subr.bf16.mxu0 0
      %976 = vmatpush1.bf16.msra.mxu0 0
      %977 = vmatprep.subr.bf16.mxu0 0
      %978 = vmatpush1.bf16.msra.mxu0 0
      %979 = vmatprep.subr.bf16.mxu0 0
      %980 = vmatpush1.bf16.msra.mxu0 0
      %981 = vmatprep.subr.bf16.mxu0 0
      %982 = vmatpush1.bf16.msra.mxu0 0
      %983 = vmatprep.mubr.bf16.mxu0 0
      %984 = vmatmul.mubr.bf16.gmra.mrb[0].mxu0 %v937
      %v985 = vpop.f32.mrb[0].mxu0
      %v986 = vadd.f32 0.0, %v985
      %v987 = vpop.f32.mrb[0].mxu0
      %v988 = vpop.f32.mrb[0].mxu0
      %v989 = vadd.f32 0.0, %v988
      %v990 = vpop.f32.mrb[0].mxu0
      %991 = vmatprep.mubr.bf16.mxu0 0
      %992 = vmatmul.mubr.bf16.gmra.mrb[0].mxu0 %v940
      %v993 = vpop.f32.mrb[0].mxu0
      %v994 = vadd.f32 0.0, %v993
      %v995 = vpop.f32.mrb[0].mxu0
      %v996 = vpop.f32.mrb[0].mxu0
      %v997 = vadd.f32 0.0, %v996
      %v998 = vpop.f32.mrb[0].mxu0
      %999 = vmatprep.mubr.bf16.mxu0 0
      %1000 = vmatmul.mubr.bf16.gmra.mrb[0].mxu0 %v943
      %v1001 = vpop.f32.mrb[0].mxu0
      %v1002 = vadd.f32 0.0, %v1001
      %v1003 = vpop.f32.mrb[0].mxu0
      %v1004 = vpop.f32.mrb[0].mxu0
      %v1005 = vadd.f32 0.0, %v1004
      %v1006 = vpop.f32.mrb[0].mxu0
      %1007 = vmatprep.mubr.bf16.mxu0 0
      %1008 = vmatmul.mubr.bf16.gmra.mrb[0].mxu0 %v946
      %v1009 = vpop.f32.mrb[0].mxu0
      %v1010 = vadd.f32 0.0, %v1009
      %v1011 = vpop.f32.mrb[0].mxu0
      %v1012 = vpop.f32.mrb[0].mxu0
      %v1013 = vadd.f32 0.0, %v1012
      %v1014 = vpop.f32.mrb[0].mxu0
      %1015 = vmatprep.mubr.bf16.mxu0 0
      %1016 = vmatmul.mubr.bf16.gmra.mrb[0].mxu0 %v949
      %v1017 = vpop.f32.mrb[0].mxu0
      %v1018 = vadd.f32 0.0, %v1017
      %v1019 = vpop.f32.mrb[0].mxu0
      %v1020 = vpop.f32.mrb[0].mxu0
      %v1021 = vadd.f32 0.0, %v1020
      %v1022 = vpop.f32.mrb[0].mxu0
      %1023 = vdwg.mxu0
      %v1024 = vadd.f32 %v893, %v986
      %v1025 = vadd.f32 %v894, %v989
      %v1026 = vadd.f32 %v895, %v994
      %v1027 = vadd.f32 %v896, %v997
      %v1028 = vadd.f32 %v897, %v1002
      %v1029 = vadd.f32 %v898, %v1005
      %v1030 = vadd.f32 %v899, %v1010
      %v1031 = vadd.f32 %v900, %v1013
      %v1032 = vadd.f32 %v901, %v1018
      %v1033 = vadd.f32 %v902, %v1021
      %v1034 = vld [vmem:[%s138 + $0x8] sm:$0xc]
      %v1035 = vld [vmem:[%s138 + $0xc] sm:$0xf]
      %v1036 = vld [vmem:[%s138 + $0x10] sm:$0xf]
      %v1037 = vld [vmem:[%s138 + $0x14] sm:$0xf]
      %v1038 = vld [vmem:[%s138 + $0x18] sm:$0xf]
      %v1039 = vld [vmem:[%s138 + $0x1c] sm:$0xf]
      %v1040 = vld [vmem:[%s138 + $0x20] sm:$0xf]
      %v1041 = vld [vmem:[%s138 + $0x24] sm:$0xf]
      %v1042 = vld [vmem:[%s138 + $0x28] sm:$0xf]
      %v1043 = vld [vmem:[%s138 + $0x2c] sm:$0xf]
      %v1044 = vld [vmem:[%s138 + $0x30] sm:$0x3]
      %s1045 = scalar_lea.vmem %s1, 96
      %v1046 = vld [vmem:[%s1045] sm:$0xf]
      %v1047 = vld [vmem:[%s1045 + $0x4] sm:$0xf]
      %v1048 = vld [vmem:[%s1045 + $0x8] sm:$0xf]
      %v1049 = vld [vmem:[%s1045 + $0xc] sm:$0xf]
      %v1061 = vunpack.c.l.b16 %v1034
      %v1062 = vunpack.c.l.b16 %v1035
      %v1063 = vunpack.c.l.b16 %v1036
      %v1064 = vunpack.c.l.b16 %v1037
      %v1065 = vunpack.c.l.b16 %v1038
      %v1066 = vunpack.c.l.b16 %v1039
      %v1067 = vunpack.c.l.b16 %v1040
      %v1068 = vunpack.c.l.b16 %v1041
      %v1069 = vunpack.c.l.b16 %v1042
      %v1070 = vunpack.c.l.b16 %v1043
      %v1071 = vunpack.c.l.b16 %v1044
      %v1072 = vpack.c.b16 %v1062, %v1061
      %v1073 = vpack.c.b16 %v1064, %v1063
      %v1074 = vpack.c.b16 %v1066, %v1065
      %v1075 = vpack.c.b16 %v1068, %v1067
      %v1076 = vpack.c.b16 %v1070, %v1069
      %v1077 = vpack.c.b16 %v1071, %v1071
      %v1078 = vrot.slane %v1072, 2
      %v1079 = vrot.slane %v1073, 2
      %v1080 = vsel %vm912, %v1078, %v1079
      %v1081 = vrot.slane %v1074, 2
      %v1082 = vsel %vm912, %v1079, %v1081
      %v1083 = vrot.slane %v1075, 2
      %v1084 = vsel %vm912, %v1081, %v1083
      %v1085 = vrot.slane %v1076, 2
      %v1086 = vsel %vm912, %v1083, %v1085
      %v1087 = vrot.slane %v1077, 2
      %v1088 = vsel %vm912, %v1085, %v1087
      %v1093 = vunpack.c.l.b16 %v1046
      %v1094 = vunpack.c.l.b16 %v1047
      %v1095 = vunpack.c.l.b16 %v1048
      %v1096 = vunpack.c.l.b16 %v1049
      %v1097 = vpack.c.b16 %v1094, %v1093
      %v1098 = vpack.c.b16 %v1096, %v1095
      %v1102 = vsel %vm250, %v1080, 0
      %v1105 = vsel %vm250, %v1082, 0
      %v1108 = vsel %vm250, %v1084, 0
      %v1111 = vsel %vm250, %v1086, 0
      %v1114 = vsel %vm250, %v1088, 0
      %1116 = vmatprep.subr.bf16.mxu0 0
      %1117 = vmatpush1.bf16.msra.mxu0 %v1097
      %1118 = vmatprep.subr.bf16.mxu0 0
      %1119 = vmatpush1.bf16.msra.mxu0 %v1098
      %1120 = vmatprep.subr.bf16.mxu0 0
      %1121 = vmatpush1.bf16.msra.mxu0 0
      %1122 = vmatprep.subr.bf16.mxu0 0
      %1123 = vmatpush1.bf16.msra.mxu0 0
      %1124 = vmatprep.subr.bf16.mxu0 0
      %1125 = vmatpush1.bf16.msra.mxu0 0
      %1126 = vmatprep.subr.bf16.mxu0 0
      %1127 = vmatpush1.bf16.msra.mxu0 0
      %1128 = vmatprep.subr.bf16.mxu0 0
      %1129 = vmatpush1.bf16.msra.mxu0 0
      %1130 = vmatprep.subr.bf16.mxu0 0
      %1131 = vmatpush1.bf16.msra.mxu0 0
      %1132 = vmatprep.subr.bf16.mxu0 0
      %1133 = vmatpush1.bf16.msra.mxu0 0
      %1134 = vmatprep.subr.bf16.mxu0 0
      %1135 = vmatpush1.bf16.msra.mxu0 0
      %1136 = vmatprep.subr.bf16.mxu0 0
      %1137 = vmatpush1.bf16.msra.mxu0 0
      %1138 = vmatprep.subr.bf16.mxu0 0
      %1139 = vmatpush1.bf16.msra.mxu0 0
      %1140 = vmatprep.subr.bf16.mxu0 0
      %1141 = vmatpush1.bf16.msra.mxu0 0
      %1142 = vmatprep.subr.bf16.mxu0 0
      %1143 = vmatpush1.bf16.msra.mxu0 0
      %1144 = vmatprep.subr.bf16.mxu0 0
      %1145 = vmatpush1.bf16.msra.mxu0 0
      %1146 = vmatprep.subr.bf16.mxu0 0
      %1147 = vmatpush1.bf16.msra.mxu0 0
      %1148 = vmatprep.mubr.bf16.mxu0 0
      %1149 = vmatmul.mubr.bf16.gmra.mrb[0].mxu0 %v1102
      %v1150 = vpop.f32.mrb[0].mxu0
      %v1151 = vadd.f32 0.0, %v1150
      %v1152 = vpop.f32.mrb[0].mxu0
      %v1153 = vpop.f32.mrb[0].mxu0
      %v1154 = vadd.f32 0.0, %v1153
      %v1155 = vpop.f32.mrb[0].mxu0
      %1156 = vmatprep.mubr.bf16.mxu0 0
      %1157 = vmatmul.mubr.bf16.gmra.mrb[0].mxu0 %v1105
      %v1158 = vpop.f32.mrb[0].mxu0
      %v1159 = vadd.f32 0.0, %v1158
      %v1160 = vpop.f32.mrb[0].mxu0
      %v1161 = vpop.f32.mrb[0].mxu0
      %v1162 = vadd.f32 0.0, %v1161
      %v1163 = vpop.f32.mrb[0].mxu0
      %1164 = vmatprep.mubr.bf16.mxu0 0
      %1165 = vmatmul.mubr.bf16.gmra.mrb[0].mxu0 %v1108
      %v1166 = vpop.f32.mrb[0].mxu0
      %v1167 = vadd.f32 0.0, %v1166
      %v1168 = vpop.f32.mrb[0].mxu0
      %v1169 = vpop.f32.mrb[0].mxu0
      %v1170 = vadd.f32 0.0, %v1169
      %v1171 = vpop.f32.mrb[0].mxu0
      %1172 = vmatprep.mubr.bf16.mxu0 0
      %1173 = vmatmul.mubr.bf16.gmra.mrb[0].mxu0 %v1111
      %v1174 = vpop.f32.mrb[0].mxu0
      %v1175 = vadd.f32 0.0, %v1174
      %v1176 = vpop.f32.mrb[0].mxu0
      %v1177 = vpop.f32.mrb[0].mxu0
      %v1178 = vadd.f32 0.0, %v1177
      %v1179 = vpop.f32.mrb[0].mxu0
      %1180 = vmatprep.mubr.bf16.mxu0 0
      %1181 = vmatmul.mubr.bf16.gmra.mrb[0].mxu0 %v1114
      %v1182 = vpop.f32.mrb[0].mxu0
      %v1183 = vadd.f32 0.0, %v1182
      %v1184 = vpop.f32.mrb[0].mxu0
      %v1185 = vpop.f32.mrb[0].mxu0
      %v1186 = vadd.f32 0.0, %v1185
      %v1187 = vpop.f32.mrb[0].mxu0
      %1188 = vdwg.mxu0
      %v1189 = vadd.f32 %v1024, %v1151
      %v1190 = vadd.f32 %v1025, %v1154
      %v1191 = vadd.f32 %v1026, %v1159
      %v1192 = vadd.f32 %v1027, %v1162
      %v1193 = vadd.f32 %v1028, %v1167
      %v1194 = vadd.f32 %v1029, %v1170
      %v1195 = vadd.f32 %v1030, %v1175
      %v1196 = vadd.f32 %v1031, %v1178
      %v1197 = vadd.f32 %v1032, %v1183
      %v1198 = vadd.f32 %v1033, %v1186
      %v1199 = vld [vmem:[%s138 + $0x30] sm:$0x7]
      %s1200 = scalar_lea.vmem %s1, 112
      %v1201 = vld [vmem:[%s1200] sm:$0xf]
      %v1202 = vld [vmem:[%s1200 + $0x4] sm:$0xf]
      %v1203 = vld [vmem:[%s1200 + $0x8] sm:$0xf]
      %v1204 = vld [vmem:[%s1200 + $0xc] sm:$0xf]
      %v1206 = vunpack.c.l.b16 %v1199
      %v1207 = vpack.c.b16 %v1206, %v1206
      %vm1208 = vsmask.f32 5376
      %v1210 = vshrl.u32 %v1072, 16
      %v1212 = vrot.slane %v1210, 2
      %v1213 = vshll.u32 %v1072, 16
      %v1215 = vrot.slane %v1213, 3
      %v1216 = vor.u32 %v1212, %v1215
      %v1218 = vshrl.u32 %v1073, 16
      %v1220 = vrot.slane %v1218, 2
      %v1221 = vshll.u32 %v1073, 16
      %v1223 = vrot.slane %v1221, 3
      %v1224 = vor.u32 %v1220, %v1223
      %v1225 = vsel %vm1208, %v1216, %v1224
      %v1227 = vshrl.u32 %v1074, 16
      %v1229 = vrot.slane %v1227, 2
      %v1230 = vshll.u32 %v1074, 16
      %v1232 = vrot.slane %v1230, 3
      %v1233 = vor.u32 %v1229, %v1232
      %v1234 = vsel %vm1208, %v1224, %v1233
      %v1236 = vshrl.u32 %v1075, 16
      %v1238 = vrot.slane %v1236, 2
      %v1239 = vshll.u32 %v1075, 16
      %v1241 = vrot.slane %v1239, 3
      %v1242 = vor.u32 %v1238, %v1241
      %v1243 = vsel %vm1208, %v1233, %v1242
      %v1245 = vshrl.u32 %v1076, 16
      %v1247 = vrot.slane %v1245, 2
      %v1248 = vshll.u32 %v1076, 16
      %v1250 = vrot.slane %v1248, 3
      %v1251 = vor.u32 %v1247, %v1250
      %v1252 = vsel %vm1208, %v1242, %v1251
      %v1254 = vshrl.u32 %v1207, 16
      %v1256 = vrot.slane %v1254, 2
      %v1257 = vshll.u32 %v1207, 16
      %v1259 = vrot.slane %v1257, 3
      %v1260 = vor.u32 %v1256, %v1259
      %v1261 = vsel %vm1208, %v1251, %v1260
      %v1266 = vunpack.c.l.b16 %v1201
      %v1267 = vunpack.c.l.b16 %v1202
      %v1268 = vunpack.c.l.b16 %v1203
      %v1269 = vunpack.c.l.b16 %v1204
      %v1270 = vpack.c.b16 %v1267, %v1266
      %v1271 = vpack.c.b16 %v1269, %v1268
      %v1275 = vsel %vm250, %v1225, 0
      %v1278 = vsel %vm250, %v1234, 0
      %v1281 = vsel %vm250, %v1243, 0
      %v1284 = vsel %vm250, %v1252, 0
      %v1287 = vsel %vm250, %v1261, 0
      %1289 = vmatprep.subr.bf16.mxu0 0
      %1290 = vmatpush1.bf16.msra.mxu0 %v1270
      %1291 = vmatprep.subr.bf16.mxu0 0
      %1292 = vmatpush1.bf16.msra.mxu0 %v1271
      %1293 = vmatprep.subr.bf16.mxu0 0
      %1294 = vmatpush1.bf16.msra.mxu0 0
      %1295 = vmatprep.subr.bf16.mxu0 0
      %1296 = vmatpush1.bf16.msra.mxu0 0
      %1297 = vmatprep.subr.bf16.mxu0 0
      %1298 = vmatpush1.bf16.msra.mxu0 0
      %1299 = vmatprep.subr.bf16.mxu0 0
      %1300 = vmatpush1.bf16.msra.mxu0 0
      %1301 = vmatprep.subr.bf16.mxu0 0
      %1302 = vmatpush1.bf16.msra.mxu0 0
      %1303 = vmatprep.subr.bf16.mxu0 0
      %1304 = vmatpush1.bf16.msra.mxu0 0
      %1305 = vmatprep.subr.bf16.mxu0 0
      %1306 = vmatpush1.bf16.msra.mxu0 0
      %1307 = vmatprep.subr.bf16.mxu0 0
      %1308 = vmatpush1.bf16.msra.mxu0 0
      %1309 = vmatprep.subr.bf16.mxu0 0
      %1310 = vmatpush1.bf16.msra.mxu0 0
      %1311 = vmatprep.subr.bf16.mxu0 0
      %1312 = vmatpush1.bf16.msra.mxu0 0
      %1313 = vmatprep.subr.bf16.mxu0 0
      %1314 = vmatpush1.bf16.msra.mxu0 0
      %1315 = vmatprep.subr.bf16.mxu0 0
      %1316 = vmatpush1.bf16.msra.mxu0 0
      %1317 = vmatprep.subr.bf16.mxu0 0
      %1318 = vmatpush1.bf16.msra.mxu0 0
      %1319 = vmatprep.subr.bf16.mxu0 0
      %1320 = vmatpush1.bf16.msra.mxu0 0
      %1321 = vmatprep.mubr.bf16.mxu0 0
      %1322 = vmatmul.mubr.bf16.gmra.mrb[0].mxu0 %v1275
      %v1323 = vpop.f32.mrb[0].mxu0
      %v1324 = vadd.f32 0.0, %v1323
      %v1325 = vpop.f32.mrb[0].mxu0
      %v1326 = vpop.f32.mrb[0].mxu0
      %v1327 = vadd.f32 0.0, %v1326
      %v1328 = vpop.f32.mrb[0].mxu0
      %1329 = vmatprep.mubr.bf16.mxu0 0
      %1330 = vmatmul.mubr.bf16.gmra.mrb[0].mxu0 %v1278
      %v1331 = vpop.f32.mrb[0].mxu0
      %v1332 = vadd.f32 0.0, %v1331
      %v1333 = vpop.f32.mrb[0].mxu0
      %v1334 = vpop.f32.mrb[0].mxu0
      %v1335 = vadd.f32 0.0, %v1334
      %v1336 = vpop.f32.mrb[0].mxu0
      %1337 = vmatprep.mubr.bf16.mxu0 0
      %1338 = vmatmul.mubr.bf16.gmra.mrb[0].mxu0 %v1281
      %v1339 = vpop.f32.mrb[0].mxu0
      %v1340 = vadd.f32 0.0, %v1339
      %v1341 = vpop.f32.mrb[0].mxu0
      %v1342 = vpop.f32.mrb[0].mxu0
      %v1343 = vadd.f32 0.0, %v1342
      %v1344 = vpop.f32.mrb[0].mxu0
      %1345 = vmatprep.mubr.bf16.mxu0 0
      %1346 = vmatmul.mubr.bf16.gmra.mrb[0].mxu0 %v1284
      %v1347 = vpop.f32.mrb[0].mxu0
      %v1348 = vadd.f32 0.0, %v1347
      %v1349 = vpop.f32.mrb[0].mxu0
      %v1350 = vpop.f32.mrb[0].mxu0
      %v1351 = vadd.f32 0.0, %v1350
      %v1352 = vpop.f32.mrb[0].mxu0
      %1353 = vmatprep.mubr.bf16.mxu0 0
      %1354 = vmatmul.mubr.bf16.gmra.mrb[0].mxu0 %v1287
      %v1355 = vpop.f32.mrb[0].mxu0
      %v1356 = vadd.f32 0.0, %v1355
      %v1357 = vpop.f32.mrb[0].mxu0
      %v1358 = vpop.f32.mrb[0].mxu0
      %v1359 = vadd.f32 0.0, %v1358
      %v1360 = vpop.f32.mrb[0].mxu0
      %1361 = vdwg.mxu0
      %v1362 = vadd.f32 %v1189, %v1324
      %v1363 = vadd.f32 %v1190, %v1327
      %v1364 = vadd.f32 %v1191, %v1332
      %v1365 = vadd.f32 %v1192, %v1335
      %v1366 = vadd.f32 %v1193, %v1340
      %v1367 = vadd.f32 %v1194, %v1343
      %v1368 = vadd.f32 %v1195, %v1348
      %v1369 = vadd.f32 %v1196, %v1351
      %v1370 = vadd.f32 %v1197, %v1356
      %v1371 = vadd.f32 %v1198, %v1359
      %v1372 = vld [vmem:[%s138 + $0x8] sm:$0x8]
      %s1373 = scalar_lea.vmem %s1, 128
      %v1374 = vld [vmem:[%s1373] sm:$0xf]
      %v1375 = vld [vmem:[%s1373 + $0x4] sm:$0xf]
      %v1376 = vld [vmem:[%s1373 + $0x8] sm:$0xf]
      %v1377 = vld [vmem:[%s1373 + $0xc] sm:$0xf]
      %v1379 = vunpack.c.l.b16 %v1372
      %v1380 = vpack.c.b16 %v1062, %v1379
      %vm1381 = vcmask 1044480
      %v1382 = vrot.slane %v1380, 3
      %v1383 = vrot.slane %v1073, 3
      %v1384 = vsel %vm1381, %v1382, %v1383
      %v1385 = vrot.slane %v1074, 3
      %v1386 = vsel %vm1381, %v1383, %v1385
      %v1387 = vrot.slane %v1075, 3
      %v1388 = vsel %vm1381, %v1385, %v1387
      %v1389 = vrot.slane %v1076, 3
      %v1390 = vsel %vm1381, %v1387, %v1389
      %v1391 = vrot.slane %v1207, 3
      %v1392 = vsel %vm1381, %v1389, %v1391
      %v1397 = vunpack.c.l.b16 %v1374
      %v1398 = vunpack.c.l.b16 %v1375
      %v1399 = vunpack.c.l.b16 %v1376
      %v1400 = vunpack.c.l.b16 %v1377
      %v1401 = vpack.c.b16 %v1398, %v1397
      %v1402 = vpack.c.b16 %v1400, %v1399
      %v1406 = vsel %vm250, %v1384, 0
      %v1409 = vsel %vm250, %v1386, 0
      %v1412 = vsel %vm250, %v1388, 0
      %v1415 = vsel %vm250, %v1390, 0
      %v1418 = vsel %vm250, %v1392, 0
      %1420 = vmatprep.subr.bf16.mxu0 0
      %1421 = vmatpush1.bf16.msra.mxu0 %v1401
      %1422 = vmatprep.subr.bf16.mxu0 0
      %1423 = vmatpush1.bf16.msra.mxu0 %v1402
      %1424 = vmatprep.subr.bf16.mxu0 0
      %1425 = vmatpush1.bf16.msra.mxu0 0
      %1426 = vmatprep.subr.bf16.mxu0 0
      %1427 = vmatpush1.bf16.msra.mxu0 0
      %1428 = vmatprep.subr.bf16.mxu0 0
      %1429 = vmatpush1.bf16.msra.mxu0 0
      %1430 = vmatprep.subr.bf16.mxu0 0
      %1431 = vmatpush1.bf16.msra.mxu0 0
      %1432 = vmatprep.subr.bf16.mxu0 0
      %1433 = vmatpush1.bf16.msra.mxu0 0
      %1434 = vmatprep.subr.bf16.mxu0 0
      %1435 = vmatpush1.bf16.msra.mxu0 0
      %1436 = vmatprep.subr.bf16.mxu0 0
      %1437 = vmatpush1.bf16.msra.mxu0 0
      %1438 = vmatprep.subr.bf16.mxu0 0
      %1439 = vmatpush1.bf16.msra.mxu0 0
      %1440 = vmatprep.subr.bf16.mxu0 0
      %1441 = vmatpush1.bf16.msra.mxu0 0
      %1442 = vmatprep.subr.bf16.mxu0 0
      %1443 = vmatpush1.bf16.msra.mxu0 0
      %1444 = vmatprep.subr.bf16.mxu0 0
      %1445 = vmatpush1.bf16.msra.mxu0 0
      %1446 = vmatprep.subr.bf16.mxu0 0
      %1447 = vmatpush1.bf16.msra.mxu0 0
      %1448 = vmatprep.subr.bf16.mxu0 0
      %1449 = vmatpush1.bf16.msra.mxu0 0
      %1450 = vmatprep.subr.bf16.mxu0 0
      %1451 = vmatpush1.bf16.msra.mxu0 0
      %1452 = vmatprep.mubr.bf16.mxu0 0
      %1453 = vmatmul.mubr.bf16.gmra.mrb[0].mxu0 %v1406
      %v1454 = vpop.f32.mrb[0].mxu0
      %v1455 = vadd.f32 0.0, %v1454
      %v1456 = vpop.f32.mrb[0].mxu0
      %v1457 = vpop.f32.mrb[0].mxu0
      %v1458 = vadd.f32 0.0, %v1457
      %v1459 = vpop.f32.mrb[0].mxu0
      %1460 = vmatprep.mubr.bf16.mxu0 0
      %1461 = vmatmul.mubr.bf16.gmra.mrb[0].mxu0 %v1409
      %v1462 = vpop.f32.mrb[0].mxu0
      %v1463 = vadd.f32 0.0, %v1462
      %v1464 = vpop.f32.mrb[0].mxu0
      %v1465 = vpop.f32.mrb[0].mxu0
      %v1466 = vadd.f32 0.0, %v1465
      %v1467 = vpop.f32.mrb[0].mxu0
      %1468 = vmatprep.mubr.bf16.mxu0 0
      %1469 = vmatmul.mubr.bf16.gmra.mrb[0].mxu0 %v1412
      %v1470 = vpop.f32.mrb[0].mxu0
      %v1471 = vadd.f32 0.0, %v1470
      %v1472 = vpop.f32.mrb[0].mxu0
      %v1473 = vpop.f32.mrb[0].mxu0
      %v1474 = vadd.f32 0.0, %v1473
      %v1475 = vpop.f32.mrb[0].mxu0
      %1476 = vmatprep.mubr.bf16.mxu0 0
      %1477 = vmatmul.mubr.bf16.gmra.mrb[0].mxu0 %v1415
      %v1478 = vpop.f32.mrb[0].mxu0
      %v1479 = vadd.f32 0.0, %v1478
      %v1480 = vpop.f32.mrb[0].mxu0
      %v1481 = vpop.f32.mrb[0].mxu0
      %v1482 = vadd.f32 0.0, %v1481
      %v1483 = vpop.f32.mrb[0].mxu0
      %1484 = vmatprep.mubr.bf16.mxu0 0
      %1485 = vmatmul.mubr.bf16.gmra.mrb[0].mxu0 %v1418
      %v1486 = vpop.f32.mrb[0].mxu0
      %v1487 = vadd.f32 0.0, %v1486
      %v1488 = vpop.f32.mrb[0].mxu0
      %v1489 = vpop.f32.mrb[0].mxu0
      %v1490 = vadd.f32 0.0, %v1489
      %v1491 = vpop.f32.mrb[0].mxu0
      %1492 = vdwg.mxu0
      %v1493 = vadd.f32 %v1362, %v1455
      %v1494 = vadd.f32 %v1363, %v1458
      %v1495 = vadd.f32 %v1364, %v1463
      %v1496 = vadd.f32 %v1365, %v1466
      %v1497 = vadd.f32 %v1366, %v1471
      %v1498 = vadd.f32 %v1367, %v1474
      %v1499 = vadd.f32 %v1368, %v1479
      %v1500 = vadd.f32 %v1369, %v1482
      %v1501 = vadd.f32 %v1370, %v1487
      %v1502 = vadd.f32 %v1371, %v1490
      %v1503 = vpack.c.bf16 %v1494, %v1493
      %v1504 = vpack.c.bf16 %v1496, %v1495
      %v1505 = vpack.c.bf16 %v1498, %v1497
      %v1506 = vpack.c.bf16 %v1500, %v1499
      %v1507 = vpack.c.bf16 %v1502, %v1501
      %v1513 = vunpack.c.l.b16 %v1503
      %v1514 = vunpack.c.h.b16 %v1503
      %v1515 = vunpack.c.l.b16 %v1504
      %v1516 = vunpack.c.h.b16 %v1504
      %v1517 = vunpack.c.l.b16 %v1505
      %v1518 = vunpack.c.h.b16 %v1505
      %v1519 = vunpack.c.l.b16 %v1506
      %v1520 = vunpack.c.h.b16 %v1506
      %v1521 = vunpack.c.l.b16 %v1507
      %v1522 = vunpack.c.h.b16 %v1507
      %v1523 = vpack.c.b16 %v1513, %v1513
      %v1524 = vpack.c.b16 %v1514, %v1514
      %v1525 = vpack.c.b16 %v1515, %v1515
      %v1526 = vpack.c.b16 %v1516, %v1516
      %v1527 = vpack.c.b16 %v1517, %v1517
      %v1528 = vpack.c.b16 %v1518, %v1518
      %v1529 = vpack.c.b16 %v1519, %v1519
      %v1530 = vpack.c.b16 %v1520, %v1520
      %v1531 = vpack.c.b16 %v1521, %v1521
      %v1532 = vpack.c.b16 %v1522, %v1522
      %vm1543 = vcmask 125952
      %1544 = vst.msk [vmem:[%s143] sm:$0xf] %vm1543, %v1523
      %1545 = vst.msk [vmem:[%s143 + $0x4] sm:$0xf] %vm1543, %v1524
      %1546 = vst.msk [vmem:[%s143 + $0x8] sm:$0xf] %vm1543, %v1525
      %1547 = vst.msk [vmem:[%s143 + $0xc] sm:$0xf] %vm1543, %v1526
      %1548 = vst.msk [vmem:[%s143 + $0x10] sm:$0xf] %vm1543, %v1527
      %1549 = vst.msk [vmem:[%s143 + $0x14] sm:$0xf] %vm1543, %v1528
      %1550 = vst.msk [vmem:[%s143 + $0x18] sm:$0xf] %vm1543, %v1529
      %1551 = vst.msk [vmem:[%s143 + $0x1c] sm:$0xf] %vm1543, %v1530
      %1552 = vst.msk [vmem:[%s143 + $0x20] sm:$0xf] %vm1543, %v1531
      %1553 = vst.msk [vmem:[%s143 + $0x24] sm:$0xf] %vm1543, %v1532
      %p1554 = scmp.lt.s32.totalorder %s13, 1
      %s1555 = scalar_select %p1554, %s13, 1
      %s1556 = smul.addr %s1555, 10
      %s1557 = smul.addr %s1556, 4
      %s1558 = scalar_lea.vmem %s2, %s1557
      // Predicated region
      $region29: #{densenet_forward.26} parent=27 // pred_check
        %p1559 = pneg %p78
      $region30: #{densenet_forward.26} parent=27 // pred_check_branch
        %1561 = sbr.rel (%p1559) target = $region32
      $region31: #{densenet_forward.26} parent=27 // pred_region
        _
      $region32: #{densenet_forward.26} parent=27 // pred_fallthru
        _
    $region28: #{densenet_forward.26} parent=5 // pred_fallthru
      _
    %p1562 = scmp.le.s32.totalorder 2, %s8
    // Predicated region
    $region33: #{densenet_forward.26} parent=5 // pred_check
      %p1563 = pneg %p1562
    $region34: #{densenet_forward.26} parent=5 // pred_check_branch
      %1565 = sbr.rel (%p1563) target = $region36
    $region35: #{densenet_forward.26} parent=5 // pred_region
      %s1566 = ssub.s32 %s8, 2
      // Predicated region
      $region37: #{densenet_forward.26} parent=35 // pred_check
        %p1567 = pneg %p84
      $region38: #{densenet_forward.26} parent=35 // pred_check_branch
        %1569 = sbr.rel (%p1567) target = $region40
      $region39: #{densenet_forward.26} parent=35 // pred_region
        %p1570 = scmp.lt.s32.totalorder %s14, 1
        %s1571 = scalar_select %p1570, %s14, 1
        %s1572 = smul.addr %s1571, 10
        %s1573 = smul.addr %s1572, 4
        %s1574 = scalar_lea.vmem %s2, %s1573
      $region40: #{densenet_forward.26} parent=35 // pred_fallthru
        _
    $region36: #{densenet_forward.26} parent=5 // pred_fallthru
      _
  $region6: #{densenet_forward.26} parent=0 // loop_footer
    %s12 = sadd.s32 1, %s8
  $region7: #{densenet_forward.26} parent=0 // loop_footer_branch
    %7 = sbr.rel target = $region3
  $region8: #{densenet_forward.26} parent=0 // loop_exit
    _

// kernel: densenet_forward.32
$region0: #{densenet_forward.32}
  #allocation0 [shape = 'u32[]', space=smem, size = 0x4, offset = 0x4, fixed_abs, tag = 'smem constant byte address 0x4 - core index']
  #allocation1 [shape = 'u32[144,128]{1,0:T(1,128)}', space=vmem, size = 0x12000, scoped, tag = 'internal scratch']
  #allocation2 [shape = 'f32[128,32]{1,0:T(8,128)}', space=vmem, size = 0x10000, scoped, tag = 'scratch operand']
  %s0 = inlined_call_operand.vmem [shape: bf16[128,64], index: 0, kind: input, shape index: {}]
  %s1 = inlined_call_operand.vmem [shape: bf16[64,32], index: 1, kind: input, shape index: {}]
  %s2 = inlined_call_operand.vmem [shape: bf16[128,32], index: 2, kind: output, shape index: {}]
  %s3 = sld [smem:[#allocation0]]
  $region26: #{densenet_forward.32} parent=0
    _
  %s5 = ssub.s32 1, %s3
  %s6 = scalar_select 0, %s5, %s3
  // Predicated region
  $region2: #{densenet_forward.32} parent=0 // pred_check
    _
  $region3: #{densenet_forward.32} parent=0 // pred_check_branch
    %8 = sbr.rel (0) target = $region5
  $region4: #{densenet_forward.32} parent=0 // pred_region
    _
  $region5: #{densenet_forward.32} parent=0 // pred_fallthru
    _
  // Predicated region
  $region6: #{densenet_forward.32} parent=0 // pred_check
    _
  $region7: #{densenet_forward.32} parent=0 // pred_check_branch
    %10 = sbr.rel (0) target = $region9
  $region8: #{densenet_forward.32} parent=0 // pred_region
    _
  $region9: #{densenet_forward.32} parent=0 // pred_fallthru
    _
  %p12 = scmp.eq.s32.totalorder 0, 0
  // Predicated region
  $region10: #{densenet_forward.32} parent=0 // pred_check
    %p13 = pneg %p12
  $region11: #{densenet_forward.32} parent=0 // pred_check_branch
    %15 = sbr.rel (%p13) target = $region13
  $region12: #{densenet_forward.32} parent=0 // pred_region
    %vm16 = vcmask 261120
    %17 = vst.msk [vmem:[#allocation2] sm:$0xff] %vm16, 0.0
    %18 = vst.msk [vmem:[#allocation2 + $0x8] sm:$0xff] %vm16, 0.0
    %19 = vst.msk [vmem:[#allocation2 + $0x10] sm:$0xff] %vm16, 0.0
    %20 = vst.msk [vmem:[#allocation2 + $0x18] sm:$0xff] %vm16, 0.0
    %21 = vst.msk [vmem:[#allocation2 + $0x20] sm:$0xff] %vm16, 0.0
    %22 = vst.msk [vmem:[#allocation2 + $0x28] sm:$0xff] %vm16, 0.0
    %23 = vst.msk [vmem:[#allocation2 + $0x30] sm:$0xff] %vm16, 0.0
    %24 = vst.msk [vmem:[#allocation2 + $0x38] sm:$0xff] %vm16, 0.0
    %25 = vst.msk [vmem:[#allocation2 + $0x40] sm:$0xff] %vm16, 0.0
    %26 = vst.msk [vmem:[#allocation2 + $0x48] sm:$0xff] %vm16, 0.0
    %27 = vst.msk [vmem:[#allocation2 + $0x50] sm:$0xff] %vm16, 0.0
    %28 = vst.msk [vmem:[#allocation2 + $0x58] sm:$0xff] %vm16, 0.0
    %29 = vst.msk [vmem:[#allocation2 + $0x60] sm:$0xff] %vm16, 0.0
    %30 = vst.msk [vmem:[#allocation2 + $0x68] sm:$0xff] %vm16, 0.0
    %31 = vst.msk [vmem:[#allocation2 + $0x70] sm:$0xff] %vm16, 0.0
    %32 = vst.msk [vmem:[#allocation2 + $0x78] sm:$0xff] %vm16, 0.0
  $region13: #{densenet_forward.32} parent=0 // pred_fallthru
    _
  %v33 = vld [vmem:[#allocation2] sm:$0xff]
  %v34 = vld [vmem:[#allocation2 + $0x8] sm:$0xff]
  %v35 = vld [vmem:[#allocation2 + $0x10] sm:$0xff]
  %v36 = vld [vmem:[#allocation2 + $0x18] sm:$0xff]
  %v37 = vld [vmem:[#allocation2 + $0x20] sm:$0xff]
  %v38 = vld [vmem:[#allocation2 + $0x28] sm:$0xff]
  %v39 = vld [vmem:[#allocation2 + $0x30] sm:$0xff]
  %v40 = vld [vmem:[#allocation2 + $0x38] sm:$0xff]
  %v41 = vld [vmem:[#allocation2 + $0x40] sm:$0xff]
  %v42 = vld [vmem:[#allocation2 + $0x48] sm:$0xff]
  %v43 = vld [vmem:[#allocation2 + $0x50] sm:$0xff]
  %v44 = vld [vmem:[#allocation2 + $0x58] sm:$0xff]
  %v45 = vld [vmem:[#allocation2 + $0x60] sm:$0xff]
  %v46 = vld [vmem:[#allocation2 + $0x68] sm:$0xff]
  %v47 = vld [vmem:[#allocation2 + $0x70] sm:$0xff]
  %v48 = vld [vmem:[#allocation2 + $0x78] sm:$0xff]
  %v49 = vld [vmem:[%s0] sm:$0xf]
  %v50 = vld [vmem:[%s0 + $0x4] sm:$0xf]
  %v51 = vld [vmem:[%s0 + $0x8] sm:$0xf]
  %v52 = vld [vmem:[%s0 + $0xc] sm:$0xf]
  %v53 = vld [vmem:[%s0 + $0x10] sm:$0xf]
  %v54 = vld [vmem:[%s0 + $0x14] sm:$0xf]
  %v55 = vld [vmem:[%s0 + $0x18] sm:$0xf]
  %v56 = vld [vmem:[%s0 + $0x1c] sm:$0xf]
  %v57 = vld [vmem:[%s0 + $0x20] sm:$0xf]
  %v58 = vld [vmem:[%s0 + $0x24] sm:$0xf]
  %v59 = vld [vmem:[%s0 + $0x28] sm:$0xf]
  %v60 = vld [vmem:[%s0 + $0x2c] sm:$0xf]
  %v61 = vld [vmem:[%s0 + $0x30] sm:$0xf]
  %v62 = vld [vmem:[%s0 + $0x34] sm:$0xf]
  %v63 = vld [vmem:[%s0 + $0x38] sm:$0xf]
  %v64 = vld [vmem:[%s0 + $0x3c] sm:$0xf]
  %v65 = vld [vmem:[%s1] sm:$0xf]
  %v66 = vld [vmem:[%s1 + $0x4] sm:$0xf]
  %v67 = vld [vmem:[%s1 + $0x8] sm:$0xf]
  %v68 = vld [vmem:[%s1 + $0xc] sm:$0xf]
  %v69 = vld [vmem:[%s1 + $0x10] sm:$0xf]
  %v70 = vld [vmem:[%s1 + $0x14] sm:$0xf]
  %v71 = vld [vmem:[%s1 + $0x18] sm:$0xf]
  %v72 = vld [vmem:[%s1 + $0x1c] sm:$0xf]
  %v89 = vunpack.c.l.b16 %v49
  %v90 = vunpack.c.l.b16 %v50
  %v91 = vunpack.c.l.b16 %v51
  %v92 = vunpack.c.l.b16 %v52
  %v93 = vunpack.c.l.b16 %v53
  %v94 = vunpack.c.l.b16 %v54
  %v95 = vunpack.c.l.b16 %v55
  %v96 = vunpack.c.l.b16 %v56
  %v97 = vunpack.c.l.b16 %v57
  %v98 = vunpack.c.l.b16 %v58
  %v99 = vunpack.c.l.b16 %v59
  %v100 = vunpack.c.l.b16 %v60
  %v101 = vunpack.c.l.b16 %v61
  %v102 = vunpack.c.l.b16 %v62
  %v103 = vunpack.c.l.b16 %v63
  %v104 = vunpack.c.l.b16 %v64
  %v105 = vpack.c.b16 %v90, %v89
  %v106 = vpack.c.b16 %v92, %v91
  %v107 = vpack.c.b16 %v94, %v93
  %v108 = vpack.c.b16 %v96, %v95
  %v109 = vpack.c.b16 %v98, %v97
  %v110 = vpack.c.b16 %v100, %v99
  %v111 = vpack.c.b16 %v102, %v101
  %v112 = vpack.c.b16 %v104, %v103
  %v121 = vunpack.c.l.b16 %v65
  %v122 = vunpack.c.l.b16 %v66
  %v123 = vunpack.c.l.b16 %v67
  %v124 = vunpack.c.l.b16 %v68
  %v125 = vunpack.c.l.b16 %v69
  %v126 = vunpack.c.l.b16 %v70
  %v127 = vunpack.c.l.b16 %v71
  %v128 = vunpack.c.l.b16 %v72
  %v129 = vpack.c.b16 %v122, %v121
  %v130 = vpack.c.b16 %v124, %v123
  %v131 = vpack.c.b16 %v126, %v125
  %v132 = vpack.c.b16 %v128, %v127
  %vm137 = vcmask 523264
  %v139 = vsel %vm137, %v105, 0
  %v142 = vsel %vm137, %v106, 0
  %v145 = vsel %vm137, %v107, 0
  %v148 = vsel %vm137, %v108, 0
  %v151 = vsel %vm137, %v109, 0
  %v154 = vsel %vm137, %v110, 0
  %v157 = vsel %vm137, %v111, 0
  %v160 = vsel %vm137, %v112, 0
  %162 = vmatprep.subr.bf16.mxu0 0
  %163 = vmatpush1.bf16.msra.mxu0 %v129
  %164 = vmatprep.subr.bf16.mxu0 0
  %165 = vmatpush1.bf16.msra.mxu0 %v130
  %166 = vmatprep.subr.bf16.mxu0 0
  %167 = vmatpush1.bf16.msra.mxu0 %v131
  %168 = vmatprep.subr.bf16.mxu0 0
  %169 = vmatpush1.bf16.msra.mxu0 %v132
  %170 = vmatprep.subr.bf16.mxu0 0
  %171 = vmatpush1.bf16.msra.mxu0 0
  %172 = vmatprep.subr.bf16.mxu0 0
  %173 = vmatpush1.bf16.msra.mxu0 0
  %174 = vmatprep.subr.bf16.mxu0 0
  %175 = vmatpush1.bf16.msra.mxu0 0
  %176 = vmatprep.subr.bf16.mxu0 0
  %177 = vmatpush1.bf16.msra.mxu0 0
  %178 = vmatprep.subr.bf16.mxu0 0
  %179 = vmatpush1.bf16.msra.mxu0 0
  %180 = vmatprep.subr.bf16.mxu0 0
  %181 = vmatpush1.bf16.msra.mxu0 0
  %182 = vmatprep.subr.bf16.mxu0 0
  %183 = vmatpush1.bf16.msra.mxu0 0
  %184 = vmatprep.subr.bf16.mxu0 0
  %185 = vmatpush1.bf16.msra.mxu0 0
  %186 = vmatprep.subr.bf16.mxu0 0
  %187 = vmatpush1.bf16.msra.mxu0 0
  %188 = vmatprep.subr.bf16.mxu0 0
  %189 = vmatpush1.bf16.msra.mxu0 0
  %190 = vmatprep.subr.bf16.mxu0 0
  %191 = vmatpush1.bf16.msra.mxu0 0
  %192 = vmatprep.subr.bf16.mxu0 0
  %193 = vmatpush1.bf16.msra.mxu0 0
  %194 = vmatprep.mubr.bf16.mxu0 0
  %195 = vmatmul.mubr.bf16.gmra.mrb[0].mxu0 %v139
  %v196 = vpop.f32.mrb[0].mxu0
  %v197 = vadd.f32 0.0, %v196
  %v198 = vpop.f32.mrb[0].mxu0
  %v199 = vpop.f32.mrb[0].mxu0
  %v200 = vadd.f32 0.0, %v199
  %v201 = vpop.f32.mrb[0].mxu0
  %202 = vmatprep.mubr.bf16.mxu0 0
  %203 = vmatmul.mubr.bf16.gmra.mrb[0].mxu0 %v142
  %v204 = vpop.f32.mrb[0].mxu0
  %v205 = vadd.f32 0.0, %v204
  %v206 = vpop.f32.mrb[0].mxu0
  %v207 = vpop.f32.mrb[0].mxu0
  %v208 = vadd.f32 0.0, %v207
  %v209 = vpop.f32.mrb[0].mxu0
  %210 = vmatprep.mubr.bf16.mxu0 0
  %211 = vmatmul.mubr.bf16.gmra.mrb[0].mxu0 %v145
  %v212 = vpop.f32.mrb[0].mxu0
  %v213 = vadd.f32 0.0, %v212
  %v214 = vpop.f32.mrb[0].mxu0
  %v215 = vpop.f32.mrb[0].mxu0
  %v216 = vadd.f32 0.0, %v215
  %v217 = vpop.f32.mrb[0].mxu0
  %218 = vmatprep.mubr.bf16.mxu0 0
  %219 = vmatmul.mubr.bf16.gmra.mrb[0].mxu0 %v148
  %v220 = vpop.f32.mrb[0].mxu0
  %v221 = vadd.f32 0.0, %v220
  %v222 = vpop.f32.mrb[0].mxu0
  %v223 = vpop.f32.mrb[0].mxu0
  %v224 = vadd.f32 0.0, %v223
  %v225 = vpop.f32.mrb[0].mxu0
  %226 = vmatprep.mubr.bf16.mxu0 0
  %227 = vmatmul.mubr.bf16.gmra.mrb[0].mxu0 %v151
  %v228 = vpop.f32.mrb[0].mxu0
  %v229 = vadd.f32 0.0, %v228
  %v230 = vpop.f32.mrb[0].mxu0
  %v231 = vpop.f32.mrb[0].mxu0
  %v232 = vadd.f32 0.0, %v231
  %v233 = vpop.f32.mrb[0].mxu0
  %234 = vmatprep.mubr.bf16.mxu0 0
  %235 = vmatmul.mubr.bf16.gmra.mrb[0].mxu0 %v154
  %v236 = vpop.f32.mrb[0].mxu0
  %v237 = vadd.f32 0.0, %v236
  %v238 = vpop.f32.mrb[0].mxu0
  %v239 = vpop.f32.mrb[0].mxu0
  %v240 = vadd.f32 0.0, %v239
  %v241 = vpop.f32.mrb[0].mxu0
  %242 = vmatprep.mubr.bf16.mxu0 0
  %243 = vmatmul.mubr.bf16.gmra.mrb[0].mxu0 %v157
  %v244 = vpop.f32.mrb[0].mxu0
  %v245 = vadd.f32 0.0, %v244
  %v246 = vpop.f32.mrb[0].mxu0
  %v247 = vpop.f32.mrb[0].mxu0
  %v248 = vadd.f32 0.0, %v247
  %v249 = vpop.f32.mrb[0].mxu0
  %250 = vmatprep.mubr.bf16.mxu0 0
  %251 = vmatmul.mubr.bf16.gmra.mrb[0].mxu0 %v160
  %v252 = vpop.f32.mrb[0].mxu0
  %v253 = vadd.f32 0.0, %v252
  %v254 = vpop.f32.mrb[0].mxu0
  %v255 = vpop.f32.mrb[0].mxu0
  %v256 = vadd.f32 0.0, %v255
  %v257 = vpop.f32.mrb[0].mxu0
  %258 = vdwg.mxu0
  %v259 = vadd.f32 %v33, %v197
  %v260 = vadd.f32 %v34, %v200
  %v261 = vadd.f32 %v35, %v205
  %v262 = vadd.f32 %v36, %v208
  %v263 = vadd.f32 %v37, %v213
  %v264 = vadd.f32 %v38, %v216
  %v265 = vadd.f32 %v39, %v221
  %v266 = vadd.f32 %v40, %v224
  %v267 = vadd.f32 %v41, %v229
  %v268 = vadd.f32 %v42, %v232
  %v269 = vadd.f32 %v43, %v237
  %v270 = vadd.f32 %v44, %v240
  %v271 = vadd.f32 %v45, %v245
  %v272 = vadd.f32 %v46, %v248
  %v273 = vadd.f32 %v47, %v253
  %v274 = vadd.f32 %v48, %v256
  %vm275 = vcmask 261120
  %276 = vst.msk [vmem:[#allocation2] sm:$0xff] %vm275, %v259
  %277 = vst.msk [vmem:[#allocation2 + $0x8] sm:$0xff] %vm275, %v260
  %278 = vst.msk [vmem:[#allocation2 + $0x10] sm:$0xff] %vm275, %v261
  %279 = vst.msk [vmem:[#allocation2 + $0x18] sm:$0xff] %vm275, %v262
  %280 = vst.msk [vmem:[#allocation2 + $0x20] sm:$0xff] %vm275, %v263
  %281 = vst.msk [vmem:[#allocation2 + $0x28] sm:$0xff] %vm275, %v264
  %282 = vst.msk [vmem:[#allocation2 + $0x30] sm:$0xff] %vm275, %v265
  %283 = vst.msk [vmem:[#allocation2 + $0x38] sm:$0xff] %vm275, %v266
  %284 = vst.msk [vmem:[#allocation2 + $0x40] sm:$0xff] %vm275, %v267
  %285 = vst.msk [vmem:[#allocation2 + $0x48] sm:$0xff] %vm275, %v268
  %286 = vst.msk [vmem:[#allocation2 + $0x50] sm:$0xff] %vm275, %v269
  %287 = vst.msk [vmem:[#allocation2 + $0x58] sm:$0xff] %vm275, %v270
  %288 = vst.msk [vmem:[#allocation2 + $0x60] sm:$0xff] %vm275, %v271
  %289 = vst.msk [vmem:[#allocation2 + $0x68] sm:$0xff] %vm275, %v272
  %290 = vst.msk [vmem:[#allocation2 + $0x70] sm:$0xff] %vm275, %v273
  %291 = vst.msk [vmem:[#allocation2 + $0x78] sm:$0xff] %vm275, %v274
  // Predicated region
  $region14: #{densenet_forward.32} parent=0 // pred_check
    %p292 = pneg %p12
  $region15: #{densenet_forward.32} parent=0 // pred_check_branch
    %294 = sbr.rel (%p292) target = $region17
  $region16: #{densenet_forward.32} parent=0 // pred_region
    %v295 = vld [vmem:[#allocation2] sm:$0xff]
    %v296 = vld [vmem:[#allocation2 + $0x8] sm:$0xff]
    %v297 = vld [vmem:[#allocation2 + $0x10] sm:$0xff]
    %v298 = vld [vmem:[#allocation2 + $0x18] sm:$0xff]
    %v299 = vld [vmem:[#allocation2 + $0x20] sm:$0xff]
    %v300 = vld [vmem:[#allocation2 + $0x28] sm:$0xff]
    %v301 = vld [vmem:[#allocation2 + $0x30] sm:$0xff]
    %v302 = vld [vmem:[#allocation2 + $0x38] sm:$0xff]
    %v303 = vld [vmem:[#allocation2 + $0x40] sm:$0xff]
    %v304 = vld [vmem:[#allocation2 + $0x48] sm:$0xff]
    %v305 = vld [vmem:[#allocation2 + $0x50] sm:$0xff]
    %v306 = vld [vmem:[#allocation2 + $0x58] sm:$0xff]
    %v307 = vld [vmem:[#allocation2 + $0x60] sm:$0xff]
    %v308 = vld [vmem:[#allocation2 + $0x68] sm:$0xff]
    %v309 = vld [vmem:[#allocation2 + $0x70] sm:$0xff]
    %v310 = vld [vmem:[#allocation2 + $0x78] sm:$0xff]
    %v311 = vpack.c.bf16 %v296, %v295
    %v312 = vpack.c.bf16 %v298, %v297
    %v313 = vpack.c.bf16 %v300, %v299
    %v314 = vpack.c.bf16 %v302, %v301
    %v315 = vpack.c.bf16 %v304, %v303
    %v316 = vpack.c.bf16 %v306, %v305
    %v317 = vpack.c.bf16 %v308, %v307
    %v318 = vpack.c.bf16 %v310, %v309
    %v327 = vunpack.c.l.b16 %v311
    %v328 = vunpack.c.h.b16 %v311
    %v329 = vunpack.c.l.b16 %v312
    %v330 = vunpack.c.h.b16 %v312
    %v331 = vunpack.c.l.b16 %v313
    %v332 = vunpack.c.h.b16 %v313
    %v333 = vunpack.c.l.b16 %v314
    %v334 = vunpack.c.h.b16 %v314
    %v335 = vunpack.c.l.b16 %v315
    %v336 = vunpack.c.h.b16 %v315
    %v337 = vunpack.c.l.b16 %v316
    %v338 = vunpack.c.h.b16 %v316
    %v339 = vunpack.c.l.b16 %v317
    %v340 = vunpack.c.h.b16 %v317
    %v341 = vunpack.c.l.b16 %v318
    %v342 = vunpack.c.h.b16 %v318
    %v343 = vpack.c.b16 %v327, %v327
    %v344 = vpack.c.b16 %v328, %v328
    %v345 = vpack.c.b16 %v329, %v329
    %v346 = vpack.c.b16 %v330, %v330
    %v347 = vpack.c.b16 %v331, %v331
    %v348 = vpack.c.b16 %v332, %v332
    %v349 = vpack.c.b16 %v333, %v333
    %v350 = vpack.c.b16 %v334, %v334
    %v351 = vpack.c.b16 %v335, %v335
    %v352 = vpack.c.b16 %v336, %v336
    %v353 = vpack.c.b16 %v337, %v337
    %v354 = vpack.c.b16 %v338, %v338
    %v355 = vpack.c.b16 %v339, %v339
    %v356 = vpack.c.b16 %v340, %v340
    %v357 = vpack.c.b16 %v341, %v341
    %v358 = vpack.c.b16 %v342, %v342
    %vm375 = vcmask 257024
    %376 = vst.msk [vmem:[%s2] sm:$0xf] %vm375, %v343
    %377 = vst.msk [vmem:[%s2 + $0x4] sm:$0xf] %vm375, %v344
    %378 = vst.msk [vmem:[%s2 + $0x8] sm:$0xf] %vm375, %v345
    %379 = vst.msk [vmem:[%s2 + $0xc] sm:$0xf] %vm375, %v346
    %380 = vst.msk [vmem:[%s2 + $0x10] sm:$0xf] %vm375, %v347
    %381 = vst.msk [vmem:[%s2 + $0x14] sm:$0xf] %vm375, %v348
    %382 = vst.msk [vmem:[%s2 + $0x18] sm:$0xf] %vm375, %v349
    %383 = vst.msk [vmem:[%s2 + $0x1c] sm:$0xf] %vm375, %v350
    %384 = vst.msk [vmem:[%s2 + $0x20] sm:$0xf] %vm375, %v351
    %385 = vst.msk [vmem:[%s2 + $0x24] sm:$0xf] %vm375, %v352
    %386 = vst.msk [vmem:[%s2 + $0x28] sm:$0xf] %vm375, %v353
    %387 = vst.msk [vmem:[%s2 + $0x2c] sm:$0xf] %vm375, %v354
    %388 = vst.msk [vmem:[%s2 + $0x30] sm:$0xf] %vm375, %v355
    %389 = vst.msk [vmem:[%s2 + $0x34] sm:$0xf] %vm375, %v356
    %390 = vst.msk [vmem:[%s2 + $0x38] sm:$0xf] %vm375, %v357
    %391 = vst.msk [vmem:[%s2 + $0x3c] sm:$0xf] %vm375, %v358
  $region17: #{densenet_forward.32} parent=0 // pred_fallthru
    _
  // Predicated region
  $region18: #{densenet_forward.32} parent=0 // pred_check
    _
  $region19: #{densenet_forward.32} parent=0 // pred_check_branch
    %393 = sbr.rel (0) target = $region21
  $region20: #{densenet_forward.32} parent=0 // pred_region
    _
  $region21: #{densenet_forward.32} parent=0 // pred_fallthru
    _
  // Predicated region
  $region22: #{densenet_forward.32} parent=0 // pred_check
    _
  $region23: #{densenet_forward.32} parent=0 // pred_check_branch
    %395 = sbr.rel (0) target = $region25
  $region24: #{densenet_forward.32} parent=0 // pred_region
    _
  $region25: #{densenet_forward.32} parent=0 // pred_fallthru
    _

// kernel: densenet_forward.33
$region0: #{densenet_forward.33}
  #allocation0 [shape = 'u32[]', space=smem, size = 0x4, offset = 0x4, fixed_abs, tag = 'smem constant byte address 0x4 - core index']
  #allocation1 [shape = 'u32[144,128]{1,0:T(1,128)}', space=vmem, size = 0x12000, scoped, tag = 'internal scratch']
  %s0 = inlined_call_operand.vmem [shape: bf16[2,16,32], index: 0, kind: input, shape index: {}]
  %s1 = inlined_call_operand.vmem [shape: f32[1,32], index: 1, kind: input, shape index: {}]
  %s2 = inlined_call_operand.vmem [shape: f32[1,32], index: 2, kind: input, shape index: {}]
  %s3 = inlined_call_operand.vmem [shape: bf16[2,16,32], index: 3, kind: output, shape index: {}]
  %s4 = sld [smem:[#allocation0]]
  $region45: #{densenet_forward.33} parent=0
    _
  %s6 = ssub.s32 1, %s4
  %s7 = scalar_select 0, %s6, %s4
  loop: start=0, step=1, limit=4
  $region2: #{densenet_forward.33} parent=0 // loop_pre_header
    _
  $region3: #{densenet_forward.33} parent=0 // loop_header
    %s9 = sphi 0, %s13
    %p10 = scmp.ge.s32.totalorder %s9, 4
    %s16 = sphi 0, %s28
    %s17 = sphi 0, %s24
    %s18 = sphi 0, %s16
    %s19 = sphi 0, %s17
    %s20 = sphi 0, %s18
    %s21 = sphi 0, %s19
    %s33 = sphi 0, %s35
    %s36 = sphi 0, %s33
    %s37 = sphi 0, %s36
    %s53 = sphi 0, %s37
    %s59 = sphi 0, %s61
    %s62 = sphi 0, %s59
    %s63 = sphi 0, %s62
    %s79 = sphi 0, %s63
    %s85 = sphi 0, %s87
    %s88 = sphi 0, %s85
    %s89 = sphi 0, %s88
    %s105 = sphi 0, %s89
    %s113 = sphi 0, %s115
    %s116 = sphi 0, %s113
    %s117 = sphi 0, %s116
    %s133 = sphi 0, %s117
  $region4: #{densenet_forward.33} parent=0 // loop_header_branch
    %12 = sbr.rel (%p10) target = $region8
  $region5: #{densenet_forward.33} parent=0 // loop_body
    %s14 = ssub.s32 %s9, 1
    %s15 = ssub.s32 %s9, 2
    %s22 = sadd.s32 1, %s17
    %p23 = scmp.ge.s32.totalorder %s22, 1
    %s24 = scalar_select %p23, 0, %s22
    %s25 = sadd.s32 1, %s16
    %s26 = scalar_select %p23, %s25, %s16
    %p27 = scmp.ge.s32.totalorder %s26, 2
    %s28 = scalar_select %p27, 0, %s26
    %s29 = ssub.s32 %s16, %s28
    %s30 = ssub.s32 %s17, %s24
    %s31 = sor.u32 %s29, %s30
    %p32 = scmp.eq.s32.totalorder %s31, 0
    %s34 = sadd.s32 %s33, 1
    %s35 = scalar_select %p32, %s33, %s34
    %p38 = pneg %p32
    %p39 = scmp.eq.s32.totalorder %s9, 1
    %p40 = por %p38, %p39
    %p41 = scmp.ne.s32.totalorder %s33, %s36
    %p42 = scmp.eq.s32.totalorder %s9, 0
    %p43 = por %p41, %p42
    %p44 = scmp.ne.s32.totalorder %s33, %s36
    %p45 = scmp.eq.s32.totalorder %s14, 1
    %p46 = por %p44, %p45
    %p47 = scmp.ne.s32.totalorder %s36, %s37
    %p48 = scmp.eq.s32.totalorder %s14, 0
    %p49 = por %p47, %p48
    %p50 = scmp.ne.s32.totalorder %s36, %s37
    %p51 = scmp.eq.s32.totalorder %s15, 1
    %p52 = por %p50, %p51
    %p54 = scmp.ne.s32.totalorder %s37, %s53
    %p55 = scmp.eq.s32.totalorder %s15, 0
    %p56 = por %p54, %p55
    %s57 = ssub.s32 %s17, %s24
    %p58 = scmp.eq.s32.totalorder %s57, 0
    %s60 = sadd.s32 %s59, 1
    %s61 = scalar_select %p58, %s59, %s60
    %p64 = pneg %p58
    %p65 = scmp.eq.s32.totalorder %s9, 1
    %p66 = por %p64, %p65
    %p67 = scmp.ne.s32.totalorder %s59, %s62
    %p68 = scmp.eq.s32.totalorder %s9, 0
    %p69 = por %p67, %p68
    %p70 = scmp.ne.s32.totalorder %s59, %s62
    %p71 = scmp.eq.s32.totalorder %s14, 1
    %p72 = por %p70, %p71
    %p73 = scmp.ne.s32.totalorder %s62, %s63
    %p74 = scmp.eq.s32.totalorder %s14, 0
    %p75 = por %p73, %p74
    %p76 = scmp.ne.s32.totalorder %s62, %s63
    %p77 = scmp.eq.s32.totalorder %s15, 1
    %p78 = por %p76, %p77
    %p80 = scmp.ne.s32.totalorder %s63, %s79
    %p81 = scmp.eq.s32.totalorder %s15, 0
    %p82 = por %p80, %p81
    %s83 = ssub.s32 %s17, %s24
    %p84 = scmp.eq.s32.totalorder %s83, 0
    %s86 = sadd.s32 %s85, 1
    %s87 = scalar_select %p84, %s85, %s86
    %p90 = pneg %p84
    %p91 = scmp.eq.s32.totalorder %s9, 1
    %p92 = por %p90, %p91
    %p93 = scmp.ne.s32.totalorder %s85, %s88
    %p94 = scmp.eq.s32.totalorder %s9, 0
    %p95 = por %p93, %p94
    %p96 = scmp.ne.s32.totalorder %s85, %s88
    %p97 = scmp.eq.s32.totalorder %s14, 1
    %p98 = por %p96, %p97
    %p99 = scmp.ne.s32.totalorder %s88, %s89
    %p100 = scmp.eq.s32.totalorder %s14, 0
    %p101 = por %p99, %p100
    %p102 = scmp.ne.s32.totalorder %s88, %s89
    %p103 = scmp.eq.s32.totalorder %s15, 1
    %p104 = por %p102, %p103
    %p106 = scmp.ne.s32.totalorder %s89, %s105
    %p107 = scmp.eq.s32.totalorder %s15, 0
    %p108 = por %p106, %p107
    %s109 = ssub.s32 %s16, %s28
    %s110 = ssub.s32 %s17, %s24
    %s111 = sor.u32 %s109, %s110
    %p112 = scmp.eq.s32.totalorder %s111, 0
    %s114 = sadd.s32 %s113, 1
    %s115 = scalar_select %p112, %s113, %s114
    %p118 = pneg %p112
    %p119 = scmp.eq.s32.totalorder %s9, 1
    %p120 = por %p118, %p119
    %p121 = scmp.ne.s32.totalorder %s113, %s116
    %p122 = scmp.eq.s32.totalorder %s9, 0
    %p123 = por %p121, %p122
    %p124 = scmp.ne.s32.totalorder %s113, %s116
    %p125 = scmp.eq.s32.totalorder %s14, 1
    %p126 = por %p124, %p125
    %p127 = scmp.ne.s32.totalorder %s116, %s117
    %p128 = scmp.eq.s32.totalorder %s14, 0
    %p129 = por %p127, %p128
    %p130 = scmp.ne.s32.totalorder %s116, %s117
    %p131 = scmp.eq.s32.totalorder %s15, 1
    %p132 = por %p130, %p131
    %p134 = scmp.ne.s32.totalorder %s117, %s133
    %p135 = scmp.eq.s32.totalorder %s15, 0
    %p136 = por %p134, %p135
    %p137 = scmp.le.s32.totalorder 1, %s9
    %p138 = scmp.lt.s32.totalorder %s9, 3
    %p139 = pnand %p137, %p138
    %p140 = pneg %p139
    // Predicated region
    $region9: #{densenet_forward.33} parent=5 // pred_check
      _
    $region10: #{densenet_forward.33} parent=5 // pred_check_branch
      %142 = sbr.rel (%p139) target = $region12
    $region11: #{densenet_forward.33} parent=5 // pred_region
      %s143 = ssub.s32 %s9, 1
      // Predicated region
      $region13: #{densenet_forward.33} parent=11 // pred_check
        %p144 = pneg %p75
      $region14: #{densenet_forward.33} parent=11 // pred_check_branch
        %146 = sbr.rel (%p144) target = $region16
      $region15: #{densenet_forward.33} parent=11 // pred_region
        %p147 = scmp.lt.s32.totalorder %s19, 0
        %s148 = scalar_select %p147, %s19, 0
        %s149 = scalar_lea.vmem %s1, %s148
      $region16: #{densenet_forward.33} parent=11 // pred_fallthru
        _
      // Predicated region
      $region17: #{densenet_forward.33} parent=11 // pred_check
        %p150 = pneg %p101
      $region18: #{densenet_forward.33} parent=11 // pred_check_branch
        %152 = sbr.rel (%p150) target = $region20
      $region19: #{densenet_forward.33} parent=11 // pred_region
        %p153 = scmp.lt.s32.totalorder %s19, 0
        %s154 = scalar_select %p153, %s19, 0
        %s155 = scalar_lea.vmem %s2, %s154
      $region20: #{densenet_forward.33} parent=11 // pred_fallthru
        _
    $region12: #{densenet_forward.33} parent=5 // pred_fallthru
      _
    %p156 = scmp.lt.s32.totalorder %s9, 2
    // Predicated region
    $region21: #{densenet_forward.33} parent=5 // pred_check
      %p157 = pneg %p156
    $region22: #{densenet_forward.33} parent=5 // pred_check_branch
      %159 = sbr.rel (%p157) target = $region24
    $region23: #{densenet_forward.33} parent=5 // pred_region
      // Predicated region
      $region25: #{densenet_forward.33} parent=23 // pred_check
        %p160 = pneg %p43
      $region26: #{densenet_forward.33} parent=23 // pred_check_branch
        %162 = sbr.rel (%p160) target = $region28
      $region27: #{densenet_forward.33} parent=23 // pred_region
        %p163 = scmp.lt.s32.totalorder %s16, 1
        %s164 = scalar_select %p163, %s16, 1
        %p165 = scmp.lt.s32.totalorder %s17, 0
        %s166 = scalar_select %p165, %s17, 0
        %s167 = smul.addr %s164, 2
        %s168 = sadd.s32 %s166, %s167
        %s169 = smul.addr %s168, 4
        %s170 = scalar_lea.vmem %s0, %s169
      $region28: #{densenet_forward.33} parent=23 // pred_fallthru
        _
    $region24: #{densenet_forward.33} parent=5 // pred_fallthru
      _
    %p171 = scmp.le.s32.totalorder 1, %s9
    %p172 = scmp.lt.s32.totalorder %s9, 3
    %p173 = pnand %p171, %p172
    %p174 = pneg %p173
    // Predicated region
    $region29: #{densenet_forward.33} parent=5 // pred_check
      _
    $region30: #{densenet_forward.33} parent=5 // pred_check_branch
      %176 = sbr.rel (%p173) target = $region32
    $region31: #{densenet_forward.33} parent=5 // pred_region
      %s177 = ssub.s32 %s9, 1
      %p178 = scmp.lt.s32.totalorder %s18, 1
      %s179 = scalar_select %p178, %s18, 1
      %p180 = scmp.lt.s32.totalorder %s19, 0
      %s181 = scalar_select %p180, %s19, 0
      %s182 = smul.addr %s179, 2
      %s183 = sadd.s32 %s181, %s182
      %s184 = smul.addr %s183, 4
      %s185 = scalar_lea.vmem %s0, %s184
      %p186 = pneg %p49
      %p187 = pneg %p46
      %p188 = scmp.lt.s32.totalorder %s19, 0
      %s189 = scalar_select %p188, %s19, 0
      %s190 = scalar_lea.vmem %s1, %s189
      %p191 = pneg %p75
      %p192 = pneg %p72
      %p193 = scmp.lt.s32.totalorder %s19, 0
      %s194 = scalar_select %p193, %s19, 0
      %s195 = scalar_lea.vmem %s2, %s194
      %p196 = pneg %p101
      %p197 = pneg %p98
      %p198 = pneg %p129
      %p199 = pneg %p126
      %p200 = scmp.lt.s32.totalorder %s18, 1
      %s201 = scalar_select %p200, %s18, 1
      %p202 = scmp.lt.s32.totalorder %s19, 0
      %s203 = scalar_select %p202, %s19, 0
      %s204 = smul.addr %s201, 2
      %s205 = sadd.s32 %s203, %s204
      %s206 = smul.addr %s205, 4
      %s207 = scalar_lea.vmem %s3, %s206
      %p208 = scmp.lt.s32.totalorder %s18, 1
      %s209 = scalar_select %p208, %s18, 1
      %p210 = scmp.lt.s32.totalorder %s19, 0
      %s211 = scalar_select %p210, %s19, 0
      %s212 = smul.addr %s209, 2
      %s213 = sadd.s32 %s211, %s212
      %s214 = smul.addr %s213, 4
      %s215 = scalar_lea.vmem %s0, %s214
      %p216 = scmp.lt.s32.totalorder %s19, 0
      %s217 = scalar_select %p216, %s19, 0
      %s218 = scalar_lea.vmem %s1, %s217
      %p219 = scmp.lt.s32.totalorder %s19, 0
      %s220 = scalar_select %p219, %s19, 0
      %s221 = scalar_lea.vmem %s2, %s220
      %p222 = scmp.lt.s32.totalorder %s18, 1
      %s223 = scalar_select %p222, %s18, 1
      %p224 = scmp.lt.s32.totalorder %s19, 0
      %s225 = scalar_select %p224, %s19, 0
      %s226 = smul.addr %s223, 2
      %s227 = sadd.s32 %s225, %s226
      %s228 = smul.addr %s227, 4
      %s229 = scalar_lea.vmem %s3, %s228
      %v230 = vld [vmem:[%s215] sm:$0xf]
      %v231 = vld [vmem:[%s215 + $0x4] sm:$0xf]
      %v232 = vunpack.c.l.bf16 %v230
      %v233 = vunpack.c.l.bf16 %v231
      %vm234 = vcmask 261120
      %v235 = vsel %vm234, %v232, 0.0
      %v236 = vsel %vm234, %v233, 0.0
      %v237 = vadd.f32 %v235, %v236
      %v238 = vrot.slane %v237, 4
      %v239 = vadd.f32 %v237, %v238
      %v240 = vrot.slane %v239, 2
      %v241 = vadd.f32 %v239, %v240
      %v242 = vrot.slane %v241, 1
      %v243 = vadd.f32 %v241, %v242
      %v244 = vmul.f32 %v243, 0.0625
      %v245 = vsub.f32 %v232, %v244
      %v246 = vsub.f32 %v233, %v244
      %v247 = vmul.f32 %v245, %v245
      %v248 = vmul.f32 %v246, %v246
      %v249 = vsel %vm234, %v247, 0.0
      %v250 = vsel %vm234, %v248, 0.0
      %v251 = vadd.f32 %v249, %v250
      %v252 = vrot.slane %v251, 4
      %v253 = vadd.f32 %v251, %v252
      %v254 = vrot.slane %v253, 2
      %v255 = vadd.f32 %v253, %v254
      %v256 = vrot.slane %v255, 1
      %v257 = vadd.f32 %v255, %v256
      %v258 = vmul.f32 %v257, 0.0625
      %v259 = vadd.f32 %v258, 1e-05
      %v260 = vrsqrt.pop %v259
      %v261 = vld [vmem:[%s218] sm:$0x1]
      %v262 = vmul.f32 %v260, %v261
      %v263 = vlaneseq
      %v264 = vshrl.u32 %v263, 7
      %v265 = vsub.s32 0, %v264
      %v266 = vrot.slane %v262, %v265
      %v267 = vmul.f32 %v245, %v266
      %v268 = vmul.f32 %v246, %v266
      %v269 = vld [vmem:[%s221] sm:$0x1]
      %v271 = vlaneseq
      %v272 = vshrl.u32 %v271, 7
      %v273 = vsub.s32 0, %v272
      %v274 = vrot.slane %v269, %v273
      %v276 = vadd.f32 %v267, %v274
      %v277 = vadd.f32 %v268, %v274
      %v278 = vmax.f32 %v276, 0.0
      %v279 = vmax.f32 %v277, 0.0
      %v280 = vpack.c.bf16 %v279, %v278
      %v282 = vunpack.c.l.b16 %v280
      %v283 = vunpack.c.h.b16 %v280
      %v284 = vpack.c.b16 %v282, %v282
      %v285 = vpack.c.b16 %v283, %v283
      %vm288 = vcmask 257024
      %289 = vst.msk [vmem:[%s229] sm:$0xf] %vm288, %v284
      %290 = vst.msk [vmem:[%s229 + $0x4] sm:$0xf] %vm288, %v285
      %p291 = scmp.lt.s32.totalorder %s18, 1
      %s292 = scalar_select %p291, %s18, 1
      %p293 = scmp.lt.s32.totalorder %s19, 0
      %s294 = scalar_select %p293, %s19, 0
      %s295 = smul.addr %s292, 2
      %s296 = sadd.s32 %s294, %s295
      %s297 = smul.addr %s296, 4
      %s298 = scalar_lea.vmem %s3, %s297
      // Predicated region
      $region33: #{densenet_forward.33} parent=31 // pred_check
        %p299 = pneg %p126
      $region34: #{densenet_forward.33} parent=31 // pred_check_branch
        %301 = sbr.rel (%p299) target = $region36
      $region35: #{densenet_forward.33} parent=31 // pred_region
        _
      $region36: #{densenet_forward.33} parent=31 // pred_fallthru
        _
    $region32: #{densenet_forward.33} parent=5 // pred_fallthru
      _
    %p302 = scmp.le.s32.totalorder 2, %s9
    // Predicated region
    $region37: #{densenet_forward.33} parent=5 // pred_check
      %p303 = pneg %p302
    $region38: #{densenet_forward.33} parent=5 // pred_check_branch
      %305 = sbr.rel (%p303) target = $region40
    $region39: #{densenet_forward.33} parent=5 // pred_region
      %s306 = ssub.s32 %s9, 2
      // Predicated region
      $region41: #{densenet_forward.33} parent=39 // pred_check
        %p307 = pneg %p132
      $region42: #{densenet_forward.33} parent=39 // pred_check_branch
        %309 = sbr.rel (%p307) target = $region44
      $region43: #{densenet_forward.33} parent=39 // pred_region
        %p310 = scmp.lt.s32.totalorder %s20, 1
        %s311 = scalar_select %p310, %s20, 1
        %p312 = scmp.lt.s32.totalorder %s21, 0
        %s313 = scalar_select %p312, %s21, 0
        %s314 = smul.addr %s311, 2
        %s315 = sadd.s32 %s313, %s314
        %s316 = smul.addr %s315, 4
        %s317 = scalar_lea.vmem %s3, %s316
      $region44: #{densenet_forward.33} parent=39 // pred_fallthru
        _
    $region40: #{densenet_forward.33} parent=5 // pred_fallthru
      _
  $region6: #{densenet_forward.33} parent=0 // loop_footer
    %s13 = sadd.s32 1, %s9
  $region7: #{densenet_forward.33} parent=0 // loop_footer_branch
    %8 = sbr.rel target = $region3
  $region8: #{densenet_forward.33} parent=0 // loop_exit
    _

// kernel: densenet_forward.34
$region0: #{densenet_forward.34}
  #allocation0 [shape = 'u32[]', space=smem, size = 0x4, offset = 0x4, fixed_abs, tag = 'smem constant byte address 0x4 - core index']
  #allocation1 [shape = 'u32[144,128]{1,0:T(1,128)}', space=vmem, size = 0x12000, scoped, tag = 'internal scratch']
  #allocation2 [shape = 'f32[32,32]{1,0:T(8,128)}', space=vmem, size = 0x4000, scoped, tag = 'scratch operand']
  %s0 = inlined_call_operand.vmem [shape: bf16[32,32], index: 0, kind: input, shape index: {}]
  %s1 = inlined_call_operand.vmem [shape: bf16[32,32], index: 1, kind: input, shape index: {}]
  %s2 = inlined_call_operand.vmem [shape: bf16[32,32], index: 2, kind: output, shape index: {}]
  %s3 = sld [smem:[#allocation0]]
  $region26: #{densenet_forward.34} parent=0
    _
  %s5 = ssub.s32 1, %s3
  %s6 = scalar_select 0, %s5, %s3
  // Predicated region
  $region2: #{densenet_forward.34} parent=0 // pred_check
    _
  $region3: #{densenet_forward.34} parent=0 // pred_check_branch
    %8 = sbr.rel (0) target = $region5
  $region4: #{densenet_forward.34} parent=0 // pred_region
    _
  $region5: #{densenet_forward.34} parent=0 // pred_fallthru
    _
  // Predicated region
  $region6: #{densenet_forward.34} parent=0 // pred_check
    _
  $region7: #{densenet_forward.34} parent=0 // pred_check_branch
    %10 = sbr.rel (0) target = $region9
  $region8: #{densenet_forward.34} parent=0 // pred_region
    _
  $region9: #{densenet_forward.34} parent=0 // pred_fallthru
    _
  %p12 = scmp.eq.s32.totalorder 0, 0
  // Predicated region
  $region10: #{densenet_forward.34} parent=0 // pred_check
    %p13 = pneg %p12
  $region11: #{densenet_forward.34} parent=0 // pred_check_branch
    %15 = sbr.rel (%p13) target = $region13
  $region12: #{densenet_forward.34} parent=0 // pred_region
    %vm16 = vcmask 261120
    %17 = vst.msk [vmem:[#allocation2] sm:$0xff] %vm16, 0.0
    %18 = vst.msk [vmem:[#allocation2 + $0x8] sm:$0xff] %vm16, 0.0
    %19 = vst.msk [vmem:[#allocation2 + $0x10] sm:$0xff] %vm16, 0.0
    %20 = vst.msk [vmem:[#allocation2 + $0x18] sm:$0xff] %vm16, 0.0
  $region13: #{densenet_forward.34} parent=0 // pred_fallthru
    _
  %v21 = vld [vmem:[#allocation2] sm:$0xff]
  %v22 = vld [vmem:[#allocation2 + $0x8] sm:$0xff]
  %v23 = vld [vmem:[#allocation2 + $0x10] sm:$0xff]
  %v24 = vld [vmem:[#allocation2 + $0x18] sm:$0xff]
  %v25 = vld [vmem:[%s0] sm:$0xf]
  %v26 = vld [vmem:[%s0 + $0x4] sm:$0xf]
  %v27 = vld [vmem:[%s0 + $0x8] sm:$0xf]
  %v28 = vld [vmem:[%s0 + $0xc] sm:$0xf]
  %v29 = vld [vmem:[%s1] sm:$0xf]
  %v30 = vld [vmem:[%s1 + $0x4] sm:$0xf]
  %v31 = vld [vmem:[%s1 + $0x8] sm:$0xf]
  %v32 = vld [vmem:[%s1 + $0xc] sm:$0xf]
  %v37 = vunpack.c.l.b16 %v25
  %v38 = vunpack.c.l.b16 %v26
  %v39 = vunpack.c.l.b16 %v27
  %v40 = vunpack.c.l.b16 %v28
  %v41 = vpack.c.b16 %v38, %v37
  %v42 = vpack.c.b16 %v40, %v39
  %v47 = vunpack.c.l.b16 %v29
  %v48 = vunpack.c.l.b16 %v30
  %v49 = vunpack.c.l.b16 %v31
  %v50 = vunpack.c.l.b16 %v32
  %v51 = vpack.c.b16 %v48, %v47
  %v52 = vpack.c.b16 %v50, %v49
  %vm55 = vcmask 261120
  %v57 = vsel %vm55, %v41, 0
  %v60 = vsel %vm55, %v42, 0
  %62 = vmatprep.subr.bf16.mxu0 0
  %63 = vmatpush1.bf16.msra.mxu0 %v51
  %64 = vmatprep.subr.bf16.mxu0 0
  %65 = vmatpush1.bf16.msra.mxu0 %v52
  %66 = vmatprep.subr.bf16.mxu0 0
  %67 = vmatpush1.bf16.msra.mxu0 0
  %68 = vmatprep.subr.bf16.mxu0 0
  %69 = vmatpush1.bf16.msra.mxu0 0
  %70 = vmatprep.subr.bf16.mxu0 0
  %71 = vmatpush1.bf16.msra.mxu0 0
  %72 = vmatprep.subr.bf16.mxu0 0
  %73 = vmatpush1.bf16.msra.mxu0 0
  %74 = vmatprep.subr.bf16.mxu0 0
  %75 = vmatpush1.bf16.msra.mxu0 0
  %76 = vmatprep.subr.bf16.mxu0 0
  %77 = vmatpush1.bf16.msra.mxu0 0
  %78 = vmatprep.subr.bf16.mxu0 0
  %79 = vmatpush1.bf16.msra.mxu0 0
  %80 = vmatprep.subr.bf16.mxu0 0
  %81 = vmatpush1.bf16.msra.mxu0 0
  %82 = vmatprep.subr.bf16.mxu0 0
  %83 = vmatpush1.bf16.msra.mxu0 0
  %84 = vmatprep.subr.bf16.mxu0 0
  %85 = vmatpush1.bf16.msra.mxu0 0
  %86 = vmatprep.subr.bf16.mxu0 0
  %87 = vmatpush1.bf16.msra.mxu0 0
  %88 = vmatprep.subr.bf16.mxu0 0
  %89 = vmatpush1.bf16.msra.mxu0 0
  %90 = vmatprep.subr.bf16.mxu0 0
  %91 = vmatpush1.bf16.msra.mxu0 0
  %92 = vmatprep.subr.bf16.mxu0 0
  %93 = vmatpush1.bf16.msra.mxu0 0
  %94 = vmatprep.mubr.bf16.mxu0 0
  %95 = vmatmul.mubr.bf16.gmra.mrb[0].mxu0 %v57
  %v96 = vpop.f32.mrb[0].mxu0
  %v97 = vadd.f32 0.0, %v96
  %v98 = vpop.f32.mrb[0].mxu0
  %v99 = vpop.f32.mrb[0].mxu0
  %v100 = vadd.f32 0.0, %v99
  %v101 = vpop.f32.mrb[0].mxu0
  %102 = vmatprep.mubr.bf16.mxu0 0
  %103 = vmatmul.mubr.bf16.gmra.mrb[0].mxu0 %v60
  %v104 = vpop.f32.mrb[0].mxu0
  %v105 = vadd.f32 0.0, %v104
  %v106 = vpop.f32.mrb[0].mxu0
  %v107 = vpop.f32.mrb[0].mxu0
  %v108 = vadd.f32 0.0, %v107
  %v109 = vpop.f32.mrb[0].mxu0
  %110 = vdwg.mxu0
  %v111 = vadd.f32 %v21, %v97
  %v112 = vadd.f32 %v22, %v100
  %v113 = vadd.f32 %v23, %v105
  %v114 = vadd.f32 %v24, %v108
  %115 = vst.msk [vmem:[#allocation2] sm:$0xff] %vm55, %v111
  %116 = vst.msk [vmem:[#allocation2 + $0x8] sm:$0xff] %vm55, %v112
  %117 = vst.msk [vmem:[#allocation2 + $0x10] sm:$0xff] %vm55, %v113
  %118 = vst.msk [vmem:[#allocation2 + $0x18] sm:$0xff] %vm55, %v114
  // Predicated region
  $region14: #{densenet_forward.34} parent=0 // pred_check
    %p119 = pneg %p12
  $region15: #{densenet_forward.34} parent=0 // pred_check_branch
    %121 = sbr.rel (%p119) target = $region17
  $region16: #{densenet_forward.34} parent=0 // pred_region
    %v122 = vld [vmem:[#allocation2] sm:$0xff]
    %v123 = vld [vmem:[#allocation2 + $0x8] sm:$0xff]
    %v124 = vld [vmem:[#allocation2 + $0x10] sm:$0xff]
    %v125 = vld [vmem:[#allocation2 + $0x18] sm:$0xff]
    %v126 = vpack.c.bf16 %v123, %v122
    %v127 = vpack.c.bf16 %v125, %v124
    %v130 = vunpack.c.l.b16 %v126
    %v131 = vunpack.c.h.b16 %v126
    %v132 = vunpack.c.l.b16 %v127
    %v133 = vunpack.c.h.b16 %v127
    %v134 = vpack.c.b16 %v130, %v130
    %v135 = vpack.c.b16 %v131, %v131
    %v136 = vpack.c.b16 %v132, %v132
    %v137 = vpack.c.b16 %v133, %v133
    %vm142 = vcmask 257024
    %143 = vst.msk [vmem:[%s2] sm:$0xf] %vm142, %v134
    %144 = vst.msk [vmem:[%s2 + $0x4] sm:$0xf] %vm142, %v135
    %145 = vst.msk [vmem:[%s2 + $0x8] sm:$0xf] %vm142, %v136
    %146 = vst.msk [vmem:[%s2 + $0xc] sm:$0xf] %vm142, %v137
  $region17: #{densenet_forward.34} parent=0 // pred_fallthru
    _
  // Predicated region
  $region18: #{densenet_forward.34} parent=0 // pred_check
    _
  $region19: #{densenet_forward.34} parent=0 // pred_check_branch
    %148 = sbr.rel (0) target = $region21
  $region20: #{densenet_forward.34} parent=0 // pred_region
    _
  $region21: #{densenet_forward.34} parent=0 // pred_fallthru
    _
  // Predicated region
  $region22: #{densenet_forward.34} parent=0 // pred_check
    _
  $region23: #{densenet_forward.34} parent=0 // pred_check_branch
    %150 = sbr.rel (0) target = $region25
  $region24: #{densenet_forward.34} parent=0 // pred_region
    _
  $region25: #{densenet_forward.34} parent=0 // pred_fallthru
    _

// kernel: densenet_forward.37
$region0: #{densenet_forward.37}
  #allocation0 [shape = 'u32[]', space=smem, size = 0x4, offset = 0x4, fixed_abs, tag = 'smem constant byte address 0x4 - core index']
  #allocation1 [shape = 'u32[144,128]{1,0:T(1,128)}', space=vmem, size = 0x12000, scoped, tag = 'internal scratch']
  %s0 = inlined_call_operand.vmem [shape: bf16[2,16,48], index: 0, kind: input, shape index: {}]
  %s1 = inlined_call_operand.vmem [shape: f32[1,48], index: 1, kind: input, shape index: {}]
  %s2 = inlined_call_operand.vmem [shape: f32[1,48], index: 2, kind: input, shape index: {}]
  %s3 = inlined_call_operand.vmem [shape: bf16[2,16,48], index: 3, kind: output, shape index: {}]
  %s4 = sld [smem:[#allocation0]]
  $region45: #{densenet_forward.37} parent=0
    _
  %s6 = ssub.s32 1, %s4
  %s7 = scalar_select 0, %s6, %s4
  loop: start=0, step=1, limit=4
  $region2: #{densenet_forward.37} parent=0 // loop_pre_header
    _
  $region3: #{densenet_forward.37} parent=0 // loop_header
    %s9 = sphi 0, %s13
    %p10 = scmp.ge.s32.totalorder %s9, 4
    %s16 = sphi 0, %s28
    %s17 = sphi 0, %s24
    %s18 = sphi 0, %s16
    %s19 = sphi 0, %s17
    %s20 = sphi 0, %s18
    %s21 = sphi 0, %s19
    %s33 = sphi 0, %s35
    %s36 = sphi 0, %s33
    %s37 = sphi 0, %s36
    %s53 = sphi 0, %s37
    %s59 = sphi 0, %s61
    %s62 = sphi 0, %s59
    %s63 = sphi 0, %s62
    %s79 = sphi 0, %s63
    %s85 = sphi 0, %s87
    %s88 = sphi 0, %s85
    %s89 = sphi 0, %s88
    %s105 = sphi 0, %s89
    %s113 = sphi 0, %s115
    %s116 = sphi 0, %s113
    %s117 = sphi 0, %s116
    %s133 = sphi 0, %s117
  $region4: #{densenet_forward.37} parent=0 // loop_header_branch
    %12 = sbr.rel (%p10) target = $region8
  $region5: #{densenet_forward.37} parent=0 // loop_body
    %s14 = ssub.s32 %s9, 1
    %s15 = ssub.s32 %s9, 2
    %s22 = sadd.s32 1, %s17
    %p23 = scmp.ge.s32.totalorder %s22, 1
    %s24 = scalar_select %p23, 0, %s22
    %s25 = sadd.s32 1, %s16
    %s26 = scalar_select %p23, %s25, %s16
    %p27 = scmp.ge.s32.totalorder %s26, 2
    %s28 = scalar_select %p27, 0, %s26
    %s29 = ssub.s32 %s16, %s28
    %s30 = ssub.s32 %s17, %s24
    %s31 = sor.u32 %s29, %s30
    %p32 = scmp.eq.s32.totalorder %s31, 0
    %s34 = sadd.s32 %s33, 1
    %s35 = scalar_select %p32, %s33, %s34
    %p38 = pneg %p32
    %p39 = scmp.eq.s32.totalorder %s9, 1
    %p40 = por %p38, %p39
    %p41 = scmp.ne.s32.totalorder %s33, %s36
    %p42 = scmp.eq.s32.totalorder %s9, 0
    %p43 = por %p41, %p42
    %p44 = scmp.ne.s32.totalorder %s33, %s36
    %p45 = scmp.eq.s32.totalorder %s14, 1
    %p46 = por %p44, %p45
    %p47 = scmp.ne.s32.totalorder %s36, %s37
    %p48 = scmp.eq.s32.totalorder %s14, 0
    %p49 = por %p47, %p48
    %p50 = scmp.ne.s32.totalorder %s36, %s37
    %p51 = scmp.eq.s32.totalorder %s15, 1
    %p52 = por %p50, %p51
    %p54 = scmp.ne.s32.totalorder %s37, %s53
    %p55 = scmp.eq.s32.totalorder %s15, 0
    %p56 = por %p54, %p55
    %s57 = ssub.s32 %s17, %s24
    %p58 = scmp.eq.s32.totalorder %s57, 0
    %s60 = sadd.s32 %s59, 1
    %s61 = scalar_select %p58, %s59, %s60
    %p64 = pneg %p58
    %p65 = scmp.eq.s32.totalorder %s9, 1
    %p66 = por %p64, %p65
    %p67 = scmp.ne.s32.totalorder %s59, %s62
    %p68 = scmp.eq.s32.totalorder %s9, 0
    %p69 = por %p67, %p68
    %p70 = scmp.ne.s32.totalorder %s59, %s62
    %p71 = scmp.eq.s32.totalorder %s14, 1
    %p72 = por %p70, %p71
    %p73 = scmp.ne.s32.totalorder %s62, %s63
    %p74 = scmp.eq.s32.totalorder %s14, 0
    %p75 = por %p73, %p74
    %p76 = scmp.ne.s32.totalorder %s62, %s63
    %p77 = scmp.eq.s32.totalorder %s15, 1
    %p78 = por %p76, %p77
    %p80 = scmp.ne.s32.totalorder %s63, %s79
    %p81 = scmp.eq.s32.totalorder %s15, 0
    %p82 = por %p80, %p81
    %s83 = ssub.s32 %s17, %s24
    %p84 = scmp.eq.s32.totalorder %s83, 0
    %s86 = sadd.s32 %s85, 1
    %s87 = scalar_select %p84, %s85, %s86
    %p90 = pneg %p84
    %p91 = scmp.eq.s32.totalorder %s9, 1
    %p92 = por %p90, %p91
    %p93 = scmp.ne.s32.totalorder %s85, %s88
    %p94 = scmp.eq.s32.totalorder %s9, 0
    %p95 = por %p93, %p94
    %p96 = scmp.ne.s32.totalorder %s85, %s88
    %p97 = scmp.eq.s32.totalorder %s14, 1
    %p98 = por %p96, %p97
    %p99 = scmp.ne.s32.totalorder %s88, %s89
    %p100 = scmp.eq.s32.totalorder %s14, 0
    %p101 = por %p99, %p100
    %p102 = scmp.ne.s32.totalorder %s88, %s89
    %p103 = scmp.eq.s32.totalorder %s15, 1
    %p104 = por %p102, %p103
    %p106 = scmp.ne.s32.totalorder %s89, %s105
    %p107 = scmp.eq.s32.totalorder %s15, 0
    %p108 = por %p106, %p107
    %s109 = ssub.s32 %s16, %s28
    %s110 = ssub.s32 %s17, %s24
    %s111 = sor.u32 %s109, %s110
    %p112 = scmp.eq.s32.totalorder %s111, 0
    %s114 = sadd.s32 %s113, 1
    %s115 = scalar_select %p112, %s113, %s114
    %p118 = pneg %p112
    %p119 = scmp.eq.s32.totalorder %s9, 1
    %p120 = por %p118, %p119
    %p121 = scmp.ne.s32.totalorder %s113, %s116
    %p122 = scmp.eq.s32.totalorder %s9, 0
    %p123 = por %p121, %p122
    %p124 = scmp.ne.s32.totalorder %s113, %s116
    %p125 = scmp.eq.s32.totalorder %s14, 1
    %p126 = por %p124, %p125
    %p127 = scmp.ne.s32.totalorder %s116, %s117
    %p128 = scmp.eq.s32.totalorder %s14, 0
    %p129 = por %p127, %p128
    %p130 = scmp.ne.s32.totalorder %s116, %s117
    %p131 = scmp.eq.s32.totalorder %s15, 1
    %p132 = por %p130, %p131
    %p134 = scmp.ne.s32.totalorder %s117, %s133
    %p135 = scmp.eq.s32.totalorder %s15, 0
    %p136 = por %p134, %p135
    %p137 = scmp.le.s32.totalorder 1, %s9
    %p138 = scmp.lt.s32.totalorder %s9, 3
    %p139 = pnand %p137, %p138
    %p140 = pneg %p139
    // Predicated region
    $region9: #{densenet_forward.37} parent=5 // pred_check
      _
    $region10: #{densenet_forward.37} parent=5 // pred_check_branch
      %142 = sbr.rel (%p139) target = $region12
    $region11: #{densenet_forward.37} parent=5 // pred_region
      %s143 = ssub.s32 %s9, 1
      // Predicated region
      $region13: #{densenet_forward.37} parent=11 // pred_check
        %p144 = pneg %p75
      $region14: #{densenet_forward.37} parent=11 // pred_check_branch
        %146 = sbr.rel (%p144) target = $region16
      $region15: #{densenet_forward.37} parent=11 // pred_region
        %p147 = scmp.lt.s32.totalorder %s19, 0
        %s148 = scalar_select %p147, %s19, 0
        %s149 = scalar_lea.vmem %s1, %s148
      $region16: #{densenet_forward.37} parent=11 // pred_fallthru
        _
      // Predicated region
      $region17: #{densenet_forward.37} parent=11 // pred_check
        %p150 = pneg %p101
      $region18: #{densenet_forward.37} parent=11 // pred_check_branch
        %152 = sbr.rel (%p150) target = $region20
      $region19: #{densenet_forward.37} parent=11 // pred_region
        %p153 = scmp.lt.s32.totalorder %s19, 0
        %s154 = scalar_select %p153, %s19, 0
        %s155 = scalar_lea.vmem %s2, %s154
      $region20: #{densenet_forward.37} parent=11 // pred_fallthru
        _
    $region12: #{densenet_forward.37} parent=5 // pred_fallthru
      _
    %p156 = scmp.lt.s32.totalorder %s9, 2
    // Predicated region
    $region21: #{densenet_forward.37} parent=5 // pred_check
      %p157 = pneg %p156
    $region22: #{densenet_forward.37} parent=5 // pred_check_branch
      %159 = sbr.rel (%p157) target = $region24
    $region23: #{densenet_forward.37} parent=5 // pred_region
      // Predicated region
      $region25: #{densenet_forward.37} parent=23 // pred_check
        %p160 = pneg %p43
      $region26: #{densenet_forward.37} parent=23 // pred_check_branch
        %162 = sbr.rel (%p160) target = $region28
      $region27: #{densenet_forward.37} parent=23 // pred_region
        %p163 = scmp.lt.s32.totalorder %s16, 1
        %s164 = scalar_select %p163, %s16, 1
        %p165 = scmp.lt.s32.totalorder %s17, 0
        %s166 = scalar_select %p165, %s17, 0
        %s167 = smul.addr %s164, 2
        %s168 = sadd.s32 %s166, %s167
        %s169 = smul.addr %s168, 4
        %s170 = scalar_lea.vmem %s0, %s169
      $region28: #{densenet_forward.37} parent=23 // pred_fallthru
        _
    $region24: #{densenet_forward.37} parent=5 // pred_fallthru
      _
    %p171 = scmp.le.s32.totalorder 1, %s9
    %p172 = scmp.lt.s32.totalorder %s9, 3
    %p173 = pnand %p171, %p172
    %p174 = pneg %p173
    // Predicated region
    $region29: #{densenet_forward.37} parent=5 // pred_check
      _
    $region30: #{densenet_forward.37} parent=5 // pred_check_branch
      %176 = sbr.rel (%p173) target = $region32
    $region31: #{densenet_forward.37} parent=5 // pred_region
      %s177 = ssub.s32 %s9, 1
      %p178 = scmp.lt.s32.totalorder %s18, 1
      %s179 = scalar_select %p178, %s18, 1
      %p180 = scmp.lt.s32.totalorder %s19, 0
      %s181 = scalar_select %p180, %s19, 0
      %s182 = smul.addr %s179, 2
      %s183 = sadd.s32 %s181, %s182
      %s184 = smul.addr %s183, 4
      %s185 = scalar_lea.vmem %s0, %s184
      %p186 = pneg %p49
      %p187 = pneg %p46
      %p188 = scmp.lt.s32.totalorder %s19, 0
      %s189 = scalar_select %p188, %s19, 0
      %s190 = scalar_lea.vmem %s1, %s189
      %p191 = pneg %p75
      %p192 = pneg %p72
      %p193 = scmp.lt.s32.totalorder %s19, 0
      %s194 = scalar_select %p193, %s19, 0
      %s195 = scalar_lea.vmem %s2, %s194
      %p196 = pneg %p101
      %p197 = pneg %p98
      %p198 = pneg %p129
      %p199 = pneg %p126
      %p200 = scmp.lt.s32.totalorder %s18, 1
      %s201 = scalar_select %p200, %s18, 1
      %p202 = scmp.lt.s32.totalorder %s19, 0
      %s203 = scalar_select %p202, %s19, 0
      %s204 = smul.addr %s201, 2
      %s205 = sadd.s32 %s203, %s204
      %s206 = smul.addr %s205, 4
      %s207 = scalar_lea.vmem %s3, %s206
      %p208 = scmp.lt.s32.totalorder %s18, 1
      %s209 = scalar_select %p208, %s18, 1
      %p210 = scmp.lt.s32.totalorder %s19, 0
      %s211 = scalar_select %p210, %s19, 0
      %s212 = smul.addr %s209, 2
      %s213 = sadd.s32 %s211, %s212
      %s214 = smul.addr %s213, 4
      %s215 = scalar_lea.vmem %s0, %s214
      %p216 = scmp.lt.s32.totalorder %s19, 0
      %s217 = scalar_select %p216, %s19, 0
      %s218 = scalar_lea.vmem %s1, %s217
      %p219 = scmp.lt.s32.totalorder %s19, 0
      %s220 = scalar_select %p219, %s19, 0
      %s221 = scalar_lea.vmem %s2, %s220
      %p222 = scmp.lt.s32.totalorder %s18, 1
      %s223 = scalar_select %p222, %s18, 1
      %p224 = scmp.lt.s32.totalorder %s19, 0
      %s225 = scalar_select %p224, %s19, 0
      %s226 = smul.addr %s223, 2
      %s227 = sadd.s32 %s225, %s226
      %s228 = smul.addr %s227, 4
      %s229 = scalar_lea.vmem %s3, %s228
      %v230 = vld [vmem:[%s215] sm:$0xf]
      %v231 = vld [vmem:[%s215 + $0x4] sm:$0xf]
      %v232 = vunpack.c.l.bf16 %v230
      %v233 = vunpack.c.l.bf16 %v231
      %vm234 = vcmask 392192
      %v235 = vsel %vm234, %v232, 0.0
      %v236 = vsel %vm234, %v233, 0.0
      %v237 = vadd.f32 %v235, %v236
      %v238 = vrot.slane %v237, 4
      %v239 = vadd.f32 %v237, %v238
      %v240 = vrot.slane %v239, 2
      %v241 = vadd.f32 %v239, %v240
      %v242 = vrot.slane %v241, 1
      %v243 = vadd.f32 %v241, %v242
      %v244 = vmul.f32 %v243, 0.0625
      %v245 = vsub.f32 %v232, %v244
      %v246 = vsub.f32 %v233, %v244
      %v247 = vmul.f32 %v245, %v245
      %v248 = vmul.f32 %v246, %v246
      %v249 = vsel %vm234, %v247, 0.0
      %v250 = vsel %vm234, %v248, 0.0
      %v251 = vadd.f32 %v249, %v250
      %v252 = vrot.slane %v251, 4
      %v253 = vadd.f32 %v251, %v252
      %v254 = vrot.slane %v253, 2
      %v255 = vadd.f32 %v253, %v254
      %v256 = vrot.slane %v255, 1
      %v257 = vadd.f32 %v255, %v256
      %v258 = vmul.f32 %v257, 0.0625
      %v259 = vadd.f32 %v258, 1e-05
      %v260 = vrsqrt.pop %v259
      %v261 = vld [vmem:[%s218] sm:$0x1]
      %v262 = vmul.f32 %v260, %v261
      %v263 = vlaneseq
      %v264 = vshrl.u32 %v263, 7
      %v265 = vsub.s32 0, %v264
      %v266 = vrot.slane %v262, %v265
      %v267 = vmul.f32 %v245, %v266
      %v268 = vmul.f32 %v246, %v266
      %v269 = vld [vmem:[%s221] sm:$0x1]
      %v271 = vlaneseq
      %v272 = vshrl.u32 %v271, 7
      %v273 = vsub.s32 0, %v272
      %v274 = vrot.slane %v269, %v273
      %v276 = vadd.f32 %v267, %v274
      %v277 = vadd.f32 %v268, %v274
      %v278 = vmax.f32 %v276, 0.0
      %v279 = vmax.f32 %v277, 0.0
      %v280 = vpack.c.bf16 %v279, %v278
      %v282 = vunpack.c.l.b16 %v280
      %v283 = vunpack.c.h.b16 %v280
      %v284 = vpack.c.b16 %v282, %v282
      %v285 = vpack.c.b16 %v283, %v283
      %vm288 = vcmask 388096
      %289 = vst.msk [vmem:[%s229] sm:$0xf] %vm288, %v284
      %290 = vst.msk [vmem:[%s229 + $0x4] sm:$0xf] %vm288, %v285
      %p291 = scmp.lt.s32.totalorder %s18, 1
      %s292 = scalar_select %p291, %s18, 1
      %p293 = scmp.lt.s32.totalorder %s19, 0
      %s294 = scalar_select %p293, %s19, 0
      %s295 = smul.addr %s292, 2
      %s296 = sadd.s32 %s294, %s295
      %s297 = smul.addr %s296, 4
      %s298 = scalar_lea.vmem %s3, %s297
      // Predicated region
      $region33: #{densenet_forward.37} parent=31 // pred_check
        %p299 = pneg %p126
      $region34: #{densenet_forward.37} parent=31 // pred_check_branch
        %301 = sbr.rel (%p299) target = $region36
      $region35: #{densenet_forward.37} parent=31 // pred_region
        _
      $region36: #{densenet_forward.37} parent=31 // pred_fallthru
        _
    $region32: #{densenet_forward.37} parent=5 // pred_fallthru
      _
    %p302 = scmp.le.s32.totalorder 2, %s9
    // Predicated region
    $region37: #{densenet_forward.37} parent=5 // pred_check
      %p303 = pneg %p302
    $region38: #{densenet_forward.37} parent=5 // pred_check_branch
      %305 = sbr.rel (%p303) target = $region40
    $region39: #{densenet_forward.37} parent=5 // pred_region
      %s306 = ssub.s32 %s9, 2
      // Predicated region
      $region41: #{densenet_forward.37} parent=39 // pred_check
        %p307 = pneg %p132
      $region42: #{densenet_forward.37} parent=39 // pred_check_branch
        %309 = sbr.rel (%p307) target = $region44
      $region43: #{densenet_forward.37} parent=39 // pred_region
        %p310 = scmp.lt.s32.totalorder %s20, 1
        %s311 = scalar_select %p310, %s20, 1
        %p312 = scmp.lt.s32.totalorder %s21, 0
        %s313 = scalar_select %p312, %s21, 0
        %s314 = smul.addr %s311, 2
        %s315 = sadd.s32 %s313, %s314
        %s316 = smul.addr %s315, 4
        %s317 = scalar_lea.vmem %s3, %s316
      $region44: #{densenet_forward.37} parent=39 // pred_fallthru
        _
    $region40: #{densenet_forward.37} parent=5 // pred_fallthru
      _
  $region6: #{densenet_forward.37} parent=0 // loop_footer
    %s13 = sadd.s32 1, %s9
  $region7: #{densenet_forward.37} parent=0 // loop_footer_branch
    %8 = sbr.rel target = $region3
  $region8: #{densenet_forward.37} parent=0 // loop_exit
    _

// kernel: densenet_forward.38
$region0: #{densenet_forward.38}
  #allocation0 [shape = 'u32[]', space=smem, size = 0x4, offset = 0x4, fixed_abs, tag = 'smem constant byte address 0x4 - core index']
  #allocation1 [shape = 'u32[144,128]{1,0:T(1,128)}', space=vmem, size = 0x12000, scoped, tag = 'internal scratch']
  #allocation2 [shape = 'f32[32,32]{1,0:T(8,128)}', space=vmem, size = 0x4000, scoped, tag = 'scratch operand']
  %s0 = inlined_call_operand.vmem [shape: bf16[32,48], index: 0, kind: input, shape index: {}]
  %s1 = inlined_call_operand.vmem [shape: bf16[48,32], index: 1, kind: input, shape index: {}]
  %s2 = inlined_call_operand.vmem [shape: bf16[32,32], index: 2, kind: output, shape index: {}]
  %s3 = sld [smem:[#allocation0]]
  $region26: #{densenet_forward.38} parent=0
    _
  %s5 = ssub.s32 1, %s3
  %s6 = scalar_select 0, %s5, %s3
  // Predicated region
  $region2: #{densenet_forward.38} parent=0 // pred_check
    _
  $region3: #{densenet_forward.38} parent=0 // pred_check_branch
    %8 = sbr.rel (0) target = $region5
  $region4: #{densenet_forward.38} parent=0 // pred_region
    _
  $region5: #{densenet_forward.38} parent=0 // pred_fallthru
    _
  // Predicated region
  $region6: #{densenet_forward.38} parent=0 // pred_check
    _
  $region7: #{densenet_forward.38} parent=0 // pred_check_branch
    %10 = sbr.rel (0) target = $region9
  $region8: #{densenet_forward.38} parent=0 // pred_region
    _
  $region9: #{densenet_forward.38} parent=0 // pred_fallthru
    _
  %p12 = scmp.eq.s32.totalorder 0, 0
  // Predicated region
  $region10: #{densenet_forward.38} parent=0 // pred_check
    %p13 = pneg %p12
  $region11: #{densenet_forward.38} parent=0 // pred_check_branch
    %15 = sbr.rel (%p13) target = $region13
  $region12: #{densenet_forward.38} parent=0 // pred_region
    %vm16 = vcmask 261120
    %17 = vst.msk [vmem:[#allocation2] sm:$0xff] %vm16, 0.0
    %18 = vst.msk [vmem:[#allocation2 + $0x8] sm:$0xff] %vm16, 0.0
    %19 = vst.msk [vmem:[#allocation2 + $0x10] sm:$0xff] %vm16, 0.0
    %20 = vst.msk [vmem:[#allocation2 + $0x18] sm:$0xff] %vm16, 0.0
  $region13: #{densenet_forward.38} parent=0 // pred_fallthru
    _
  %v21 = vld [vmem:[#allocation2] sm:$0xff]
  %v22 = vld [vmem:[#allocation2 + $0x8] sm:$0xff]
  %v23 = vld [vmem:[#allocation2 + $0x10] sm:$0xff]
  %v24 = vld [vmem:[#allocation2 + $0x18] sm:$0xff]
  %v25 = vld [vmem:[%s0] sm:$0xf]
  %v26 = vld [vmem:[%s0 + $0x4] sm:$0xf]
  %v27 = vld [vmem:[%s0 + $0x8] sm:$0xf]
  %v28 = vld [vmem:[%s0 + $0xc] sm:$0xf]
  %v29 = vld [vmem:[%s1] sm:$0xf]
  %v30 = vld [vmem:[%s1 + $0x4] sm:$0xf]
  %v31 = vld [vmem:[%s1 + $0x8] sm:$0xf]
  %v32 = vld [vmem:[%s1 + $0xc] sm:$0xf]
  %v33 = vld [vmem:[%s1 + $0x10] sm:$0xf]
  %v34 = vld [vmem:[%s1 + $0x14] sm:$0xf]
  %v39 = vunpack.c.l.b16 %v25
  %v40 = vunpack.c.l.b16 %v26
  %v41 = vunpack.c.l.b16 %v27
  %v42 = vunpack.c.l.b16 %v28
  %v43 = vpack.c.b16 %v40, %v39
  %v44 = vpack.c.b16 %v42, %v41
  %v51 = vunpack.c.l.b16 %v29
  %v52 = vunpack.c.l.b16 %v30
  %v53 = vunpack.c.l.b16 %v31
  %v54 = vunpack.c.l.b16 %v32
  %v55 = vunpack.c.l.b16 %v33
  %v56 = vunpack.c.l.b16 %v34
  %v57 = vpack.c.b16 %v52, %v51
  %v58 = vpack.c.b16 %v54, %v53
  %v59 = vpack.c.b16 %v56, %v55
  %vm63 = vcmask 392192
  %v65 = vsel %vm63, %v43, 0
  %v68 = vsel %vm63, %v44, 0
  %70 = vmatprep.subr.bf16.mxu0 0
  %71 = vmatpush1.bf16.msra.mxu0 %v57
  %72 = vmatprep.subr.bf16.mxu0 0
  %73 = vmatpush1.bf16.msra.mxu0 %v58
  %74 = vmatprep.subr.bf16.mxu0 0
  %75 = vmatpush1.bf16.msra.mxu0 %v59
  %76 = vmatprep.subr.bf16.mxu0 0
  %77 = vmatpush1.bf16.msra.mxu0 0
  %78 = vmatprep.subr.bf16.mxu0 0
  %79 = vmatpush1.bf16.msra.mxu0 0
  %80 = vmatprep.subr.bf16.mxu0 0
  %81 = vmatpush1.bf16.msra.mxu0 0
  %82 = vmatprep.subr.bf16.mxu0 0
  %83 = vmatpush1.bf16.msra.mxu0 0
  %84 = vmatprep.subr.bf16.mxu0 0
  %85 = vmatpush1.bf16.msra.mxu0 0
  %86 = vmatprep.subr.bf16.mxu0 0
  %87 = vmatpush1.bf16.msra.mxu0 0
  %88 = vmatprep.subr.bf16.mxu0 0
  %89 = vmatpush1.bf16.msra.mxu0 0
  %90 = vmatprep.subr.bf16.mxu0 0
  %91 = vmatpush1.bf16.msra.mxu0 0
  %92 = vmatprep.subr.bf16.mxu0 0
  %93 = vmatpush1.bf16.msra.mxu0 0
  %94 = vmatprep.subr.bf16.mxu0 0
  %95 = vmatpush1.bf16.msra.mxu0 0
  %96 = vmatprep.subr.bf16.mxu0 0
  %97 = vmatpush1.bf16.msra.mxu0 0
  %98 = vmatprep.subr.bf16.mxu0 0
  %99 = vmatpush1.bf16.msra.mxu0 0
  %100 = vmatprep.subr.bf16.mxu0 0
  %101 = vmatpush1.bf16.msra.mxu0 0
  %102 = vmatprep.mubr.bf16.mxu0 0
  %103 = vmatmul.mubr.bf16.gmra.mrb[0].mxu0 %v65
  %v104 = vpop.f32.mrb[0].mxu0
  %v105 = vadd.f32 0.0, %v104
  %v106 = vpop.f32.mrb[0].mxu0
  %v107 = vpop.f32.mrb[0].mxu0
  %v108 = vadd.f32 0.0, %v107
  %v109 = vpop.f32.mrb[0].mxu0
  %110 = vmatprep.mubr.bf16.mxu0 0
  %111 = vmatmul.mubr.bf16.gmra.mrb[0].mxu0 %v68
  %v112 = vpop.f32.mrb[0].mxu0
  %v113 = vadd.f32 0.0, %v112
  %v114 = vpop.f32.mrb[0].mxu0
  %v115 = vpop.f32.mrb[0].mxu0
  %v116 = vadd.f32 0.0, %v115
  %v117 = vpop.f32.mrb[0].mxu0
  %118 = vdwg.mxu0
  %v119 = vadd.f32 %v21, %v105
  %v120 = vadd.f32 %v22, %v108
  %v121 = vadd.f32 %v23, %v113
  %v122 = vadd.f32 %v24, %v116
  %vm123 = vcmask 261120
  %124 = vst.msk [vmem:[#allocation2] sm:$0xff] %vm123, %v119
  %125 = vst.msk [vmem:[#allocation2 + $0x8] sm:$0xff] %vm123, %v120
  %126 = vst.msk [vmem:[#allocation2 + $0x10] sm:$0xff] %vm123, %v121
  %127 = vst.msk [vmem:[#allocation2 + $0x18] sm:$0xff] %vm123, %v122
  // Predicated region
  $region14: #{densenet_forward.38} parent=0 // pred_check
    %p128 = pneg %p12
  $region15: #{densenet_forward.38} parent=0 // pred_check_branch
    %130 = sbr.rel (%p128) target = $region17
  $region16: #{densenet_forward.38} parent=0 // pred_region
    %v131 = vld [vmem:[#allocation2] sm:$0xff]
    %v132 = vld [vmem:[#allocation2 + $0x8] sm:$0xff]
    %v133 = vld [vmem:[#allocation2 + $0x10] sm:$0xff]
    %v134 = vld [vmem:[#allocation2 + $0x18] sm:$0xff]
    %v135 = vpack.c.bf16 %v132, %v131
    %v136 = vpack.c.bf16 %v134, %v133
    %v139 = vunpack.c.l.b16 %v135
    %v140 = vunpack.c.h.b16 %v135
    %v141 = vunpack.c.l.b16 %v136
    %v142 = vunpack.c.h.b16 %v136
    %v143 = vpack.c.b16 %v139, %v139
    %v144 = vpack.c.b16 %v140, %v140
    %v145 = vpack.c.b16 %v141, %v141
    %v146 = vpack.c.b16 %v142, %v142
    %vm151 = vcmask 257024
    %152 = vst.msk [vmem:[%s2] sm:$0xf] %vm151, %v143
    %153 = vst.msk [vmem:[%s2 + $0x4] sm:$0xf] %vm151, %v144
    %154 = vst.msk [vmem:[%s2 + $0x8] sm:$0xf] %vm151, %v145
    %155 = vst.msk [vmem:[%s2 + $0xc] sm:$0xf] %vm151, %v146
  $region17: #{densenet_forward.38} parent=0 // pred_fallthru
    _
  // Predicated region
  $region18: #{densenet_forward.38} parent=0 // pred_check
    _
  $region19: #{densenet_forward.38} parent=0 // pred_check_branch
    %157 = sbr.rel (0) target = $region21
  $region20: #{densenet_forward.38} parent=0 // pred_region
    _
  $region21: #{densenet_forward.38} parent=0 // pred_fallthru
    _
  // Predicated region
  $region22: #{densenet_forward.38} parent=0 // pred_check
    _
  $region23: #{densenet_forward.38} parent=0 // pred_check_branch
    %159 = sbr.rel (0) target = $region25
  $region24: #{densenet_forward.38} parent=0 // pred_region
    _
  $region25: #{densenet_forward.38} parent=0 // pred_fallthru
    _

// kernel: densenet_forward.36
$region0: #{densenet_forward.36}
  #allocation0 [shape = 'u32[]', space=smem, size = 0x4, offset = 0x4, fixed_abs, tag = 'smem constant byte address 0x4 - core index']
  #allocation1 [shape = 'u32[144,128]{1,0:T(1,128)}', space=vmem, size = 0x12000, scoped, tag = 'internal scratch']
  %s0 = inlined_call_operand.vmem [shape: bf16[2,42,32], index: 0, kind: input, shape index: {}]
  %s1 = inlined_call_operand.vmem [shape: bf16[9,32,16], index: 1, kind: input, shape index: {}]
  %s2 = inlined_call_operand.vmem [shape: bf16[2,24,16], index: 2, kind: output, shape index: {}]
  %s3 = sld [smem:[#allocation0]]
  $region41: #{densenet_forward.36} parent=0
    _
  %s5 = ssub.s32 1, %s3
  %s6 = scalar_select 0, %s5, %s3
  loop: start=0, step=1, limit=4
  $region2: #{densenet_forward.36} parent=0 // loop_pre_header
    _
  $region3: #{densenet_forward.36} parent=0 // loop_header
    %s8 = sphi 0, %s12
    %p9 = scmp.ge.s32.totalorder %s8, 4
    %s18 = sphi 0, %s20
    %s21 = sphi 0, %s18
    %s22 = sphi 0, %s21
    %s38 = sphi 0, %s22
    %s42 = sphi 0, %s42
    %s44 = sphi 0, %s42
    %s45 = sphi 0, %s44
    %s59 = sphi 0, %s45
    %s65 = sphi 0, %s67
    %s68 = sphi 0, %s65
    %s69 = sphi 0, %s68
    %s85 = sphi 0, %s69
  $region4: #{densenet_forward.36} parent=0 // loop_header_branch
    %11 = sbr.rel (%p9) target = $region8
  $region5: #{densenet_forward.36} parent=0 // loop_body
    %s13 = ssub.s32 %s8, 1
    %s14 = ssub.s32 %s8, 2
    %s15 = sadd.s32 %s8, 1
    %s16 = ssub.s32 %s8, %s15
    %p17 = scmp.eq.s32.totalorder %s16, 0
    %s19 = sadd.s32 %s18, 1
    %s20 = scalar_select %p17, %s18, %s19
    %p23 = pneg %p17
    %p24 = scmp.eq.s32.totalorder %s8, 1
    %p25 = por %p23, %p24
    %p26 = scmp.ne.s32.totalorder %s18, %s21
    %p27 = scmp.eq.s32.totalorder %s8, 0
    %p28 = por %p26, %p27
    %p29 = scmp.ne.s32.totalorder %s18, %s21
    %p30 = scmp.eq.s32.totalorder %s13, 1
    %p31 = por %p29, %p30
    %p32 = scmp.ne.s32.totalorder %s21, %s22
    %p33 = scmp.eq.s32.totalorder %s13, 0
    %p34 = por %p32, %p33
    %p35 = scmp.ne.s32.totalorder %s21, %s22
    %p36 = scmp.eq.s32.totalorder %s14, 1
    %p37 = por %p35, %p36
    %p39 = scmp.ne.s32.totalorder %s22, %s38
    %p40 = scmp.eq.s32.totalorder %s14, 0
    %p41 = por %p39, %p40
    %s43 = sadd.s32 %s42, 1
    %p46 = scmp.eq.s32.totalorder %s8, 1
    %p47 = scmp.ne.s32.totalorder %s42, %s44
    %p48 = scmp.eq.s32.totalorder %s8, 0
    %p49 = por %p47, %p48
    %p50 = scmp.ne.s32.totalorder %s42, %s44
    %p51 = scmp.eq.s32.totalorder %s13, 1
    %p52 = por %p50, %p51
    %p53 = scmp.ne.s32.totalorder %s44, %s45
    %p54 = scmp.eq.s32.totalorder %s13, 0
    %p55 = por %p53, %p54
    %p56 = scmp.ne.s32.totalorder %s44, %s45
    %p57 = scmp.eq.s32.totalorder %s14, 1
    %p58 = por %p56, %p57
    %p60 = scmp.ne.s32.totalorder %s45, %s59
    %p61 = scmp.eq.s32.totalorder %s14, 0
    %p62 = por %p60, %p61
    %s63 = ssub.s32 %s8, %s15
    %p64 = scmp.eq.s32.totalorder %s63, 0
    %s66 = sadd.s32 %s65, 1
    %s67 = scalar_select %p64, %s65, %s66
    %p70 = pneg %p64
    %p71 = scmp.eq.s32.totalorder %s8, 1
    %p72 = por %p70, %p71
    %p73 = scmp.ne.s32.totalorder %s65, %s68
    %p74 = scmp.eq.s32.totalorder %s8, 0
    %p75 = por %p73, %p74
    %p76 = scmp.ne.s32.totalorder %s65, %s68
    %p77 = scmp.eq.s32.totalorder %s13, 1
    %p78 = por %p76, %p77
    %p79 = scmp.ne.s32.totalorder %s68, %s69
    %p80 = scmp.eq.s32.totalorder %s13, 0
    %p81 = por %p79, %p80
    %p82 = scmp.ne.s32.totalorder %s68, %s69
    %p83 = scmp.eq.s32.totalorder %s14, 1
    %p84 = por %p82, %p83
    %p86 = scmp.ne.s32.totalorder %s69, %s85
    %p87 = scmp.eq.s32.totalorder %s14, 0
    %p88 = por %p86, %p87
    %p89 = scmp.le.s32.totalorder 1, %s8
    %p90 = scmp.lt.s32.totalorder %s8, 3
    %p91 = pnand %p89, %p90
    %p92 = pneg %p91
    // Predicated region
    $region9: #{densenet_forward.36} parent=5 // pred_check
      _
    $region10: #{densenet_forward.36} parent=5 // pred_check_branch
      %94 = sbr.rel (%p91) target = $region12
    $region11: #{densenet_forward.36} parent=5 // pred_region
      %s95 = ssub.s32 %s8, 1
      // Predicated region
      $region13: #{densenet_forward.36} parent=11 // pred_check
        %p96 = pneg %p55
      $region14: #{densenet_forward.36} parent=11 // pred_check_branch
        %98 = sbr.rel (%p96) target = $region16
      $region15: #{densenet_forward.36} parent=11 // pred_region
        _
      $region16: #{densenet_forward.36} parent=11 // pred_fallthru
        _
    $region12: #{densenet_forward.36} parent=5 // pred_fallthru
      _
    %p99 = scmp.lt.s32.totalorder %s8, 2
    // Predicated region
    $region17: #{densenet_forward.36} parent=5 // pred_check
      %p100 = pneg %p99
    $region18: #{densenet_forward.36} parent=5 // pred_check_branch
      %102 = sbr.rel (%p100) target = $region20
    $region19: #{densenet_forward.36} parent=5 // pred_region
      // Predicated region
      $region21: #{densenet_forward.36} parent=19 // pred_check
        %p103 = pneg %p28
      $region22: #{densenet_forward.36} parent=19 // pred_check_branch
        %105 = sbr.rel (%p103) target = $region24
      $region23: #{densenet_forward.36} parent=19 // pred_region
        %p106 = scmp.lt.s32.totalorder %s8, 1
        %s107 = scalar_select %p106, %s8, 1
        %s108 = smul.addr %s107, 6
        %s109 = smul.addr %s108, 4
        %s110 = scalar_lea.vmem %s0, %s109
      $region24: #{densenet_forward.36} parent=19 // pred_fallthru
        _
    $region20: #{densenet_forward.36} parent=5 // pred_fallthru
      _
    %p111 = scmp.le.s32.totalorder 1, %s8
    %p112 = scmp.lt.s32.totalorder %s8, 3
    %p113 = pnand %p111, %p112
    %p114 = pneg %p113
    // Predicated region
    $region25: #{densenet_forward.36} parent=5 // pred_check
      _
    $region26: #{densenet_forward.36} parent=5 // pred_check_branch
      %116 = sbr.rel (%p113) target = $region28
    $region27: #{densenet_forward.36} parent=5 // pred_region
      %s117 = ssub.s32 %s8, 1
      %p118 = scmp.lt.s32.totalorder %s13, 1
      %s119 = scalar_select %p118, %s13, 1
      %s120 = smul.addr %s119, 6
      %s121 = smul.addr %s120, 4
      %s122 = scalar_lea.vmem %s0, %s121
      %p123 = pneg %p34
      %p124 = pneg %p31
      %p125 = pneg %p55
      %p126 = pneg %p52
      %p127 = pneg %p81
      %p128 = pneg %p78
      %p129 = scmp.lt.s32.totalorder %s13, 1
      %s130 = scalar_select %p129, %s13, 1
      %s131 = smul.addr %s130, 3
      %s132 = smul.addr %s131, 4
      %s133 = scalar_lea.vmem %s2, %s132
      %p134 = scmp.lt.s32.totalorder %s13, 1
      %s135 = scalar_select %p134, %s13, 1
      %s136 = smul.addr %s135, 6
      %s137 = smul.addr %s136, 4
      %s138 = scalar_lea.vmem %s0, %s137
      %p139 = scmp.lt.s32.totalorder %s13, 1
      %s140 = scalar_select %p139, %s13, 1
      %s141 = smul.addr %s140, 3
      %s142 = smul.addr %s141, 4
      %s143 = scalar_lea.vmem %s2, %s142
      %v145 = vld [vmem:[%s138] sm:$0xf]
      %v146 = vld [vmem:[%s138 + $0x4] sm:$0xf]
      %v147 = vld [vmem:[%s138 + $0x8] sm:$0xf]
      %v148 = vld [vmem:[%s1] sm:$0xf]
      %v149 = vld [vmem:[%s1 + $0x4] sm:$0xf]
      %v150 = vld [vmem:[%s1 + $0x8] sm:$0xf]
      %v151 = vld [vmem:[%s1 + $0xc] sm:$0xf]
      %v152 = vld [vmem:[%s138 + $0xc] sm:$0x1]
      %s153 = scalar_lea.vmem %s1, 16
      %v154 = vld [vmem:[%s153] sm:$0xf]
      %v155 = vld [vmem:[%s153 + $0x4] sm:$0xf]
      %v156 = vld [vmem:[%s153 + $0x8] sm:$0xf]
      %v157 = vld [vmem:[%s153 + $0xc] sm:$0xf]
      %v162 = vunpack.c.l.b16 %v145
      %v163 = vunpack.c.l.b16 %v146
      %v164 = vunpack.c.l.b16 %v147
      %v165 = vunpack.c.l.b16 %v152
      %v166 = vpack.c.b16 %v163, %v162
      %v167 = vpack.c.b16 %v165, %v164
      %vm168 = vsmask.f32 7424
      %v170 = vshrl.u32 %v166, 16
      %v172 = vshll.u32 %v166, 16
      %v174 = vrot.slane %v172, 1
      %v175 = vor.u32 %v170, %v174
      %v177 = vshll.u32 %v167, 16
      %v179 = vrot.slane %v177, 1
      %v180 = vsel %vm168, %v175, %v179
      %v181 = vshrl.u32 %v167, 16
      %v183 = vor.u32 %v181, %v179
      %v188 = vunpack.c.l.b16 %v154
      %v189 = vunpack.c.l.b16 %v155
      %v190 = vunpack.c.l.b16 %v156
      %v191 = vunpack.c.l.b16 %v157
      %v192 = vpack.c.b16 %v189, %v188
      %v193 = vpack.c.b16 %v191, %v190
      %vm196 = vcmask 261120
      %v198 = vsel %vm196, %v180, 0
      %v201 = vsel %vm196, %v183, 0
      %203 = vmatprep.subr.bf16.mxu0 0
      %204 = vmatpush1.bf16.msra.mxu0 %v192
      %205 = vmatprep.subr.bf16.mxu0 0
      %206 = vmatpush1.bf16.msra.mxu0 %v193
      %207 = vmatprep.subr.bf16.mxu0 0
      %208 = vmatpush1.bf16.msra.mxu0 0
      %209 = vmatprep.subr.bf16.mxu0 0
      %210 = vmatpush1.bf16.msra.mxu0 0
      %211 = vmatprep.subr.bf16.mxu0 0
      %212 = vmatpush1.bf16.msra.mxu0 0
      %213 = vmatprep.subr.bf16.mxu0 0
      %214 = vmatpush1.bf16.msra.mxu0 0
      %215 = vmatprep.subr.bf16.mxu0 0
      %216 = vmatpush1.bf16.msra.mxu0 0
      %217 = vmatprep.subr.bf16.mxu0 0
      %218 = vmatpush1.bf16.msra.mxu0 0
      %219 = vmatprep.subr.bf16.mxu0 0
      %220 = vmatpush1.bf16.msra.mxu0 0
      %221 = vmatprep.subr.bf16.mxu0 0
      %222 = vmatpush1.bf16.msra.mxu0 0
      %223 = vmatprep.subr.bf16.mxu0 0
      %224 = vmatpush1.bf16.msra.mxu0 0
      %225 = vmatprep.subr.bf16.mxu0 0
      %226 = vmatpush1.bf16.msra.mxu0 0
      %227 = vmatprep.subr.bf16.mxu0 0
      %228 = vmatpush1.bf16.msra.mxu0 0
      %229 = vmatprep.subr.bf16.mxu0 0
      %230 = vmatpush1.bf16.msra.mxu0 0
      %231 = vmatprep.subr.bf16.mxu0 0
      %232 = vmatpush1.bf16.msra.mxu0 0
      %233 = vmatprep.subr.bf16.mxu0 0
      %234 = vmatpush1.bf16.msra.mxu0 0
      %235 = vmatprep.mubr.bf16.mxu0 0
      %236 = vmatmul.mubr.bf16.gmra.mrb[0].mxu0 %v198
      %v237 = vpop.f32.mrb[0].mxu0
      %v238 = vadd.f32 0.0, %v237
      %v239 = vpop.f32.mrb[0].mxu0
      %v240 = vpop.f32.mrb[0].mxu0
      %v241 = vadd.f32 0.0, %v240
      %v242 = vpop.f32.mrb[0].mxu0
      %243 = vmatprep.mubr.bf16.mxu0 0
      %244 = vmatmul.mubr.bf16.gmra.mrb[0].mxu0 %v201
      %v245 = vpop.f32.mrb[0].mxu0
      %v246 = vadd.f32 0.0, %v245
      %v247 = vpop.f32.mrb[0].mxu0
      %v248 = vpop.f32.mrb[0].mxu0
      %v249 = vpop.f32.mrb[0].mxu0
      %250 = vdwg.mxu0
      %v251 = vpack.c.b16 %v164, %v164
      %v256 = vunpack.c.l.b16 %v148
      %v257 = vunpack.c.l.b16 %v149
      %v258 = vunpack.c.l.b16 %v150
      %v259 = vunpack.c.l.b16 %v151
      %v260 = vpack.c.b16 %v257, %v256
      %v261 = vpack.c.b16 %v259, %v258
      %v264 = vsel %vm196, %v166, 0
      %v267 = vsel %vm196, %v251, 0
      %269 = vmatprep.subr.bf16.mxu0 0
      %270 = vmatpush1.bf16.msra.mxu0 %v260
      %271 = vmatprep.subr.bf16.mxu0 0
      %272 = vmatpush1.bf16.msra.mxu0 %v261
      %273 = vmatprep.subr.bf16.mxu0 0
      %274 = vmatpush1.bf16.msra.mxu0 0
      %275 = vmatprep.subr.bf16.mxu0 0
      %276 = vmatpush1.bf16.msra.mxu0 0
      %277 = vmatprep.subr.bf16.mxu0 0
      %278 = vmatpush1.bf16.msra.mxu0 0
      %279 = vmatprep.subr.bf16.mxu0 0
      %280 = vmatpush1.bf16.msra.mxu0 0
      %281 = vmatprep.subr.bf16.mxu0 0
      %282 = vmatpush1.bf16.msra.mxu0 0
      %283 = vmatprep.subr.bf16.mxu0 0
      %284 = vmatpush1.bf16.msra.mxu0 0
      %285 = vmatprep.subr.bf16.mxu0 0
      %286 = vmatpush1.bf16.msra.mxu0 0
      %287 = vmatprep.subr.bf16.mxu0 0
      %288 = vmatpush1.bf16.msra.mxu0 0
      %289 = vmatprep.subr.bf16.mxu0 0
      %290 = vmatpush1.bf16.msra.mxu0 0
      %291 = vmatprep.subr.bf16.mxu0 0
      %292 = vmatpush1.bf16.msra.mxu0 0
      %293 = vmatprep.subr.bf16.mxu0 0
      %294 = vmatpush1.bf16.msra.mxu0 0
      %295 = vmatprep.subr.bf16.mxu0 0
      %296 = vmatpush1.bf16.msra.mxu0 0
      %297 = vmatprep.subr.bf16.mxu0 0
      %298 = vmatpush1.bf16.msra.mxu0 0
      %299 = vmatprep.subr.bf16.mxu0 0
      %300 = vmatpush1.bf16.msra.mxu0 0
      %301 = vmatprep.mubr.bf16.mxu0 0
      %302 = vmatmul.mubr.bf16.gmra.mrb[0].mxu0 %v264
      %v303 = vpop.f32.mrb[0].mxu0
      %v304 = vadd.f32 %v238, %v303
      %v305 = vpop.f32.mrb[0].mxu0
      %v306 = vpop.f32.mrb[0].mxu0
      %v307 = vadd.f32 %v241, %v306
      %v308 = vpop.f32.mrb[0].mxu0
      %309 = vmatprep.mubr.bf16.mxu0 0
      %310 = vmatmul.mubr.bf16.gmra.mrb[0].mxu0 %v267
      %v311 = vpop.f32.mrb[0].mxu0
      %v312 = vadd.f32 %v246, %v311
      %v313 = vpop.f32.mrb[0].mxu0
      %v314 = vpop.f32.mrb[0].mxu0
      %v315 = vpop.f32.mrb[0].mxu0
      %316 = vdwg.mxu0
      %v317 = vld [vmem:[%s138] sm:$0xe]
      %s318 = scalar_lea.vmem %s1, 32
      %v319 = vld [vmem:[%s318] sm:$0xf]
      %v320 = vld [vmem:[%s318 + $0x4] sm:$0xf]
      %v321 = vld [vmem:[%s318 + $0x8] sm:$0xf]
      %v322 = vld [vmem:[%s318 + $0xc] sm:$0xf]
      %v324 = vunpack.c.l.b16 %v317
      %v325 = vpack.c.b16 %v163, %v324
      %vm326 = vcmask 1046528
      %v327 = vrot.slane %v325, 1
      %v328 = vrot.slane %v167, 1
      %v329 = vsel %vm326, %v327, %v328
      %v334 = vunpack.c.l.b16 %v319
      %v335 = vunpack.c.l.b16 %v320
      %v336 = vunpack.c.l.b16 %v321
      %v337 = vunpack.c.l.b16 %v322
      %v338 = vpack.c.b16 %v335, %v334
      %v339 = vpack.c.b16 %v337, %v336
      %v343 = vsel %vm196, %v329, 0
      %v346 = vsel %vm196, %v328, 0
      %348 = vmatprep.subr.bf16.mxu0 0
      %349 = vmatpush1.bf16.msra.mxu0 %v338
      %350 = vmatprep.subr.bf16.mxu0 0
      %351 = vmatpush1.bf16.msra.mxu0 %v339
      %352 = vmatprep.subr.bf16.mxu0 0
      %353 = vmatpush1.bf16.msra.mxu0 0
      %354 = vmatprep.subr.bf16.mxu0 0
      %355 = vmatpush1.bf16.msra.mxu0 0
      %356 = vmatprep.subr.bf16.mxu0 0
      %357 = vmatpush1.bf16.msra.mxu0 0
      %358 = vmatprep.subr.bf16.mxu0 0
      %359 = vmatpush1.bf16.msra.mxu0 0
      %360 = vmatprep.subr.bf16.mxu0 0
      %361 = vmatpush1.bf16.msra.mxu0 0
      %362 = vmatprep.subr.bf16.mxu0 0
      %363 = vmatpush1.bf16.msra.mxu0 0
      %364 = vmatprep.subr.bf16.mxu0 0
      %365 = vmatpush1.bf16.msra.mxu0 0
      %366 = vmatprep.subr.bf16.mxu0 0
      %367 = vmatpush1.bf16.msra.mxu0 0
      %368 = vmatprep.subr.bf16.mxu0 0
      %369 = vmatpush1.bf16.msra.mxu0 0
      %370 = vmatprep.subr.bf16.mxu0 0
      %371 = vmatpush1.bf16.msra.mxu0 0
      %372 = vmatprep.subr.bf16.mxu0 0
      %373 = vmatpush1.bf16.msra.mxu0 0
      %374 = vmatprep.subr.bf16.mxu0 0
      %375 = vmatpush1.bf16.msra.mxu0 0
      %376 = vmatprep.subr.bf16.mxu0 0
      %377 = vmatpush1.bf16.msra.mxu0 0
      %378 = vmatprep.subr.bf16.mxu0 0
      %379 = vmatpush1.bf16.msra.mxu0 0
      %380 = vmatprep.mubr.bf16.mxu0 0
      %381 = vmatmul.mubr.bf16.gmra.mrb[0].mxu0 %v343
      %v382 = vpop.f32.mrb[0].mxu0
      %v383 = vadd.f32 0.0, %v382
      %v384 = vpop.f32.mrb[0].mxu0
      %v385 = vpop.f32.mrb[0].mxu0
      %v386 = vadd.f32 0.0, %v385
      %v387 = vpop.f32.mrb[0].mxu0
      %388 = vmatprep.mubr.bf16.mxu0 0
      %389 = vmatmul.mubr.bf16.gmra.mrb[0].mxu0 %v346
      %v390 = vpop.f32.mrb[0].mxu0
      %v391 = vadd.f32 0.0, %v390
      %v392 = vpop.f32.mrb[0].mxu0
      %v393 = vpop.f32.mrb[0].mxu0
      %v394 = vpop.f32.mrb[0].mxu0
      %395 = vdwg.mxu0
      %v396 = vadd.f32 %v304, %v383
      %v397 = vadd.f32 %v307, %v386
      %v398 = vadd.f32 %v312, %v391
      %v399 = vld [vmem:[%s138] sm:$0x8]
      %v400 = vld [vmem:[%s138 + $0xc] sm:$0x7]
      %s401 = scalar_lea.vmem %s1, 48
      %v402 = vld [vmem:[%s401] sm:$0xf]
      %v403 = vld [vmem:[%s401 + $0x4] sm:$0xf]
      %v404 = vld [vmem:[%s401 + $0x8] sm:$0xf]
      %v405 = vld [vmem:[%s401 + $0xc] sm:$0xf]
      %v408 = vunpack.c.l.b16 %v399
      %v409 = vunpack.c.l.b16 %v400
      %v410 = vpack.c.b16 %v163, %v408
      %v411 = vpack.c.b16 %v409, %v164
      %vm412 = vcmask 1044480
      %v413 = vrot.slane %v410, 3
      %v414 = vrot.slane %v411, 3
      %v415 = vsel %vm412, %v413, %v414
      %v420 = vunpack.c.l.b16 %v402
      %v421 = vunpack.c.l.b16 %v403
      %v422 = vunpack.c.l.b16 %v404
      %v423 = vunpack.c.l.b16 %v405
      %v424 = vpack.c.b16 %v421, %v420
      %v425 = vpack.c.b16 %v423, %v422
      %v429 = vsel %vm196, %v415, 0
      %v432 = vsel %vm196, %v414, 0
      %434 = vmatprep.subr.bf16.mxu0 0
      %435 = vmatpush1.bf16.msra.mxu0 %v424
      %436 = vmatprep.subr.bf16.mxu0 0
      %437 = vmatpush1.bf16.msra.mxu0 %v425
      %438 = vmatprep.subr.bf16.mxu0 0
      %439 = vmatpush1.bf16.msra.mxu0 0
      %440 = vmatprep.subr.bf16.mxu0 0
      %441 = vmatpush1.bf16.msra.mxu0 0
      %442 = vmatprep.subr.bf16.mxu0 0
      %443 = vmatpush1.bf16.msra.mxu0 0
      %444 = vmatprep.subr.bf16.mxu0 0
      %445 = vmatpush1.bf16.msra.mxu0 0
      %446 = vmatprep.subr.bf16.mxu0 0
      %447 = vmatpush1.bf16.msra.mxu0 0
      %448 = vmatprep.subr.bf16.mxu0 0
      %449 = vmatpush1.bf16.msra.mxu0 0
      %450 = vmatprep.subr.bf16.mxu0 0
      %451 = vmatpush1.bf16.msra.mxu0 0
      %452 = vmatprep.subr.bf16.mxu0 0
      %453 = vmatpush1.bf16.msra.mxu0 0
      %454 = vmatprep.subr.bf16.mxu0 0
      %455 = vmatpush1.bf16.msra.mxu0 0
      %456 = vmatprep.subr.bf16.mxu0 0
      %457 = vmatpush1.bf16.msra.mxu0 0
      %458 = vmatprep.subr.bf16.mxu0 0
      %459 = vmatpush1.bf16.msra.mxu0 0
      %460 = vmatprep.subr.bf16.mxu0 0
      %461 = vmatpush1.bf16.msra.mxu0 0
      %462 = vmatprep.subr.bf16.mxu0 0
      %463 = vmatpush1.bf16.msra.mxu0 0
      %464 = vmatprep.subr.bf16.mxu0 0
      %465 = vmatpush1.bf16.msra.mxu0 0
      %466 = vmatprep.mubr.bf16.mxu0 0
      %467 = vmatmul.mubr.bf16.gmra.mrb[0].mxu0 %v429
      %v468 = vpop.f32.mrb[0].mxu0
      %v469 = vadd.f32 0.0, %v468
      %v470 = vpop.f32.mrb[0].mxu0
      %v471 = vpop.f32.mrb[0].mxu0
      %v472 = vadd.f32 0.0, %v471
      %v473 = vpop.f32.mrb[0].mxu0
      %474 = vmatprep.mubr.bf16.mxu0 0
      %475 = vmatmul.mubr.bf16.gmra.mrb[0].mxu0 %v432
      %v476 = vpop.f32.mrb[0].mxu0
      %v477 = vadd.f32 0.0, %v476
      %v478 = vpop.f32.mrb[0].mxu0
      %v479 = vpop.f32.mrb[0].mxu0
      %v480 = vpop.f32.mrb[0].mxu0
      %481 = vdwg.mxu0
      %v482 = vadd.f32 %v396, %v469
      %v483 = vadd.f32 %v397, %v472
      %v484 = vadd.f32 %v398, %v477
      %v485 = vld [vmem:[%s138 + $0xc] sm:$0xf]
      %s486 = scalar_lea.vmem %s1, 64
      %v487 = vld [vmem:[%s486] sm:$0xf]
      %v488 = vld [vmem:[%s486 + $0x4] sm:$0xf]
      %v489 = vld [vmem:[%s486 + $0x8] sm:$0xf]
      %v490 = vld [vmem:[%s486 + $0xc] sm:$0xf]
      %v492 = vunpack.c.l.b16 %v485
      %v493 = vpack.c.b16 %v492, %v164
      %vm494 = vsmask.f32 4352
      %v496 = vshrl.u32 %v410, 16
      %v498 = vrot.slane %v496, 3
      %v499 = vshll.u32 %v410, 16
      %v501 = vrot.slane %v499, 4
      %v502 = vor.u32 %v498, %v501
      %v504 = vshrl.u32 %v493, 16
      %v506 = vrot.slane %v504, 3
      %v507 = vshll.u32 %v493, 16
      %v509 = vrot.slane %v507, 4
      %v510 = vor.u32 %v506, %v509
      %v511 = vsel %vm494, %v502, %v510
      %v516 = vunpack.c.l.b16 %v487
      %v517 = vunpack.c.l.b16 %v488
      %v518 = vunpack.c.l.b16 %v489
      %v519 = vunpack.c.l.b16 %v490
      %v520 = vpack.c.b16 %v517, %v516
      %v521 = vpack.c.b16 %v519, %v518
      %v525 = vsel %vm196, %v511, 0
      %v528 = vsel %vm196, %v510, 0
      %530 = vmatprep.subr.bf16.mxu0 0
      %531 = vmatpush1.bf16.msra.mxu0 %v520
      %532 = vmatprep.subr.bf16.mxu0 0
      %533 = vmatpush1.bf16.msra.mxu0 %v521
      %534 = vmatprep.subr.bf16.mxu0 0
      %535 = vmatpush1.bf16.msra.mxu0 0
      %536 = vmatprep.subr.bf16.mxu0 0
      %537 = vmatpush1.bf16.msra.mxu0 0
      %538 = vmatprep.subr.bf16.mxu0 0
      %539 = vmatpush1.bf16.msra.mxu0 0
      %540 = vmatprep.subr.bf16.mxu0 0
      %541 = vmatpush1.bf16.msra.mxu0 0
      %542 = vmatprep.subr.bf16.mxu0 0
      %543 = vmatpush1.bf16.msra.mxu0 0
      %544 = vmatprep.subr.bf16.mxu0 0
      %545 = vmatpush1.bf16.msra.mxu0 0
      %546 = vmatprep.subr.bf16.mxu0 0
      %547 = vmatpush1.bf16.msra.mxu0 0
      %548 = vmatprep.subr.bf16.mxu0 0
      %549 = vmatpush1.bf16.msra.mxu0 0
      %550 = vmatprep.subr.bf16.mxu0 0
      %551 = vmatpush1.bf16.msra.mxu0 0
      %552 = vmatprep.subr.bf16.mxu0 0
      %553 = vmatpush1.bf16.msra.mxu0 0
      %554 = vmatprep.subr.bf16.mxu0 0
      %555 = vmatpush1.bf16.msra.mxu0 0
      %556 = vmatprep.subr.bf16.mxu0 0
      %557 = vmatpush1.bf16.msra.mxu0 0
      %558 = vmatprep.subr.bf16.mxu0 0
      %559 = vmatpush1.bf16.msra.mxu0 0
      %560 = vmatprep.subr.bf16.mxu0 0
      %561 = vmatpush1.bf16.msra.mxu0 0
      %562 = vmatprep.mubr.bf16.mxu0 0
      %563 = vmatmul.mubr.bf16.gmra.mrb[0].mxu0 %v525
      %v564 = vpop.f32.mrb[0].mxu0
      %v565 = vadd.f32 0.0, %v564
      %v566 = vpop.f32.mrb[0].mxu0
      %v567 = vpop.f32.mrb[0].mxu0
      %v568 = vadd.f32 0.0, %v567
      %v569 = vpop.f32.mrb[0].mxu0
      %570 = vmatprep.mubr.bf16.mxu0 0
      %571 = vmatmul.mubr.bf16.gmra.mrb[0].mxu0 %v528
      %v572 = vpop.f32.mrb[0].mxu0
      %v573 = vadd.f32 0.0, %v572
      %v574 = vpop.f32.mrb[0].mxu0
      %v575 = vpop.f32.mrb[0].mxu0
      %v576 = vpop.f32.mrb[0].mxu0
      %577 = vdwg.mxu0
      %v578 = vadd.f32 %v482, %v565
      %v579 = vadd.f32 %v483, %v568
      %v580 = vadd.f32 %v484, %v573
      %s581 = scalar_lea.vmem %s1, 80
      %v582 = vld [vmem:[%s581] sm:$0xf]
      %v583 = vld [vmem:[%s581 + $0x4] sm:$0xf]
      %v584 = vld [vmem:[%s581 + $0x8] sm:$0xf]
      %v585 = vld [vmem:[%s581 + $0xc] sm:$0xf]
      %v586 = vpack.c.b16 %v164, %v163
      %v587 = vpack.c.b16 %v492, %v492
      %v592 = vunpack.c.l.b16 %v582
      %v593 = vunpack.c.l.b16 %v583
      %v594 = vunpack.c.l.b16 %v584
      %v595 = vunpack.c.l.b16 %v585
      %v596 = vpack.c.b16 %v593, %v592
      %v597 = vpack.c.b16 %v595, %v594
      %v601 = vsel %vm196, %v586, 0
      %v604 = vsel %vm196, %v587, 0
      %606 = vmatprep.subr.bf16.mxu0 0
      %607 = vmatpush1.bf16.msra.mxu0 %v596
      %608 = vmatprep.subr.bf16.mxu0 0
      %609 = vmatpush1.bf16.msra.mxu0 %v597
      %610 = vmatprep.subr.bf16.mxu0 0
      %611 = vmatpush1.bf16.msra.mxu0 0
      %612 = vmatprep.subr.bf16.mxu0 0
      %613 = vmatpush1.bf16.msra.mxu0 0
      %614 = vmatprep.subr.bf16.mxu0 0
      %615 = vmatpush1.bf16.msra.mxu0 0
      %616 = vmatprep.subr.bf16.mxu0 0
      %617 = vmatpush1.bf16.msra.mxu0 0
      %618 = vmatprep.subr.bf16.mxu0 0
      %619 = vmatpush1.bf16.msra.mxu0 0
      %620 = vmatprep.subr.bf16.mxu0 0
      %621 = vmatpush1.bf16.msra.mxu0 0
      %622 = vmatprep.subr.bf16.mxu0 0
      %623 = vmatpush1.bf16.msra.mxu0 0
      %624 = vmatprep.subr.bf16.mxu0 0
      %625 = vmatpush1.bf16.msra.mxu0 0
      %626 = vmatprep.subr.bf16.mxu0 0
      %627 = vmatpush1.bf16.msra.mxu0 0
      %628 = vmatprep.subr.bf16.mxu0 0
      %629 = vmatpush1.bf16.msra.mxu0 0
      %630 = vmatprep.subr.bf16.mxu0 0
      %631 = vmatpush1.bf16.msra.mxu0 0
      %632 = vmatprep.subr.bf16.mxu0 0
      %633 = vmatpush1.bf16.msra.mxu0 0
      %634 = vmatprep.subr.bf16.mxu0 0
      %635 = vmatpush1.bf16.msra.mxu0 0
      %636 = vmatprep.subr.bf16.mxu0 0
      %637 = vmatpush1.bf16.msra.mxu0 0
      %638 = vmatprep.mubr.bf16.mxu0 0
      %639 = vmatmul.mubr.bf16.gmra.mrb[0].mxu0 %v601
      %v640 = vpop.f32.mrb[0].mxu0
      %v641 = vadd.f32 0.0, %v640
      %v642 = vpop.f32.mrb[0].mxu0
      %v643 = vpop.f32.mrb[0].mxu0
      %v644 = vadd.f32 0.0, %v643
      %v645 = vpop.f32.mrb[0].mxu0
      %646 = vmatprep.mubr.bf16.mxu0 0
      %647 = vmatmul.mubr.bf16.gmra.mrb[0].mxu0 %v604
      %v648 = vpop.f32.mrb[0].mxu0
      %v649 = vadd.f32 0.0, %v648
      %v650 = vpop.f32.mrb[0].mxu0
      %v651 = vpop.f32.mrb[0].mxu0
      %v652 = vpop.f32.mrb[0].mxu0
      %653 = vdwg.mxu0
      %v654 = vadd.f32 %v578, %v641
      %v655 = vadd.f32 %v579, %v644
      %v656 = vadd.f32 %v580, %v649
      %v657 = vld [vmem:[%s138 + $0x4] sm:$0xc]
      %v658 = vld [vmem:[%s138 + $0x8] sm:$0xf]
      %v659 = vld [vmem:[%s138 + $0xc] sm:$0xf]
      %v660 = vld [vmem:[%s138 + $0x10] sm:$0x3]
      %s661 = scalar_lea.vmem %s1, 96
      %v662 = vld [vmem:[%s661] sm:$0xf]
      %v663 = vld [vmem:[%s661 + $0x4] sm:$0xf]
      %v664 = vld [vmem:[%s661 + $0x8] sm:$0xf]
      %v665 = vld [vmem:[%s661 + $0xc] sm:$0xf]
      %v670 = vunpack.c.l.b16 %v657
      %v671 = vunpack.c.l.b16 %v658
      %v672 = vunpack.c.l.b16 %v659
      %v673 = vunpack.c.l.b16 %v660
      %v674 = vpack.c.b16 %v671, %v670
      %v675 = vpack.c.b16 %v673, %v672
      %vm676 = vcmask 1045504
      %v677 = vrot.slane %v674, 2
      %v678 = vrot.slane %v675, 2
      %v679 = vsel %vm676, %v677, %v678
      %v684 = vunpack.c.l.b16 %v662
      %v685 = vunpack.c.l.b16 %v663
      %v686 = vunpack.c.l.b16 %v664
      %v687 = vunpack.c.l.b16 %v665
      %v688 = vpack.c.b16 %v685, %v684
      %v689 = vpack.c.b16 %v687, %v686
      %v693 = vsel %vm196, %v679, 0
      %v696 = vsel %vm196, %v678, 0
      %698 = vmatprep.subr.bf16.mxu0 0
      %699 = vmatpush1.bf16.msra.mxu0 %v688
      %700 = vmatprep.subr.bf16.mxu0 0
      %701 = vmatpush1.bf16.msra.mxu0 %v689
      %702 = vmatprep.subr.bf16.mxu0 0
      %703 = vmatpush1.bf16.msra.mxu0 0
      %704 = vmatprep.subr.bf16.mxu0 0
      %705 = vmatpush1.bf16.msra.mxu0 0
      %706 = vmatprep.subr.bf16.mxu0 0
      %707 = vmatpush1.bf16.msra.mxu0 0
      %708 = vmatprep.subr.bf16.mxu0 0
      %709 = vmatpush1.bf16.msra.mxu0 0
      %710 = vmatprep.subr.bf16.mxu0 0
      %711 = vmatpush1.bf16.msra.mxu0 0
      %712 = vmatprep.subr.bf16.mxu0 0
      %713 = vmatpush1.bf16.msra.mxu0 0
      %714 = vmatprep.subr.bf16.mxu0 0
      %715 = vmatpush1.bf16.msra.mxu0 0
      %716 = vmatprep.subr.bf16.mxu0 0
      %717 = vmatpush1.bf16.msra.mxu0 0
      %718 = vmatprep.subr.bf16.mxu0 0
      %719 = vmatpush1.bf16.msra.mxu0 0
      %720 = vmatprep.subr.bf16.mxu0 0
      %721 = vmatpush1.bf16.msra.mxu0 0
      %722 = vmatprep.subr.bf16.mxu0 0
      %723 = vmatpush1.bf16.msra.mxu0 0
      %724 = vmatprep.subr.bf16.mxu0 0
      %725 = vmatpush1.bf16.msra.mxu0 0
      %726 = vmatprep.subr.bf16.mxu0 0
      %727 = vmatpush1.bf16.msra.mxu0 0
      %728 = vmatprep.subr.bf16.mxu0 0
      %729 = vmatpush1.bf16.msra.mxu0 0
      %730 = vmatprep.mubr.bf16.mxu0 0
      %731 = vmatmul.mubr.bf16.gmra.mrb[0].mxu0 %v693
      %v732 = vpop.f32.mrb[0].mxu0
      %v733 = vadd.f32 0.0, %v732
      %v734 = vpop.f32.mrb[0].mxu0
      %v735 = vpop.f32.mrb[0].mxu0
      %v736 = vadd.f32 0.0, %v735
      %v737 = vpop.f32.mrb[0].mxu0
      %738 = vmatprep.mubr.bf16.mxu0 0
      %739 = vmatmul.mubr.bf16.gmra.mrb[0].mxu0 %v696
      %v740 = vpop.f32.mrb[0].mxu0
      %v741 = vadd.f32 0.0, %v740
      %v742 = vpop.f32.mrb[0].mxu0
      %v743 = vpop.f32.mrb[0].mxu0
      %v744 = vpop.f32.mrb[0].mxu0
      %745 = vdwg.mxu0
      %v746 = vadd.f32 %v654, %v733
      %v747 = vadd.f32 %v655, %v736
      %v748 = vadd.f32 %v656, %v741
      %v749 = vld [vmem:[%s138 + $0x10] sm:$0x7]
      %s750 = scalar_lea.vmem %s1, 112
      %v751 = vld [vmem:[%s750] sm:$0xf]
      %v752 = vld [vmem:[%s750 + $0x4] sm:$0xf]
      %v753 = vld [vmem:[%s750 + $0x8] sm:$0xf]
      %v754 = vld [vmem:[%s750 + $0xc] sm:$0xf]
      %v756 = vunpack.c.l.b16 %v749
      %v757 = vpack.c.b16 %v756, %v672
      %vm758 = vsmask.f32 5376
      %v760 = vshrl.u32 %v674, 16
      %v762 = vrot.slane %v760, 2
      %v763 = vshll.u32 %v674, 16
      %v765 = vrot.slane %v763, 3
      %v766 = vor.u32 %v762, %v765
      %v768 = vshrl.u32 %v757, 16
      %v770 = vrot.slane %v768, 2
      %v771 = vshll.u32 %v757, 16
      %v773 = vrot.slane %v771, 3
      %v774 = vor.u32 %v770, %v773
      %v775 = vsel %vm758, %v766, %v774
      %v780 = vunpack.c.l.b16 %v751
      %v781 = vunpack.c.l.b16 %v752
      %v782 = vunpack.c.l.b16 %v753
      %v783 = vunpack.c.l.b16 %v754
      %v784 = vpack.c.b16 %v781, %v780
      %v785 = vpack.c.b16 %v783, %v782
      %v789 = vsel %vm196, %v775, 0
      %v792 = vsel %vm196, %v774, 0
      %794 = vmatprep.subr.bf16.mxu0 0
      %795 = vmatpush1.bf16.msra.mxu0 %v784
      %796 = vmatprep.subr.bf16.mxu0 0
      %797 = vmatpush1.bf16.msra.mxu0 %v785
      %798 = vmatprep.subr.bf16.mxu0 0
      %799 = vmatpush1.bf16.msra.mxu0 0
      %800 = vmatprep.subr.bf16.mxu0 0
      %801 = vmatpush1.bf16.msra.mxu0 0
      %802 = vmatprep.subr.bf16.mxu0 0
      %803 = vmatpush1.bf16.msra.mxu0 0
      %804 = vmatprep.subr.bf16.mxu0 0
      %805 = vmatpush1.bf16.msra.mxu0 0
      %806 = vmatprep.subr.bf16.mxu0 0
      %807 = vmatpush1.bf16.msra.mxu0 0
      %808 = vmatprep.subr.bf16.mxu0 0
      %809 = vmatpush1.bf16.msra.mxu0 0
      %810 = vmatprep.subr.bf16.mxu0 0
      %811 = vmatpush1.bf16.msra.mxu0 0
      %812 = vmatprep.subr.bf16.mxu0 0
      %813 = vmatpush1.bf16.msra.mxu0 0
      %814 = vmatprep.subr.bf16.mxu0 0
      %815 = vmatpush1.bf16.msra.mxu0 0
      %816 = vmatprep.subr.bf16.mxu0 0
      %817 = vmatpush1.bf16.msra.mxu0 0
      %818 = vmatprep.subr.bf16.mxu0 0
      %819 = vmatpush1.bf16.msra.mxu0 0
      %820 = vmatprep.subr.bf16.mxu0 0
      %821 = vmatpush1.bf16.msra.mxu0 0
      %822 = vmatprep.subr.bf16.mxu0 0
      %823 = vmatpush1.bf16.msra.mxu0 0
      %824 = vmatprep.subr.bf16.mxu0 0
      %825 = vmatpush1.bf16.msra.mxu0 0
      %826 = vmatprep.mubr.bf16.mxu0 0
      %827 = vmatmul.mubr.bf16.gmra.mrb[0].mxu0 %v789
      %v828 = vpop.f32.mrb[0].mxu0
      %v829 = vadd.f32 0.0, %v828
      %v830 = vpop.f32.mrb[0].mxu0
      %v831 = vpop.f32.mrb[0].mxu0
      %v832 = vadd.f32 0.0, %v831
      %v833 = vpop.f32.mrb[0].mxu0
      %834 = vmatprep.mubr.bf16.mxu0 0
      %835 = vmatmul.mubr.bf16.gmra.mrb[0].mxu0 %v792
      %v836 = vpop.f32.mrb[0].mxu0
      %v837 = vadd.f32 0.0, %v836
      %v838 = vpop.f32.mrb[0].mxu0
      %v839 = vpop.f32.mrb[0].mxu0
      %v840 = vpop.f32.mrb[0].mxu0
      %841 = vdwg.mxu0
      %v842 = vadd.f32 %v746, %v829
      %v843 = vadd.f32 %v747, %v832
      %v844 = vadd.f32 %v748, %v837
      %v845 = vld [vmem:[%s138 + $0x4] sm:$0x8]
      %s846 = scalar_lea.vmem %s1, 128
      %v847 = vld [vmem:[%s846] sm:$0xf]
      %v848 = vld [vmem:[%s846 + $0x4] sm:$0xf]
      %v849 = vld [vmem:[%s846 + $0x8] sm:$0xf]
      %v850 = vld [vmem:[%s846 + $0xc] sm:$0xf]
      %v852 = vunpack.c.l.b16 %v845
      %v853 = vpack.c.b16 %v671, %v852
      %v854 = vrot.slane %v853, 3
      %v855 = vrot.slane %v757, 3
      %v856 = vsel %vm412, %v854, %v855
      %v861 = vunpack.c.l.b16 %v847
      %v862 = vunpack.c.l.b16 %v848
      %v863 = vunpack.c.l.b16 %v849
      %v864 = vunpack.c.l.b16 %v850
      %v865 = vpack.c.b16 %v862, %v861
      %v866 = vpack.c.b16 %v864, %v863
      %v870 = vsel %vm196, %v856, 0
      %v873 = vsel %vm196, %v855, 0
      %875 = vmatprep.subr.bf16.mxu0 0
      %876 = vmatpush1.bf16.msra.mxu0 %v865
      %877 = vmatprep.subr.bf16.mxu0 0
      %878 = vmatpush1.bf16.msra.mxu0 %v866
      %879 = vmatprep.subr.bf16.mxu0 0
      %880 = vmatpush1.bf16.msra.mxu0 0
      %881 = vmatprep.subr.bf16.mxu0 0
      %882 = vmatpush1.bf16.msra.mxu0 0
      %883 = vmatprep.subr.bf16.mxu0 0
      %884 = vmatpush1.bf16.msra.mxu0 0
      %885 = vmatprep.subr.bf16.mxu0 0
      %886 = vmatpush1.bf16.msra.mxu0 0
      %887 = vmatprep.subr.bf16.mxu0 0
      %888 = vmatpush1.bf16.msra.mxu0 0
      %889 = vmatprep.subr.bf16.mxu0 0
      %890 = vmatpush1.bf16.msra.mxu0 0
      %891 = vmatprep.subr.bf16.mxu0 0
      %892 = vmatpush1.bf16.msra.mxu0 0
      %893 = vmatprep.subr.bf16.mxu0 0
      %894 = vmatpush1.bf16.msra.mxu0 0
      %895 = vmatprep.subr.bf16.mxu0 0
      %896 = vmatpush1.bf16.msra.mxu0 0
      %897 = vmatprep.subr.bf16.mxu0 0
      %898 = vmatpush1.bf16.msra.mxu0 0
      %899 = vmatprep.subr.bf16.mxu0 0
      %900 = vmatpush1.bf16.msra.mxu0 0
      %901 = vmatprep.subr.bf16.mxu0 0
      %902 = vmatpush1.bf16.msra.mxu0 0
      %903 = vmatprep.subr.bf16.mxu0 0
      %904 = vmatpush1.bf16.msra.mxu0 0
      %905 = vmatprep.subr.bf16.mxu0 0
      %906 = vmatpush1.bf16.msra.mxu0 0
      %907 = vmatprep.mubr.bf16.mxu0 0
      %908 = vmatmul.mubr.bf16.gmra.mrb[0].mxu0 %v870
      %v909 = vpop.f32.mrb[0].mxu0
      %v910 = vadd.f32 0.0, %v909
      %v911 = vpop.f32.mrb[0].mxu0
      %v912 = vpop.f32.mrb[0].mxu0
      %v913 = vadd.f32 0.0, %v912
      %v914 = vpop.f32.mrb[0].mxu0
      %915 = vmatprep.mubr.bf16.mxu0 0
      %916 = vmatmul.mubr.bf16.gmra.mrb[0].mxu0 %v873
      %v917 = vpop.f32.mrb[0].mxu0
      %v918 = vadd.f32 0.0, %v917
      %v919 = vpop.f32.mrb[0].mxu0
      %v920 = vpop.f32.mrb[0].mxu0
      %v921 = vpop.f32.mrb[0].mxu0
      %922 = vdwg.mxu0
      %v923 = vadd.f32 %v842, %v910
      %v924 = vadd.f32 %v843, %v913
      %v925 = vadd.f32 %v844, %v918
      %v926 = vpack.c.bf16 %v924, %v923
      %v927 = vpack.c.bf16 %v925, %v925
      %v930 = vunpack.c.l.b16 %v926
      %v931 = vunpack.c.h.b16 %v926
      %v932 = vunpack.c.l.b16 %v927
      %v933 = vpack.c.b16 %v930, %v930
      %v934 = vpack.c.b16 %v931, %v931
      %v935 = vpack.c.b16 %v932, %v932
      %vm939 = vcmask 125952
      %940 = vst.msk [vmem:[%s143] sm:$0xf] %vm939, %v933
      %941 = vst.msk [vmem:[%s143 + $0x4] sm:$0xf] %vm939, %v934
      %942 = vst.msk [vmem:[%s143 + $0x8] sm:$0xf] %vm939, %v935
      %p943 = scmp.lt.s32.totalorder %s13, 1
      %s944 = scalar_select %p943, %s13, 1
      %s945 = smul.addr %s944, 3
      %s946 = smul.addr %s945, 4
      %s947 = scalar_lea.vmem %s2, %s946
      // Predicated region
      $region29: #{densenet_forward.36} parent=27 // pred_check
        %p948 = pneg %p78
      $region30: #{densenet_forward.36} parent=27 // pred_check_branch
        %950 = sbr.rel (%p948) target = $region32
      $region31: #{densenet_forward.36} parent=27 // pred_region
        _
      $region32: #{densenet_forward.36} parent=27 // pred_fallthru
        _
    $region28: #{densenet_forward.36} parent=5 // pred_fallthru
      _
    %p951 = scmp.le.s32.totalorder 2, %s8
    // Predicated region
    $region33: #{densenet_forward.36} parent=5 // pred_check
      %p952 = pneg %p951
    $region34: #{densenet_forward.36} parent=5 // pred_check_branch
      %954 = sbr.rel (%p952) target = $region36
    $region35: #{densenet_forward.36} parent=5 // pred_region
      %s955 = ssub.s32 %s8, 2
      // Predicated region
      $region37: #{densenet_forward.36} parent=35 // pred_check
        %p956 = pneg %p84
      $region38: #{densenet_forward.36} parent=35 // pred_check_branch
        %958 = sbr.rel (%p956) target = $region40
      $region39: #{densenet_forward.36} parent=35 // pred_region
        %p959 = scmp.lt.s32.totalorder %s14, 1
        %s960 = scalar_select %p959, %s14, 1
        %s961 = smul.addr %s960, 3
        %s962 = smul.addr %s961, 4
        %s963 = scalar_lea.vmem %s2, %s962
      $region40: #{densenet_forward.36} parent=35 // pred_fallthru
        _
    $region36: #{densenet_forward.36} parent=5 // pred_fallthru
      _
  $region6: #{densenet_forward.36} parent=0 // loop_footer
    %s12 = sadd.s32 1, %s8
  $region7: #{densenet_forward.36} parent=0 // loop_footer_branch
    %7 = sbr.rel target = $region3
  $region8: #{densenet_forward.36} parent=0 // loop_exit
    _

// kernel: densenet_forward.41
$region0: #{densenet_forward.41}
  #allocation0 [shape = 'u32[]', space=smem, size = 0x4, offset = 0x4, fixed_abs, tag = 'smem constant byte address 0x4 - core index']
  #allocation1 [shape = 'u32[144,128]{1,0:T(1,128)}', space=vmem, size = 0x12000, scoped, tag = 'internal scratch']
  %s0 = inlined_call_operand.vmem [shape: bf16[2,16,64], index: 0, kind: input, shape index: {}]
  %s1 = inlined_call_operand.vmem [shape: f32[1,64], index: 1, kind: input, shape index: {}]
  %s2 = inlined_call_operand.vmem [shape: f32[1,64], index: 2, kind: input, shape index: {}]
  %s3 = inlined_call_operand.vmem [shape: f32[64,32], index: 3, kind: input, shape index: {}]
  %s4 = inlined_call_operand.vmem [shape: f32[32,64], index: 4, kind: input, shape index: {}]
  %s5 = inlined_call_operand.vmem [shape: bf16[2,16,64], index: 5, kind: output, shape index: {}]
  %s6 = sld [smem:[#allocation0]]
  $region53: #{densenet_forward.41} parent=0
    _
  %s8 = ssub.s32 1, %s6
  %s9 = scalar_select 0, %s8, %s6
  loop: start=0, step=1, limit=4
  $region2: #{densenet_forward.41} parent=0 // loop_pre_header
    _
  $region3: #{densenet_forward.41} parent=0 // loop_header
    %s11 = sphi 0, %s15
    %p12 = scmp.ge.s32.totalorder %s11, 4
    %s18 = sphi 0, %s30
    %s19 = sphi 0, %s26
    %s20 = sphi 0, %s18
    %s21 = sphi 0, %s19
    %s22 = sphi 0, %s20
    %s23 = sphi 0, %s21
    %s35 = sphi 0, %s37
    %s38 = sphi 0, %s35
    %s39 = sphi 0, %s38
    %s55 = sphi 0, %s39
    %s61 = sphi 0, %s63
    %s64 = sphi 0, %s61
    %s65 = sphi 0, %s64
    %s81 = sphi 0, %s65
    %s87 = sphi 0, %s89
    %s90 = sphi 0, %s87
    %s91 = sphi 0, %s90
    %s107 = sphi 0, %s91
    %s111 = sphi 0, %s111
    %s113 = sphi 0, %s111
    %s114 = sphi 0, %s113
    %s128 = sphi 0, %s114
    %s132 = sphi 0, %s132
    %s134 = sphi 0, %s132
    %s135 = sphi 0, %s134
    %s149 = sphi 0, %s135
    %s157 = sphi 0, %s159
    %s160 = sphi 0, %s157
    %s161 = sphi 0, %s160
    %s177 = sphi 0, %s161
  $region4: #{densenet_forward.41} parent=0 // loop_header_branch
    %14 = sbr.rel (%p12) target = $region8
  $region5: #{densenet_forward.41} parent=0 // loop_body
    %s16 = ssub.s32 %s11, 1
    %s17 = ssub.s32 %s11, 2
    %s24 = sadd.s32 1, %s19
    %p25 = scmp.ge.s32.totalorder %s24, 1
    %s26 = scalar_select %p25, 0, %s24
    %s27 = sadd.s32 1, %s18
    %s28 = scalar_select %p25, %s27, %s18
    %p29 = scmp.ge.s32.totalorder %s28, 2
    %s30 = scalar_select %p29, 0, %s28
    %s31 = ssub.s32 %s18, %s30
    %s32 = ssub.s32 %s19, %s26
    %s33 = sor.u32 %s31, %s32
    %p34 = scmp.eq.s32.totalorder %s33, 0
    %s36 = sadd.s32 %s35, 1
    %s37 = scalar_select %p34, %s35, %s36
    %p40 = pneg %p34
    %p41 = scmp.eq.s32.totalorder %s11, 1
    %p42 = por %p40, %p41
    %p43 = scmp.ne.s32.totalorder %s35, %s38
    %p44 = scmp.eq.s32.totalorder %s11, 0
    %p45 = por %p43, %p44
    %p46 = scmp.ne.s32.totalorder %s35, %s38
    %p47 = scmp.eq.s32.totalorder %s16, 1
    %p48 = por %p46, %p47
    %p49 = scmp.ne.s32.totalorder %s38, %s39
    %p50 = scmp.eq.s32.totalorder %s16, 0
    %p51 = por %p49, %p50
    %p52 = scmp.ne.s32.totalorder %s38, %s39
    %p53 = scmp.eq.s32.totalorder %s17, 1
    %p54 = por %p52, %p53
    %p56 = scmp.ne.s32.totalorder %s39, %s55
    %p57 = scmp.eq.s32.totalorder %s17, 0
    %p58 = por %p56, %p57
    %s59 = ssub.s32 %s19, %s26
    %p60 = scmp.eq.s32.totalorder %s59, 0
    %s62 = sadd.s32 %s61, 1
    %s63 = scalar_select %p60, %s61, %s62
    %p66 = pneg %p60
    %p67 = scmp.eq.s32.totalorder %s11, 1
    %p68 = por %p66, %p67
    %p69 = scmp.ne.s32.totalorder %s61, %s64
    %p70 = scmp.eq.s32.totalorder %s11, 0
    %p71 = por %p69, %p70
    %p72 = scmp.ne.s32.totalorder %s61, %s64
    %p73 = scmp.eq.s32.totalorder %s16, 1
    %p74 = por %p72, %p73
    %p75 = scmp.ne.s32.totalorder %s64, %s65
    %p76 = scmp.eq.s32.totalorder %s16, 0
    %p77 = por %p75, %p76
    %p78 = scmp.ne.s32.totalorder %s64, %s65
    %p79 = scmp.eq.s32.totalorder %s17, 1
    %p80 = por %p78, %p79
    %p82 = scmp.ne.s32.totalorder %s65, %s81
    %p83 = scmp.eq.s32.totalorder %s17, 0
    %p84 = por %p82, %p83
    %s85 = ssub.s32 %s19, %s26
    %p86 = scmp.eq.s32.totalorder %s85, 0
    %s88 = sadd.s32 %s87, 1
    %s89 = scalar_select %p86, %s87, %s88
    %p92 = pneg %p86
    %p93 = scmp.eq.s32.totalorder %s11, 1
    %p94 = por %p92, %p93
    %p95 = scmp.ne.s32.totalorder %s87, %s90
    %p96 = scmp.eq.s32.totalorder %s11, 0
    %p97 = por %p95, %p96
    %p98 = scmp.ne.s32.totalorder %s87, %s90
    %p99 = scmp.eq.s32.totalorder %s16, 1
    %p100 = por %p98, %p99
    %p101 = scmp.ne.s32.totalorder %s90, %s91
    %p102 = scmp.eq.s32.totalorder %s16, 0
    %p103 = por %p101, %p102
    %p104 = scmp.ne.s32.totalorder %s90, %s91
    %p105 = scmp.eq.s32.totalorder %s17, 1
    %p106 = por %p104, %p105
    %p108 = scmp.ne.s32.totalorder %s91, %s107
    %p109 = scmp.eq.s32.totalorder %s17, 0
    %p110 = por %p108, %p109
    %s112 = sadd.s32 %s111, 1
    %p115 = scmp.eq.s32.totalorder %s11, 1
    %p116 = scmp.ne.s32.totalorder %s111, %s113
    %p117 = scmp.eq.s32.totalorder %s11, 0
    %p118 = por %p116, %p117
    %p119 = scmp.ne.s32.totalorder %s111, %s113
    %p120 = scmp.eq.s32.totalorder %s16, 1
    %p121 = por %p119, %p120
    %p122 = scmp.ne.s32.totalorder %s113, %s114
    %p123 = scmp.eq.s32.totalorder %s16, 0
    %p124 = por %p122, %p123
    %p125 = scmp.ne.s32.totalorder %s113, %s114
    %p126 = scmp.eq.s32.totalorder %s17, 1
    %p127 = por %p125, %p126
    %p129 = scmp.ne.s32.totalorder %s114, %s128
    %p130 = scmp.eq.s32.totalorder %s17, 0
    %p131 = por %p129, %p130
    %s133 = sadd.s32 %s132, 1
    %p136 = scmp.eq.s32.totalorder %s11, 1
    %p137 = scmp.ne.s32.totalorder %s132, %s134
    %p138 = scmp.eq.s32.totalorder %s11, 0
    %p139 = por %p137, %p138
    %p140 = scmp.ne.s32.totalorder %s132, %s134
    %p141 = scmp.eq.s32.totalorder %s16, 1
    %p142 = por %p140, %p141
    %p143 = scmp.ne.s32.totalorder %s134, %s135
    %p144 = scmp.eq.s32.totalorder %s16, 0
    %p145 = por %p143, %p144
    %p146 = scmp.ne.s32.totalorder %s134, %s135
    %p147 = scmp.eq.s32.totalorder %s17, 1
    %p148 = por %p146, %p147
    %p150 = scmp.ne.s32.totalorder %s135, %s149
    %p151 = scmp.eq.s32.totalorder %s17, 0
    %p152 = por %p150, %p151
    %s153 = ssub.s32 %s18, %s30
    %s154 = ssub.s32 %s19, %s26
    %s155 = sor.u32 %s153, %s154
    %p156 = scmp.eq.s32.totalorder %s155, 0
    %s158 = sadd.s32 %s157, 1
    %s159 = scalar_select %p156, %s157, %s158
    %p162 = pneg %p156
    %p163 = scmp.eq.s32.totalorder %s11, 1
    %p164 = por %p162, %p163
    %p165 = scmp.ne.s32.totalorder %s157, %s160
    %p166 = scmp.eq.s32.totalorder %s11, 0
    %p167 = por %p165, %p166
    %p168 = scmp.ne.s32.totalorder %s157, %s160
    %p169 = scmp.eq.s32.totalorder %s16, 1
    %p170 = por %p168, %p169
    %p171 = scmp.ne.s32.totalorder %s160, %s161
    %p172 = scmp.eq.s32.totalorder %s16, 0
    %p173 = por %p171, %p172
    %p174 = scmp.ne.s32.totalorder %s160, %s161
    %p175 = scmp.eq.s32.totalorder %s17, 1
    %p176 = por %p174, %p175
    %p178 = scmp.ne.s32.totalorder %s161, %s177
    %p179 = scmp.eq.s32.totalorder %s17, 0
    %p180 = por %p178, %p179
    %p181 = scmp.le.s32.totalorder 1, %s11
    %p182 = scmp.lt.s32.totalorder %s11, 3
    %p183 = pnand %p181, %p182
    %p184 = pneg %p183
    // Predicated region
    $region9: #{densenet_forward.41} parent=5 // pred_check
      _
    $region10: #{densenet_forward.41} parent=5 // pred_check_branch
      %186 = sbr.rel (%p183) target = $region12
    $region11: #{densenet_forward.41} parent=5 // pred_region
      %s187 = ssub.s32 %s11, 1
      // Predicated region
      $region13: #{densenet_forward.41} parent=11 // pred_check
        %p188 = pneg %p77
      $region14: #{densenet_forward.41} parent=11 // pred_check_branch
        %190 = sbr.rel (%p188) target = $region16
      $region15: #{densenet_forward.41} parent=11 // pred_region
        %p191 = scmp.lt.s32.totalorder %s21, 0
        %s192 = scalar_select %p191, %s21, 0
        %s193 = scalar_lea.vmem %s1, %s192
      $region16: #{densenet_forward.41} parent=11 // pred_fallthru
        _
      // Predicated region
      $region17: #{densenet_forward.41} parent=11 // pred_check
        %p194 = pneg %p103
      $region18: #{densenet_forward.41} parent=11 // pred_check_branch
        %196 = sbr.rel (%p194) target = $region20
      $region19: #{densenet_forward.41} parent=11 // pred_region
        %p197 = scmp.lt.s32.totalorder %s21, 0
        %s198 = scalar_select %p197, %s21, 0
        %s199 = scalar_lea.vmem %s2, %s198
      $region20: #{densenet_forward.41} parent=11 // pred_fallthru
        _
      // Predicated region
      $region21: #{densenet_forward.41} parent=11 // pred_check
        %p200 = pneg %p124
      $region22: #{densenet_forward.41} parent=11 // pred_check_branch
        %202 = sbr.rel (%p200) target = $region24
      $region23: #{densenet_forward.41} parent=11 // pred_region
        _
      $region24: #{densenet_forward.41} parent=11 // pred_fallthru
        _
      // Predicated region
      $region25: #{densenet_forward.41} parent=11 // pred_check
        %p203 = pneg %p145
      $region26: #{densenet_forward.41} parent=11 // pred_check_branch
        %205 = sbr.rel (%p203) target = $region28
      $region27: #{densenet_forward.41} parent=11 // pred_region
        _
      $region28: #{densenet_forward.41} parent=11 // pred_fallthru
        _
    $region12: #{densenet_forward.41} parent=5 // pred_fallthru
      _
    %p206 = scmp.lt.s32.totalorder %s11, 2
    // Predicated region
    $region29: #{densenet_forward.41} parent=5 // pred_check
      %p207 = pneg %p206
    $region30: #{densenet_forward.41} parent=5 // pred_check_branch
      %209 = sbr.rel (%p207) target = $region32
    $region31: #{densenet_forward.41} parent=5 // pred_region
      // Predicated region
      $region33: #{densenet_forward.41} parent=31 // pred_check
        %p210 = pneg %p45
      $region34: #{densenet_forward.41} parent=31 // pred_check_branch
        %212 = sbr.rel (%p210) target = $region36
      $region35: #{densenet_forward.41} parent=31 // pred_region
        %p213 = scmp.lt.s32.totalorder %s18, 1
        %s214 = scalar_select %p213, %s18, 1
        %p215 = scmp.lt.s32.totalorder %s19, 0
        %s216 = scalar_select %p215, %s19, 0
        %s217 = smul.addr %s214, 2
        %s218 = sadd.s32 %s216, %s217
        %s219 = smul.addr %s218, 4
        %s220 = scalar_lea.vmem %s0, %s219
      $region36: #{densenet_forward.41} parent=31 // pred_fallthru
        _
    $region32: #{densenet_forward.41} parent=5 // pred_fallthru
      _
    %p221 = scmp.le.s32.totalorder 1, %s11
    %p222 = scmp.lt.s32.totalorder %s11, 3
    %p223 = pnand %p221, %p222
    %p224 = pneg %p223
    // Predicated region
    $region37: #{densenet_forward.41} parent=5 // pred_check
      _
    $region38: #{densenet_forward.41} parent=5 // pred_check_branch
      %226 = sbr.rel (%p223) target = $region40
    $region39: #{densenet_forward.41} parent=5 // pred_region
      %s227 = ssub.s32 %s11, 1
      %p228 = scmp.lt.s32.totalorder %s20, 1
      %s229 = scalar_select %p228, %s20, 1
      %p230 = scmp.lt.s32.totalorder %s21, 0
      %s231 = scalar_select %p230, %s21, 0
      %s232 = smul.addr %s229, 2
      %s233 = sadd.s32 %s231, %s232
      %s234 = smul.addr %s233, 4
      %s235 = scalar_lea.vmem %s0, %s234
      %p236 = pneg %p51
      %p237 = pneg %p48
      %p238 = scmp.lt.s32.totalorder %s21, 0
      %s239 = scalar_select %p238, %s21, 0
      %s240 = scalar_lea.vmem %s1, %s239
      %p241 = pneg %p77
      %p242 = pneg %p74
      %p243 = scmp.lt.s32.totalorder %s21, 0
      %s244 = scalar_select %p243, %s21, 0
      %s245 = scalar_lea.vmem %s2, %s244
      %p246 = pneg %p103
      %p247 = pneg %p100
      %p248 = pneg %p124
      %p249 = pneg %p121
      %p250 = pneg %p145
      %p251 = pneg %p142
      %p252 = pneg %p173
      %p253 = pneg %p170
      %p254 = scmp.lt.s32.totalorder %s20, 1
      %s255 = scalar_select %p254, %s20, 1
      %p256 = scmp.lt.s32.totalorder %s21, 0
      %s257 = scalar_select %p256, %s21, 0
      %s258 = smul.addr %s255, 2
      %s259 = sadd.s32 %s257, %s258
      %s260 = smul.addr %s259, 4
      %s261 = scalar_lea.vmem %s5, %s260
      %p262 = scmp.lt.s32.totalorder %s20, 1
      %s263 = scalar_select %p262, %s20, 1
      %p264 = scmp.lt.s32.totalorder %s21, 0
      %s265 = scalar_select %p264, %s21, 0
      %s266 = smul.addr %s263, 2
      %s267 = sadd.s32 %s265, %s266
      %s268 = smul.addr %s267, 4
      %s269 = scalar_lea.vmem %s0, %s268
      %p270 = scmp.lt.s32.totalorder %s21, 0
      %s271 = scalar_select %p270, %s21, 0
      %s272 = scalar_lea.vmem %s1, %s271
      %p273 = scmp.lt.s32.totalorder %s21, 0
      %s274 = scalar_select %p273, %s21, 0
      %s275 = scalar_lea.vmem %s2, %s274
      %p276 = scmp.lt.s32.totalorder %s20, 1
      %s277 = scalar_select %p276, %s20, 1
      %p278 = scmp.lt.s32.totalorder %s21, 0
      %s279 = scalar_select %p278, %s21, 0
      %s280 = smul.addr %s277, 2
      %s281 = sadd.s32 %s279, %s280
      %s282 = smul.addr %s281, 4
      %s283 = scalar_lea.vmem %s5, %s282
      %v284 = vld [vmem:[%s269] sm:$0xf]
      %v285 = vld [vmem:[%s269 + $0x4] sm:$0xf]
      %v286 = vunpack.c.l.bf16 %v284
      %v287 = vunpack.c.l.bf16 %v285
      %v288 = vld [vmem:[%s3] sm:$0xff]
      %v289 = vld [vmem:[%s3 + $0x8] sm:$0xff]
      %v290 = vld [vmem:[%s3 + $0x10] sm:$0xff]
      %v291 = vld [vmem:[%s3 + $0x18] sm:$0xff]
      %v292 = vld [vmem:[%s3 + $0x20] sm:$0xff]
      %v293 = vld [vmem:[%s3 + $0x28] sm:$0xff]
      %v294 = vld [vmem:[%s3 + $0x30] sm:$0xff]
      %v295 = vld [vmem:[%s3 + $0x38] sm:$0xff]
      %v296 = vld [vmem:[%s4] sm:$0xff]
      %v297 = vld [vmem:[%s4 + $0x8] sm:$0xff]
      %v298 = vld [vmem:[%s4 + $0x10] sm:$0xff]
      %v299 = vld [vmem:[%s4 + $0x18] sm:$0xff]
      %vm300 = vcmask 523264
      %v301 = vsel %vm300, %v286, 0.0
      %v302 = vsel %vm300, %v287, 0.0
      %v303 = vadd.f32 %v301, %v302
      %v304 = vrot.slane %v303, 4
      %v305 = vadd.f32 %v303, %v304
      %v306 = vrot.slane %v305, 2
      %v307 = vadd.f32 %v305, %v306
      %v308 = vrot.slane %v307, 1
      %v309 = vadd.f32 %v307, %v308
      %v311 = vsel %vm300, %v309, 0
      %313 = vmatprep.subr.mxu0 0.0
      %314 = vmatpush1.msra.mxu0 %v288
      %315 = vmatprep.subr.mxu0 0.0
      %316 = vmatpush1.msra.mxu0 %v289
      %317 = vmatprep.subr.mxu0 0.0
      %318 = vmatpush1.msra.mxu0 %v290
      %319 = vmatprep.subr.mxu0 0.0
      %320 = vmatpush1.msra.mxu0 %v291
      %321 = vmatprep.subr.mxu0 0.0
      %322 = vmatpush1.msra.mxu0 %v292
      %323 = vmatprep.subr.mxu0 0.0
      %324 = vmatpush1.msra.mxu0 %v293
      %325 = vmatprep.subr.mxu0 0.0
      %326 = vmatpush1.msra.mxu0 %v294
      %327 = vmatprep.subr.mxu0 0.0
      %328 = vmatpush1.msra.mxu0 %v295
      %329 = vmatprep.subr.mxu0 0.0
      %330 = vmatpush1.msra.mxu0 0.0
      %331 = vmatprep.subr.mxu0 0.0
      %332 = vmatpush1.msra.mxu0 0.0
      %333 = vmatprep.subr.mxu0 0.0
      %334 = vmatpush1.msra.mxu0 0.0
      %335 = vmatprep.subr.mxu0 0.0
      %336 = vmatpush1.msra.mxu0 0.0
      %337 = vmatprep.subr.mxu0 0.0
      %338 = vmatpush1.msra.mxu0 0.0
      %339 = vmatprep.subr.mxu0 0.0
      %340 = vmatpush1.msra.mxu0 0.0
      %341 = vmatprep.subr.mxu0 0.0
      %342 = vmatpush1.msra.mxu0 0.0
      %343 = vmatprep.subr.mxu0 0.0
      %344 = vmatpush1.msra.mxu0 0.0
      %345 = vmatprep.subr.mxu0 0.0
      %346 = vmatpush1.msra.mxu0 0.0
      %347 = vmatprep.subr.mxu0 0.0
      %348 = vmatpush1.msra.mxu0 0.0
      %349 = vmatprep.subr.mxu0 0.0
      %350 = vmatpush1.msra.mxu0 0.0
      %351 = vmatprep.subr.mxu0 0.0
      %352 = vmatpush1.msra.mxu0 0.0
      %353 = vmatprep.subr.mxu0 0.0
      %354 = vmatpush1.msra.mxu0 0.0
      %355 = vmatprep.subr.mxu0 0.0
      %356 = vmatpush1.msra.mxu0 0.0
      %357 = vmatprep.subr.mxu0 0.0
      %358 = vmatpush1.msra.mxu0 0.0
      %359 = vmatprep.subr.mxu0 0.0
      %360 = vmatpush1.msra.mxu0 0.0
      %361 = vmatprep.subr.mxu0 0.0
      %362 = vmatpush1.msra.mxu0 0.0
      %363 = vmatprep.subr.mxu0 0.0
      %364 = vmatpush1.msra.mxu0 0.0
      %365 = vmatprep.subr.mxu0 0.0
      %366 = vmatpush1.msra.mxu0 0.0
      %367 = vmatprep.subr.mxu0 0.0
      %368 = vmatpush1.msra.mxu0 0.0
      %369 = vmatprep.subr.mxu0 0.0
      %370 = vmatpush1.msra.mxu0 0.0
      %371 = vmatprep.subr.mxu0 0.0
      %372 = vmatpush1.msra.mxu0 0.0
      %373 = vmatprep.subr.mxu0 0.0
      %374 = vmatpush1.msra.mxu0 0.0
      %375 = vmatprep.subr.mxu0 0.0
      %376 = vmatpush1.msra.mxu0 0.0
      %377 = vmatprep.mubr.f32.mxu0 0.0
      %378 = vmatmul.mubr.f32.gmra.mrb[0].mxu0 %v311
      %v379 = vpop.f32.mrb[0].mxu0
      %v380 = vadd.f32 0.0, %v379
      %v381 = vpop.f32.mrb[0].mxu0
      %382 = vdwg.mxu0
      %v383 = vmul.f32 %v380, 0.03125
      %vm384 = vcmask 261120
      %v386 = vsel %vm384, %v383, 0
      %388 = vmatprep.subr.mxu0 0.0
      %389 = vmatpush1.msra.mxu0 %v296
      %390 = vmatprep.subr.mxu0 0.0
      %391 = vmatpush1.msra.mxu0 %v297
      %392 = vmatprep.subr.mxu0 0.0
      %393 = vmatpush1.msra.mxu0 %v298
      %394 = vmatprep.subr.mxu0 0.0
      %395 = vmatpush1.msra.mxu0 %v299
      %396 = vmatprep.subr.mxu0 0.0
      %397 = vmatpush1.msra.mxu0 0.0
      %398 = vmatprep.subr.mxu0 0.0
      %399 = vmatpush1.msra.mxu0 0.0
      %400 = vmatprep.subr.mxu0 0.0
      %401 = vmatpush1.msra.mxu0 0.0
      %402 = vmatprep.subr.mxu0 0.0
      %403 = vmatpush1.msra.mxu0 0.0
      %404 = vmatprep.subr.mxu0 0.0
      %405 = vmatpush1.msra.mxu0 0.0
      %406 = vmatprep.subr.mxu0 0.0
      %407 = vmatpush1.msra.mxu0 0.0
      %408 = vmatprep.subr.mxu0 0.0
      %409 = vmatpush1.msra.mxu0 0.0
      %410 = vmatprep.subr.mxu0 0.0
      %411 = vmatpush1.msra.mxu0 0.0
      %412 = vmatprep.subr.mxu0 0.0
      %413 = vmatpush1.msra.mxu0 0.0
      %414 = vmatprep.subr.mxu0 0.0
      %415 = vmatpush1.msra.mxu0 0.0
      %416 = vmatprep.subr.mxu0 0.0
      %417 = vmatpush1.msra.mxu0 0.0
      %418 = vmatprep.subr.mxu0 0.0
      %419 = vmatpush1.msra.mxu0 0.0
      %420 = vmatprep.subr.mxu0 0.0
      %421 = vmatpush1.msra.mxu0 0.0
      %422 = vmatprep.subr.mxu0 0.0
      %423 = vmatpush1.msra.mxu0 0.0
      %424 = vmatprep.subr.mxu0 0.0
      %425 = vmatpush1.msra.mxu0 0.0
      %426 = vmatprep.subr.mxu0 0.0
      %427 = vmatpush1.msra.mxu0 0.0
      %428 = vmatprep.subr.mxu0 0.0
      %429 = vmatpush1.msra.mxu0 0.0
      %430 = vmatprep.subr.mxu0 0.0
      %431 = vmatpush1.msra.mxu0 0.0
      %432 = vmatprep.subr.mxu0 0.0
      %433 = vmatpush1.msra.mxu0 0.0
      %434 = vmatprep.subr.mxu0 0.0
      %435 = vmatpush1.msra.mxu0 0.0
      %436 = vmatprep.subr.mxu0 0.0
      %437 = vmatpush1.msra.mxu0 0.0
      %438 = vmatprep.subr.mxu0 0.0
      %439 = vmatpush1.msra.mxu0 0.0
      %440 = vmatprep.subr.mxu0 0.0
      %441 = vmatpush1.msra.mxu0 0.0
      %442 = vmatprep.subr.mxu0 0.0
      %443 = vmatpush1.msra.mxu0 0.0
      %444 = vmatprep.subr.mxu0 0.0
      %445 = vmatpush1.msra.mxu0 0.0
      %446 = vmatprep.subr.mxu0 0.0
      %447 = vmatpush1.msra.mxu0 0.0
      %448 = vmatprep.subr.mxu0 0.0
      %449 = vmatpush1.msra.mxu0 0.0
      %450 = vmatprep.subr.mxu0 0.0
      %451 = vmatpush1.msra.mxu0 0.0
      %452 = vmatprep.mubr.f32.mxu0 0.0
      %453 = vmatmul.mubr.f32.gmra.mrb[0].mxu0 %v386
      %v454 = vpop.f32.mrb[0].mxu0
      %v455 = vadd.f32 0.0, %v454
      %v456 = vpop.f32.mrb[0].mxu0
      %457 = vdwg.mxu0
      %v458 = vlaneseq
      %v459 = vshrl.u32 %v458, 7
      %v460 = vsub.s32 0, %v459
      %v461 = vrot.slane %v455, %v460
      %v462 = vsub.f32 %v286, %v461
      %v463 = vsub.f32 %v287, %v461
      %v464 = vmul.f32 %v462, %v462
      %v465 = vmul.f32 %v463, %v463
      %v466 = vsel %vm300, %v464, 0.0
      %v467 = vsel %vm300, %v465, 0.0
      %v468 = vadd.f32 %v466, %v467
      %v469 = vrot.slane %v468, 4
      %v470 = vadd.f32 %v468, %v469
      %v471 = vrot.slane %v470, 2
      %v472 = vadd.f32 %v470, %v471
      %v473 = vrot.slane %v472, 1
      %v474 = vadd.f32 %v472, %v473
      %v476 = vsel %vm300, %v474, 0
      %478 = vmatprep.subr.mxu0 0.0
      %479 = vmatpush1.msra.mxu0 %v288
      %480 = vmatprep.subr.mxu0 0.0
      %481 = vmatpush1.msra.mxu0 %v289
      %482 = vmatprep.subr.mxu0 0.0
      %483 = vmatpush1.msra.mxu0 %v290
      %484 = vmatprep.subr.mxu0 0.0
      %485 = vmatpush1.msra.mxu0 %v291
      %486 = vmatprep.subr.mxu0 0.0
      %487 = vmatpush1.msra.mxu0 %v292
      %488 = vmatprep.subr.mxu0 0.0
      %489 = vmatpush1.msra.mxu0 %v293
      %490 = vmatprep.subr.mxu0 0.0
      %491 = vmatpush1.msra.mxu0 %v294
      %492 = vmatprep.subr.mxu0 0.0
      %493 = vmatpush1.msra.mxu0 %v295
      %494 = vmatprep.subr.mxu0 0.0
      %495 = vmatpush1.msra.mxu0 0.0
      %496 = vmatprep.subr.mxu0 0.0
      %497 = vmatpush1.msra.mxu0 0.0
      %498 = vmatprep.subr.mxu0 0.0
      %499 = vmatpush1.msra.mxu0 0.0
      %500 = vmatprep.subr.mxu0 0.0
      %501 = vmatpush1.msra.mxu0 0.0
      %502 = vmatprep.subr.mxu0 0.0
      %503 = vmatpush1.msra.mxu0 0.0
      %504 = vmatprep.subr.mxu0 0.0
      %505 = vmatpush1.msra.mxu0 0.0
      %506 = vmatprep.subr.mxu0 0.0
      %507 = vmatpush1.msra.mxu0 0.0
      %508 = vmatprep.subr.mxu0 0.0
      %509 = vmatpush1.msra.mxu0 0.0
      %510 = vmatprep.subr.mxu0 0.0
      %511 = vmatpush1.msra.mxu0 0.0
      %512 = vmatprep.subr.mxu0 0.0
      %513 = vmatpush1.msra.mxu0 0.0
      %514 = vmatprep.subr.mxu0 0.0
      %515 = vmatpush1.msra.mxu0 0.0
      %516 = vmatprep.subr.mxu0 0.0
      %517 = vmatpush1.msra.mxu0 0.0
      %518 = vmatprep.subr.mxu0 0.0
      %519 = vmatpush1.msra.mxu0 0.0
      %520 = vmatprep.subr.mxu0 0.0
      %521 = vmatpush1.msra.mxu0 0.0
      %522 = vmatprep.subr.mxu0 0.0
      %523 = vmatpush1.msra.mxu0 0.0
      %524 = vmatprep.subr.mxu0 0.0
      %525 = vmatpush1.msra.mxu0 0.0
      %526 = vmatprep.subr.mxu0 0.0
      %527 = vmatpush1.msra.mxu0 0.0
      %528 = vmatprep.subr.mxu0 0.0
      %529 = vmatpush1.msra.mxu0 0.0
      %530 = vmatprep.subr.mxu0 0.0
      %531 = vmatpush1.msra.mxu0 0.0
      %532 = vmatprep.subr.mxu0 0.0
      %533 = vmatpush1.msra.mxu0 0.0
      %534 = vmatprep.subr.mxu0 0.0
      %535 = vmatpush1.msra.mxu0 0.0
      %536 = vmatprep.subr.mxu0 0.0
      %537 = vmatpush1.msra.mxu0 0.0
      %538 = vmatprep.subr.mxu0 0.0
      %539 = vmatpush1.msra.mxu0 0.0
      %540 = vmatprep.subr.mxu0 0.0
      %541 = vmatpush1.msra.mxu0 0.0
      %542 = vmatprep.mubr.f32.mxu0 0.0
      %543 = vmatmul.mubr.f32.gmra.mrb[0].mxu0 %v476
      %v544 = vpop.f32.mrb[0].mxu0
      %v545 = vadd.f32 0.0, %v544
      %v546 = vpop.f32.mrb[0].mxu0
      %547 = vdwg.mxu0
      %v548 = vmul.f32 %v545, 0.03125
      %v549 = vadd.f32 %v548, 1e-05
      %v550 = vrsqrt.pop %v549
      %v552 = vsel %vm384, %v550, 0
      %554 = vmatprep.subr.mxu0 0.0
      %555 = vmatpush1.msra.mxu0 %v296
      %556 = vmatprep.subr.mxu0 0.0
      %557 = vmatpush1.msra.mxu0 %v297
      %558 = vmatprep.subr.mxu0 0.0
      %559 = vmatpush1.msra.mxu0 %v298
      %560 = vmatprep.subr.mxu0 0.0
      %561 = vmatpush1.msra.mxu0 %v299
      %562 = vmatprep.subr.mxu0 0.0
      %563 = vmatpush1.msra.mxu0 0.0
      %564 = vmatprep.subr.mxu0 0.0
      %565 = vmatpush1.msra.mxu0 0.0
      %566 = vmatprep.subr.mxu0 0.0
      %567 = vmatpush1.msra.mxu0 0.0
      %568 = vmatprep.subr.mxu0 0.0
      %569 = vmatpush1.msra.mxu0 0.0
      %570 = vmatprep.subr.mxu0 0.0
      %571 = vmatpush1.msra.mxu0 0.0
      %572 = vmatprep.subr.mxu0 0.0
      %573 = vmatpush1.msra.mxu0 0.0
      %574 = vmatprep.subr.mxu0 0.0
      %575 = vmatpush1.msra.mxu0 0.0
      %576 = vmatprep.subr.mxu0 0.0
      %577 = vmatpush1.msra.mxu0 0.0
      %578 = vmatprep.subr.mxu0 0.0
      %579 = vmatpush1.msra.mxu0 0.0
      %580 = vmatprep.subr.mxu0 0.0
      %581 = vmatpush1.msra.mxu0 0.0
      %582 = vmatprep.subr.mxu0 0.0
      %583 = vmatpush1.msra.mxu0 0.0
      %584 = vmatprep.subr.mxu0 0.0
      %585 = vmatpush1.msra.mxu0 0.0
      %586 = vmatprep.subr.mxu0 0.0
      %587 = vmatpush1.msra.mxu0 0.0
      %588 = vmatprep.subr.mxu0 0.0
      %589 = vmatpush1.msra.mxu0 0.0
      %590 = vmatprep.subr.mxu0 0.0
      %591 = vmatpush1.msra.mxu0 0.0
      %592 = vmatprep.subr.mxu0 0.0
      %593 = vmatpush1.msra.mxu0 0.0
      %594 = vmatprep.subr.mxu0 0.0
      %595 = vmatpush1.msra.mxu0 0.0
      %596 = vmatprep.subr.mxu0 0.0
      %597 = vmatpush1.msra.mxu0 0.0
      %598 = vmatprep.subr.mxu0 0.0
      %599 = vmatpush1.msra.mxu0 0.0
      %600 = vmatprep.subr.mxu0 0.0
      %601 = vmatpush1.msra.mxu0 0.0
      %602 = vmatprep.subr.mxu0 0.0
      %603 = vmatpush1.msra.mxu0 0.0
      %604 = vmatprep.subr.mxu0 0.0
      %605 = vmatpush1.msra.mxu0 0.0
      %606 = vmatprep.subr.mxu0 0.0
      %607 = vmatpush1.msra.mxu0 0.0
      %608 = vmatprep.subr.mxu0 0.0
      %609 = vmatpush1.msra.mxu0 0.0
      %610 = vmatprep.subr.mxu0 0.0
      %611 = vmatpush1.msra.mxu0 0.0
      %612 = vmatprep.subr.mxu0 0.0
      %613 = vmatpush1.msra.mxu0 0.0
      %614 = vmatprep.subr.mxu0 0.0
      %615 = vmatpush1.msra.mxu0 0.0
      %616 = vmatprep.subr.mxu0 0.0
      %617 = vmatpush1.msra.mxu0 0.0
      %618 = vmatprep.mubr.f32.mxu0 0.0
      %619 = vmatmul.mubr.f32.gmra.mrb[0].mxu0 %v552
      %v620 = vpop.f32.mrb[0].mxu0
      %v621 = vadd.f32 0.0, %v620
      %v622 = vpop.f32.mrb[0].mxu0
      %623 = vdwg.mxu0
      %v624 = vld [vmem:[%s272] sm:$0x1]
      %v625 = vmul.f32 %v621, %v624
      %v626 = vlaneseq
      %v627 = vshrl.u32 %v626, 7
      %v628 = vsub.s32 0, %v627
      %v629 = vrot.slane %v625, %v628
      %v630 = vmul.f32 %v462, %v629
      %v631 = vmul.f32 %v463, %v629
      %v632 = vld [vmem:[%s275] sm:$0x1]
      %v634 = vlaneseq
      %v635 = vshrl.u32 %v634, 7
      %v636 = vsub.s32 0, %v635
      %v637 = vrot.slane %v632, %v636
      %v639 = vadd.f32 %v630, %v637
      %v640 = vadd.f32 %v631, %v637
      %v641 = vmax.f32 %v639, 0.0
      %v642 = vmax.f32 %v640, 0.0
      %v643 = vpack.c.bf16 %v642, %v641
      %v645 = vunpack.c.l.b16 %v643
      %v646 = vunpack.c.h.b16 %v643
      %v647 = vpack.c.b16 %v645, %v645
      %v648 = vpack.c.b16 %v646, %v646
      %vm651 = vcmask 519168
      %652 = vst.msk [vmem:[%s283] sm:$0xf] %vm651, %v647
      %653 = vst.msk [vmem:[%s283 + $0x4] sm:$0xf] %vm651, %v648
      %p654 = scmp.lt.s32.totalorder %s20, 1
      %s655 = scalar_select %p654, %s20, 1
      %p656 = scmp.lt.s32.totalorder %s21, 0
      %s657 = scalar_select %p656, %s21, 0
      %s658 = smul.addr %s655, 2
      %s659 = sadd.s32 %s657, %s658
      %s660 = smul.addr %s659, 4
      %s661 = scalar_lea.vmem %s5, %s660
      // Predicated region
      $region41: #{densenet_forward.41} parent=39 // pred_check
        %p662 = pneg %p170
      $region42: #{densenet_forward.41} parent=39 // pred_check_branch
        %664 = sbr.rel (%p662) target = $region44
      $region43: #{densenet_forward.41} parent=39 // pred_region
        _
      $region44: #{densenet_forward.41} parent=39 // pred_fallthru
        _
    $region40: #{densenet_forward.41} parent=5 // pred_fallthru
      _
    %p665 = scmp.le.s32.totalorder 2, %s11
    // Predicated region
    $region45: #{densenet_forward.41} parent=5 // pred_check
      %p666 = pneg %p665
    $region46: #{densenet_forward.41} parent=5 // pred_check_branch
      %668 = sbr.rel (%p666) target = $region48
    $region47: #{densenet_forward.41} parent=5 // pred_region
      %s669 = ssub.s32 %s11, 2
      // Predicated region
      $region49: #{densenet_forward.41} parent=47 // pred_check
        %p670 = pneg %p176
      $region50: #{densenet_forward.41} parent=47 // pred_check_branch
        %672 = sbr.rel (%p670) target = $region52
      $region51: #{densenet_forward.41} parent=47 // pred_region
        %p673 = scmp.lt.s32.totalorder %s22, 1
        %s674 = scalar_select %p673, %s22, 1
        %p675 = scmp.lt.s32.totalorder %s23, 0
        %s676 = scalar_select %p675, %s23, 0
        %s677 = smul.addr %s674, 2
        %s678 = sadd.s32 %s676, %s677
        %s679 = smul.addr %s678, 4
        %s680 = scalar_lea.vmem %s5, %s679
      $region52: #{densenet_forward.41} parent=47 // pred_fallthru
        _
    $region48: #{densenet_forward.41} parent=5 // pred_fallthru
      _
  $region6: #{densenet_forward.41} parent=0 // loop_footer
    %s15 = sadd.s32 1, %s11
  $region7: #{densenet_forward.41} parent=0 // loop_footer_branch
    %10 = sbr.rel target = $region3
  $region8: #{densenet_forward.41} parent=0 // loop_exit
    _

</llo_original>
